<compile_context>
chip_gen: v7x
topology: tpu7x:2x2x1
jax: 0.10.0
libtpu: 0.0.40
codegen_flags: <defaults>
</compile_context>

<pallas_src>
import functools

import numpy as np
import jax
import jax.numpy as jnp
from jax.experimental import pallas as pl
from jax.experimental.pallas import tpu as pltpu

NUM_HIDDEN = 50
IN_FEATURES = 2
OUT_FEATURES = 1
NUM_MIDDLE_LAYERS = 5          # fc2..fc6 (all 50x50)
TWO_PI = 2.0 * np.pi


# --------------------------------------------------------------------------
# Kernel
# --------------------------------------------------------------------------
def _mlp_kernel(xy_ref, w1_ref, b1_ref, wh_ref, bh_ref, wo_ref, bo_ref, o_ref,
                *, precision_mode):
    # xy_ref : (2, tile)        x = row 0, y = row 1
    # w1_ref : (50, 2)   b1_ref : (50, 1)
    # wh_ref : (5, 50, 50)  bh_ref : (5, 50, 1)
    # wo_ref : (1, 50)   bo_ref : (1, 1)
    # o_ref  : (1, tile)
    xy = xy_ref[...]
    x = xy[0:1, :]                                    # (1, tile)
    y = xy[1:2, :]                                    # (1, tile)

    # --- layer 1: K=2, done on the VPU as a broadcast-FMA (no MXU push) ----
    w1 = w1_ref[...]                                  # (50, 2)
    b1 = b1_ref[...]                                  # (50, 1)
    u = jnp.sin(w1[:, 0:1] * x + w1[:, 1:2] * y + b1)  # (50, tile)

    # --- layers 2..6: sin(W @ u + b), batch on lanes ------------------------
    if precision_mode == "bf16":
        # single-pass bf16 operands, f32 accumulation
        for l in range(NUM_MIDDLE_LAYERS):
            w = wh_ref[l].astype(jnp.bfloat16)        # (50, 50)
            b = bh_ref[l]                             # (50, 1)
            u = jnp.sin(
                jnp.dot(w, u.astype(jnp.bfloat16),
                        preferred_element_type=jnp.float32) + b)
    elif precision_mode == "bf16_3x":
        # manual hi/lo split: 3 native bf16 MXU passes, ~f32 accuracy
        for l in range(NUM_MIDDLE_LAYERS):
            w = wh_ref[l]                             # (50, 50) f32
            b = bh_ref[l]                             # (50, 1)
            w_hi = w.astype(jnp.bfloat16)
            w_lo = (w - w_hi.astype(jnp.float32)).astype(jnp.bfloat16)
            u_hi = u.astype(jnp.bfloat16)
            u_lo = (u - u_hi.astype(jnp.float32)).astype(jnp.bfloat16)
            acc = jnp.dot(w_hi, u_hi, preferred_element_type=jnp.float32)
            acc = acc + jnp.dot(w_hi, u_lo, preferred_element_type=jnp.float32)
            acc = acc + jnp.dot(w_lo, u_hi, preferred_element_type=jnp.float32)
            u = jnp.sin(acc + b)
    else:  # "f32": original multi-pass f32 emulation
        for l in range(NUM_MIDDLE_LAYERS):
            u = jnp.sin(
                jnp.dot(wh_ref[l], u, preferred_element_type=jnp.float32)
                + bh_ref[l])

    # --- output layer (no activation) ---------------------------------------
    wo = wo_ref[...]                                  # (1, 50)
    bo = bo_ref[...]                                  # (1, 1)
    u = jnp.dot(wo, u, preferred_element_type=jnp.float32) + bo   # (1, tile)

    # --- hard boundary-condition blend --------------------------------------
    o_ref[...] = (
        x * (x - 1.0) * y * (y - 1.0) * u + y * jnp.sin(TWO_PI * x)
    ).astype(o_ref.dtype)


# --------------------------------------------------------------------------
# Params
# --------------------------------------------------------------------------
def xavier_uniform(key, fan_out, fan_in, dtype=jnp.float32):
    # matches torch.nn.init.xavier_uniform_ (gain=1) on a (out, in) weight
    limit = float(np.sqrt(6.0 / (fan_in + fan_out)))
    return jax.random.uniform(
        key, (fan_out, fan_in), dtype=dtype, minval=-limit, maxval=limit)


def init_params(key):
    """Packed params: (w1, b1, wh, bh, wo, bo) — weights in (out, in) order."""
    keys = jax.random.split(key, 7)
    w1 = xavier_uniform(keys[0], NUM_HIDDEN, IN_FEATURES)            # (50, 2)
    b1 = jnp.zeros((NUM_HIDDEN, 1), jnp.float32)                     # (50, 1)
    wh = jnp.stack(
        [xavier_uniform(keys[1 + l], NUM_HIDDEN, NUM_HIDDEN)
         for l in range(NUM_MIDDLE_LAYERS)], axis=0)                 # (5, 50, 50)
    bh = jnp.zeros((NUM_MIDDLE_LAYERS, NUM_HIDDEN, 1), jnp.float32)  # (5, 50, 1)
    wo = xavier_uniform(keys[6], OUT_FEATURES, NUM_HIDDEN)           # (1, 50)
    bo = jnp.zeros((OUT_FEATURES, 1), jnp.float32)                   # (1, 1)
    return (w1, b1, wh, bh, wo, bo)


# --------------------------------------------------------------------------
# Tiling / hardware helpers
# --------------------------------------------------------------------------
def _num_tensorcores():
    """Best-effort TensorCore count (v7x has 2/chip; v5e/v6e have 1)."""
    try:
        info = pltpu.get_tpu_info()
        for attr in ("num_cores", "num_tensorcores", "tensorcore_count",
                     "cores_per_chip"):
            v = getattr(info, attr, None)
            if isinstance(v, int) and v > 0:
                return v
    except Exception:
        pass
    try:
        v = getattr(jax.devices()[0], "num_cores", None)
        if isinstance(v, int) and v > 0:
            return v
    except Exception:
        pass
    return 1   # conservative: serial grid, maximal single tile


def _vmem_limit_bytes():
    limit = 48 * 1024 * 1024
    try:
        cap = int(pltpu.get_tpu_info().vmem_capacity_bytes)
        limit = min(limit, (cap * 3) // 4)
    except Exception:
        pass
    return limit


def _largest_dividing_tile(n, max_tile):
    tile = max((min(max_tile, n) // 128) * 128, 128)
    while n % tile != 0:
        tile -= 128
    return tile


def _choose_tile(n, num_cores, max_tile=16384):
    """n is a multiple of 128.  Single-TC: one maximal tile (grid is a serial
    loop; extra steps are pure overhead).  Multi-TC: grid count a multiple of
    the core count so the 'parallel' axis shards evenly."""
    if num_cores <= 1 or n // 128 < num_cores:
        return _largest_dividing_tile(n, max_tile)
    tile = min(max_tile, max((n // (128 * num_cores)) * 128, 128))
    while tile >= 128:
        if n % tile == 0 and (n // tile) % num_cores == 0:
            return tile
        tile -= 128
    return _largest_dividing_tile(n, max_tile)


# --------------------------------------------------------------------------
# Forward passes
# --------------------------------------------------------------------------
def helmholtz_forward_lanes(xy, params, *, tile_n=None, max_tile=16384,
                            precision_mode="bf16_3x"):
    """Fused layout: xy is (2, N) [row 0 = x, row 1 = y]; returns (1, N).
    Preferred entry point inside a jit-ed training step (no relayout ops)."""
    assert xy.ndim == 2 and xy.shape[0] == 2
    n = xy.shape[1]
    n_pad = ((n + 127) // 128) * 128
    if n_pad != n:
        xy = jnp.pad(xy, ((0, 0), (0, n_pad - n)))

    if tile_n is None:
        tile_n = _choose_tile(n_pad, _num_tensorcores(), max_tile=max_tile)
    assert n_pad % tile_n == 0 and tile_n % 128 == 0
    grid = (n_pad // tile_n,)

    w1, b1, wh, bh, wo, bo = params

    xy_spec = pl.BlockSpec((2, tile_n), lambda i: (0, i))
    out_spec = pl.BlockSpec((1, tile_n), lambda i: (0, i))
    # broadcast (full-array) specs for the packed params
    w1_spec = pl.BlockSpec(w1.shape, lambda i: (0, 0))
    b1_spec = pl.BlockSpec(b1.shape, lambda i: (0, 0))
    wh_spec = pl.BlockSpec(wh.shape, lambda i: (0, 0, 0))
    bh_spec = pl.BlockSpec(bh.shape, lambda i: (0, 0, 0))
    wo_spec = pl.BlockSpec(wo.shape, lambda i: (0, 0))
    bo_spec = pl.BlockSpec(bo.shape, lambda i: (0, 0))

    param_bytes = sum(int(np.prod(p.shape)) * 4 for p in params)
    cost = pl.CostEstimate(
        flops=int(n_pad) * (2 * IN_FEATURES * NUM_HIDDEN
                            + NUM_MIDDLE_LAYERS * 2 * NUM_HIDDEN * NUM_HIDDEN
                            + 2 * NUM_HIDDEN + 10),
        transcendentals=int(n_pad) * (NUM_HIDDEN * (1 + NUM_MIDDLE_LAYERS) + 1),
        bytes_accessed=int(n_pad) * 12 + param_bytes,
    )

    kernel = functools.partial(_mlp_kernel, precision_mode=precision_mode)

    out = pl.pallas_call(
        kernel,
        out_shape=jax.ShapeDtypeStruct((1, n_pad), jnp.float32),
        grid_spec=pltpu.PrefetchScalarGridSpec(
            num_scalar_prefetch=0,
            grid=grid,
            in_specs=[xy_spec, w1_spec, b1_spec, wh_spec, bh_spec,
                      wo_spec, bo_spec],
            out_specs=out_spec,
        ),
        compiler_params=pltpu.CompilerParams(
            dimension_semantics=("parallel",),
            vmem_limit_bytes=_vmem_limit_bytes(),
        ),
        cost_estimate=cost,
    )(xy, w1, b1, wh, bh, wo, bo)

    if n_pad != n:
        out = out[:, :n]
    return out


def helmholtz_forward(x, y, params, *, tile_n=None, max_tile=16384,
                      precision_mode="bf16_3x"):
    """PyTorch-shaped wrapper: x, y are (N, 1); returns (N, 1)."""
    n = x.shape[0]
    assert x.shape == (n, 1) and y.shape == (n, 1)
    xy = jnp.concatenate([x, y], axis=1).T            # (2, N)
    out = helmholtz_forward_lanes(xy, params, tile_n=tile_n,
                                  max_tile=max_tile,
                                  precision_mode=precision_mode)
    return out.T                                      # (N, 1)


def reference_forward(x, y, params):
    # pure-JAX reference with full-precision dots for correctness checking
    w1, b1, wh, bh, wo, bo = params
    hp = jax.lax.Precision.HIGHEST
    u = jnp.concatenate([x, y], axis=1)               # (N, 2)
    u = jnp.sin(jnp.dot(u, w1.T, precision=hp) + b1[:, 0])
    for l in range(NUM_MIDDLE_LAYERS):
        u = jnp.sin(jnp.dot(u, wh[l].T, precision=hp) + bh[l, :, 0])
    u = jnp.dot(u, wo.T, precision=hp) + bo[:, 0]     # (N, 1)
    return x * (x - 1.0) * y * (y - 1.0) * u + y * jnp.sin(TWO_PI * x)


if __name__ == "__main__":
    key = jax.random.PRNGKey(0)
    k_params, k_x, k_y = jax.random.split(key, 3)

    params = init_params(k_params)

    N = 256  # batch of collocation points (small demo shape)
    x = jax.random.uniform(k_x, (N, 1), dtype=jnp.float32)
    y = jax.random.uniform(k_y, (N, 1), dtype=jnp.float32)

    out = jax.block_until_ready(helmholtz_forward(x, y, params))
    ref = reference_forward(x, y, params)
    np.testing.assert_allclose(np.asarray(out), np.asarray(ref),
                               rtol=3e-4, atol=5e-5)

    # ragged batch exercises the padding path (N not a multiple of 128)
    N2 = 200
    out2 = jax.block_until_ready(helmholtz_forward(x[:N2], y[:N2], params))
    np.testing.assert_allclose(np.asarray(out2), np.asarray(ref[:N2]),
                               rtol=3e-4, atol=5e-5)

    print("KERNEL_OK")
</pallas_src>

<mosaic_0001>
module attributes {stable_mosaic.version = 11 : i64} {
  func.func @_mlp_kernel(%arg0: i32, %arg1: memref<2x256xf32, #tpu.memory_space<vmem>>, %arg2: memref<50x2xf32, #tpu.memory_space<vmem>>, %arg3: memref<50x1xf32, #tpu.memory_space<vmem>>, %arg4: memref<5x50x50xf32, #tpu.memory_space<vmem>>, %arg5: memref<5x50x1xf32, #tpu.memory_space<vmem>>, %arg6: memref<1x50xf32, #tpu.memory_space<vmem>>, %arg7: memref<1x1xf32, #tpu.memory_space<vmem>>, %arg8: memref<1x256xf32, #tpu.memory_space<vmem>>) attributes {dimension_semantics = [#tpu.dimension_semantics<parallel>], iteration_bounds = array<i64: 1>, scalar_prefetch = 0 : i64, scratch_operands = 0 : i64, tpu.core_type = #tpu.core_type<tc>, window_params = [{transform_indices = @transform_0, window_bounds = array<i64: 2, 256>}, {pipeline_mode = #tpu.pipeline_mode<synchronous>, transform_indices = @transform_1, window_bounds = array<i64: 50, 2>}, {pipeline_mode = #tpu.pipeline_mode<synchronous>, transform_indices = @transform_2, window_bounds = array<i64: 50, 1>}, {pipeline_mode = #tpu.pipeline_mode<synchronous>, transform_indices = @transform_3, window_bounds = array<i64: 5, 50, 50>}, {pipeline_mode = #tpu.pipeline_mode<synchronous>, transform_indices = @transform_4, window_bounds = array<i64: 5, 50, 1>}, {pipeline_mode = #tpu.pipeline_mode<synchronous>, transform_indices = @transform_5, window_bounds = array<i64: 1, 50>}, {pipeline_mode = #tpu.pipeline_mode<synchronous>, transform_indices = @transform_6, window_bounds = array<i64: 1, 1>}, {transform_indices = @transform_7, window_bounds = array<i64: 1, 256>}]} {
    %c0 = arith.constant 0 : index
    %c0_0 = arith.constant 0 : index
    %0 = vector.load %arg1[%c0, %c0_0] : memref<2x256xf32, #tpu.memory_space<vmem>>, vector<2x256xf32>
    %1 = vector.extract_strided_slice %0 {offsets = [0, 0], sizes = [1, 256], strides = [1, 1]} : vector<2x256xf32> to vector<1x256xf32>
    %2 = vector.extract_strided_slice %0 {offsets = [1, 0], sizes = [1, 256], strides = [1, 1]} : vector<2x256xf32> to vector<1x256xf32>
    %c0_1 = arith.constant 0 : index
    %c0_2 = arith.constant 0 : index
    %3 = vector.load %arg2[%c0_1, %c0_2] : memref<50x2xf32, #tpu.memory_space<vmem>>, vector<50x2xf32>
    %c0_3 = arith.constant 0 : index
    %c0_4 = arith.constant 0 : index
    %4 = vector.load %arg3[%c0_3, %c0_4] : memref<50x1xf32, #tpu.memory_space<vmem>>, vector<50x1xf32>
    %5 = vector.extract_strided_slice %3 {offsets = [0, 0], sizes = [50, 1], strides = [1, 1]} : vector<50x2xf32> to vector<50x1xf32>
    %6 = vector.broadcast %5 : vector<50x1xf32> to vector<50x256xf32>
    %7 = vector.broadcast %1 : vector<1x256xf32> to vector<50x256xf32>
    %8 = arith.mulf %6, %7 : vector<50x256xf32>
    %9 = vector.extract_strided_slice %3 {offsets = [0, 1], sizes = [50, 1], strides = [1, 1]} : vector<50x2xf32> to vector<50x1xf32>
    %10 = vector.broadcast %9 : vector<50x1xf32> to vector<50x256xf32>
    %11 = vector.broadcast %2 : vector<1x256xf32> to vector<50x256xf32>
    %12 = arith.mulf %10, %11 : vector<50x256xf32>
    %13 = arith.addf %8, %12 : vector<50x256xf32>
    %14 = vector.broadcast %4 : vector<50x1xf32> to vector<50x256xf32>
    %15 = arith.addf %13, %14 : vector<50x256xf32>
    %16 = math.sin %15 : vector<50x256xf32>
    %c0_5 = arith.constant 0 : index
    %c0_6 = arith.constant 0 : index
    %c0_7 = arith.constant 0 : index
    %17 = vector.load %arg4[%c0_5, %c0_6, %c0_7] : memref<5x50x50xf32, #tpu.memory_space<vmem>>, vector<1x50x50xf32>
    %18 = vector.shape_cast %17 : vector<1x50x50xf32> to vector<50x50xf32>
    %c0_8 = arith.constant 0 : index
    %c0_9 = arith.constant 0 : index
    %c0_10 = arith.constant 0 : index
    %19 = vector.load %arg5[%c0_8, %c0_9, %c0_10] : memref<5x50x1xf32, #tpu.memory_space<vmem>>, vector<1x50x1xf32>
    %20 = vector.shape_cast %19 : vector<1x50x1xf32> to vector<50x1xf32>
    %21 = arith.truncf %18 : vector<50x50xf32> to vector<50x50xbf16>
    %22 = arith.extf %21 : vector<50x50xbf16> to vector<50x50xf32>
    %23 = arith.subf %18, %22 : vector<50x50xf32>
    %24 = arith.truncf %23 : vector<50x50xf32> to vector<50x50xbf16>
    %25 = arith.truncf %16 : vector<50x256xf32> to vector<50x256xbf16>
    %26 = arith.extf %25 : vector<50x256xbf16> to vector<50x256xf32>
    %27 = arith.subf %16, %26 : vector<50x256xf32>
    %28 = arith.truncf %27 : vector<50x256xf32> to vector<50x256xbf16>
    %cst = arith.constant dense<0.000000e+00> : vector<50x256xf32>
    %29 = tpu.matmul %21, %25, %cst {dimension_numbers = #tpu.dot_dimension_numbers<[1], [0], [0], [1], [0, 0, 1, 1], [], []>} : vector<50x50xbf16>, vector<50x256xbf16>, vector<50x256xf32> -> vector<50x256xf32>
    %cst_11 = arith.constant dense<0.000000e+00> : vector<50x256xf32>
    %30 = tpu.matmul %21, %28, %cst_11 {dimension_numbers = #tpu.dot_dimension_numbers<[1], [0], [0], [1], [0, 0, 1, 1], [], []>} : vector<50x50xbf16>, vector<50x256xbf16>, vector<50x256xf32> -> vector<50x256xf32>
    %31 = arith.addf %29, %30 : vector<50x256xf32>
    %cst_12 = arith.constant dense<0.000000e+00> : vector<50x256xf32>
    %32 = tpu.matmul %24, %25, %cst_12 {dimension_numbers = #tpu.dot_dimension_numbers<[1], [0], [0], [1], [0, 0, 1, 1], [], []>} : vector<50x50xbf16>, vector<50x256xbf16>, vector<50x256xf32> -> vector<50x256xf32>
    %33 = arith.addf %31, %32 : vector<50x256xf32>
    %34 = vector.broadcast %20 : vector<50x1xf32> to vector<50x256xf32>
    %35 = arith.addf %33, %34 : vector<50x256xf32>
    %36 = math.sin %35 : vector<50x256xf32>
    %c1 = arith.constant 1 : index
    %c0_13 = arith.constant 0 : index
    %c0_14 = arith.constant 0 : index
    %37 = vector.load %arg4[%c1, %c0_13, %c0_14] : memref<5x50x50xf32, #tpu.memory_space<vmem>>, vector<1x50x50xf32>
    %38 = vector.shape_cast %37 : vector<1x50x50xf32> to vector<50x50xf32>
    %c1_15 = arith.constant 1 : index
    %c0_16 = arith.constant 0 : index
    %c0_17 = arith.constant 0 : index
    %39 = vector.load %arg5[%c1_15, %c0_16, %c0_17] : memref<5x50x1xf32, #tpu.memory_space<vmem>>, vector<1x50x1xf32>
    %40 = vector.shape_cast %39 : vector<1x50x1xf32> to vector<50x1xf32>
    %41 = arith.truncf %38 : vector<50x50xf32> to vector<50x50xbf16>
    %42 = arith.extf %41 : vector<50x50xbf16> to vector<50x50xf32>
    %43 = arith.subf %38, %42 : vector<50x50xf32>
    %44 = arith.truncf %43 : vector<50x50xf32> to vector<50x50xbf16>
    %45 = arith.truncf %36 : vector<50x256xf32> to vector<50x256xbf16>
    %46 = arith.extf %45 : vector<50x256xbf16> to vector<50x256xf32>
    %47 = arith.subf %36, %46 : vector<50x256xf32>
    %48 = arith.truncf %47 : vector<50x256xf32> to vector<50x256xbf16>
    %cst_18 = arith.constant dense<0.000000e+00> : vector<50x256xf32>
    %49 = tpu.matmul %41, %45, %cst_18 {dimension_numbers = #tpu.dot_dimension_numbers<[1], [0], [0], [1], [0, 0, 1, 1], [], []>} : vector<50x50xbf16>, vector<50x256xbf16>, vector<50x256xf32> -> vector<50x256xf32>
    %cst_19 = arith.constant dense<0.000000e+00> : vector<50x256xf32>
    %50 = tpu.matmul %41, %48, %cst_19 {dimension_numbers = #tpu.dot_dimension_numbers<[1], [0], [0], [1], [0, 0, 1, 1], [], []>} : vector<50x50xbf16>, vector<50x256xbf16>, vector<50x256xf32> -> vector<50x256xf32>
    %51 = arith.addf %49, %50 : vector<50x256xf32>
    %cst_20 = arith.constant dense<0.000000e+00> : vector<50x256xf32>
    %52 = tpu.matmul %44, %45, %cst_20 {dimension_numbers = #tpu.dot_dimension_numbers<[1], [0], [0], [1], [0, 0, 1, 1], [], []>} : vector<50x50xbf16>, vector<50x256xbf16>, vector<50x256xf32> -> vector<50x256xf32>
    %53 = arith.addf %51, %52 : vector<50x256xf32>
    %54 = vector.broadcast %40 : vector<50x1xf32> to vector<50x256xf32>
    %55 = arith.addf %53, %54 : vector<50x256xf32>
    %56 = math.sin %55 : vector<50x256xf32>
    %c2 = arith.constant 2 : index
    %c0_21 = arith.constant 0 : index
    %c0_22 = arith.constant 0 : index
    %57 = vector.load %arg4[%c2, %c0_21, %c0_22] : memref<5x50x50xf32, #tpu.memory_space<vmem>>, vector<1x50x50xf32>
    %58 = vector.shape_cast %57 : vector<1x50x50xf32> to vector<50x50xf32>
    %c2_23 = arith.constant 2 : index
    %c0_24 = arith.constant 0 : index
    %c0_25 = arith.constant 0 : index
    %59 = vector.load %arg5[%c2_23, %c0_24, %c0_25] : memref<5x50x1xf32, #tpu.memory_space<vmem>>, vector<1x50x1xf32>
    %60 = vector.shape_cast %59 : vector<1x50x1xf32> to vector<50x1xf32>
    %61 = arith.truncf %58 : vector<50x50xf32> to vector<50x50xbf16>
    %62 = arith.extf %61 : vector<50x50xbf16> to vector<50x50xf32>
    %63 = arith.subf %58, %62 : vector<50x50xf32>
    %64 = arith.truncf %63 : vector<50x50xf32> to vector<50x50xbf16>
    %65 = arith.truncf %56 : vector<50x256xf32> to vector<50x256xbf16>
    %66 = arith.extf %65 : vector<50x256xbf16> to vector<50x256xf32>
    %67 = arith.subf %56, %66 : vector<50x256xf32>
    %68 = arith.truncf %67 : vector<50x256xf32> to vector<50x256xbf16>
    %cst_26 = arith.constant dense<0.000000e+00> : vector<50x256xf32>
    %69 = tpu.matmul %61, %65, %cst_26 {dimension_numbers = #tpu.dot_dimension_numbers<[1], [0], [0], [1], [0, 0, 1, 1], [], []>} : vector<50x50xbf16>, vector<50x256xbf16>, vector<50x256xf32> -> vector<50x256xf32>
    %cst_27 = arith.constant dense<0.000000e+00> : vector<50x256xf32>
    %70 = tpu.matmul %61, %68, %cst_27 {dimension_numbers = #tpu.dot_dimension_numbers<[1], [0], [0], [1], [0, 0, 1, 1], [], []>} : vector<50x50xbf16>, vector<50x256xbf16>, vector<50x256xf32> -> vector<50x256xf32>
    %71 = arith.addf %69, %70 : vector<50x256xf32>
    %cst_28 = arith.constant dense<0.000000e+00> : vector<50x256xf32>
    %72 = tpu.matmul %64, %65, %cst_28 {dimension_numbers = #tpu.dot_dimension_numbers<[1], [0], [0], [1], [0, 0, 1, 1], [], []>} : vector<50x50xbf16>, vector<50x256xbf16>, vector<50x256xf32> -> vector<50x256xf32>
    %73 = arith.addf %71, %72 : vector<50x256xf32>
    %74 = vector.broadcast %60 : vector<50x1xf32> to vector<50x256xf32>
    %75 = arith.addf %73, %74 : vector<50x256xf32>
    %76 = math.sin %75 : vector<50x256xf32>
    %c3 = arith.constant 3 : index
    %c0_29 = arith.constant 0 : index
    %c0_30 = arith.constant 0 : index
    %77 = vector.load %arg4[%c3, %c0_29, %c0_30] : memref<5x50x50xf32, #tpu.memory_space<vmem>>, vector<1x50x50xf32>
    %78 = vector.shape_cast %77 : vector<1x50x50xf32> to vector<50x50xf32>
    %c3_31 = arith.constant 3 : index
    %c0_32 = arith.constant 0 : index
    %c0_33 = arith.constant 0 : index
    %79 = vector.load %arg5[%c3_31, %c0_32, %c0_33] : memref<5x50x1xf32, #tpu.memory_space<vmem>>, vector<1x50x1xf32>
    %80 = vector.shape_cast %79 : vector<1x50x1xf32> to vector<50x1xf32>
    %81 = arith.truncf %78 : vector<50x50xf32> to vector<50x50xbf16>
    %82 = arith.extf %81 : vector<50x50xbf16> to vector<50x50xf32>
    %83 = arith.subf %78, %82 : vector<50x50xf32>
    %84 = arith.truncf %83 : vector<50x50xf32> to vector<50x50xbf16>
    %85 = arith.truncf %76 : vector<50x256xf32> to vector<50x256xbf16>
    %86 = arith.extf %85 : vector<50x256xbf16> to vector<50x256xf32>
    %87 = arith.subf %76, %86 : vector<50x256xf32>
    %88 = arith.truncf %87 : vector<50x256xf32> to vector<50x256xbf16>
    %cst_34 = arith.constant dense<0.000000e+00> : vector<50x256xf32>
    %89 = tpu.matmul %81, %85, %cst_34 {dimension_numbers = #tpu.dot_dimension_numbers<[1], [0], [0], [1], [0, 0, 1, 1], [], []>} : vector<50x50xbf16>, vector<50x256xbf16>, vector<50x256xf32> -> vector<50x256xf32>
    %cst_35 = arith.constant dense<0.000000e+00> : vector<50x256xf32>
    %90 = tpu.matmul %81, %88, %cst_35 {dimension_numbers = #tpu.dot_dimension_numbers<[1], [0], [0], [1], [0, 0, 1, 1], [], []>} : vector<50x50xbf16>, vector<50x256xbf16>, vector<50x256xf32> -> vector<50x256xf32>
    %91 = arith.addf %89, %90 : vector<50x256xf32>
    %cst_36 = arith.constant dense<0.000000e+00> : vector<50x256xf32>
    %92 = tpu.matmul %84, %85, %cst_36 {dimension_numbers = #tpu.dot_dimension_numbers<[1], [0], [0], [1], [0, 0, 1, 1], [], []>} : vector<50x50xbf16>, vector<50x256xbf16>, vector<50x256xf32> -> vector<50x256xf32>
    %93 = arith.addf %91, %92 : vector<50x256xf32>
    %94 = vector.broadcast %80 : vector<50x1xf32> to vector<50x256xf32>
    %95 = arith.addf %93, %94 : vector<50x256xf32>
    %96 = math.sin %95 : vector<50x256xf32>
    %c4 = arith.constant 4 : index
    %c0_37 = arith.constant 0 : index
    %c0_38 = arith.constant 0 : index
    %97 = vector.load %arg4[%c4, %c0_37, %c0_38] : memref<5x50x50xf32, #tpu.memory_space<vmem>>, vector<1x50x50xf32>
    %98 = vector.shape_cast %97 : vector<1x50x50xf32> to vector<50x50xf32>
    %c4_39 = arith.constant 4 : index
    %c0_40 = arith.constant 0 : index
    %c0_41 = arith.constant 0 : index
    %99 = vector.load %arg5[%c4_39, %c0_40, %c0_41] : memref<5x50x1xf32, #tpu.memory_space<vmem>>, vector<1x50x1xf32>
    %100 = vector.shape_cast %99 : vector<1x50x1xf32> to vector<50x1xf32>
    %101 = arith.truncf %98 : vector<50x50xf32> to vector<50x50xbf16>
    %102 = arith.extf %101 : vector<50x50xbf16> to vector<50x50xf32>
    %103 = arith.subf %98, %102 : vector<50x50xf32>
    %104 = arith.truncf %103 : vector<50x50xf32> to vector<50x50xbf16>
    %105 = arith.truncf %96 : vector<50x256xf32> to vector<50x256xbf16>
    %106 = arith.extf %105 : vector<50x256xbf16> to vector<50x256xf32>
    %107 = arith.subf %96, %106 : vector<50x256xf32>
    %108 = arith.truncf %107 : vector<50x256xf32> to vector<50x256xbf16>
    %cst_42 = arith.constant dense<0.000000e+00> : vector<50x256xf32>
    %109 = tpu.matmul %101, %105, %cst_42 {dimension_numbers = #tpu.dot_dimension_numbers<[1], [0], [0], [1], [0, 0, 1, 1], [], []>} : vector<50x50xbf16>, vector<50x256xbf16>, vector<50x256xf32> -> vector<50x256xf32>
    %cst_43 = arith.constant dense<0.000000e+00> : vector<50x256xf32>
    %110 = tpu.matmul %101, %108, %cst_43 {dimension_numbers = #tpu.dot_dimension_numbers<[1], [0], [0], [1], [0, 0, 1, 1], [], []>} : vector<50x50xbf16>, vector<50x256xbf16>, vector<50x256xf32> -> vector<50x256xf32>
    %111 = arith.addf %109, %110 : vector<50x256xf32>
    %cst_44 = arith.constant dense<0.000000e+00> : vector<50x256xf32>
    %112 = tpu.matmul %104, %105, %cst_44 {dimension_numbers = #tpu.dot_dimension_numbers<[1], [0], [0], [1], [0, 0, 1, 1], [], []>} : vector<50x50xbf16>, vector<50x256xbf16>, vector<50x256xf32> -> vector<50x256xf32>
    %113 = arith.addf %111, %112 : vector<50x256xf32>
    %114 = vector.broadcast %100 : vector<50x1xf32> to vector<50x256xf32>
    %115 = arith.addf %113, %114 : vector<50x256xf32>
    %116 = math.sin %115 : vector<50x256xf32>
    %c0_45 = arith.constant 0 : index
    %c0_46 = arith.constant 0 : index
    %117 = vector.load %arg6[%c0_45, %c0_46] : memref<1x50xf32, #tpu.memory_space<vmem>>, vector<1x50xf32>
    %c0_47 = arith.constant 0 : index
    %c0_48 = arith.constant 0 : index
    %118 = vector.load %arg7[%c0_47, %c0_48] : memref<1x1xf32, #tpu.memory_space<vmem>>, vector<1x1xf32>
    %cst_49 = arith.constant dense<0.000000e+00> : vector<1x256xf32>
    %119 = tpu.matmul %117, %116, %cst_49 {dimension_numbers = #tpu.dot_dimension_numbers<[1], [0], [0], [1], [0, 0, 1, 1], [], []>} : vector<1x50xf32>, vector<50x256xf32>, vector<1x256xf32> -> vector<1x256xf32>
    %120 = vector.broadcast %118 : vector<1x1xf32> to vector<1x256xf32>
    %121 = arith.addf %119, %120 : vector<1x256xf32>
    %cst_50 = arith.constant 1.000000e+00 : f32
    %122 = vector.broadcast %cst_50 : f32 to vector<1x256xf32>
    %123 = arith.subf %1, %122 : vector<1x256xf32>
    %124 = arith.mulf %1, %123 : vector<1x256xf32>
    %125 = arith.mulf %124, %2 : vector<1x256xf32>
    %cst_51 = arith.constant 1.000000e+00 : f32
    %126 = vector.broadcast %cst_51 : f32 to vector<1x256xf32>
    %127 = arith.subf %2, %126 : vector<1x256xf32>
    %128 = arith.mulf %125, %127 : vector<1x256xf32>
    %129 = arith.mulf %128, %121 : vector<1x256xf32>
    %cst_52 = arith.constant 6.28318548 : f32
    %130 = vector.broadcast %cst_52 : f32 to vector<1x256xf32>
    %131 = arith.mulf %130, %1 : vector<1x256xf32>
    %132 = math.sin %131 : vector<1x256xf32>
    %133 = arith.mulf %2, %132 : vector<1x256xf32>
    %134 = arith.addf %129, %133 : vector<1x256xf32>
    %c0_53 = arith.constant 0 : index
    %c0_54 = arith.constant 0 : index
    %135 = vector.load %arg8[%c0_53, %c0_54] : memref<1x256xf32, #tpu.memory_space<vmem>>, vector<1x256xf32>
    tpu.vector_store %arg8[%c0_53, %c0_54], %134 {strides = array<i32>} : memref<1x256xf32, #tpu.memory_space<vmem>>, vector<1x256xf32>,
    return
  }
  func.func @transform_0(%arg0: i32) -> (i32, i32) {
    %c0_i32 = arith.constant 0 : i32
    %c0_i32_0 = arith.constant 0 : i32
    return %c0_i32, %arg0 : i32, i32
  }
  func.func @transform_1(%arg0: i32) -> (i32, i32) {
    %c0_i32 = arith.constant 0 : i32
    %c0_i32_0 = arith.constant 0 : i32
    %c0_i32_1 = arith.constant 0 : i32
    return %c0_i32, %c0_i32_0 : i32, i32
  }
  func.func @transform_2(%arg0: i32) -> (i32, i32) {
    %c0_i32 = arith.constant 0 : i32
    %c0_i32_0 = arith.constant 0 : i32
    %c0_i32_1 = arith.constant 0 : i32
    return %c0_i32, %c0_i32_0 : i32, i32
  }
  func.func @transform_3(%arg0: i32) -> (i32, i32, i32) {
    %c0_i32 = arith.constant 0 : i32
    %c0_i32_0 = arith.constant 0 : i32
    %c0_i32_1 = arith.constant 0 : i32
    %c0_i32_2 = arith.constant 0 : i32
    return %c0_i32, %c0_i32_0, %c0_i32_1 : i32, i32, i32
  }
  func.func @transform_4(%arg0: i32) -> (i32, i32, i32) {
    %c0_i32 = arith.constant 0 : i32
    %c0_i32_0 = arith.constant 0 : i32
    %c0_i32_1 = arith.constant 0 : i32
    %c0_i32_2 = arith.constant 0 : i32
    return %c0_i32, %c0_i32_0, %c0_i32_1 : i32, i32, i32
  }
  func.func @transform_5(%arg0: i32) -> (i32, i32) {
    %c0_i32 = arith.constant 0 : i32
    %c0_i32_0 = arith.constant 0 : i32
    %c0_i32_1 = arith.constant 0 : i32
    return %c0_i32, %c0_i32_0 : i32, i32
  }
  func.func @transform_6(%arg0: i32) -> (i32, i32) {
    %c0_i32 = arith.constant 0 : i32
    %c0_i32_0 = arith.constant 0 : i32
    %c0_i32_1 = arith.constant 0 : i32
    return %c0_i32, %c0_i32_0 : i32, i32
  }
  func.func @transform_7(%arg0: i32) -> (i32, i32) {
    %c0_i32 = arith.constant 0 : i32
    %c0_i32_0 = arith.constant 0 : i32
    return %c0_i32, %arg0 : i32, i32
  }
}

</mosaic_0001>

<llo_original>
// kernel: tpu_custom_call.1
$region0: #{tpu_custom_call.1}
  #allocation0 [shape = 'u32[]', space=smem, size = 0x4, offset = 0x4, fixed_abs, tag = 'smem constant byte address 0x4 - core index']
  #allocation1 [shape = 'u32[144,128]{1,0:T(1,128)}', space=vmem, size = 0x12000, scoped, tag = 'internal scratch']
  #allocation2 [shape = 'f32[1,1]{1,0:T(1,128)S(1)}', space=vmem, size = 0x200, scoped, tag = 'scoped memory for tpu_custom_call.1']
  %s0 = inlined_call_operand.vmem [shape: f32[2,256], index: 0, kind: input, shape index: {}]
  %s1 = inlined_call_operand.vmem [shape: f32[50,2], index: 1, kind: input, shape index: {}]
  %s2 = inlined_call_operand.vmem [shape: f32[50,1], index: 2, kind: input, shape index: {}]
  %s3 = inlined_call_operand.vmem [shape: f32[5,50,50], index: 3, kind: input, shape index: {}]
  %s4 = inlined_call_operand.vmem [shape: f32[5,50,1], index: 4, kind: input, shape index: {}]
  %s5 = inlined_call_operand.vmem [shape: f32[1,50], index: 5, kind: input, shape index: {}]
  %s6 = inlined_call_operand.<no memory space> [shape: f32[1,1], index: 6, kind: input, shape index: {}]
  %s7 = inlined_call_operand.hbm [shape: f32[1,256], index: 7, kind: output, shape index: {}]
  %s8 = sld [smem:[#allocation0]]
  $region38: #{tpu_custom_call.1} parent=0
    _
  %s10 = ssub.s32 1, %s8
  %s11 = scalar_select 0, %s10, %s8
  %v12 = vstv %s6
  %13 = vst [vmem:[#allocation2] sm:$0x1] %v12
  $region1: #{tpu_custom_call.1} parent=0
    #allocation3 [shape = 'u8[1024]{0}', space=vmem, size = 0x400, scoped, tag = 'output window, operand 0, single buffered']
    #allocation4 [shape = 's32[1]{0}', space=sflag, size = 0x4, scoped, tag = 'scoped memory for tpu_custom_call.1']
    %14 = vsyncpa [#allocation4], 0
    // Predicated region
    $region2: #{tpu_custom_call.1} parent=1 // pred_check
      _
    $region3: #{tpu_custom_call.1} parent=1 // pred_check_branch
      %16 = sbr.rel (0) target = $region5
    $region4: #{tpu_custom_call.1} parent=1 // pred_region
      _
    $region5: #{tpu_custom_call.1} parent=1 // pred_fallthru
      _
    // Predicated region
    $region6: #{tpu_custom_call.1} parent=1 // pred_check
      _
    $region7: #{tpu_custom_call.1} parent=1 // pred_check_branch
      %18 = sbr.rel (0) target = $region9
    $region8: #{tpu_custom_call.1} parent=1 // pred_region
      _
    $region9: #{tpu_custom_call.1} parent=1 // pred_fallthru
      _
    // Predicated region
    $region10: #{tpu_custom_call.1} parent=1 // pred_check
      _
    $region11: #{tpu_custom_call.1} parent=1 // pred_check_branch
      %20 = sbr.rel (0) target = $region13
    $region12: #{tpu_custom_call.1} parent=1 // pred_region
      _
    $region13: #{tpu_custom_call.1} parent=1 // pred_fallthru
      _
    // Predicated region
    $region14: #{tpu_custom_call.1} parent=1 // pred_check
      _
    $region15: #{tpu_custom_call.1} parent=1 // pred_check_branch
      %22 = sbr.rel (0) target = $region17
    $region16: #{tpu_custom_call.1} parent=1 // pred_region
      _
    $region17: #{tpu_custom_call.1} parent=1 // pred_fallthru
      _
    // Predicated region
    $region18: #{tpu_custom_call.1} parent=1 // pred_check
      _
    $region19: #{tpu_custom_call.1} parent=1 // pred_check_branch
      %24 = sbr.rel (0) target = $region21
    $region20: #{tpu_custom_call.1} parent=1 // pred_region
      _
    $region21: #{tpu_custom_call.1} parent=1 // pred_fallthru
      _
    // Predicated region
    $region22: #{tpu_custom_call.1} parent=1 // pred_check
      _
    $region23: #{tpu_custom_call.1} parent=1 // pred_check_branch
      %26 = sbr.rel (0) target = $region25
    $region24: #{tpu_custom_call.1} parent=1 // pred_region
      _
    $region25: #{tpu_custom_call.1} parent=1 // pred_fallthru
      _
    // Predicated region
    $region26: #{tpu_custom_call.1} parent=1 // pred_check
      _
    $region27: #{tpu_custom_call.1} parent=1 // pred_check_branch
      %28 = sbr.rel (0) target = $region29
    $region28: #{tpu_custom_call.1} parent=1 // pred_region
      _
    $region29: #{tpu_custom_call.1} parent=1 // pred_fallthru
      _
    %v30 = vld [vmem:[%s0] sm:$0xf]
    %v31 = vld [vmem:[%s1] sm:$0xff]
    %v32 = vld [vmem:[%s1 + $0x8] sm:$0xff]
    %v33 = vld [vmem:[%s1 + $0x10] sm:$0xff]
    %v34 = vld [vmem:[%s1 + $0x18] sm:$0xff]
    %v35 = vld [vmem:[%s1 + $0x20] sm:$0xff]
    %v36 = vld [vmem:[%s1 + $0x28] sm:$0xff]
    %v37 = vld [vmem:[%s1 + $0x30] sm:$0x3]
    %v38 = vld [vmem:[%s2] sm:$0xff]
    %v39 = vld [vmem:[%s2 + $0x8] sm:$0xff]
    %v40 = vld [vmem:[%s2 + $0x10] sm:$0xff]
    %v41 = vld [vmem:[%s2 + $0x18] sm:$0xff]
    %v42 = vld [vmem:[%s2 + $0x20] sm:$0xff]
    %v43 = vld [vmem:[%s2 + $0x28] sm:$0xff]
    %v44 = vld [vmem:[%s2 + $0x30] sm:$0x3]
    %46 = vset.pattern.permute.xlu0 0
    %47 = vperm.xlu0 %46, %v31
    %v48 = vpop.permute.xlu0 %47
    %51 = vset.pattern.permute.xlu0 0
    %52 = vperm.xlu0 %51, %v32
    %v53 = vpop.permute.xlu0 %52
    %56 = vset.pattern.permute.xlu0 0
    %57 = vperm.xlu0 %56, %v33
    %v58 = vpop.permute.xlu0 %57
    %61 = vset.pattern.permute.xlu0 0
    %62 = vperm.xlu0 %61, %v34
    %v63 = vpop.permute.xlu0 %62
    %66 = vset.pattern.permute.xlu0 0
    %67 = vperm.xlu0 %66, %v35
    %v68 = vpop.permute.xlu0 %67
    %71 = vset.pattern.permute.xlu0 0
    %72 = vperm.xlu0 %71, %v36
    %v73 = vpop.permute.xlu0 %72
    %76 = vset.pattern.permute.xlu0 0
    %77 = vperm.xlu0 %76, %v37
    %v78 = vpop.permute.xlu0 %77
    %v81 = vlaneseq
    %v82 = vshrl.u32 %v81, 7
    %v83 = vsub.s32 0, %v82
    %v84 = vrot.slane %v30, %v83
    %v85 = vlaneseq
    %v86 = vshrl.u32 %v85, 7
    %v87 = vsub.s32 2, %v86
    %v88 = vrot.slane %v30, %v87
    %v91 = vlaneseq
    %v92 = vshrl.u32 %v91, 7
    %v93 = vsub.s32 0, %v92
    %v94 = vrot.slane %v84, %v93
    %v95 = vlaneseq
    %v96 = vshrl.u32 %v95, 7
    %v97 = vsub.s32 0, %v96
    %v98 = vrot.slane %v88, %v97
    %v99 = vmul.f32 %v48, %v94
    %v100 = vmul.f32 %v48, %v98
    %v101 = vmul.f32 %v53, %v94
    %v102 = vmul.f32 %v53, %v98
    %v103 = vmul.f32 %v58, %v94
    %v104 = vmul.f32 %v58, %v98
    %v105 = vmul.f32 %v63, %v94
    %v106 = vmul.f32 %v63, %v98
    %v107 = vmul.f32 %v68, %v94
    %v108 = vmul.f32 %v68, %v98
    %v109 = vmul.f32 %v73, %v94
    %v110 = vmul.f32 %v73, %v98
    %v111 = vmul.f32 %v78, %v94
    %v112 = vmul.f32 %v78, %v98
    %113 = vset.pattern.permute.xlu0 1
    %114 = vperm.xlu0 %113, %v31
    %v115 = vpop.permute.xlu0 %114
    %117 = vset.pattern.permute.xlu0 1
    %118 = vperm.xlu0 %117, %v32
    %v119 = vpop.permute.xlu0 %118
    %121 = vset.pattern.permute.xlu0 1
    %122 = vperm.xlu0 %121, %v33
    %v123 = vpop.permute.xlu0 %122
    %125 = vset.pattern.permute.xlu0 1
    %126 = vperm.xlu0 %125, %v34
    %v127 = vpop.permute.xlu0 %126
    %129 = vset.pattern.permute.xlu0 1
    %130 = vperm.xlu0 %129, %v35
    %v131 = vpop.permute.xlu0 %130
    %133 = vset.pattern.permute.xlu0 1
    %134 = vperm.xlu0 %133, %v36
    %v135 = vpop.permute.xlu0 %134
    %137 = vset.pattern.permute.xlu0 1
    %138 = vperm.xlu0 %137, %v37
    %v139 = vpop.permute.xlu0 %138
    %v141 = vlaneseq
    %v142 = vshrl.u32 %v141, 7
    %v143 = vsub.s32 1, %v142
    %v144 = vrot.slane %v30, %v143
    %v145 = vlaneseq
    %v146 = vshrl.u32 %v145, 7
    %v147 = vsub.s32 3, %v146
    %v148 = vrot.slane %v30, %v147
    %v151 = vlaneseq
    %v152 = vshrl.u32 %v151, 7
    %v153 = vsub.s32 1, %v152
    %v154 = vrot.slane %v144, %v153
    %v155 = vlaneseq
    %v156 = vshrl.u32 %v155, 7
    %v157 = vsub.s32 1, %v156
    %v158 = vrot.slane %v148, %v157
    %v159 = vmul.f32 %v115, %v154
    %v160 = vmul.f32 %v115, %v158
    %v161 = vmul.f32 %v119, %v154
    %v162 = vmul.f32 %v119, %v158
    %v163 = vmul.f32 %v123, %v154
    %v164 = vmul.f32 %v123, %v158
    %v165 = vmul.f32 %v127, %v154
    %v166 = vmul.f32 %v127, %v158
    %v167 = vmul.f32 %v131, %v154
    %v168 = vmul.f32 %v131, %v158
    %v169 = vmul.f32 %v135, %v154
    %v170 = vmul.f32 %v135, %v158
    %v171 = vmul.f32 %v139, %v154
    %v172 = vmul.f32 %v139, %v158
    %v173 = vadd.f32 %v99, %v159
    %v174 = vadd.f32 %v100, %v160
    %v175 = vadd.f32 %v101, %v161
    %v176 = vadd.f32 %v102, %v162
    %v177 = vadd.f32 %v103, %v163
    %v178 = vadd.f32 %v104, %v164
    %v179 = vadd.f32 %v105, %v165
    %v180 = vadd.f32 %v106, %v166
    %v181 = vadd.f32 %v107, %v167
    %v182 = vadd.f32 %v108, %v168
    %v183 = vadd.f32 %v109, %v169
    %v184 = vadd.f32 %v110, %v170
    %v185 = vadd.f32 %v111, %v171
    %v186 = vadd.f32 %v112, %v172
    %188 = vset.pattern.permute.xlu0 0
    %189 = vperm.xlu0 %188, %v38
    %v190 = vpop.permute.xlu0 %189
    %193 = vset.pattern.permute.xlu0 0
    %194 = vperm.xlu0 %193, %v39
    %v195 = vpop.permute.xlu0 %194
    %198 = vset.pattern.permute.xlu0 0
    %199 = vperm.xlu0 %198, %v40
    %v200 = vpop.permute.xlu0 %199
    %203 = vset.pattern.permute.xlu0 0
    %204 = vperm.xlu0 %203, %v41
    %v205 = vpop.permute.xlu0 %204
    %208 = vset.pattern.permute.xlu0 0
    %209 = vperm.xlu0 %208, %v42
    %v210 = vpop.permute.xlu0 %209
    %213 = vset.pattern.permute.xlu0 0
    %214 = vperm.xlu0 %213, %v43
    %v215 = vpop.permute.xlu0 %214
    %218 = vset.pattern.permute.xlu0 0
    %219 = vperm.xlu0 %218, %v44
    %v220 = vpop.permute.xlu0 %219
    %v222 = vadd.f32 %v173, %v190
    %v223 = vadd.f32 %v174, %v190
    %v224 = vadd.f32 %v175, %v195
    %v225 = vadd.f32 %v176, %v195
    %v226 = vadd.f32 %v177, %v200
    %v227 = vadd.f32 %v178, %v200
    %v228 = vadd.f32 %v179, %v205
    %v229 = vadd.f32 %v180, %v205
    %v230 = vadd.f32 %v181, %v210
    %v231 = vadd.f32 %v182, %v210
    %v232 = vadd.f32 %v183, %v215
    %v233 = vadd.f32 %v184, %v215
    %v234 = vadd.f32 %v185, %v220
    %v235 = vadd.f32 %v186, %v220
    %v236 = vand.u32 2147483647, %v222
    %vm237 = vcmp.le.f32.partialorder %v236, 0.7853982
    %vm238 = vcmp.lt.s32.totalorder %v222, 0
    %v239 = vand.u32 %v222, 2139095040
    %v240 = vshrl.u32 %v239, 23
    %v241 = vsub.s32 %v240, 127
    %v242 = vand.u32 2147483647, %v222
    %v243 = vand.u32 %v242, 8388607
    %v244 = vor.u32 %v243, 8388608
    %v245 = vsub.s32 0, %v244
    %v246 = vadd.s32 %v241, 1
    %vm247 = vcmp.gt.s32.totalorder %v246, 0
    %v248 = vsel %vm247, %v246, 0
    %v249 = vshrl.u32 %v248, 5
    %v250 = vand.u32 %v248, 31
    %v251 = vsub.s32 32, %v250
    %v252 = vshrl.u32 683565275, %v251
    %v253 = vshll.u32 683565275, %v250
    %v254 = vshrl.u32 2475754826, %v251
    %v255 = vor.u32 %v253, %v254
    %v256 = vshll.u32 2475754826, %v250
    %v257 = vshrl.u32 2131351028, %v251
    %v258 = vor.u32 %v256, %v257
    %v259 = vshll.u32 2131351028, %v250
    %v260 = vshrl.u32 2102212464, %v251
    %v261 = vor.u32 %v259, %v260
    %v262 = vshll.u32 2102212464, %v250
    %v263 = vshrl.u32 920167782, %v251
    %v264 = vor.u32 %v262, %v263
    %v265 = vshll.u32 920167782, %v250
    %v266 = vshrl.u32 1326507024, %v251
    %v267 = vor.u32 %v265, %v266
    %vm268 = vcmp.lt.s32.totalorder %v249, 1
    %vm269 = vcmp.lt.s32.totalorder %v249, 2
    %vm270 = vcmp.lt.s32.totalorder %v249, 3
    %vm271 = vcmp.lt.s32.totalorder %v249, 4
    %v272 = vsel %vm268, %v252, %v255
    %v273 = vsel %vm271, %v261, 2102212464
    %v274 = vsel %vm270, %v258, %v273
    %v275 = vsel %vm269, %v272, %v274
    %v276 = vsel %vm268, %v255, %v258
    %v277 = vsel %vm271, %v264, 920167782
    %v278 = vsel %vm270, %v261, %v277
    %v279 = vsel %vm269, %v276, %v278
    %v280 = vsel %vm268, %v258, %v261
    %v281 = vsel %vm271, %v267, 1326507024
    %v282 = vsel %vm270, %v264, %v281
    %v283 = vsel %vm269, %v280, %v282
    %v284 = vshll.u32 %v244, 8
    %v285 = vmul.u32.u64.compose %v284, %v283
    %v286 = vextract.low.u32 %v285
    %v287 = vextract.high.u32 %v285
    %v288 = vmul.u32.u64.compose %v284, %v279
    %v289 = vextract.low.u32 %v288
    %v290 = vextract.high.u32 %v288
    %v291 = vmul.u32 %v284, %v275
    %v292 = vadd.s32 %v287, %v289
    %vm293 = vc.u32 %v287, %v289
    %v294 = vadd.s32 %v290, 1
    %v295 = vsel %vm293, %v294, %v290
    %v296 = vadd.s32 %v291, %v295
    %v297 = vadd.s32 %v296, 536870912
    %v298 = vshrl.u32 %v297, 30
    %v299 = vshll.u32 %v298, 30
    %v300 = vsub.s32 %v296, %v299
    %vm301 = vcmp.lt.s32.totalorder %v300, 0
    %v302 = vsub.s32 0, %v300
    %v303 = vsel %vm301, %v302, %v300
    %v304 = vclz %v303
    %v305 = vsub.s32 %v304, 2
    %vm306 = vcmp.gt.s32.totalorder 0, %v305
    %v307 = vsel %vm306, 0, %v305
    %v308 = vsub.s32 32, %v307
    %v309 = vshll.u32 %v300, %v307
    %v310 = vshrl.u32 %v292, %v308
    %v311 = vor.u32 %v309, %v310
    %v312 = vsub.s32 4294967266, %v307
    %v313 = vadd.s32 %v312, 127
    %v314 = vshll.u32 %v313, 23
    %v315 = vor.u32 4788187, %v314
    %v316 = vand.u32 2147483647, %v315
    %v318 = vcvt.s32.f32 %v311
    %v319 = vmul.f32 %v318, %v316
    %v320 = vxor.u32 %v319, 2147483648
    %v321 = vsel %vm238, %v320, %v319
    %v322 = vsub.s32 4, %v298
    %v323 = vsel %vm238, %v322, %v298
    %v324 = vsel %vm237, %v222, %v321
    %v325 = vsel %vm237, 0, %v323
    %v326 = vcosq.f32.pop %v324
    %v327 = vsinq.f32.pop %v324
    %vm328 = vweird.f32 %v222
    %v329 = vadd.s32 %v325, 3
    %v330 = vand.u32 %v329, 3
    %vm331 = vcmp.lt.s32.totalorder %v330, 2
    %vm332 = vcmp.eq.s32.totalorder %v330, 0
    %v333 = vxor.u32 %v327, 2147483648
    %v334 = vsel %vm332, %v326, %v333
    %vm335 = vcmp.eq.s32.totalorder %v330, 2
    %v336 = vxor.u32 %v326, 2147483648
    %v337 = vsel %vm335, %v336, %v327
    %v338 = vsel %vm331, %v334, %v337
    %v339 = vsel %vm328, nan, %v338
    %v340 = vand.u32 2147483647, %v223
    %vm341 = vcmp.le.f32.partialorder %v340, 0.7853982
    %vm342 = vcmp.lt.s32.totalorder %v223, 0
    %v343 = vand.u32 %v223, 2139095040
    %v344 = vshrl.u32 %v343, 23
    %v345 = vsub.s32 %v344, 127
    %v346 = vand.u32 2147483647, %v223
    %v347 = vand.u32 %v346, 8388607
    %v348 = vor.u32 %v347, 8388608
    %v349 = vsub.s32 0, %v348
    %v350 = vadd.s32 %v345, 1
    %vm351 = vcmp.gt.s32.totalorder %v350, 0
    %v352 = vsel %vm351, %v350, 0
    %v353 = vshrl.u32 %v352, 5
    %v354 = vand.u32 %v352, 31
    %v355 = vsub.s32 32, %v354
    %v356 = vshrl.u32 683565275, %v355
    %v357 = vshll.u32 683565275, %v354
    %v358 = vshrl.u32 2475754826, %v355
    %v359 = vor.u32 %v357, %v358
    %v360 = vshll.u32 2475754826, %v354
    %v361 = vshrl.u32 2131351028, %v355
    %v362 = vor.u32 %v360, %v361
    %v363 = vshll.u32 2131351028, %v354
    %v364 = vshrl.u32 2102212464, %v355
    %v365 = vor.u32 %v363, %v364
    %v366 = vshll.u32 2102212464, %v354
    %v367 = vshrl.u32 920167782, %v355
    %v368 = vor.u32 %v366, %v367
    %v369 = vshll.u32 920167782, %v354
    %v370 = vshrl.u32 1326507024, %v355
    %v371 = vor.u32 %v369, %v370
    %vm372 = vcmp.lt.s32.totalorder %v353, 1
    %vm373 = vcmp.lt.s32.totalorder %v353, 2
    %vm374 = vcmp.lt.s32.totalorder %v353, 3
    %vm375 = vcmp.lt.s32.totalorder %v353, 4
    %v376 = vsel %vm372, %v356, %v359
    %v377 = vsel %vm375, %v365, 2102212464
    %v378 = vsel %vm374, %v362, %v377
    %v379 = vsel %vm373, %v376, %v378
    %v380 = vsel %vm372, %v359, %v362
    %v381 = vsel %vm375, %v368, 920167782
    %v382 = vsel %vm374, %v365, %v381
    %v383 = vsel %vm373, %v380, %v382
    %v384 = vsel %vm372, %v362, %v365
    %v385 = vsel %vm375, %v371, 1326507024
    %v386 = vsel %vm374, %v368, %v385
    %v387 = vsel %vm373, %v384, %v386
    %v388 = vshll.u32 %v348, 8
    %v389 = vmul.u32.u64.compose %v388, %v387
    %v390 = vextract.low.u32 %v389
    %v391 = vextract.high.u32 %v389
    %v392 = vmul.u32.u64.compose %v388, %v383
    %v393 = vextract.low.u32 %v392
    %v394 = vextract.high.u32 %v392
    %v395 = vmul.u32 %v388, %v379
    %v396 = vadd.s32 %v391, %v393
    %vm397 = vc.u32 %v391, %v393
    %v398 = vadd.s32 %v394, 1
    %v399 = vsel %vm397, %v398, %v394
    %v400 = vadd.s32 %v395, %v399
    %v401 = vadd.s32 %v400, 536870912
    %v402 = vshrl.u32 %v401, 30
    %v403 = vshll.u32 %v402, 30
    %v404 = vsub.s32 %v400, %v403
    %vm405 = vcmp.lt.s32.totalorder %v404, 0
    %v406 = vsub.s32 0, %v404
    %v407 = vsel %vm405, %v406, %v404
    %v408 = vclz %v407
    %v409 = vsub.s32 %v408, 2
    %vm410 = vcmp.gt.s32.totalorder 0, %v409
    %v411 = vsel %vm410, 0, %v409
    %v412 = vsub.s32 32, %v411
    %v413 = vshll.u32 %v404, %v411
    %v414 = vshrl.u32 %v396, %v412
    %v415 = vor.u32 %v413, %v414
    %v416 = vsub.s32 4294967266, %v411
    %v417 = vadd.s32 %v416, 127
    %v418 = vshll.u32 %v417, 23
    %v419 = vor.u32 4788187, %v418
    %v420 = vand.u32 2147483647, %v419
    %v422 = vcvt.s32.f32 %v415
    %v423 = vmul.f32 %v422, %v420
    %v424 = vxor.u32 %v423, 2147483648
    %v425 = vsel %vm342, %v424, %v423
    %v426 = vsub.s32 4, %v402
    %v427 = vsel %vm342, %v426, %v402
    %v428 = vsel %vm341, %v223, %v425
    %v429 = vsel %vm341, 0, %v427
    %v430 = vcosq.f32.pop %v428
    %v431 = vsinq.f32.pop %v428
    %vm432 = vweird.f32 %v223
    %v433 = vadd.s32 %v429, 3
    %v434 = vand.u32 %v433, 3
    %vm435 = vcmp.lt.s32.totalorder %v434, 2
    %vm436 = vcmp.eq.s32.totalorder %v434, 0
    %v437 = vxor.u32 %v431, 2147483648
    %v438 = vsel %vm436, %v430, %v437
    %vm439 = vcmp.eq.s32.totalorder %v434, 2
    %v440 = vxor.u32 %v430, 2147483648
    %v441 = vsel %vm439, %v440, %v431
    %v442 = vsel %vm435, %v438, %v441
    %v443 = vsel %vm432, nan, %v442
    %v444 = vand.u32 2147483647, %v224
    %vm445 = vcmp.le.f32.partialorder %v444, 0.7853982
    %vm446 = vcmp.lt.s32.totalorder %v224, 0
    %v447 = vand.u32 %v224, 2139095040
    %v448 = vshrl.u32 %v447, 23
    %v449 = vsub.s32 %v448, 127
    %v450 = vand.u32 2147483647, %v224
    %v451 = vand.u32 %v450, 8388607
    %v452 = vor.u32 %v451, 8388608
    %v453 = vsub.s32 0, %v452
    %v454 = vadd.s32 %v449, 1
    %vm455 = vcmp.gt.s32.totalorder %v454, 0
    %v456 = vsel %vm455, %v454, 0
    %v457 = vshrl.u32 %v456, 5
    %v458 = vand.u32 %v456, 31
    %v459 = vsub.s32 32, %v458
    %v460 = vshrl.u32 683565275, %v459
    %v461 = vshll.u32 683565275, %v458
    %v462 = vshrl.u32 2475754826, %v459
    %v463 = vor.u32 %v461, %v462
    %v464 = vshll.u32 2475754826, %v458
    %v465 = vshrl.u32 2131351028, %v459
    %v466 = vor.u32 %v464, %v465
    %v467 = vshll.u32 2131351028, %v458
    %v468 = vshrl.u32 2102212464, %v459
    %v469 = vor.u32 %v467, %v468
    %v470 = vshll.u32 2102212464, %v458
    %v471 = vshrl.u32 920167782, %v459
    %v472 = vor.u32 %v470, %v471
    %v473 = vshll.u32 920167782, %v458
    %v474 = vshrl.u32 1326507024, %v459
    %v475 = vor.u32 %v473, %v474
    %vm476 = vcmp.lt.s32.totalorder %v457, 1
    %vm477 = vcmp.lt.s32.totalorder %v457, 2
    %vm478 = vcmp.lt.s32.totalorder %v457, 3
    %vm479 = vcmp.lt.s32.totalorder %v457, 4
    %v480 = vsel %vm476, %v460, %v463
    %v481 = vsel %vm479, %v469, 2102212464
    %v482 = vsel %vm478, %v466, %v481
    %v483 = vsel %vm477, %v480, %v482
    %v484 = vsel %vm476, %v463, %v466
    %v485 = vsel %vm479, %v472, 920167782
    %v486 = vsel %vm478, %v469, %v485
    %v487 = vsel %vm477, %v484, %v486
    %v488 = vsel %vm476, %v466, %v469
    %v489 = vsel %vm479, %v475, 1326507024
    %v490 = vsel %vm478, %v472, %v489
    %v491 = vsel %vm477, %v488, %v490
    %v492 = vshll.u32 %v452, 8
    %v493 = vmul.u32.u64.compose %v492, %v491
    %v494 = vextract.low.u32 %v493
    %v495 = vextract.high.u32 %v493
    %v496 = vmul.u32.u64.compose %v492, %v487
    %v497 = vextract.low.u32 %v496
    %v498 = vextract.high.u32 %v496
    %v499 = vmul.u32 %v492, %v483
    %v500 = vadd.s32 %v495, %v497
    %vm501 = vc.u32 %v495, %v497
    %v502 = vadd.s32 %v498, 1
    %v503 = vsel %vm501, %v502, %v498
    %v504 = vadd.s32 %v499, %v503
    %v505 = vadd.s32 %v504, 536870912
    %v506 = vshrl.u32 %v505, 30
    %v507 = vshll.u32 %v506, 30
    %v508 = vsub.s32 %v504, %v507
    %vm509 = vcmp.lt.s32.totalorder %v508, 0
    %v510 = vsub.s32 0, %v508
    %v511 = vsel %vm509, %v510, %v508
    %v512 = vclz %v511
    %v513 = vsub.s32 %v512, 2
    %vm514 = vcmp.gt.s32.totalorder 0, %v513
    %v515 = vsel %vm514, 0, %v513
    %v516 = vsub.s32 32, %v515
    %v517 = vshll.u32 %v508, %v515
    %v518 = vshrl.u32 %v500, %v516
    %v519 = vor.u32 %v517, %v518
    %v520 = vsub.s32 4294967266, %v515
    %v521 = vadd.s32 %v520, 127
    %v522 = vshll.u32 %v521, 23
    %v523 = vor.u32 4788187, %v522
    %v524 = vand.u32 2147483647, %v523
    %v526 = vcvt.s32.f32 %v519
    %v527 = vmul.f32 %v526, %v524
    %v528 = vxor.u32 %v527, 2147483648
    %v529 = vsel %vm446, %v528, %v527
    %v530 = vsub.s32 4, %v506
    %v531 = vsel %vm446, %v530, %v506
    %v532 = vsel %vm445, %v224, %v529
    %v533 = vsel %vm445, 0, %v531
    %v534 = vcosq.f32.pop %v532
    %v535 = vsinq.f32.pop %v532
    %vm536 = vweird.f32 %v224
    %v537 = vadd.s32 %v533, 3
    %v538 = vand.u32 %v537, 3
    %vm539 = vcmp.lt.s32.totalorder %v538, 2
    %vm540 = vcmp.eq.s32.totalorder %v538, 0
    %v541 = vxor.u32 %v535, 2147483648
    %v542 = vsel %vm540, %v534, %v541
    %vm543 = vcmp.eq.s32.totalorder %v538, 2
    %v544 = vxor.u32 %v534, 2147483648
    %v545 = vsel %vm543, %v544, %v535
    %v546 = vsel %vm539, %v542, %v545
    %v547 = vsel %vm536, nan, %v546
    %v548 = vand.u32 2147483647, %v225
    %vm549 = vcmp.le.f32.partialorder %v548, 0.7853982
    %vm550 = vcmp.lt.s32.totalorder %v225, 0
    %v551 = vand.u32 %v225, 2139095040
    %v552 = vshrl.u32 %v551, 23
    %v553 = vsub.s32 %v552, 127
    %v554 = vand.u32 2147483647, %v225
    %v555 = vand.u32 %v554, 8388607
    %v556 = vor.u32 %v555, 8388608
    %v557 = vsub.s32 0, %v556
    %v558 = vadd.s32 %v553, 1
    %vm559 = vcmp.gt.s32.totalorder %v558, 0
    %v560 = vsel %vm559, %v558, 0
    %v561 = vshrl.u32 %v560, 5
    %v562 = vand.u32 %v560, 31
    %v563 = vsub.s32 32, %v562
    %v564 = vshrl.u32 683565275, %v563
    %v565 = vshll.u32 683565275, %v562
    %v566 = vshrl.u32 2475754826, %v563
    %v567 = vor.u32 %v565, %v566
    %v568 = vshll.u32 2475754826, %v562
    %v569 = vshrl.u32 2131351028, %v563
    %v570 = vor.u32 %v568, %v569
    %v571 = vshll.u32 2131351028, %v562
    %v572 = vshrl.u32 2102212464, %v563
    %v573 = vor.u32 %v571, %v572
    %v574 = vshll.u32 2102212464, %v562
    %v575 = vshrl.u32 920167782, %v563
    %v576 = vor.u32 %v574, %v575
    %v577 = vshll.u32 920167782, %v562
    %v578 = vshrl.u32 1326507024, %v563
    %v579 = vor.u32 %v577, %v578
    %vm580 = vcmp.lt.s32.totalorder %v561, 1
    %vm581 = vcmp.lt.s32.totalorder %v561, 2
    %vm582 = vcmp.lt.s32.totalorder %v561, 3
    %vm583 = vcmp.lt.s32.totalorder %v561, 4
    %v584 = vsel %vm580, %v564, %v567
    %v585 = vsel %vm583, %v573, 2102212464
    %v586 = vsel %vm582, %v570, %v585
    %v587 = vsel %vm581, %v584, %v586
    %v588 = vsel %vm580, %v567, %v570
    %v589 = vsel %vm583, %v576, 920167782
    %v590 = vsel %vm582, %v573, %v589
    %v591 = vsel %vm581, %v588, %v590
    %v592 = vsel %vm580, %v570, %v573
    %v593 = vsel %vm583, %v579, 1326507024
    %v594 = vsel %vm582, %v576, %v593
    %v595 = vsel %vm581, %v592, %v594
    %v596 = vshll.u32 %v556, 8
    %v597 = vmul.u32.u64.compose %v596, %v595
    %v598 = vextract.low.u32 %v597
    %v599 = vextract.high.u32 %v597
    %v600 = vmul.u32.u64.compose %v596, %v591
    %v601 = vextract.low.u32 %v600
    %v602 = vextract.high.u32 %v600
    %v603 = vmul.u32 %v596, %v587
    %v604 = vadd.s32 %v599, %v601
    %vm605 = vc.u32 %v599, %v601
    %v606 = vadd.s32 %v602, 1
    %v607 = vsel %vm605, %v606, %v602
    %v608 = vadd.s32 %v603, %v607
    %v609 = vadd.s32 %v608, 536870912
    %v610 = vshrl.u32 %v609, 30
    %v611 = vshll.u32 %v610, 30
    %v612 = vsub.s32 %v608, %v611
    %vm613 = vcmp.lt.s32.totalorder %v612, 0
    %v614 = vsub.s32 0, %v612
    %v615 = vsel %vm613, %v614, %v612
    %v616 = vclz %v615
    %v617 = vsub.s32 %v616, 2
    %vm618 = vcmp.gt.s32.totalorder 0, %v617
    %v619 = vsel %vm618, 0, %v617
    %v620 = vsub.s32 32, %v619
    %v621 = vshll.u32 %v612, %v619
    %v622 = vshrl.u32 %v604, %v620
    %v623 = vor.u32 %v621, %v622
    %v624 = vsub.s32 4294967266, %v619
    %v625 = vadd.s32 %v624, 127
    %v626 = vshll.u32 %v625, 23
    %v627 = vor.u32 4788187, %v626
    %v628 = vand.u32 2147483647, %v627
    %v630 = vcvt.s32.f32 %v623
    %v631 = vmul.f32 %v630, %v628
    %v632 = vxor.u32 %v631, 2147483648
    %v633 = vsel %vm550, %v632, %v631
    %v634 = vsub.s32 4, %v610
    %v635 = vsel %vm550, %v634, %v610
    %v636 = vsel %vm549, %v225, %v633
    %v637 = vsel %vm549, 0, %v635
    %v638 = vcosq.f32.pop %v636
    %v639 = vsinq.f32.pop %v636
    %vm640 = vweird.f32 %v225
    %v641 = vadd.s32 %v637, 3
    %v642 = vand.u32 %v641, 3
    %vm643 = vcmp.lt.s32.totalorder %v642, 2
    %vm644 = vcmp.eq.s32.totalorder %v642, 0
    %v645 = vxor.u32 %v639, 2147483648
    %v646 = vsel %vm644, %v638, %v645
    %vm647 = vcmp.eq.s32.totalorder %v642, 2
    %v648 = vxor.u32 %v638, 2147483648
    %v649 = vsel %vm647, %v648, %v639
    %v650 = vsel %vm643, %v646, %v649
    %v651 = vsel %vm640, nan, %v650
    %v652 = vand.u32 2147483647, %v226
    %vm653 = vcmp.le.f32.partialorder %v652, 0.7853982
    %vm654 = vcmp.lt.s32.totalorder %v226, 0
    %v655 = vand.u32 %v226, 2139095040
    %v656 = vshrl.u32 %v655, 23
    %v657 = vsub.s32 %v656, 127
    %v658 = vand.u32 2147483647, %v226
    %v659 = vand.u32 %v658, 8388607
    %v660 = vor.u32 %v659, 8388608
    %v661 = vsub.s32 0, %v660
    %v662 = vadd.s32 %v657, 1
    %vm663 = vcmp.gt.s32.totalorder %v662, 0
    %v664 = vsel %vm663, %v662, 0
    %v665 = vshrl.u32 %v664, 5
    %v666 = vand.u32 %v664, 31
    %v667 = vsub.s32 32, %v666
    %v668 = vshrl.u32 683565275, %v667
    %v669 = vshll.u32 683565275, %v666
    %v670 = vshrl.u32 2475754826, %v667
    %v671 = vor.u32 %v669, %v670
    %v672 = vshll.u32 2475754826, %v666
    %v673 = vshrl.u32 2131351028, %v667
    %v674 = vor.u32 %v672, %v673
    %v675 = vshll.u32 2131351028, %v666
    %v676 = vshrl.u32 2102212464, %v667
    %v677 = vor.u32 %v675, %v676
    %v678 = vshll.u32 2102212464, %v666
    %v679 = vshrl.u32 920167782, %v667
    %v680 = vor.u32 %v678, %v679
    %v681 = vshll.u32 920167782, %v666
    %v682 = vshrl.u32 1326507024, %v667
    %v683 = vor.u32 %v681, %v682
    %vm684 = vcmp.lt.s32.totalorder %v665, 1
    %vm685 = vcmp.lt.s32.totalorder %v665, 2
    %vm686 = vcmp.lt.s32.totalorder %v665, 3
    %vm687 = vcmp.lt.s32.totalorder %v665, 4
    %v688 = vsel %vm684, %v668, %v671
    %v689 = vsel %vm687, %v677, 2102212464
    %v690 = vsel %vm686, %v674, %v689
    %v691 = vsel %vm685, %v688, %v690
    %v692 = vsel %vm684, %v671, %v674
    %v693 = vsel %vm687, %v680, 920167782
    %v694 = vsel %vm686, %v677, %v693
    %v695 = vsel %vm685, %v692, %v694
    %v696 = vsel %vm684, %v674, %v677
    %v697 = vsel %vm687, %v683, 1326507024
    %v698 = vsel %vm686, %v680, %v697
    %v699 = vsel %vm685, %v696, %v698
    %v700 = vshll.u32 %v660, 8
    %v701 = vmul.u32.u64.compose %v700, %v699
    %v702 = vextract.low.u32 %v701
    %v703 = vextract.high.u32 %v701
    %v704 = vmul.u32.u64.compose %v700, %v695
    %v705 = vextract.low.u32 %v704
    %v706 = vextract.high.u32 %v704
    %v707 = vmul.u32 %v700, %v691
    %v708 = vadd.s32 %v703, %v705
    %vm709 = vc.u32 %v703, %v705
    %v710 = vadd.s32 %v706, 1
    %v711 = vsel %vm709, %v710, %v706
    %v712 = vadd.s32 %v707, %v711
    %v713 = vadd.s32 %v712, 536870912
    %v714 = vshrl.u32 %v713, 30
    %v715 = vshll.u32 %v714, 30
    %v716 = vsub.s32 %v712, %v715
    %vm717 = vcmp.lt.s32.totalorder %v716, 0
    %v718 = vsub.s32 0, %v716
    %v719 = vsel %vm717, %v718, %v716
    %v720 = vclz %v719
    %v721 = vsub.s32 %v720, 2
    %vm722 = vcmp.gt.s32.totalorder 0, %v721
    %v723 = vsel %vm722, 0, %v721
    %v724 = vsub.s32 32, %v723
    %v725 = vshll.u32 %v716, %v723
    %v726 = vshrl.u32 %v708, %v724
    %v727 = vor.u32 %v725, %v726
    %v728 = vsub.s32 4294967266, %v723
    %v729 = vadd.s32 %v728, 127
    %v730 = vshll.u32 %v729, 23
    %v731 = vor.u32 4788187, %v730
    %v732 = vand.u32 2147483647, %v731
    %v734 = vcvt.s32.f32 %v727
    %v735 = vmul.f32 %v734, %v732
    %v736 = vxor.u32 %v735, 2147483648
    %v737 = vsel %vm654, %v736, %v735
    %v738 = vsub.s32 4, %v714
    %v739 = vsel %vm654, %v738, %v714
    %v740 = vsel %vm653, %v226, %v737
    %v741 = vsel %vm653, 0, %v739
    %v742 = vcosq.f32.pop %v740
    %v743 = vsinq.f32.pop %v740
    %vm744 = vweird.f32 %v226
    %v745 = vadd.s32 %v741, 3
    %v746 = vand.u32 %v745, 3
    %vm747 = vcmp.lt.s32.totalorder %v746, 2
    %vm748 = vcmp.eq.s32.totalorder %v746, 0
    %v749 = vxor.u32 %v743, 2147483648
    %v750 = vsel %vm748, %v742, %v749
    %vm751 = vcmp.eq.s32.totalorder %v746, 2
    %v752 = vxor.u32 %v742, 2147483648
    %v753 = vsel %vm751, %v752, %v743
    %v754 = vsel %vm747, %v750, %v753
    %v755 = vsel %vm744, nan, %v754
    %v756 = vand.u32 2147483647, %v227
    %vm757 = vcmp.le.f32.partialorder %v756, 0.7853982
    %vm758 = vcmp.lt.s32.totalorder %v227, 0
    %v759 = vand.u32 %v227, 2139095040
    %v760 = vshrl.u32 %v759, 23
    %v761 = vsub.s32 %v760, 127
    %v762 = vand.u32 2147483647, %v227
    %v763 = vand.u32 %v762, 8388607
    %v764 = vor.u32 %v763, 8388608
    %v765 = vsub.s32 0, %v764
    %v766 = vadd.s32 %v761, 1
    %vm767 = vcmp.gt.s32.totalorder %v766, 0
    %v768 = vsel %vm767, %v766, 0
    %v769 = vshrl.u32 %v768, 5
    %v770 = vand.u32 %v768, 31
    %v771 = vsub.s32 32, %v770
    %v772 = vshrl.u32 683565275, %v771
    %v773 = vshll.u32 683565275, %v770
    %v774 = vshrl.u32 2475754826, %v771
    %v775 = vor.u32 %v773, %v774
    %v776 = vshll.u32 2475754826, %v770
    %v777 = vshrl.u32 2131351028, %v771
    %v778 = vor.u32 %v776, %v777
    %v779 = vshll.u32 2131351028, %v770
    %v780 = vshrl.u32 2102212464, %v771
    %v781 = vor.u32 %v779, %v780
    %v782 = vshll.u32 2102212464, %v770
    %v783 = vshrl.u32 920167782, %v771
    %v784 = vor.u32 %v782, %v783
    %v785 = vshll.u32 920167782, %v770
    %v786 = vshrl.u32 1326507024, %v771
    %v787 = vor.u32 %v785, %v786
    %vm788 = vcmp.lt.s32.totalorder %v769, 1
    %vm789 = vcmp.lt.s32.totalorder %v769, 2
    %vm790 = vcmp.lt.s32.totalorder %v769, 3
    %vm791 = vcmp.lt.s32.totalorder %v769, 4
    %v792 = vsel %vm788, %v772, %v775
    %v793 = vsel %vm791, %v781, 2102212464
    %v794 = vsel %vm790, %v778, %v793
    %v795 = vsel %vm789, %v792, %v794
    %v796 = vsel %vm788, %v775, %v778
    %v797 = vsel %vm791, %v784, 920167782
    %v798 = vsel %vm790, %v781, %v797
    %v799 = vsel %vm789, %v796, %v798
    %v800 = vsel %vm788, %v778, %v781
    %v801 = vsel %vm791, %v787, 1326507024
    %v802 = vsel %vm790, %v784, %v801
    %v803 = vsel %vm789, %v800, %v802
    %v804 = vshll.u32 %v764, 8
    %v805 = vmul.u32.u64.compose %v804, %v803
    %v806 = vextract.low.u32 %v805
    %v807 = vextract.high.u32 %v805
    %v808 = vmul.u32.u64.compose %v804, %v799
    %v809 = vextract.low.u32 %v808
    %v810 = vextract.high.u32 %v808
    %v811 = vmul.u32 %v804, %v795
    %v812 = vadd.s32 %v807, %v809
    %vm813 = vc.u32 %v807, %v809
    %v814 = vadd.s32 %v810, 1
    %v815 = vsel %vm813, %v814, %v810
    %v816 = vadd.s32 %v811, %v815
    %v817 = vadd.s32 %v816, 536870912
    %v818 = vshrl.u32 %v817, 30
    %v819 = vshll.u32 %v818, 30
    %v820 = vsub.s32 %v816, %v819
    %vm821 = vcmp.lt.s32.totalorder %v820, 0
    %v822 = vsub.s32 0, %v820
    %v823 = vsel %vm821, %v822, %v820
    %v824 = vclz %v823
    %v825 = vsub.s32 %v824, 2
    %vm826 = vcmp.gt.s32.totalorder 0, %v825
    %v827 = vsel %vm826, 0, %v825
    %v828 = vsub.s32 32, %v827
    %v829 = vshll.u32 %v820, %v827
    %v830 = vshrl.u32 %v812, %v828
    %v831 = vor.u32 %v829, %v830
    %v832 = vsub.s32 4294967266, %v827
    %v833 = vadd.s32 %v832, 127
    %v834 = vshll.u32 %v833, 23
    %v835 = vor.u32 4788187, %v834
    %v836 = vand.u32 2147483647, %v835
    %v838 = vcvt.s32.f32 %v831
    %v839 = vmul.f32 %v838, %v836
    %v840 = vxor.u32 %v839, 2147483648
    %v841 = vsel %vm758, %v840, %v839
    %v842 = vsub.s32 4, %v818
    %v843 = vsel %vm758, %v842, %v818
    %v844 = vsel %vm757, %v227, %v841
    %v845 = vsel %vm757, 0, %v843
    %v846 = vcosq.f32.pop %v844
    %v847 = vsinq.f32.pop %v844
    %vm848 = vweird.f32 %v227
    %v849 = vadd.s32 %v845, 3
    %v850 = vand.u32 %v849, 3
    %vm851 = vcmp.lt.s32.totalorder %v850, 2
    %vm852 = vcmp.eq.s32.totalorder %v850, 0
    %v853 = vxor.u32 %v847, 2147483648
    %v854 = vsel %vm852, %v846, %v853
    %vm855 = vcmp.eq.s32.totalorder %v850, 2
    %v856 = vxor.u32 %v846, 2147483648
    %v857 = vsel %vm855, %v856, %v847
    %v858 = vsel %vm851, %v854, %v857
    %v859 = vsel %vm848, nan, %v858
    %v860 = vand.u32 2147483647, %v228
    %vm861 = vcmp.le.f32.partialorder %v860, 0.7853982
    %vm862 = vcmp.lt.s32.totalorder %v228, 0
    %v863 = vand.u32 %v228, 2139095040
    %v864 = vshrl.u32 %v863, 23
    %v865 = vsub.s32 %v864, 127
    %v866 = vand.u32 2147483647, %v228
    %v867 = vand.u32 %v866, 8388607
    %v868 = vor.u32 %v867, 8388608
    %v869 = vsub.s32 0, %v868
    %v870 = vadd.s32 %v865, 1
    %vm871 = vcmp.gt.s32.totalorder %v870, 0
    %v872 = vsel %vm871, %v870, 0
    %v873 = vshrl.u32 %v872, 5
    %v874 = vand.u32 %v872, 31
    %v875 = vsub.s32 32, %v874
    %v876 = vshrl.u32 683565275, %v875
    %v877 = vshll.u32 683565275, %v874
    %v878 = vshrl.u32 2475754826, %v875
    %v879 = vor.u32 %v877, %v878
    %v880 = vshll.u32 2475754826, %v874
    %v881 = vshrl.u32 2131351028, %v875
    %v882 = vor.u32 %v880, %v881
    %v883 = vshll.u32 2131351028, %v874
    %v884 = vshrl.u32 2102212464, %v875
    %v885 = vor.u32 %v883, %v884
    %v886 = vshll.u32 2102212464, %v874
    %v887 = vshrl.u32 920167782, %v875
    %v888 = vor.u32 %v886, %v887
    %v889 = vshll.u32 920167782, %v874
    %v890 = vshrl.u32 1326507024, %v875
    %v891 = vor.u32 %v889, %v890
    %vm892 = vcmp.lt.s32.totalorder %v873, 1
    %vm893 = vcmp.lt.s32.totalorder %v873, 2
    %vm894 = vcmp.lt.s32.totalorder %v873, 3
    %vm895 = vcmp.lt.s32.totalorder %v873, 4
    %v896 = vsel %vm892, %v876, %v879
    %v897 = vsel %vm895, %v885, 2102212464
    %v898 = vsel %vm894, %v882, %v897
    %v899 = vsel %vm893, %v896, %v898
    %v900 = vsel %vm892, %v879, %v882
    %v901 = vsel %vm895, %v888, 920167782
    %v902 = vsel %vm894, %v885, %v901
    %v903 = vsel %vm893, %v900, %v902
    %v904 = vsel %vm892, %v882, %v885
    %v905 = vsel %vm895, %v891, 1326507024
    %v906 = vsel %vm894, %v888, %v905
    %v907 = vsel %vm893, %v904, %v906
    %v908 = vshll.u32 %v868, 8
    %v909 = vmul.u32.u64.compose %v908, %v907
    %v910 = vextract.low.u32 %v909
    %v911 = vextract.high.u32 %v909
    %v912 = vmul.u32.u64.compose %v908, %v903
    %v913 = vextract.low.u32 %v912
    %v914 = vextract.high.u32 %v912
    %v915 = vmul.u32 %v908, %v899
    %v916 = vadd.s32 %v911, %v913
    %vm917 = vc.u32 %v911, %v913
    %v918 = vadd.s32 %v914, 1
    %v919 = vsel %vm917, %v918, %v914
    %v920 = vadd.s32 %v915, %v919
    %v921 = vadd.s32 %v920, 536870912
    %v922 = vshrl.u32 %v921, 30
    %v923 = vshll.u32 %v922, 30
    %v924 = vsub.s32 %v920, %v923
    %vm925 = vcmp.lt.s32.totalorder %v924, 0
    %v926 = vsub.s32 0, %v924
    %v927 = vsel %vm925, %v926, %v924
    %v928 = vclz %v927
    %v929 = vsub.s32 %v928, 2
    %vm930 = vcmp.gt.s32.totalorder 0, %v929
    %v931 = vsel %vm930, 0, %v929
    %v932 = vsub.s32 32, %v931
    %v933 = vshll.u32 %v924, %v931
    %v934 = vshrl.u32 %v916, %v932
    %v935 = vor.u32 %v933, %v934
    %v936 = vsub.s32 4294967266, %v931
    %v937 = vadd.s32 %v936, 127
    %v938 = vshll.u32 %v937, 23
    %v939 = vor.u32 4788187, %v938
    %v940 = vand.u32 2147483647, %v939
    %v942 = vcvt.s32.f32 %v935
    %v943 = vmul.f32 %v942, %v940
    %v944 = vxor.u32 %v943, 2147483648
    %v945 = vsel %vm862, %v944, %v943
    %v946 = vsub.s32 4, %v922
    %v947 = vsel %vm862, %v946, %v922
    %v948 = vsel %vm861, %v228, %v945
    %v949 = vsel %vm861, 0, %v947
    %v950 = vcosq.f32.pop %v948
    %v951 = vsinq.f32.pop %v948
    %vm952 = vweird.f32 %v228
    %v953 = vadd.s32 %v949, 3
    %v954 = vand.u32 %v953, 3
    %vm955 = vcmp.lt.s32.totalorder %v954, 2
    %vm956 = vcmp.eq.s32.totalorder %v954, 0
    %v957 = vxor.u32 %v951, 2147483648
    %v958 = vsel %vm956, %v950, %v957
    %vm959 = vcmp.eq.s32.totalorder %v954, 2
    %v960 = vxor.u32 %v950, 2147483648
    %v961 = vsel %vm959, %v960, %v951
    %v962 = vsel %vm955, %v958, %v961
    %v963 = vsel %vm952, nan, %v962
    %v964 = vand.u32 2147483647, %v229
    %vm965 = vcmp.le.f32.partialorder %v964, 0.7853982
    %vm966 = vcmp.lt.s32.totalorder %v229, 0
    %v967 = vand.u32 %v229, 2139095040
    %v968 = vshrl.u32 %v967, 23
    %v969 = vsub.s32 %v968, 127
    %v970 = vand.u32 2147483647, %v229
    %v971 = vand.u32 %v970, 8388607
    %v972 = vor.u32 %v971, 8388608
    %v973 = vsub.s32 0, %v972
    %v974 = vadd.s32 %v969, 1
    %vm975 = vcmp.gt.s32.totalorder %v974, 0
    %v976 = vsel %vm975, %v974, 0
    %v977 = vshrl.u32 %v976, 5
    %v978 = vand.u32 %v976, 31
    %v979 = vsub.s32 32, %v978
    %v980 = vshrl.u32 683565275, %v979
    %v981 = vshll.u32 683565275, %v978
    %v982 = vshrl.u32 2475754826, %v979
    %v983 = vor.u32 %v981, %v982
    %v984 = vshll.u32 2475754826, %v978
    %v985 = vshrl.u32 2131351028, %v979
    %v986 = vor.u32 %v984, %v985
    %v987 = vshll.u32 2131351028, %v978
    %v988 = vshrl.u32 2102212464, %v979
    %v989 = vor.u32 %v987, %v988
    %v990 = vshll.u32 2102212464, %v978
    %v991 = vshrl.u32 920167782, %v979
    %v992 = vor.u32 %v990, %v991
    %v993 = vshll.u32 920167782, %v978
    %v994 = vshrl.u32 1326507024, %v979
    %v995 = vor.u32 %v993, %v994
    %vm996 = vcmp.lt.s32.totalorder %v977, 1
    %vm997 = vcmp.lt.s32.totalorder %v977, 2
    %vm998 = vcmp.lt.s32.totalorder %v977, 3
    %vm999 = vcmp.lt.s32.totalorder %v977, 4
    %v1000 = vsel %vm996, %v980, %v983
    %v1001 = vsel %vm999, %v989, 2102212464
    %v1002 = vsel %vm998, %v986, %v1001
    %v1003 = vsel %vm997, %v1000, %v1002
    %v1004 = vsel %vm996, %v983, %v986
    %v1005 = vsel %vm999, %v992, 920167782
    %v1006 = vsel %vm998, %v989, %v1005
    %v1007 = vsel %vm997, %v1004, %v1006
    %v1008 = vsel %vm996, %v986, %v989
    %v1009 = vsel %vm999, %v995, 1326507024
    %v1010 = vsel %vm998, %v992, %v1009
    %v1011 = vsel %vm997, %v1008, %v1010
    %v1012 = vshll.u32 %v972, 8
    %v1013 = vmul.u32.u64.compose %v1012, %v1011
    %v1014 = vextract.low.u32 %v1013
    %v1015 = vextract.high.u32 %v1013
    %v1016 = vmul.u32.u64.compose %v1012, %v1007
    %v1017 = vextract.low.u32 %v1016
    %v1018 = vextract.high.u32 %v1016
    %v1019 = vmul.u32 %v1012, %v1003
    %v1020 = vadd.s32 %v1015, %v1017
    %vm1021 = vc.u32 %v1015, %v1017
    %v1022 = vadd.s32 %v1018, 1
    %v1023 = vsel %vm1021, %v1022, %v1018
    %v1024 = vadd.s32 %v1019, %v1023
    %v1025 = vadd.s32 %v1024, 536870912
    %v1026 = vshrl.u32 %v1025, 30
    %v1027 = vshll.u32 %v1026, 30
    %v1028 = vsub.s32 %v1024, %v1027
    %vm1029 = vcmp.lt.s32.totalorder %v1028, 0
    %v1030 = vsub.s32 0, %v1028
    %v1031 = vsel %vm1029, %v1030, %v1028
    %v1032 = vclz %v1031
    %v1033 = vsub.s32 %v1032, 2
    %vm1034 = vcmp.gt.s32.totalorder 0, %v1033
    %v1035 = vsel %vm1034, 0, %v1033
    %v1036 = vsub.s32 32, %v1035
    %v1037 = vshll.u32 %v1028, %v1035
    %v1038 = vshrl.u32 %v1020, %v1036
    %v1039 = vor.u32 %v1037, %v1038
    %v1040 = vsub.s32 4294967266, %v1035
    %v1041 = vadd.s32 %v1040, 127
    %v1042 = vshll.u32 %v1041, 23
    %v1043 = vor.u32 4788187, %v1042
    %v1044 = vand.u32 2147483647, %v1043
    %v1046 = vcvt.s32.f32 %v1039
    %v1047 = vmul.f32 %v1046, %v1044
    %v1048 = vxor.u32 %v1047, 2147483648
    %v1049 = vsel %vm966, %v1048, %v1047
    %v1050 = vsub.s32 4, %v1026
    %v1051 = vsel %vm966, %v1050, %v1026
    %v1052 = vsel %vm965, %v229, %v1049
    %v1053 = vsel %vm965, 0, %v1051
    %v1054 = vcosq.f32.pop %v1052
    %v1055 = vsinq.f32.pop %v1052
    %vm1056 = vweird.f32 %v229
    %v1057 = vadd.s32 %v1053, 3
    %v1058 = vand.u32 %v1057, 3
    %vm1059 = vcmp.lt.s32.totalorder %v1058, 2
    %vm1060 = vcmp.eq.s32.totalorder %v1058, 0
    %v1061 = vxor.u32 %v1055, 2147483648
    %v1062 = vsel %vm1060, %v1054, %v1061
    %vm1063 = vcmp.eq.s32.totalorder %v1058, 2
    %v1064 = vxor.u32 %v1054, 2147483648
    %v1065 = vsel %vm1063, %v1064, %v1055
    %v1066 = vsel %vm1059, %v1062, %v1065
    %v1067 = vsel %vm1056, nan, %v1066
    %v1068 = vand.u32 2147483647, %v230
    %vm1069 = vcmp.le.f32.partialorder %v1068, 0.7853982
    %vm1070 = vcmp.lt.s32.totalorder %v230, 0
    %v1071 = vand.u32 %v230, 2139095040
    %v1072 = vshrl.u32 %v1071, 23
    %v1073 = vsub.s32 %v1072, 127
    %v1074 = vand.u32 2147483647, %v230
    %v1075 = vand.u32 %v1074, 8388607
    %v1076 = vor.u32 %v1075, 8388608
    %v1077 = vsub.s32 0, %v1076
    %v1078 = vadd.s32 %v1073, 1
    %vm1079 = vcmp.gt.s32.totalorder %v1078, 0
    %v1080 = vsel %vm1079, %v1078, 0
    %v1081 = vshrl.u32 %v1080, 5
    %v1082 = vand.u32 %v1080, 31
    %v1083 = vsub.s32 32, %v1082
    %v1084 = vshrl.u32 683565275, %v1083
    %v1085 = vshll.u32 683565275, %v1082
    %v1086 = vshrl.u32 2475754826, %v1083
    %v1087 = vor.u32 %v1085, %v1086
    %v1088 = vshll.u32 2475754826, %v1082
    %v1089 = vshrl.u32 2131351028, %v1083
    %v1090 = vor.u32 %v1088, %v1089
    %v1091 = vshll.u32 2131351028, %v1082
    %v1092 = vshrl.u32 2102212464, %v1083
    %v1093 = vor.u32 %v1091, %v1092
    %v1094 = vshll.u32 2102212464, %v1082
    %v1095 = vshrl.u32 920167782, %v1083
    %v1096 = vor.u32 %v1094, %v1095
    %v1097 = vshll.u32 920167782, %v1082
    %v1098 = vshrl.u32 1326507024, %v1083
    %v1099 = vor.u32 %v1097, %v1098
    %vm1100 = vcmp.lt.s32.totalorder %v1081, 1
    %vm1101 = vcmp.lt.s32.totalorder %v1081, 2
    %vm1102 = vcmp.lt.s32.totalorder %v1081, 3
    %vm1103 = vcmp.lt.s32.totalorder %v1081, 4
    %v1104 = vsel %vm1100, %v1084, %v1087
    %v1105 = vsel %vm1103, %v1093, 2102212464
    %v1106 = vsel %vm1102, %v1090, %v1105
    %v1107 = vsel %vm1101, %v1104, %v1106
    %v1108 = vsel %vm1100, %v1087, %v1090
    %v1109 = vsel %vm1103, %v1096, 920167782
    %v1110 = vsel %vm1102, %v1093, %v1109
    %v1111 = vsel %vm1101, %v1108, %v1110
    %v1112 = vsel %vm1100, %v1090, %v1093
    %v1113 = vsel %vm1103, %v1099, 1326507024
    %v1114 = vsel %vm1102, %v1096, %v1113
    %v1115 = vsel %vm1101, %v1112, %v1114
    %v1116 = vshll.u32 %v1076, 8
    %v1117 = vmul.u32.u64.compose %v1116, %v1115
    %v1118 = vextract.low.u32 %v1117
    %v1119 = vextract.high.u32 %v1117
    %v1120 = vmul.u32.u64.compose %v1116, %v1111
    %v1121 = vextract.low.u32 %v1120
    %v1122 = vextract.high.u32 %v1120
    %v1123 = vmul.u32 %v1116, %v1107
    %v1124 = vadd.s32 %v1119, %v1121
    %vm1125 = vc.u32 %v1119, %v1121
    %v1126 = vadd.s32 %v1122, 1
    %v1127 = vsel %vm1125, %v1126, %v1122
    %v1128 = vadd.s32 %v1123, %v1127
    %v1129 = vadd.s32 %v1128, 536870912
    %v1130 = vshrl.u32 %v1129, 30
    %v1131 = vshll.u32 %v1130, 30
    %v1132 = vsub.s32 %v1128, %v1131
    %vm1133 = vcmp.lt.s32.totalorder %v1132, 0
    %v1134 = vsub.s32 0, %v1132
    %v1135 = vsel %vm1133, %v1134, %v1132
    %v1136 = vclz %v1135
    %v1137 = vsub.s32 %v1136, 2
    %vm1138 = vcmp.gt.s32.totalorder 0, %v1137
    %v1139 = vsel %vm1138, 0, %v1137
    %v1140 = vsub.s32 32, %v1139
    %v1141 = vshll.u32 %v1132, %v1139
    %v1142 = vshrl.u32 %v1124, %v1140
    %v1143 = vor.u32 %v1141, %v1142
    %v1144 = vsub.s32 4294967266, %v1139
    %v1145 = vadd.s32 %v1144, 127
    %v1146 = vshll.u32 %v1145, 23
    %v1147 = vor.u32 4788187, %v1146
    %v1148 = vand.u32 2147483647, %v1147
    %v1150 = vcvt.s32.f32 %v1143
    %v1151 = vmul.f32 %v1150, %v1148
    %v1152 = vxor.u32 %v1151, 2147483648
    %v1153 = vsel %vm1070, %v1152, %v1151
    %v1154 = vsub.s32 4, %v1130
    %v1155 = vsel %vm1070, %v1154, %v1130
    %v1156 = vsel %vm1069, %v230, %v1153
    %v1157 = vsel %vm1069, 0, %v1155
    %v1158 = vcosq.f32.pop %v1156
    %v1159 = vsinq.f32.pop %v1156
    %vm1160 = vweird.f32 %v230
    %v1161 = vadd.s32 %v1157, 3
    %v1162 = vand.u32 %v1161, 3
    %vm1163 = vcmp.lt.s32.totalorder %v1162, 2
    %vm1164 = vcmp.eq.s32.totalorder %v1162, 0
    %v1165 = vxor.u32 %v1159, 2147483648
    %v1166 = vsel %vm1164, %v1158, %v1165
    %vm1167 = vcmp.eq.s32.totalorder %v1162, 2
    %v1168 = vxor.u32 %v1158, 2147483648
    %v1169 = vsel %vm1167, %v1168, %v1159
    %v1170 = vsel %vm1163, %v1166, %v1169
    %v1171 = vsel %vm1160, nan, %v1170
    %v1172 = vand.u32 2147483647, %v231
    %vm1173 = vcmp.le.f32.partialorder %v1172, 0.7853982
    %vm1174 = vcmp.lt.s32.totalorder %v231, 0
    %v1175 = vand.u32 %v231, 2139095040
    %v1176 = vshrl.u32 %v1175, 23
    %v1177 = vsub.s32 %v1176, 127
    %v1178 = vand.u32 2147483647, %v231
    %v1179 = vand.u32 %v1178, 8388607
    %v1180 = vor.u32 %v1179, 8388608
    %v1181 = vsub.s32 0, %v1180
    %v1182 = vadd.s32 %v1177, 1
    %vm1183 = vcmp.gt.s32.totalorder %v1182, 0
    %v1184 = vsel %vm1183, %v1182, 0
    %v1185 = vshrl.u32 %v1184, 5
    %v1186 = vand.u32 %v1184, 31
    %v1187 = vsub.s32 32, %v1186
    %v1188 = vshrl.u32 683565275, %v1187
    %v1189 = vshll.u32 683565275, %v1186
    %v1190 = vshrl.u32 2475754826, %v1187
    %v1191 = vor.u32 %v1189, %v1190
    %v1192 = vshll.u32 2475754826, %v1186
    %v1193 = vshrl.u32 2131351028, %v1187
    %v1194 = vor.u32 %v1192, %v1193
    %v1195 = vshll.u32 2131351028, %v1186
    %v1196 = vshrl.u32 2102212464, %v1187
    %v1197 = vor.u32 %v1195, %v1196
    %v1198 = vshll.u32 2102212464, %v1186
    %v1199 = vshrl.u32 920167782, %v1187
    %v1200 = vor.u32 %v1198, %v1199
    %v1201 = vshll.u32 920167782, %v1186
    %v1202 = vshrl.u32 1326507024, %v1187
    %v1203 = vor.u32 %v1201, %v1202
    %vm1204 = vcmp.lt.s32.totalorder %v1185, 1
    %vm1205 = vcmp.lt.s32.totalorder %v1185, 2
    %vm1206 = vcmp.lt.s32.totalorder %v1185, 3
    %vm1207 = vcmp.lt.s32.totalorder %v1185, 4
    %v1208 = vsel %vm1204, %v1188, %v1191
    %v1209 = vsel %vm1207, %v1197, 2102212464
    %v1210 = vsel %vm1206, %v1194, %v1209
    %v1211 = vsel %vm1205, %v1208, %v1210
    %v1212 = vsel %vm1204, %v1191, %v1194
    %v1213 = vsel %vm1207, %v1200, 920167782
    %v1214 = vsel %vm1206, %v1197, %v1213
    %v1215 = vsel %vm1205, %v1212, %v1214
    %v1216 = vsel %vm1204, %v1194, %v1197
    %v1217 = vsel %vm1207, %v1203, 1326507024
    %v1218 = vsel %vm1206, %v1200, %v1217
    %v1219 = vsel %vm1205, %v1216, %v1218
    %v1220 = vshll.u32 %v1180, 8
    %v1221 = vmul.u32.u64.compose %v1220, %v1219
    %v1222 = vextract.low.u32 %v1221
    %v1223 = vextract.high.u32 %v1221
    %v1224 = vmul.u32.u64.compose %v1220, %v1215
    %v1225 = vextract.low.u32 %v1224
    %v1226 = vextract.high.u32 %v1224
    %v1227 = vmul.u32 %v1220, %v1211
    %v1228 = vadd.s32 %v1223, %v1225
    %vm1229 = vc.u32 %v1223, %v1225
    %v1230 = vadd.s32 %v1226, 1
    %v1231 = vsel %vm1229, %v1230, %v1226
    %v1232 = vadd.s32 %v1227, %v1231
    %v1233 = vadd.s32 %v1232, 536870912
    %v1234 = vshrl.u32 %v1233, 30
    %v1235 = vshll.u32 %v1234, 30
    %v1236 = vsub.s32 %v1232, %v1235
    %vm1237 = vcmp.lt.s32.totalorder %v1236, 0
    %v1238 = vsub.s32 0, %v1236
    %v1239 = vsel %vm1237, %v1238, %v1236
    %v1240 = vclz %v1239
    %v1241 = vsub.s32 %v1240, 2
    %vm1242 = vcmp.gt.s32.totalorder 0, %v1241
    %v1243 = vsel %vm1242, 0, %v1241
    %v1244 = vsub.s32 32, %v1243
    %v1245 = vshll.u32 %v1236, %v1243
    %v1246 = vshrl.u32 %v1228, %v1244
    %v1247 = vor.u32 %v1245, %v1246
    %v1248 = vsub.s32 4294967266, %v1243
    %v1249 = vadd.s32 %v1248, 127
    %v1250 = vshll.u32 %v1249, 23
    %v1251 = vor.u32 4788187, %v1250
    %v1252 = vand.u32 2147483647, %v1251
    %v1254 = vcvt.s32.f32 %v1247
    %v1255 = vmul.f32 %v1254, %v1252
    %v1256 = vxor.u32 %v1255, 2147483648
    %v1257 = vsel %vm1174, %v1256, %v1255
    %v1258 = vsub.s32 4, %v1234
    %v1259 = vsel %vm1174, %v1258, %v1234
    %v1260 = vsel %vm1173, %v231, %v1257
    %v1261 = vsel %vm1173, 0, %v1259
    %v1262 = vcosq.f32.pop %v1260
    %v1263 = vsinq.f32.pop %v1260
    %vm1264 = vweird.f32 %v231
    %v1265 = vadd.s32 %v1261, 3
    %v1266 = vand.u32 %v1265, 3
    %vm1267 = vcmp.lt.s32.totalorder %v1266, 2
    %vm1268 = vcmp.eq.s32.totalorder %v1266, 0
    %v1269 = vxor.u32 %v1263, 2147483648
    %v1270 = vsel %vm1268, %v1262, %v1269
    %vm1271 = vcmp.eq.s32.totalorder %v1266, 2
    %v1272 = vxor.u32 %v1262, 2147483648
    %v1273 = vsel %vm1271, %v1272, %v1263
    %v1274 = vsel %vm1267, %v1270, %v1273
    %v1275 = vsel %vm1264, nan, %v1274
    %v1276 = vand.u32 2147483647, %v232
    %vm1277 = vcmp.le.f32.partialorder %v1276, 0.7853982
    %vm1278 = vcmp.lt.s32.totalorder %v232, 0
    %v1279 = vand.u32 %v232, 2139095040
    %v1280 = vshrl.u32 %v1279, 23
    %v1281 = vsub.s32 %v1280, 127
    %v1282 = vand.u32 2147483647, %v232
    %v1283 = vand.u32 %v1282, 8388607
    %v1284 = vor.u32 %v1283, 8388608
    %v1285 = vsub.s32 0, %v1284
    %v1286 = vadd.s32 %v1281, 1
    %vm1287 = vcmp.gt.s32.totalorder %v1286, 0
    %v1288 = vsel %vm1287, %v1286, 0
    %v1289 = vshrl.u32 %v1288, 5
    %v1290 = vand.u32 %v1288, 31
    %v1291 = vsub.s32 32, %v1290
    %v1292 = vshrl.u32 683565275, %v1291
    %v1293 = vshll.u32 683565275, %v1290
    %v1294 = vshrl.u32 2475754826, %v1291
    %v1295 = vor.u32 %v1293, %v1294
    %v1296 = vshll.u32 2475754826, %v1290
    %v1297 = vshrl.u32 2131351028, %v1291
    %v1298 = vor.u32 %v1296, %v1297
    %v1299 = vshll.u32 2131351028, %v1290
    %v1300 = vshrl.u32 2102212464, %v1291
    %v1301 = vor.u32 %v1299, %v1300
    %v1302 = vshll.u32 2102212464, %v1290
    %v1303 = vshrl.u32 920167782, %v1291
    %v1304 = vor.u32 %v1302, %v1303
    %v1305 = vshll.u32 920167782, %v1290
    %v1306 = vshrl.u32 1326507024, %v1291
    %v1307 = vor.u32 %v1305, %v1306
    %vm1308 = vcmp.lt.s32.totalorder %v1289, 1
    %vm1309 = vcmp.lt.s32.totalorder %v1289, 2
    %vm1310 = vcmp.lt.s32.totalorder %v1289, 3
    %vm1311 = vcmp.lt.s32.totalorder %v1289, 4
    %v1312 = vsel %vm1308, %v1292, %v1295
    %v1313 = vsel %vm1311, %v1301, 2102212464
    %v1314 = vsel %vm1310, %v1298, %v1313
    %v1315 = vsel %vm1309, %v1312, %v1314
    %v1316 = vsel %vm1308, %v1295, %v1298
    %v1317 = vsel %vm1311, %v1304, 920167782
    %v1318 = vsel %vm1310, %v1301, %v1317
    %v1319 = vsel %vm1309, %v1316, %v1318
    %v1320 = vsel %vm1308, %v1298, %v1301
    %v1321 = vsel %vm1311, %v1307, 1326507024
    %v1322 = vsel %vm1310, %v1304, %v1321
    %v1323 = vsel %vm1309, %v1320, %v1322
    %v1324 = vshll.u32 %v1284, 8
    %v1325 = vmul.u32.u64.compose %v1324, %v1323
    %v1326 = vextract.low.u32 %v1325
    %v1327 = vextract.high.u32 %v1325
    %v1328 = vmul.u32.u64.compose %v1324, %v1319
    %v1329 = vextract.low.u32 %v1328
    %v1330 = vextract.high.u32 %v1328
    %v1331 = vmul.u32 %v1324, %v1315
    %v1332 = vadd.s32 %v1327, %v1329
    %vm1333 = vc.u32 %v1327, %v1329
    %v1334 = vadd.s32 %v1330, 1
    %v1335 = vsel %vm1333, %v1334, %v1330
    %v1336 = vadd.s32 %v1331, %v1335
    %v1337 = vadd.s32 %v1336, 536870912
    %v1338 = vshrl.u32 %v1337, 30
    %v1339 = vshll.u32 %v1338, 30
    %v1340 = vsub.s32 %v1336, %v1339
    %vm1341 = vcmp.lt.s32.totalorder %v1340, 0
    %v1342 = vsub.s32 0, %v1340
    %v1343 = vsel %vm1341, %v1342, %v1340
    %v1344 = vclz %v1343
    %v1345 = vsub.s32 %v1344, 2
    %vm1346 = vcmp.gt.s32.totalorder 0, %v1345
    %v1347 = vsel %vm1346, 0, %v1345
    %v1348 = vsub.s32 32, %v1347
    %v1349 = vshll.u32 %v1340, %v1347
    %v1350 = vshrl.u32 %v1332, %v1348
    %v1351 = vor.u32 %v1349, %v1350
    %v1352 = vsub.s32 4294967266, %v1347
    %v1353 = vadd.s32 %v1352, 127
    %v1354 = vshll.u32 %v1353, 23
    %v1355 = vor.u32 4788187, %v1354
    %v1356 = vand.u32 2147483647, %v1355
    %v1358 = vcvt.s32.f32 %v1351
    %v1359 = vmul.f32 %v1358, %v1356
    %v1360 = vxor.u32 %v1359, 2147483648
    %v1361 = vsel %vm1278, %v1360, %v1359
    %v1362 = vsub.s32 4, %v1338
    %v1363 = vsel %vm1278, %v1362, %v1338
    %v1364 = vsel %vm1277, %v232, %v1361
    %v1365 = vsel %vm1277, 0, %v1363
    %v1366 = vcosq.f32.pop %v1364
    %v1367 = vsinq.f32.pop %v1364
    %vm1368 = vweird.f32 %v232
    %v1369 = vadd.s32 %v1365, 3
    %v1370 = vand.u32 %v1369, 3
    %vm1371 = vcmp.lt.s32.totalorder %v1370, 2
    %vm1372 = vcmp.eq.s32.totalorder %v1370, 0
    %v1373 = vxor.u32 %v1367, 2147483648
    %v1374 = vsel %vm1372, %v1366, %v1373
    %vm1375 = vcmp.eq.s32.totalorder %v1370, 2
    %v1376 = vxor.u32 %v1366, 2147483648
    %v1377 = vsel %vm1375, %v1376, %v1367
    %v1378 = vsel %vm1371, %v1374, %v1377
    %v1379 = vsel %vm1368, nan, %v1378
    %v1380 = vand.u32 2147483647, %v233
    %vm1381 = vcmp.le.f32.partialorder %v1380, 0.7853982
    %vm1382 = vcmp.lt.s32.totalorder %v233, 0
    %v1383 = vand.u32 %v233, 2139095040
    %v1384 = vshrl.u32 %v1383, 23
    %v1385 = vsub.s32 %v1384, 127
    %v1386 = vand.u32 2147483647, %v233
    %v1387 = vand.u32 %v1386, 8388607
    %v1388 = vor.u32 %v1387, 8388608
    %v1389 = vsub.s32 0, %v1388
    %v1390 = vadd.s32 %v1385, 1
    %vm1391 = vcmp.gt.s32.totalorder %v1390, 0
    %v1392 = vsel %vm1391, %v1390, 0
    %v1393 = vshrl.u32 %v1392, 5
    %v1394 = vand.u32 %v1392, 31
    %v1395 = vsub.s32 32, %v1394
    %v1396 = vshrl.u32 683565275, %v1395
    %v1397 = vshll.u32 683565275, %v1394
    %v1398 = vshrl.u32 2475754826, %v1395
    %v1399 = vor.u32 %v1397, %v1398
    %v1400 = vshll.u32 2475754826, %v1394
    %v1401 = vshrl.u32 2131351028, %v1395
    %v1402 = vor.u32 %v1400, %v1401
    %v1403 = vshll.u32 2131351028, %v1394
    %v1404 = vshrl.u32 2102212464, %v1395
    %v1405 = vor.u32 %v1403, %v1404
    %v1406 = vshll.u32 2102212464, %v1394
    %v1407 = vshrl.u32 920167782, %v1395
    %v1408 = vor.u32 %v1406, %v1407
    %v1409 = vshll.u32 920167782, %v1394
    %v1410 = vshrl.u32 1326507024, %v1395
    %v1411 = vor.u32 %v1409, %v1410
    %vm1412 = vcmp.lt.s32.totalorder %v1393, 1
    %vm1413 = vcmp.lt.s32.totalorder %v1393, 2
    %vm1414 = vcmp.lt.s32.totalorder %v1393, 3
    %vm1415 = vcmp.lt.s32.totalorder %v1393, 4
    %v1416 = vsel %vm1412, %v1396, %v1399
    %v1417 = vsel %vm1415, %v1405, 2102212464
    %v1418 = vsel %vm1414, %v1402, %v1417
    %v1419 = vsel %vm1413, %v1416, %v1418
    %v1420 = vsel %vm1412, %v1399, %v1402
    %v1421 = vsel %vm1415, %v1408, 920167782
    %v1422 = vsel %vm1414, %v1405, %v1421
    %v1423 = vsel %vm1413, %v1420, %v1422
    %v1424 = vsel %vm1412, %v1402, %v1405
    %v1425 = vsel %vm1415, %v1411, 1326507024
    %v1426 = vsel %vm1414, %v1408, %v1425
    %v1427 = vsel %vm1413, %v1424, %v1426
    %v1428 = vshll.u32 %v1388, 8
    %v1429 = vmul.u32.u64.compose %v1428, %v1427
    %v1430 = vextract.low.u32 %v1429
    %v1431 = vextract.high.u32 %v1429
    %v1432 = vmul.u32.u64.compose %v1428, %v1423
    %v1433 = vextract.low.u32 %v1432
    %v1434 = vextract.high.u32 %v1432
    %v1435 = vmul.u32 %v1428, %v1419
    %v1436 = vadd.s32 %v1431, %v1433
    %vm1437 = vc.u32 %v1431, %v1433
    %v1438 = vadd.s32 %v1434, 1
    %v1439 = vsel %vm1437, %v1438, %v1434
    %v1440 = vadd.s32 %v1435, %v1439
    %v1441 = vadd.s32 %v1440, 536870912
    %v1442 = vshrl.u32 %v1441, 30
    %v1443 = vshll.u32 %v1442, 30
    %v1444 = vsub.s32 %v1440, %v1443
    %vm1445 = vcmp.lt.s32.totalorder %v1444, 0
    %v1446 = vsub.s32 0, %v1444
    %v1447 = vsel %vm1445, %v1446, %v1444
    %v1448 = vclz %v1447
    %v1449 = vsub.s32 %v1448, 2
    %vm1450 = vcmp.gt.s32.totalorder 0, %v1449
    %v1451 = vsel %vm1450, 0, %v1449
    %v1452 = vsub.s32 32, %v1451
    %v1453 = vshll.u32 %v1444, %v1451
    %v1454 = vshrl.u32 %v1436, %v1452
    %v1455 = vor.u32 %v1453, %v1454
    %v1456 = vsub.s32 4294967266, %v1451
    %v1457 = vadd.s32 %v1456, 127
    %v1458 = vshll.u32 %v1457, 23
    %v1459 = vor.u32 4788187, %v1458
    %v1460 = vand.u32 2147483647, %v1459
    %v1462 = vcvt.s32.f32 %v1455
    %v1463 = vmul.f32 %v1462, %v1460
    %v1464 = vxor.u32 %v1463, 2147483648
    %v1465 = vsel %vm1382, %v1464, %v1463
    %v1466 = vsub.s32 4, %v1442
    %v1467 = vsel %vm1382, %v1466, %v1442
    %v1468 = vsel %vm1381, %v233, %v1465
    %v1469 = vsel %vm1381, 0, %v1467
    %v1470 = vcosq.f32.pop %v1468
    %v1471 = vsinq.f32.pop %v1468
    %vm1472 = vweird.f32 %v233
    %v1473 = vadd.s32 %v1469, 3
    %v1474 = vand.u32 %v1473, 3
    %vm1475 = vcmp.lt.s32.totalorder %v1474, 2
    %vm1476 = vcmp.eq.s32.totalorder %v1474, 0
    %v1477 = vxor.u32 %v1471, 2147483648
    %v1478 = vsel %vm1476, %v1470, %v1477
    %vm1479 = vcmp.eq.s32.totalorder %v1474, 2
    %v1480 = vxor.u32 %v1470, 2147483648
    %v1481 = vsel %vm1479, %v1480, %v1471
    %v1482 = vsel %vm1475, %v1478, %v1481
    %v1483 = vsel %vm1472, nan, %v1482
    %v1484 = vand.u32 2147483647, %v234
    %vm1485 = vcmp.le.f32.partialorder %v1484, 0.7853982
    %vm1486 = vcmp.lt.s32.totalorder %v234, 0
    %v1487 = vand.u32 %v234, 2139095040
    %v1488 = vshrl.u32 %v1487, 23
    %v1489 = vsub.s32 %v1488, 127
    %v1490 = vand.u32 2147483647, %v234
    %v1491 = vand.u32 %v1490, 8388607
    %v1492 = vor.u32 %v1491, 8388608
    %v1493 = vsub.s32 0, %v1492
    %v1494 = vadd.s32 %v1489, 1
    %vm1495 = vcmp.gt.s32.totalorder %v1494, 0
    %v1496 = vsel %vm1495, %v1494, 0
    %v1497 = vshrl.u32 %v1496, 5
    %v1498 = vand.u32 %v1496, 31
    %v1499 = vsub.s32 32, %v1498
    %v1500 = vshrl.u32 683565275, %v1499
    %v1501 = vshll.u32 683565275, %v1498
    %v1502 = vshrl.u32 2475754826, %v1499
    %v1503 = vor.u32 %v1501, %v1502
    %v1504 = vshll.u32 2475754826, %v1498
    %v1505 = vshrl.u32 2131351028, %v1499
    %v1506 = vor.u32 %v1504, %v1505
    %v1507 = vshll.u32 2131351028, %v1498
    %v1508 = vshrl.u32 2102212464, %v1499
    %v1509 = vor.u32 %v1507, %v1508
    %v1510 = vshll.u32 2102212464, %v1498
    %v1511 = vshrl.u32 920167782, %v1499
    %v1512 = vor.u32 %v1510, %v1511
    %v1513 = vshll.u32 920167782, %v1498
    %v1514 = vshrl.u32 1326507024, %v1499
    %v1515 = vor.u32 %v1513, %v1514
    %vm1516 = vcmp.lt.s32.totalorder %v1497, 1
    %vm1517 = vcmp.lt.s32.totalorder %v1497, 2
    %vm1518 = vcmp.lt.s32.totalorder %v1497, 3
    %vm1519 = vcmp.lt.s32.totalorder %v1497, 4
    %v1520 = vsel %vm1516, %v1500, %v1503
    %v1521 = vsel %vm1519, %v1509, 2102212464
    %v1522 = vsel %vm1518, %v1506, %v1521
    %v1523 = vsel %vm1517, %v1520, %v1522
    %v1524 = vsel %vm1516, %v1503, %v1506
    %v1525 = vsel %vm1519, %v1512, 920167782
    %v1526 = vsel %vm1518, %v1509, %v1525
    %v1527 = vsel %vm1517, %v1524, %v1526
    %v1528 = vsel %vm1516, %v1506, %v1509
    %v1529 = vsel %vm1519, %v1515, 1326507024
    %v1530 = vsel %vm1518, %v1512, %v1529
    %v1531 = vsel %vm1517, %v1528, %v1530
    %v1532 = vshll.u32 %v1492, 8
    %v1533 = vmul.u32.u64.compose %v1532, %v1531
    %v1534 = vextract.low.u32 %v1533
    %v1535 = vextract.high.u32 %v1533
    %v1536 = vmul.u32.u64.compose %v1532, %v1527
    %v1537 = vextract.low.u32 %v1536
    %v1538 = vextract.high.u32 %v1536
    %v1539 = vmul.u32 %v1532, %v1523
    %v1540 = vadd.s32 %v1535, %v1537
    %vm1541 = vc.u32 %v1535, %v1537
    %v1542 = vadd.s32 %v1538, 1
    %v1543 = vsel %vm1541, %v1542, %v1538
    %v1544 = vadd.s32 %v1539, %v1543
    %v1545 = vadd.s32 %v1544, 536870912
    %v1546 = vshrl.u32 %v1545, 30
    %v1547 = vshll.u32 %v1546, 30
    %v1548 = vsub.s32 %v1544, %v1547
    %vm1549 = vcmp.lt.s32.totalorder %v1548, 0
    %v1550 = vsub.s32 0, %v1548
    %v1551 = vsel %vm1549, %v1550, %v1548
    %v1552 = vclz %v1551
    %v1553 = vsub.s32 %v1552, 2
    %vm1554 = vcmp.gt.s32.totalorder 0, %v1553
    %v1555 = vsel %vm1554, 0, %v1553
    %v1556 = vsub.s32 32, %v1555
    %v1557 = vshll.u32 %v1548, %v1555
    %v1558 = vshrl.u32 %v1540, %v1556
    %v1559 = vor.u32 %v1557, %v1558
    %v1560 = vsub.s32 4294967266, %v1555
    %v1561 = vadd.s32 %v1560, 127
    %v1562 = vshll.u32 %v1561, 23
    %v1563 = vor.u32 4788187, %v1562
    %v1564 = vand.u32 2147483647, %v1563
    %v1566 = vcvt.s32.f32 %v1559
    %v1567 = vmul.f32 %v1566, %v1564
    %v1568 = vxor.u32 %v1567, 2147483648
    %v1569 = vsel %vm1486, %v1568, %v1567
    %v1570 = vsub.s32 4, %v1546
    %v1571 = vsel %vm1486, %v1570, %v1546
    %v1572 = vsel %vm1485, %v234, %v1569
    %v1573 = vsel %vm1485, 0, %v1571
    %v1574 = vcosq.f32.pop %v1572
    %v1575 = vsinq.f32.pop %v1572
    %vm1576 = vweird.f32 %v234
    %v1577 = vadd.s32 %v1573, 3
    %v1578 = vand.u32 %v1577, 3
    %vm1579 = vcmp.lt.s32.totalorder %v1578, 2
    %vm1580 = vcmp.eq.s32.totalorder %v1578, 0
    %v1581 = vxor.u32 %v1575, 2147483648
    %v1582 = vsel %vm1580, %v1574, %v1581
    %vm1583 = vcmp.eq.s32.totalorder %v1578, 2
    %v1584 = vxor.u32 %v1574, 2147483648
    %v1585 = vsel %vm1583, %v1584, %v1575
    %v1586 = vsel %vm1579, %v1582, %v1585
    %v1587 = vsel %vm1576, nan, %v1586
    %v1588 = vand.u32 2147483647, %v235
    %vm1589 = vcmp.le.f32.partialorder %v1588, 0.7853982
    %vm1590 = vcmp.lt.s32.totalorder %v235, 0
    %v1591 = vand.u32 %v235, 2139095040
    %v1592 = vshrl.u32 %v1591, 23
    %v1593 = vsub.s32 %v1592, 127
    %v1594 = vand.u32 2147483647, %v235
    %v1595 = vand.u32 %v1594, 8388607
    %v1596 = vor.u32 %v1595, 8388608
    %v1597 = vsub.s32 0, %v1596
    %v1598 = vadd.s32 %v1593, 1
    %vm1599 = vcmp.gt.s32.totalorder %v1598, 0
    %v1600 = vsel %vm1599, %v1598, 0
    %v1601 = vshrl.u32 %v1600, 5
    %v1602 = vand.u32 %v1600, 31
    %v1603 = vsub.s32 32, %v1602
    %v1604 = vshrl.u32 683565275, %v1603
    %v1605 = vshll.u32 683565275, %v1602
    %v1606 = vshrl.u32 2475754826, %v1603
    %v1607 = vor.u32 %v1605, %v1606
    %v1608 = vshll.u32 2475754826, %v1602
    %v1609 = vshrl.u32 2131351028, %v1603
    %v1610 = vor.u32 %v1608, %v1609
    %v1611 = vshll.u32 2131351028, %v1602
    %v1612 = vshrl.u32 2102212464, %v1603
    %v1613 = vor.u32 %v1611, %v1612
    %v1614 = vshll.u32 2102212464, %v1602
    %v1615 = vshrl.u32 920167782, %v1603
    %v1616 = vor.u32 %v1614, %v1615
    %v1617 = vshll.u32 920167782, %v1602
    %v1618 = vshrl.u32 1326507024, %v1603
    %v1619 = vor.u32 %v1617, %v1618
    %vm1620 = vcmp.lt.s32.totalorder %v1601, 1
    %vm1621 = vcmp.lt.s32.totalorder %v1601, 2
    %vm1622 = vcmp.lt.s32.totalorder %v1601, 3
    %vm1623 = vcmp.lt.s32.totalorder %v1601, 4
    %v1624 = vsel %vm1620, %v1604, %v1607
    %v1625 = vsel %vm1623, %v1613, 2102212464
    %v1626 = vsel %vm1622, %v1610, %v1625
    %v1627 = vsel %vm1621, %v1624, %v1626
    %v1628 = vsel %vm1620, %v1607, %v1610
    %v1629 = vsel %vm1623, %v1616, 920167782
    %v1630 = vsel %vm1622, %v1613, %v1629
    %v1631 = vsel %vm1621, %v1628, %v1630
    %v1632 = vsel %vm1620, %v1610, %v1613
    %v1633 = vsel %vm1623, %v1619, 1326507024
    %v1634 = vsel %vm1622, %v1616, %v1633
    %v1635 = vsel %vm1621, %v1632, %v1634
    %v1636 = vshll.u32 %v1596, 8
    %v1637 = vmul.u32.u64.compose %v1636, %v1635
    %v1638 = vextract.low.u32 %v1637
    %v1639 = vextract.high.u32 %v1637
    %v1640 = vmul.u32.u64.compose %v1636, %v1631
    %v1641 = vextract.low.u32 %v1640
    %v1642 = vextract.high.u32 %v1640
    %v1643 = vmul.u32 %v1636, %v1627
    %v1644 = vadd.s32 %v1639, %v1641
    %vm1645 = vc.u32 %v1639, %v1641
    %v1646 = vadd.s32 %v1642, 1
    %v1647 = vsel %vm1645, %v1646, %v1642
    %v1648 = vadd.s32 %v1643, %v1647
    %v1649 = vadd.s32 %v1648, 536870912
    %v1650 = vshrl.u32 %v1649, 30
    %v1651 = vshll.u32 %v1650, 30
    %v1652 = vsub.s32 %v1648, %v1651
    %vm1653 = vcmp.lt.s32.totalorder %v1652, 0
    %v1654 = vsub.s32 0, %v1652
    %v1655 = vsel %vm1653, %v1654, %v1652
    %v1656 = vclz %v1655
    %v1657 = vsub.s32 %v1656, 2
    %vm1658 = vcmp.gt.s32.totalorder 0, %v1657
    %v1659 = vsel %vm1658, 0, %v1657
    %v1660 = vsub.s32 32, %v1659
    %v1661 = vshll.u32 %v1652, %v1659
    %v1662 = vshrl.u32 %v1644, %v1660
    %v1663 = vor.u32 %v1661, %v1662
    %v1664 = vsub.s32 4294967266, %v1659
    %v1665 = vadd.s32 %v1664, 127
    %v1666 = vshll.u32 %v1665, 23
    %v1667 = vor.u32 4788187, %v1666
    %v1668 = vand.u32 2147483647, %v1667
    %v1670 = vcvt.s32.f32 %v1663
    %v1671 = vmul.f32 %v1670, %v1668
    %v1672 = vxor.u32 %v1671, 2147483648
    %v1673 = vsel %vm1590, %v1672, %v1671
    %v1674 = vsub.s32 4, %v1650
    %v1675 = vsel %vm1590, %v1674, %v1650
    %v1676 = vsel %vm1589, %v235, %v1673
    %v1677 = vsel %vm1589, 0, %v1675
    %v1678 = vcosq.f32.pop %v1676
    %v1679 = vsinq.f32.pop %v1676
    %vm1680 = vweird.f32 %v235
    %v1681 = vadd.s32 %v1677, 3
    %v1682 = vand.u32 %v1681, 3
    %vm1683 = vcmp.lt.s32.totalorder %v1682, 2
    %vm1684 = vcmp.eq.s32.totalorder %v1682, 0
    %v1685 = vxor.u32 %v1679, 2147483648
    %v1686 = vsel %vm1684, %v1678, %v1685
    %vm1687 = vcmp.eq.s32.totalorder %v1682, 2
    %v1688 = vxor.u32 %v1678, 2147483648
    %v1689 = vsel %vm1687, %v1688, %v1679
    %v1690 = vsel %vm1683, %v1686, %v1689
    %v1691 = vsel %vm1680, nan, %v1690
    %v1692 = vld [vmem:[%s3] sm:$0xff]
    %v1693 = vld [vmem:[%s3 + $0x8] sm:$0xff]
    %v1694 = vld [vmem:[%s3 + $0x10] sm:$0xff]
    %v1695 = vld [vmem:[%s3 + $0x18] sm:$0xff]
    %v1696 = vld [vmem:[%s3 + $0x20] sm:$0xff]
    %v1697 = vld [vmem:[%s3 + $0x28] sm:$0xff]
    %v1698 = vld [vmem:[%s3 + $0x30] sm:$0x3]
    %v1699 = vld [vmem:[%s4] sm:$0xff]
    %v1700 = vld [vmem:[%s4 + $0x8] sm:$0xff]
    %v1701 = vld [vmem:[%s4 + $0x10] sm:$0xff]
    %v1702 = vld [vmem:[%s4 + $0x18] sm:$0xff]
    %v1703 = vld [vmem:[%s4 + $0x20] sm:$0xff]
    %v1704 = vld [vmem:[%s4 + $0x28] sm:$0xff]
    %v1705 = vld [vmem:[%s4 + $0x30] sm:$0x3]
    %v1706 = vpack.c.bf16 %v1693, %v1692
    %v1707 = vpack.c.bf16 %v1695, %v1694
    %v1708 = vpack.c.bf16 %v1697, %v1696
    %v1709 = vpack.c.bf16 %v1698, %v1698
    %v1710 = vunpack.c.l.bf16 %v1706
    %v1711 = vunpack.c.h.bf16 %v1706
    %v1712 = vunpack.c.l.bf16 %v1707
    %v1713 = vunpack.c.h.bf16 %v1707
    %v1714 = vunpack.c.l.bf16 %v1708
    %v1715 = vunpack.c.h.bf16 %v1708
    %v1716 = vunpack.c.l.bf16 %v1709
    %v1717 = vsub.f32 %v1692, %v1710
    %v1718 = vsub.f32 %v1693, %v1711
    %v1719 = vsub.f32 %v1694, %v1712
    %v1720 = vsub.f32 %v1695, %v1713
    %v1721 = vsub.f32 %v1696, %v1714
    %v1722 = vsub.f32 %v1697, %v1715
    %v1723 = vsub.f32 %v1698, %v1716
    %v1724 = vpack.c.bf16 %v1718, %v1717
    %v1725 = vpack.c.bf16 %v1720, %v1719
    %v1726 = vpack.c.bf16 %v1722, %v1721
    %v1727 = vpack.c.bf16 %v1723, %v1723
    %v1728 = vpack.c.bf16 %v547, %v339
    %v1729 = vpack.c.bf16 %v651, %v443
    %v1730 = vpack.c.bf16 %v963, %v755
    %v1731 = vpack.c.bf16 %v1067, %v859
    %v1732 = vpack.c.bf16 %v1379, %v1171
    %v1733 = vpack.c.bf16 %v1483, %v1275
    %v1734 = vpack.c.bf16 %v1587, %v1587
    %v1735 = vpack.c.bf16 %v1691, %v1691
    %v1736 = vunpack.c.l.bf16 %v1728
    %v1737 = vunpack.c.l.bf16 %v1729
    %v1738 = vunpack.c.h.bf16 %v1728
    %v1739 = vunpack.c.h.bf16 %v1729
    %v1740 = vunpack.c.l.bf16 %v1730
    %v1741 = vunpack.c.l.bf16 %v1731
    %v1742 = vunpack.c.h.bf16 %v1730
    %v1743 = vunpack.c.h.bf16 %v1731
    %v1744 = vunpack.c.l.bf16 %v1732
    %v1745 = vunpack.c.l.bf16 %v1733
    %v1746 = vunpack.c.h.bf16 %v1732
    %v1747 = vunpack.c.h.bf16 %v1733
    %v1748 = vunpack.c.l.bf16 %v1734
    %v1749 = vunpack.c.l.bf16 %v1735
    %v1750 = vsub.f32 %v339, %v1736
    %v1751 = vsub.f32 %v443, %v1737
    %v1752 = vsub.f32 %v547, %v1738
    %v1753 = vsub.f32 %v651, %v1739
    %v1754 = vsub.f32 %v755, %v1740
    %v1755 = vsub.f32 %v859, %v1741
    %v1756 = vsub.f32 %v963, %v1742
    %v1757 = vsub.f32 %v1067, %v1743
    %v1758 = vsub.f32 %v1171, %v1744
    %v1759 = vsub.f32 %v1275, %v1745
    %v1760 = vsub.f32 %v1379, %v1746
    %v1761 = vsub.f32 %v1483, %v1747
    %v1762 = vsub.f32 %v1587, %v1748
    %v1763 = vsub.f32 %v1691, %v1749
    %v1764 = vpack.c.bf16 %v1752, %v1750
    %v1765 = vpack.c.bf16 %v1753, %v1751
    %v1766 = vpack.c.bf16 %v1756, %v1754
    %v1767 = vpack.c.bf16 %v1757, %v1755
    %v1768 = vpack.c.bf16 %v1760, %v1758
    %v1769 = vpack.c.bf16 %v1761, %v1759
    %v1770 = vpack.c.bf16 %v1762, %v1762
    %v1771 = vpack.c.bf16 %v1763, %v1763
    %vm1772 = vcmask 408576
    %v1774 = vsel %vm1772, %v1706, 0
    %v1777 = vsel %vm1772, %v1707, 0
    %v1780 = vsel %vm1772, %v1708, 0
    %v1783 = vsel %vm1772, %v1709, 0
    %vm1785 = vcmask 1040384
    %v1787 = vsel %vm1785, %v1770, 0
    %v1790 = vsel %vm1785, %v1771, 0
    %1792 = vmatprep.subr.bf16.mxu0 %v1765
    %1793 = vmatpush1.bf16.msra.mxu0 %v1764
    %1794 = vmatprep.subr.bf16.mxu0 %v1767
    %1795 = vmatpush1.bf16.msra.mxu0 %v1766
    %1796 = vmatprep.subr.bf16.mxu0 %v1769
    %1797 = vmatpush1.bf16.msra.mxu0 %v1768
    %1798 = vmatprep.subr.bf16.mxu0 %v1790
    %1799 = vmatpush1.bf16.msra.mxu0 %v1787
    %1800 = vmatprep.subr.bf16.mxu0 0
    %1801 = vmatpush1.bf16.msra.mxu0 0
    %1802 = vmatprep.subr.bf16.mxu0 0
    %1803 = vmatpush1.bf16.msra.mxu0 0
    %1804 = vmatprep.subr.bf16.mxu0 0
    %1805 = vmatpush1.bf16.msra.mxu0 0
    %1806 = vmatprep.subr.bf16.mxu0 0
    %1807 = vmatpush1.bf16.msra.mxu0 0
    %1808 = vmatprep.subr.bf16.mxu0 0
    %1809 = vmatpush1.bf16.msra.mxu0 0
    %1810 = vmatprep.subr.bf16.mxu0 0
    %1811 = vmatpush1.bf16.msra.mxu0 0
    %1812 = vmatprep.subr.bf16.mxu0 0
    %1813 = vmatpush1.bf16.msra.mxu0 0
    %1814 = vmatprep.subr.bf16.mxu0 0
    %1815 = vmatpush1.bf16.msra.mxu0 0
    %1816 = vmatprep.subr.bf16.mxu0 0
    %1817 = vmatpush1.bf16.msra.mxu0 0
    %1818 = vmatprep.subr.bf16.mxu0 0
    %1819 = vmatpush1.bf16.msra.mxu0 0
    %1820 = vmatprep.subr.bf16.mxu0 0
    %1821 = vmatpush1.bf16.msra.mxu0 0
    %1822 = vmatprep.subr.bf16.mxu0 0
    %1823 = vmatpush1.bf16.msra.mxu0 0
    %1824 = vmatprep.mubr.bf16.mxu0 0
    %1825 = vmatmul.mubr.bf16.gmra.mrb[0].mxu0 %v1774
    %v1826 = vpop.f32.mrb[0].mxu0
    %v1827 = vadd.f32 0.0, %v1826
    %v1828 = vpop.f32.mrb[0].mxu0
    %v1829 = vadd.f32 0.0, %v1828
    %v1830 = vpop.f32.mrb[0].mxu0
    %v1831 = vadd.f32 0.0, %v1830
    %v1832 = vpop.f32.mrb[0].mxu0
    %v1833 = vadd.f32 0.0, %v1832
    %1834 = vmatprep.mubr.bf16.mxu0 0
    %1835 = vmatmul.mubr.bf16.gmra.mrb[0].mxu0 %v1777
    %v1836 = vpop.f32.mrb[0].mxu0
    %v1837 = vadd.f32 0.0, %v1836
    %v1838 = vpop.f32.mrb[0].mxu0
    %v1839 = vadd.f32 0.0, %v1838
    %v1840 = vpop.f32.mrb[0].mxu0
    %v1841 = vadd.f32 0.0, %v1840
    %v1842 = vpop.f32.mrb[0].mxu0
    %v1843 = vadd.f32 0.0, %v1842
    %1844 = vmatprep.mubr.bf16.mxu0 0
    %1845 = vmatmul.mubr.bf16.gmra.mrb[0].mxu0 %v1780
    %v1846 = vpop.f32.mrb[0].mxu0
    %v1847 = vadd.f32 0.0, %v1846
    %v1848 = vpop.f32.mrb[0].mxu0
    %v1849 = vadd.f32 0.0, %v1848
    %v1850 = vpop.f32.mrb[0].mxu0
    %v1851 = vadd.f32 0.0, %v1850
    %v1852 = vpop.f32.mrb[0].mxu0
    %v1853 = vadd.f32 0.0, %v1852
    %1854 = vmatprep.mubr.bf16.mxu0 0
    %1855 = vmatmul.mubr.bf16.gmra.mrb[0].mxu0 %v1783
    %v1856 = vpop.f32.mrb[0].mxu0
    %v1857 = vadd.f32 0.0, %v1856
    %v1858 = vpop.f32.mrb[0].mxu0
    %v1859 = vadd.f32 0.0, %v1858
    %v1860 = vpop.f32.mrb[0].mxu0
    %v1861 = vpop.f32.mrb[0].mxu0
    %1862 = vdwg.mxu0
    %v1864 = vsel %vm1785, %v1734, 0
    %v1867 = vsel %vm1785, %v1735, 0
    %1869 = vmatprep.subr.bf16.mxu0 %v1729
    %1870 = vmatpush1.bf16.msra.mxu0 %v1728
    %1871 = vmatprep.subr.bf16.mxu0 %v1731
    %1872 = vmatpush1.bf16.msra.mxu0 %v1730
    %1873 = vmatprep.subr.bf16.mxu0 %v1733
    %1874 = vmatpush1.bf16.msra.mxu0 %v1732
    %1875 = vmatprep.subr.bf16.mxu0 %v1867
    %1876 = vmatpush1.bf16.msra.mxu0 %v1864
    %1877 = vmatprep.subr.bf16.mxu0 0
    %1878 = vmatpush1.bf16.msra.mxu0 0
    %1879 = vmatprep.subr.bf16.mxu0 0
    %1880 = vmatpush1.bf16.msra.mxu0 0
    %1881 = vmatprep.subr.bf16.mxu0 0
    %1882 = vmatpush1.bf16.msra.mxu0 0
    %1883 = vmatprep.subr.bf16.mxu0 0
    %1884 = vmatpush1.bf16.msra.mxu0 0
    %1885 = vmatprep.subr.bf16.mxu0 0
    %1886 = vmatpush1.bf16.msra.mxu0 0
    %1887 = vmatprep.subr.bf16.mxu0 0
    %1888 = vmatpush1.bf16.msra.mxu0 0
    %1889 = vmatprep.subr.bf16.mxu0 0
    %1890 = vmatpush1.bf16.msra.mxu0 0
    %1891 = vmatprep.subr.bf16.mxu0 0
    %1892 = vmatpush1.bf16.msra.mxu0 0
    %1893 = vmatprep.subr.bf16.mxu0 0
    %1894 = vmatpush1.bf16.msra.mxu0 0
    %1895 = vmatprep.subr.bf16.mxu0 0
    %1896 = vmatpush1.bf16.msra.mxu0 0
    %1897 = vmatprep.subr.bf16.mxu0 0
    %1898 = vmatpush1.bf16.msra.mxu0 0
    %1899 = vmatprep.subr.bf16.mxu0 0
    %1900 = vmatpush1.bf16.msra.mxu0 0
    %1901 = vmatprep.mubr.bf16.mxu0 0
    %1902 = vmatmul.mubr.bf16.gmra.mrb[0].mxu0 %v1774
    %v1903 = vpop.f32.mrb[0].mxu0
    %v1904 = vadd.f32 %v1827, %v1903
    %v1905 = vpop.f32.mrb[0].mxu0
    %v1906 = vadd.f32 %v1829, %v1905
    %v1907 = vpop.f32.mrb[0].mxu0
    %v1908 = vadd.f32 %v1831, %v1907
    %v1909 = vpop.f32.mrb[0].mxu0
    %v1910 = vadd.f32 %v1833, %v1909
    %1911 = vmatprep.mubr.bf16.mxu0 0
    %1912 = vmatmul.mubr.bf16.gmra.mrb[0].mxu0 %v1777
    %v1913 = vpop.f32.mrb[0].mxu0
    %v1914 = vadd.f32 %v1837, %v1913
    %v1915 = vpop.f32.mrb[0].mxu0
    %v1916 = vadd.f32 %v1839, %v1915
    %v1917 = vpop.f32.mrb[0].mxu0
    %v1918 = vadd.f32 %v1841, %v1917
    %v1919 = vpop.f32.mrb[0].mxu0
    %v1920 = vadd.f32 %v1843, %v1919
    %1921 = vmatprep.mubr.bf16.mxu0 0
    %1922 = vmatmul.mubr.bf16.gmra.mrb[0].mxu0 %v1780
    %v1923 = vpop.f32.mrb[0].mxu0
    %v1924 = vadd.f32 %v1847, %v1923
    %v1925 = vpop.f32.mrb[0].mxu0
    %v1926 = vadd.f32 %v1849, %v1925
    %v1927 = vpop.f32.mrb[0].mxu0
    %v1928 = vadd.f32 %v1851, %v1927
    %v1929 = vpop.f32.mrb[0].mxu0
    %v1930 = vadd.f32 %v1853, %v1929
    %1931 = vmatprep.mubr.bf16.mxu0 0
    %1932 = vmatmul.mubr.bf16.gmra.mrb[0].mxu0 %v1783
    %v1933 = vpop.f32.mrb[0].mxu0
    %v1934 = vadd.f32 %v1857, %v1933
    %v1935 = vpop.f32.mrb[0].mxu0
    %v1936 = vadd.f32 %v1859, %v1935
    %v1937 = vpop.f32.mrb[0].mxu0
    %v1938 = vpop.f32.mrb[0].mxu0
    %1939 = vdwg.mxu0
    %v1941 = vsel %vm1772, %v1724, 0
    %v1944 = vsel %vm1772, %v1725, 0
    %v1947 = vsel %vm1772, %v1726, 0
    %v1950 = vsel %vm1772, %v1727, 0
    %1952 = vmatprep.subr.bf16.mxu0 %v1729
    %1953 = vmatpush1.bf16.msra.mxu0 %v1728
    %1954 = vmatprep.subr.bf16.mxu0 %v1731
    %1955 = vmatpush1.bf16.msra.mxu0 %v1730
    %1956 = vmatprep.subr.bf16.mxu0 %v1733
    %1957 = vmatpush1.bf16.msra.mxu0 %v1732
    %1958 = vmatprep.subr.bf16.mxu0 %v1867
    %1959 = vmatpush1.bf16.msra.mxu0 %v1864
    %1960 = vmatprep.subr.bf16.mxu0 0
    %1961 = vmatpush1.bf16.msra.mxu0 0
    %1962 = vmatprep.subr.bf16.mxu0 0
    %1963 = vmatpush1.bf16.msra.mxu0 0
    %1964 = vmatprep.subr.bf16.mxu0 0
    %1965 = vmatpush1.bf16.msra.mxu0 0
    %1966 = vmatprep.subr.bf16.mxu0 0
    %1967 = vmatpush1.bf16.msra.mxu0 0
    %1968 = vmatprep.subr.bf16.mxu0 0
    %1969 = vmatpush1.bf16.msra.mxu0 0
    %1970 = vmatprep.subr.bf16.mxu0 0
    %1971 = vmatpush1.bf16.msra.mxu0 0
    %1972 = vmatprep.subr.bf16.mxu0 0
    %1973 = vmatpush1.bf16.msra.mxu0 0
    %1974 = vmatprep.subr.bf16.mxu0 0
    %1975 = vmatpush1.bf16.msra.mxu0 0
    %1976 = vmatprep.subr.bf16.mxu0 0
    %1977 = vmatpush1.bf16.msra.mxu0 0
    %1978 = vmatprep.subr.bf16.mxu0 0
    %1979 = vmatpush1.bf16.msra.mxu0 0
    %1980 = vmatprep.subr.bf16.mxu0 0
    %1981 = vmatpush1.bf16.msra.mxu0 0
    %1982 = vmatprep.subr.bf16.mxu0 0
    %1983 = vmatpush1.bf16.msra.mxu0 0
    %1984 = vmatprep.mubr.bf16.mxu0 0
    %1985 = vmatmul.mubr.bf16.gmra.mrb[0].mxu0 %v1941
    %v1986 = vpop.f32.mrb[0].mxu0
    %v1987 = vadd.f32 0.0, %v1986
    %v1988 = vpop.f32.mrb[0].mxu0
    %v1989 = vadd.f32 0.0, %v1988
    %v1990 = vpop.f32.mrb[0].mxu0
    %v1991 = vadd.f32 0.0, %v1990
    %v1992 = vpop.f32.mrb[0].mxu0
    %v1993 = vadd.f32 0.0, %v1992
    %1994 = vmatprep.mubr.bf16.mxu0 0
    %1995 = vmatmul.mubr.bf16.gmra.mrb[0].mxu0 %v1944
    %v1996 = vpop.f32.mrb[0].mxu0
    %v1997 = vadd.f32 0.0, %v1996
    %v1998 = vpop.f32.mrb[0].mxu0
    %v1999 = vadd.f32 0.0, %v1998
    %v2000 = vpop.f32.mrb[0].mxu0
    %v2001 = vadd.f32 0.0, %v2000
    %v2002 = vpop.f32.mrb[0].mxu0
    %v2003 = vadd.f32 0.0, %v2002
    %2004 = vmatprep.mubr.bf16.mxu0 0
    %2005 = vmatmul.mubr.bf16.gmra.mrb[0].mxu0 %v1947
    %v2006 = vpop.f32.mrb[0].mxu0
    %v2007 = vadd.f32 0.0, %v2006
    %v2008 = vpop.f32.mrb[0].mxu0
    %v2009 = vadd.f32 0.0, %v2008
    %v2010 = vpop.f32.mrb[0].mxu0
    %v2011 = vadd.f32 0.0, %v2010
    %v2012 = vpop.f32.mrb[0].mxu0
    %v2013 = vadd.f32 0.0, %v2012
    %2014 = vmatprep.mubr.bf16.mxu0 0
    %2015 = vmatmul.mubr.bf16.gmra.mrb[0].mxu0 %v1950
    %v2016 = vpop.f32.mrb[0].mxu0
    %v2017 = vadd.f32 0.0, %v2016
    %v2018 = vpop.f32.mrb[0].mxu0
    %v2019 = vadd.f32 0.0, %v2018
    %v2020 = vpop.f32.mrb[0].mxu0
    %v2021 = vpop.f32.mrb[0].mxu0
    %2022 = vdwg.mxu0
    %v2023 = vadd.f32 %v1904, %v1987
    %v2024 = vadd.f32 %v1906, %v1989
    %v2025 = vadd.f32 %v1908, %v1991
    %v2026 = vadd.f32 %v1910, %v1993
    %v2027 = vadd.f32 %v1914, %v1997
    %v2028 = vadd.f32 %v1916, %v1999
    %v2029 = vadd.f32 %v1918, %v2001
    %v2030 = vadd.f32 %v1920, %v2003
    %v2031 = vadd.f32 %v1924, %v2007
    %v2032 = vadd.f32 %v1926, %v2009
    %v2033 = vadd.f32 %v1928, %v2011
    %v2034 = vadd.f32 %v1930, %v2013
    %v2035 = vadd.f32 %v1934, %v2017
    %v2036 = vadd.f32 %v1936, %v2019
    %2038 = vset.pattern.permute.xlu0 0
    %2039 = vperm.xlu0 %2038, %v1699
    %v2040 = vpop.permute.xlu0 %2039
    %2043 = vset.pattern.permute.xlu0 0
    %2044 = vperm.xlu0 %2043, %v1700
    %v2045 = vpop.permute.xlu0 %2044
    %2048 = vset.pattern.permute.xlu0 0
    %2049 = vperm.xlu0 %2048, %v1701
    %v2050 = vpop.permute.xlu0 %2049
    %2053 = vset.pattern.permute.xlu0 0
    %2054 = vperm.xlu0 %2053, %v1702
    %v2055 = vpop.permute.xlu0 %2054
    %2058 = vset.pattern.permute.xlu0 0
    %2059 = vperm.xlu0 %2058, %v1703
    %v2060 = vpop.permute.xlu0 %2059
    %2063 = vset.pattern.permute.xlu0 0
    %2064 = vperm.xlu0 %2063, %v1704
    %v2065 = vpop.permute.xlu0 %2064
    %2068 = vset.pattern.permute.xlu0 0
    %2069 = vperm.xlu0 %2068, %v1705
    %v2070 = vpop.permute.xlu0 %2069
    %v2072 = vadd.f32 %v2023, %v2040
    %v2073 = vadd.f32 %v2024, %v2040
    %v2074 = vadd.f32 %v2025, %v2045
    %v2075 = vadd.f32 %v2026, %v2045
    %v2076 = vadd.f32 %v2027, %v2050
    %v2077 = vadd.f32 %v2028, %v2050
    %v2078 = vadd.f32 %v2029, %v2055
    %v2079 = vadd.f32 %v2030, %v2055
    %v2080 = vadd.f32 %v2031, %v2060
    %v2081 = vadd.f32 %v2032, %v2060
    %v2082 = vadd.f32 %v2033, %v2065
    %v2083 = vadd.f32 %v2034, %v2065
    %v2084 = vadd.f32 %v2035, %v2070
    %v2085 = vadd.f32 %v2036, %v2070
    %v2086 = vand.u32 2147483647, %v2072
    %vm2087 = vcmp.le.f32.partialorder %v2086, 0.7853982
    %vm2088 = vcmp.lt.s32.totalorder %v2072, 0
    %v2089 = vand.u32 %v2072, 2139095040
    %v2090 = vshrl.u32 %v2089, 23
    %v2091 = vsub.s32 %v2090, 127
    %v2092 = vand.u32 2147483647, %v2072
    %v2093 = vand.u32 %v2092, 8388607
    %v2094 = vor.u32 %v2093, 8388608
    %v2095 = vsub.s32 0, %v2094
    %v2096 = vadd.s32 %v2091, 1
    %vm2097 = vcmp.gt.s32.totalorder %v2096, 0
    %v2098 = vsel %vm2097, %v2096, 0
    %v2099 = vshrl.u32 %v2098, 5
    %v2100 = vand.u32 %v2098, 31
    %v2101 = vsub.s32 32, %v2100
    %v2102 = vshrl.u32 683565275, %v2101
    %v2103 = vshll.u32 683565275, %v2100
    %v2104 = vshrl.u32 2475754826, %v2101
    %v2105 = vor.u32 %v2103, %v2104
    %v2106 = vshll.u32 2475754826, %v2100
    %v2107 = vshrl.u32 2131351028, %v2101
    %v2108 = vor.u32 %v2106, %v2107
    %v2109 = vshll.u32 2131351028, %v2100
    %v2110 = vshrl.u32 2102212464, %v2101
    %v2111 = vor.u32 %v2109, %v2110
    %v2112 = vshll.u32 2102212464, %v2100
    %v2113 = vshrl.u32 920167782, %v2101
    %v2114 = vor.u32 %v2112, %v2113
    %v2115 = vshll.u32 920167782, %v2100
    %v2116 = vshrl.u32 1326507024, %v2101
    %v2117 = vor.u32 %v2115, %v2116
    %vm2118 = vcmp.lt.s32.totalorder %v2099, 1
    %vm2119 = vcmp.lt.s32.totalorder %v2099, 2
    %vm2120 = vcmp.lt.s32.totalorder %v2099, 3
    %vm2121 = vcmp.lt.s32.totalorder %v2099, 4
    %v2122 = vsel %vm2118, %v2102, %v2105
    %v2123 = vsel %vm2121, %v2111, 2102212464
    %v2124 = vsel %vm2120, %v2108, %v2123
    %v2125 = vsel %vm2119, %v2122, %v2124
    %v2126 = vsel %vm2118, %v2105, %v2108
    %v2127 = vsel %vm2121, %v2114, 920167782
    %v2128 = vsel %vm2120, %v2111, %v2127
    %v2129 = vsel %vm2119, %v2126, %v2128
    %v2130 = vsel %vm2118, %v2108, %v2111
    %v2131 = vsel %vm2121, %v2117, 1326507024
    %v2132 = vsel %vm2120, %v2114, %v2131
    %v2133 = vsel %vm2119, %v2130, %v2132
    %v2134 = vshll.u32 %v2094, 8
    %v2135 = vmul.u32.u64.compose %v2134, %v2133
    %v2136 = vextract.low.u32 %v2135
    %v2137 = vextract.high.u32 %v2135
    %v2138 = vmul.u32.u64.compose %v2134, %v2129
    %v2139 = vextract.low.u32 %v2138
    %v2140 = vextract.high.u32 %v2138
    %v2141 = vmul.u32 %v2134, %v2125
    %v2142 = vadd.s32 %v2137, %v2139
    %vm2143 = vc.u32 %v2137, %v2139
    %v2144 = vadd.s32 %v2140, 1
    %v2145 = vsel %vm2143, %v2144, %v2140
    %v2146 = vadd.s32 %v2141, %v2145
    %v2147 = vadd.s32 %v2146, 536870912
    %v2148 = vshrl.u32 %v2147, 30
    %v2149 = vshll.u32 %v2148, 30
    %v2150 = vsub.s32 %v2146, %v2149
    %vm2151 = vcmp.lt.s32.totalorder %v2150, 0
    %v2152 = vsub.s32 0, %v2150
    %v2153 = vsel %vm2151, %v2152, %v2150
    %v2154 = vclz %v2153
    %v2155 = vsub.s32 %v2154, 2
    %vm2156 = vcmp.gt.s32.totalorder 0, %v2155
    %v2157 = vsel %vm2156, 0, %v2155
    %v2158 = vsub.s32 32, %v2157
    %v2159 = vshll.u32 %v2150, %v2157
    %v2160 = vshrl.u32 %v2142, %v2158
    %v2161 = vor.u32 %v2159, %v2160
    %v2162 = vsub.s32 4294967266, %v2157
    %v2163 = vadd.s32 %v2162, 127
    %v2164 = vshll.u32 %v2163, 23
    %v2165 = vor.u32 4788187, %v2164
    %v2166 = vand.u32 2147483647, %v2165
    %v2168 = vcvt.s32.f32 %v2161
    %v2169 = vmul.f32 %v2168, %v2166
    %v2170 = vxor.u32 %v2169, 2147483648
    %v2171 = vsel %vm2088, %v2170, %v2169
    %v2172 = vsub.s32 4, %v2148
    %v2173 = vsel %vm2088, %v2172, %v2148
    %v2174 = vsel %vm2087, %v2072, %v2171
    %v2175 = vsel %vm2087, 0, %v2173
    %v2176 = vcosq.f32.pop %v2174
    %v2177 = vsinq.f32.pop %v2174
    %vm2178 = vweird.f32 %v2072
    %v2179 = vadd.s32 %v2175, 3
    %v2180 = vand.u32 %v2179, 3
    %vm2181 = vcmp.lt.s32.totalorder %v2180, 2
    %vm2182 = vcmp.eq.s32.totalorder %v2180, 0
    %v2183 = vxor.u32 %v2177, 2147483648
    %v2184 = vsel %vm2182, %v2176, %v2183
    %vm2185 = vcmp.eq.s32.totalorder %v2180, 2
    %v2186 = vxor.u32 %v2176, 2147483648
    %v2187 = vsel %vm2185, %v2186, %v2177
    %v2188 = vsel %vm2181, %v2184, %v2187
    %v2189 = vsel %vm2178, nan, %v2188
    %v2190 = vand.u32 2147483647, %v2073
    %vm2191 = vcmp.le.f32.partialorder %v2190, 0.7853982
    %vm2192 = vcmp.lt.s32.totalorder %v2073, 0
    %v2193 = vand.u32 %v2073, 2139095040
    %v2194 = vshrl.u32 %v2193, 23
    %v2195 = vsub.s32 %v2194, 127
    %v2196 = vand.u32 2147483647, %v2073
    %v2197 = vand.u32 %v2196, 8388607
    %v2198 = vor.u32 %v2197, 8388608
    %v2199 = vsub.s32 0, %v2198
    %v2200 = vadd.s32 %v2195, 1
    %vm2201 = vcmp.gt.s32.totalorder %v2200, 0
    %v2202 = vsel %vm2201, %v2200, 0
    %v2203 = vshrl.u32 %v2202, 5
    %v2204 = vand.u32 %v2202, 31
    %v2205 = vsub.s32 32, %v2204
    %v2206 = vshrl.u32 683565275, %v2205
    %v2207 = vshll.u32 683565275, %v2204
    %v2208 = vshrl.u32 2475754826, %v2205
    %v2209 = vor.u32 %v2207, %v2208
    %v2210 = vshll.u32 2475754826, %v2204
    %v2211 = vshrl.u32 2131351028, %v2205
    %v2212 = vor.u32 %v2210, %v2211
    %v2213 = vshll.u32 2131351028, %v2204
    %v2214 = vshrl.u32 2102212464, %v2205
    %v2215 = vor.u32 %v2213, %v2214
    %v2216 = vshll.u32 2102212464, %v2204
    %v2217 = vshrl.u32 920167782, %v2205
    %v2218 = vor.u32 %v2216, %v2217
    %v2219 = vshll.u32 920167782, %v2204
    %v2220 = vshrl.u32 1326507024, %v2205
    %v2221 = vor.u32 %v2219, %v2220
    %vm2222 = vcmp.lt.s32.totalorder %v2203, 1
    %vm2223 = vcmp.lt.s32.totalorder %v2203, 2
    %vm2224 = vcmp.lt.s32.totalorder %v2203, 3
    %vm2225 = vcmp.lt.s32.totalorder %v2203, 4
    %v2226 = vsel %vm2222, %v2206, %v2209
    %v2227 = vsel %vm2225, %v2215, 2102212464
    %v2228 = vsel %vm2224, %v2212, %v2227
    %v2229 = vsel %vm2223, %v2226, %v2228
    %v2230 = vsel %vm2222, %v2209, %v2212
    %v2231 = vsel %vm2225, %v2218, 920167782
    %v2232 = vsel %vm2224, %v2215, %v2231
    %v2233 = vsel %vm2223, %v2230, %v2232
    %v2234 = vsel %vm2222, %v2212, %v2215
    %v2235 = vsel %vm2225, %v2221, 1326507024
    %v2236 = vsel %vm2224, %v2218, %v2235
    %v2237 = vsel %vm2223, %v2234, %v2236
    %v2238 = vshll.u32 %v2198, 8
    %v2239 = vmul.u32.u64.compose %v2238, %v2237
    %v2240 = vextract.low.u32 %v2239
    %v2241 = vextract.high.u32 %v2239
    %v2242 = vmul.u32.u64.compose %v2238, %v2233
    %v2243 = vextract.low.u32 %v2242
    %v2244 = vextract.high.u32 %v2242
    %v2245 = vmul.u32 %v2238, %v2229
    %v2246 = vadd.s32 %v2241, %v2243
    %vm2247 = vc.u32 %v2241, %v2243
    %v2248 = vadd.s32 %v2244, 1
    %v2249 = vsel %vm2247, %v2248, %v2244
    %v2250 = vadd.s32 %v2245, %v2249
    %v2251 = vadd.s32 %v2250, 536870912
    %v2252 = vshrl.u32 %v2251, 30
    %v2253 = vshll.u32 %v2252, 30
    %v2254 = vsub.s32 %v2250, %v2253
    %vm2255 = vcmp.lt.s32.totalorder %v2254, 0
    %v2256 = vsub.s32 0, %v2254
    %v2257 = vsel %vm2255, %v2256, %v2254
    %v2258 = vclz %v2257
    %v2259 = vsub.s32 %v2258, 2
    %vm2260 = vcmp.gt.s32.totalorder 0, %v2259
    %v2261 = vsel %vm2260, 0, %v2259
    %v2262 = vsub.s32 32, %v2261
    %v2263 = vshll.u32 %v2254, %v2261
    %v2264 = vshrl.u32 %v2246, %v2262
    %v2265 = vor.u32 %v2263, %v2264
    %v2266 = vsub.s32 4294967266, %v2261
    %v2267 = vadd.s32 %v2266, 127
    %v2268 = vshll.u32 %v2267, 23
    %v2269 = vor.u32 4788187, %v2268
    %v2270 = vand.u32 2147483647, %v2269
    %v2272 = vcvt.s32.f32 %v2265
    %v2273 = vmul.f32 %v2272, %v2270
    %v2274 = vxor.u32 %v2273, 2147483648
    %v2275 = vsel %vm2192, %v2274, %v2273
    %v2276 = vsub.s32 4, %v2252
    %v2277 = vsel %vm2192, %v2276, %v2252
    %v2278 = vsel %vm2191, %v2073, %v2275
    %v2279 = vsel %vm2191, 0, %v2277
    %v2280 = vcosq.f32.pop %v2278
    %v2281 = vsinq.f32.pop %v2278
    %vm2282 = vweird.f32 %v2073
    %v2283 = vadd.s32 %v2279, 3
    %v2284 = vand.u32 %v2283, 3
    %vm2285 = vcmp.lt.s32.totalorder %v2284, 2
    %vm2286 = vcmp.eq.s32.totalorder %v2284, 0
    %v2287 = vxor.u32 %v2281, 2147483648
    %v2288 = vsel %vm2286, %v2280, %v2287
    %vm2289 = vcmp.eq.s32.totalorder %v2284, 2
    %v2290 = vxor.u32 %v2280, 2147483648
    %v2291 = vsel %vm2289, %v2290, %v2281
    %v2292 = vsel %vm2285, %v2288, %v2291
    %v2293 = vsel %vm2282, nan, %v2292
    %v2294 = vand.u32 2147483647, %v2074
    %vm2295 = vcmp.le.f32.partialorder %v2294, 0.7853982
    %vm2296 = vcmp.lt.s32.totalorder %v2074, 0
    %v2297 = vand.u32 %v2074, 2139095040
    %v2298 = vshrl.u32 %v2297, 23
    %v2299 = vsub.s32 %v2298, 127
    %v2300 = vand.u32 2147483647, %v2074
    %v2301 = vand.u32 %v2300, 8388607
    %v2302 = vor.u32 %v2301, 8388608
    %v2303 = vsub.s32 0, %v2302
    %v2304 = vadd.s32 %v2299, 1
    %vm2305 = vcmp.gt.s32.totalorder %v2304, 0
    %v2306 = vsel %vm2305, %v2304, 0
    %v2307 = vshrl.u32 %v2306, 5
    %v2308 = vand.u32 %v2306, 31
    %v2309 = vsub.s32 32, %v2308
    %v2310 = vshrl.u32 683565275, %v2309
    %v2311 = vshll.u32 683565275, %v2308
    %v2312 = vshrl.u32 2475754826, %v2309
    %v2313 = vor.u32 %v2311, %v2312
    %v2314 = vshll.u32 2475754826, %v2308
    %v2315 = vshrl.u32 2131351028, %v2309
    %v2316 = vor.u32 %v2314, %v2315
    %v2317 = vshll.u32 2131351028, %v2308
    %v2318 = vshrl.u32 2102212464, %v2309
    %v2319 = vor.u32 %v2317, %v2318
    %v2320 = vshll.u32 2102212464, %v2308
    %v2321 = vshrl.u32 920167782, %v2309
    %v2322 = vor.u32 %v2320, %v2321
    %v2323 = vshll.u32 920167782, %v2308
    %v2324 = vshrl.u32 1326507024, %v2309
    %v2325 = vor.u32 %v2323, %v2324
    %vm2326 = vcmp.lt.s32.totalorder %v2307, 1
    %vm2327 = vcmp.lt.s32.totalorder %v2307, 2
    %vm2328 = vcmp.lt.s32.totalorder %v2307, 3
    %vm2329 = vcmp.lt.s32.totalorder %v2307, 4
    %v2330 = vsel %vm2326, %v2310, %v2313
    %v2331 = vsel %vm2329, %v2319, 2102212464
    %v2332 = vsel %vm2328, %v2316, %v2331
    %v2333 = vsel %vm2327, %v2330, %v2332
    %v2334 = vsel %vm2326, %v2313, %v2316
    %v2335 = vsel %vm2329, %v2322, 920167782
    %v2336 = vsel %vm2328, %v2319, %v2335
    %v2337 = vsel %vm2327, %v2334, %v2336
    %v2338 = vsel %vm2326, %v2316, %v2319
    %v2339 = vsel %vm2329, %v2325, 1326507024
    %v2340 = vsel %vm2328, %v2322, %v2339
    %v2341 = vsel %vm2327, %v2338, %v2340
    %v2342 = vshll.u32 %v2302, 8
    %v2343 = vmul.u32.u64.compose %v2342, %v2341
    %v2344 = vextract.low.u32 %v2343
    %v2345 = vextract.high.u32 %v2343
    %v2346 = vmul.u32.u64.compose %v2342, %v2337
    %v2347 = vextract.low.u32 %v2346
    %v2348 = vextract.high.u32 %v2346
    %v2349 = vmul.u32 %v2342, %v2333
    %v2350 = vadd.s32 %v2345, %v2347
    %vm2351 = vc.u32 %v2345, %v2347
    %v2352 = vadd.s32 %v2348, 1
    %v2353 = vsel %vm2351, %v2352, %v2348
    %v2354 = vadd.s32 %v2349, %v2353
    %v2355 = vadd.s32 %v2354, 536870912
    %v2356 = vshrl.u32 %v2355, 30
    %v2357 = vshll.u32 %v2356, 30
    %v2358 = vsub.s32 %v2354, %v2357
    %vm2359 = vcmp.lt.s32.totalorder %v2358, 0
    %v2360 = vsub.s32 0, %v2358
    %v2361 = vsel %vm2359, %v2360, %v2358
    %v2362 = vclz %v2361
    %v2363 = vsub.s32 %v2362, 2
    %vm2364 = vcmp.gt.s32.totalorder 0, %v2363
    %v2365 = vsel %vm2364, 0, %v2363
    %v2366 = vsub.s32 32, %v2365
    %v2367 = vshll.u32 %v2358, %v2365
    %v2368 = vshrl.u32 %v2350, %v2366
    %v2369 = vor.u32 %v2367, %v2368
    %v2370 = vsub.s32 4294967266, %v2365
    %v2371 = vadd.s32 %v2370, 127
    %v2372 = vshll.u32 %v2371, 23
    %v2373 = vor.u32 4788187, %v2372
    %v2374 = vand.u32 2147483647, %v2373
    %v2376 = vcvt.s32.f32 %v2369
    %v2377 = vmul.f32 %v2376, %v2374
    %v2378 = vxor.u32 %v2377, 2147483648
    %v2379 = vsel %vm2296, %v2378, %v2377
    %v2380 = vsub.s32 4, %v2356
    %v2381 = vsel %vm2296, %v2380, %v2356
    %v2382 = vsel %vm2295, %v2074, %v2379
    %v2383 = vsel %vm2295, 0, %v2381
    %v2384 = vcosq.f32.pop %v2382
    %v2385 = vsinq.f32.pop %v2382
    %vm2386 = vweird.f32 %v2074
    %v2387 = vadd.s32 %v2383, 3
    %v2388 = vand.u32 %v2387, 3
    %vm2389 = vcmp.lt.s32.totalorder %v2388, 2
    %vm2390 = vcmp.eq.s32.totalorder %v2388, 0
    %v2391 = vxor.u32 %v2385, 2147483648
    %v2392 = vsel %vm2390, %v2384, %v2391
    %vm2393 = vcmp.eq.s32.totalorder %v2388, 2
    %v2394 = vxor.u32 %v2384, 2147483648
    %v2395 = vsel %vm2393, %v2394, %v2385
    %v2396 = vsel %vm2389, %v2392, %v2395
    %v2397 = vsel %vm2386, nan, %v2396
    %v2398 = vand.u32 2147483647, %v2075
    %vm2399 = vcmp.le.f32.partialorder %v2398, 0.7853982
    %vm2400 = vcmp.lt.s32.totalorder %v2075, 0
    %v2401 = vand.u32 %v2075, 2139095040
    %v2402 = vshrl.u32 %v2401, 23
    %v2403 = vsub.s32 %v2402, 127
    %v2404 = vand.u32 2147483647, %v2075
    %v2405 = vand.u32 %v2404, 8388607
    %v2406 = vor.u32 %v2405, 8388608
    %v2407 = vsub.s32 0, %v2406
    %v2408 = vadd.s32 %v2403, 1
    %vm2409 = vcmp.gt.s32.totalorder %v2408, 0
    %v2410 = vsel %vm2409, %v2408, 0
    %v2411 = vshrl.u32 %v2410, 5
    %v2412 = vand.u32 %v2410, 31
    %v2413 = vsub.s32 32, %v2412
    %v2414 = vshrl.u32 683565275, %v2413
    %v2415 = vshll.u32 683565275, %v2412
    %v2416 = vshrl.u32 2475754826, %v2413
    %v2417 = vor.u32 %v2415, %v2416
    %v2418 = vshll.u32 2475754826, %v2412
    %v2419 = vshrl.u32 2131351028, %v2413
    %v2420 = vor.u32 %v2418, %v2419
    %v2421 = vshll.u32 2131351028, %v2412
    %v2422 = vshrl.u32 2102212464, %v2413
    %v2423 = vor.u32 %v2421, %v2422
    %v2424 = vshll.u32 2102212464, %v2412
    %v2425 = vshrl.u32 920167782, %v2413
    %v2426 = vor.u32 %v2424, %v2425
    %v2427 = vshll.u32 920167782, %v2412
    %v2428 = vshrl.u32 1326507024, %v2413
    %v2429 = vor.u32 %v2427, %v2428
    %vm2430 = vcmp.lt.s32.totalorder %v2411, 1
    %vm2431 = vcmp.lt.s32.totalorder %v2411, 2
    %vm2432 = vcmp.lt.s32.totalorder %v2411, 3
    %vm2433 = vcmp.lt.s32.totalorder %v2411, 4
    %v2434 = vsel %vm2430, %v2414, %v2417
    %v2435 = vsel %vm2433, %v2423, 2102212464
    %v2436 = vsel %vm2432, %v2420, %v2435
    %v2437 = vsel %vm2431, %v2434, %v2436
    %v2438 = vsel %vm2430, %v2417, %v2420
    %v2439 = vsel %vm2433, %v2426, 920167782
    %v2440 = vsel %vm2432, %v2423, %v2439
    %v2441 = vsel %vm2431, %v2438, %v2440
    %v2442 = vsel %vm2430, %v2420, %v2423
    %v2443 = vsel %vm2433, %v2429, 1326507024
    %v2444 = vsel %vm2432, %v2426, %v2443
    %v2445 = vsel %vm2431, %v2442, %v2444
    %v2446 = vshll.u32 %v2406, 8
    %v2447 = vmul.u32.u64.compose %v2446, %v2445
    %v2448 = vextract.low.u32 %v2447
    %v2449 = vextract.high.u32 %v2447
    %v2450 = vmul.u32.u64.compose %v2446, %v2441
    %v2451 = vextract.low.u32 %v2450
    %v2452 = vextract.high.u32 %v2450
    %v2453 = vmul.u32 %v2446, %v2437
    %v2454 = vadd.s32 %v2449, %v2451
    %vm2455 = vc.u32 %v2449, %v2451
    %v2456 = vadd.s32 %v2452, 1
    %v2457 = vsel %vm2455, %v2456, %v2452
    %v2458 = vadd.s32 %v2453, %v2457
    %v2459 = vadd.s32 %v2458, 536870912
    %v2460 = vshrl.u32 %v2459, 30
    %v2461 = vshll.u32 %v2460, 30
    %v2462 = vsub.s32 %v2458, %v2461
    %vm2463 = vcmp.lt.s32.totalorder %v2462, 0
    %v2464 = vsub.s32 0, %v2462
    %v2465 = vsel %vm2463, %v2464, %v2462
    %v2466 = vclz %v2465
    %v2467 = vsub.s32 %v2466, 2
    %vm2468 = vcmp.gt.s32.totalorder 0, %v2467
    %v2469 = vsel %vm2468, 0, %v2467
    %v2470 = vsub.s32 32, %v2469
    %v2471 = vshll.u32 %v2462, %v2469
    %v2472 = vshrl.u32 %v2454, %v2470
    %v2473 = vor.u32 %v2471, %v2472
    %v2474 = vsub.s32 4294967266, %v2469
    %v2475 = vadd.s32 %v2474, 127
    %v2476 = vshll.u32 %v2475, 23
    %v2477 = vor.u32 4788187, %v2476
    %v2478 = vand.u32 2147483647, %v2477
    %v2480 = vcvt.s32.f32 %v2473
    %v2481 = vmul.f32 %v2480, %v2478
    %v2482 = vxor.u32 %v2481, 2147483648
    %v2483 = vsel %vm2400, %v2482, %v2481
    %v2484 = vsub.s32 4, %v2460
    %v2485 = vsel %vm2400, %v2484, %v2460
    %v2486 = vsel %vm2399, %v2075, %v2483
    %v2487 = vsel %vm2399, 0, %v2485
    %v2488 = vcosq.f32.pop %v2486
    %v2489 = vsinq.f32.pop %v2486
    %vm2490 = vweird.f32 %v2075
    %v2491 = vadd.s32 %v2487, 3
    %v2492 = vand.u32 %v2491, 3
    %vm2493 = vcmp.lt.s32.totalorder %v2492, 2
    %vm2494 = vcmp.eq.s32.totalorder %v2492, 0
    %v2495 = vxor.u32 %v2489, 2147483648
    %v2496 = vsel %vm2494, %v2488, %v2495
    %vm2497 = vcmp.eq.s32.totalorder %v2492, 2
    %v2498 = vxor.u32 %v2488, 2147483648
    %v2499 = vsel %vm2497, %v2498, %v2489
    %v2500 = vsel %vm2493, %v2496, %v2499
    %v2501 = vsel %vm2490, nan, %v2500
    %v2502 = vand.u32 2147483647, %v2076
    %vm2503 = vcmp.le.f32.partialorder %v2502, 0.7853982
    %vm2504 = vcmp.lt.s32.totalorder %v2076, 0
    %v2505 = vand.u32 %v2076, 2139095040
    %v2506 = vshrl.u32 %v2505, 23
    %v2507 = vsub.s32 %v2506, 127
    %v2508 = vand.u32 2147483647, %v2076
    %v2509 = vand.u32 %v2508, 8388607
    %v2510 = vor.u32 %v2509, 8388608
    %v2511 = vsub.s32 0, %v2510
    %v2512 = vadd.s32 %v2507, 1
    %vm2513 = vcmp.gt.s32.totalorder %v2512, 0
    %v2514 = vsel %vm2513, %v2512, 0
    %v2515 = vshrl.u32 %v2514, 5
    %v2516 = vand.u32 %v2514, 31
    %v2517 = vsub.s32 32, %v2516
    %v2518 = vshrl.u32 683565275, %v2517
    %v2519 = vshll.u32 683565275, %v2516
    %v2520 = vshrl.u32 2475754826, %v2517
    %v2521 = vor.u32 %v2519, %v2520
    %v2522 = vshll.u32 2475754826, %v2516
    %v2523 = vshrl.u32 2131351028, %v2517
    %v2524 = vor.u32 %v2522, %v2523
    %v2525 = vshll.u32 2131351028, %v2516
    %v2526 = vshrl.u32 2102212464, %v2517
    %v2527 = vor.u32 %v2525, %v2526
    %v2528 = vshll.u32 2102212464, %v2516
    %v2529 = vshrl.u32 920167782, %v2517
    %v2530 = vor.u32 %v2528, %v2529
    %v2531 = vshll.u32 920167782, %v2516
    %v2532 = vshrl.u32 1326507024, %v2517
    %v2533 = vor.u32 %v2531, %v2532
    %vm2534 = vcmp.lt.s32.totalorder %v2515, 1
    %vm2535 = vcmp.lt.s32.totalorder %v2515, 2
    %vm2536 = vcmp.lt.s32.totalorder %v2515, 3
    %vm2537 = vcmp.lt.s32.totalorder %v2515, 4
    %v2538 = vsel %vm2534, %v2518, %v2521
    %v2539 = vsel %vm2537, %v2527, 2102212464
    %v2540 = vsel %vm2536, %v2524, %v2539
    %v2541 = vsel %vm2535, %v2538, %v2540
    %v2542 = vsel %vm2534, %v2521, %v2524
    %v2543 = vsel %vm2537, %v2530, 920167782
    %v2544 = vsel %vm2536, %v2527, %v2543
    %v2545 = vsel %vm2535, %v2542, %v2544
    %v2546 = vsel %vm2534, %v2524, %v2527
    %v2547 = vsel %vm2537, %v2533, 1326507024
    %v2548 = vsel %vm2536, %v2530, %v2547
    %v2549 = vsel %vm2535, %v2546, %v2548
    %v2550 = vshll.u32 %v2510, 8
    %v2551 = vmul.u32.u64.compose %v2550, %v2549
    %v2552 = vextract.low.u32 %v2551
    %v2553 = vextract.high.u32 %v2551
    %v2554 = vmul.u32.u64.compose %v2550, %v2545
    %v2555 = vextract.low.u32 %v2554
    %v2556 = vextract.high.u32 %v2554
    %v2557 = vmul.u32 %v2550, %v2541
    %v2558 = vadd.s32 %v2553, %v2555
    %vm2559 = vc.u32 %v2553, %v2555
    %v2560 = vadd.s32 %v2556, 1
    %v2561 = vsel %vm2559, %v2560, %v2556
    %v2562 = vadd.s32 %v2557, %v2561
    %v2563 = vadd.s32 %v2562, 536870912
    %v2564 = vshrl.u32 %v2563, 30
    %v2565 = vshll.u32 %v2564, 30
    %v2566 = vsub.s32 %v2562, %v2565
    %vm2567 = vcmp.lt.s32.totalorder %v2566, 0
    %v2568 = vsub.s32 0, %v2566
    %v2569 = vsel %vm2567, %v2568, %v2566
    %v2570 = vclz %v2569
    %v2571 = vsub.s32 %v2570, 2
    %vm2572 = vcmp.gt.s32.totalorder 0, %v2571
    %v2573 = vsel %vm2572, 0, %v2571
    %v2574 = vsub.s32 32, %v2573
    %v2575 = vshll.u32 %v2566, %v2573
    %v2576 = vshrl.u32 %v2558, %v2574
    %v2577 = vor.u32 %v2575, %v2576
    %v2578 = vsub.s32 4294967266, %v2573
    %v2579 = vadd.s32 %v2578, 127
    %v2580 = vshll.u32 %v2579, 23
    %v2581 = vor.u32 4788187, %v2580
    %v2582 = vand.u32 2147483647, %v2581
    %v2584 = vcvt.s32.f32 %v2577
    %v2585 = vmul.f32 %v2584, %v2582
    %v2586 = vxor.u32 %v2585, 2147483648
    %v2587 = vsel %vm2504, %v2586, %v2585
    %v2588 = vsub.s32 4, %v2564
    %v2589 = vsel %vm2504, %v2588, %v2564
    %v2590 = vsel %vm2503, %v2076, %v2587
    %v2591 = vsel %vm2503, 0, %v2589
    %v2592 = vcosq.f32.pop %v2590
    %v2593 = vsinq.f32.pop %v2590
    %vm2594 = vweird.f32 %v2076
    %v2595 = vadd.s32 %v2591, 3
    %v2596 = vand.u32 %v2595, 3
    %vm2597 = vcmp.lt.s32.totalorder %v2596, 2
    %vm2598 = vcmp.eq.s32.totalorder %v2596, 0
    %v2599 = vxor.u32 %v2593, 2147483648
    %v2600 = vsel %vm2598, %v2592, %v2599
    %vm2601 = vcmp.eq.s32.totalorder %v2596, 2
    %v2602 = vxor.u32 %v2592, 2147483648
    %v2603 = vsel %vm2601, %v2602, %v2593
    %v2604 = vsel %vm2597, %v2600, %v2603
    %v2605 = vsel %vm2594, nan, %v2604
    %v2606 = vand.u32 2147483647, %v2077
    %vm2607 = vcmp.le.f32.partialorder %v2606, 0.7853982
    %vm2608 = vcmp.lt.s32.totalorder %v2077, 0
    %v2609 = vand.u32 %v2077, 2139095040
    %v2610 = vshrl.u32 %v2609, 23
    %v2611 = vsub.s32 %v2610, 127
    %v2612 = vand.u32 2147483647, %v2077
    %v2613 = vand.u32 %v2612, 8388607
    %v2614 = vor.u32 %v2613, 8388608
    %v2615 = vsub.s32 0, %v2614
    %v2616 = vadd.s32 %v2611, 1
    %vm2617 = vcmp.gt.s32.totalorder %v2616, 0
    %v2618 = vsel %vm2617, %v2616, 0
    %v2619 = vshrl.u32 %v2618, 5
    %v2620 = vand.u32 %v2618, 31
    %v2621 = vsub.s32 32, %v2620
    %v2622 = vshrl.u32 683565275, %v2621
    %v2623 = vshll.u32 683565275, %v2620
    %v2624 = vshrl.u32 2475754826, %v2621
    %v2625 = vor.u32 %v2623, %v2624
    %v2626 = vshll.u32 2475754826, %v2620
    %v2627 = vshrl.u32 2131351028, %v2621
    %v2628 = vor.u32 %v2626, %v2627
    %v2629 = vshll.u32 2131351028, %v2620
    %v2630 = vshrl.u32 2102212464, %v2621
    %v2631 = vor.u32 %v2629, %v2630
    %v2632 = vshll.u32 2102212464, %v2620
    %v2633 = vshrl.u32 920167782, %v2621
    %v2634 = vor.u32 %v2632, %v2633
    %v2635 = vshll.u32 920167782, %v2620
    %v2636 = vshrl.u32 1326507024, %v2621
    %v2637 = vor.u32 %v2635, %v2636
    %vm2638 = vcmp.lt.s32.totalorder %v2619, 1
    %vm2639 = vcmp.lt.s32.totalorder %v2619, 2
    %vm2640 = vcmp.lt.s32.totalorder %v2619, 3
    %vm2641 = vcmp.lt.s32.totalorder %v2619, 4
    %v2642 = vsel %vm2638, %v2622, %v2625
    %v2643 = vsel %vm2641, %v2631, 2102212464
    %v2644 = vsel %vm2640, %v2628, %v2643
    %v2645 = vsel %vm2639, %v2642, %v2644
    %v2646 = vsel %vm2638, %v2625, %v2628
    %v2647 = vsel %vm2641, %v2634, 920167782
    %v2648 = vsel %vm2640, %v2631, %v2647
    %v2649 = vsel %vm2639, %v2646, %v2648
    %v2650 = vsel %vm2638, %v2628, %v2631
    %v2651 = vsel %vm2641, %v2637, 1326507024
    %v2652 = vsel %vm2640, %v2634, %v2651
    %v2653 = vsel %vm2639, %v2650, %v2652
    %v2654 = vshll.u32 %v2614, 8
    %v2655 = vmul.u32.u64.compose %v2654, %v2653
    %v2656 = vextract.low.u32 %v2655
    %v2657 = vextract.high.u32 %v2655
    %v2658 = vmul.u32.u64.compose %v2654, %v2649
    %v2659 = vextract.low.u32 %v2658
    %v2660 = vextract.high.u32 %v2658
    %v2661 = vmul.u32 %v2654, %v2645
    %v2662 = vadd.s32 %v2657, %v2659
    %vm2663 = vc.u32 %v2657, %v2659
    %v2664 = vadd.s32 %v2660, 1
    %v2665 = vsel %vm2663, %v2664, %v2660
    %v2666 = vadd.s32 %v2661, %v2665
    %v2667 = vadd.s32 %v2666, 536870912
    %v2668 = vshrl.u32 %v2667, 30
    %v2669 = vshll.u32 %v2668, 30
    %v2670 = vsub.s32 %v2666, %v2669
    %vm2671 = vcmp.lt.s32.totalorder %v2670, 0
    %v2672 = vsub.s32 0, %v2670
    %v2673 = vsel %vm2671, %v2672, %v2670
    %v2674 = vclz %v2673
    %v2675 = vsub.s32 %v2674, 2
    %vm2676 = vcmp.gt.s32.totalorder 0, %v2675
    %v2677 = vsel %vm2676, 0, %v2675
    %v2678 = vsub.s32 32, %v2677
    %v2679 = vshll.u32 %v2670, %v2677
    %v2680 = vshrl.u32 %v2662, %v2678
    %v2681 = vor.u32 %v2679, %v2680
    %v2682 = vsub.s32 4294967266, %v2677
    %v2683 = vadd.s32 %v2682, 127
    %v2684 = vshll.u32 %v2683, 23
    %v2685 = vor.u32 4788187, %v2684
    %v2686 = vand.u32 2147483647, %v2685
    %v2688 = vcvt.s32.f32 %v2681
    %v2689 = vmul.f32 %v2688, %v2686
    %v2690 = vxor.u32 %v2689, 2147483648
    %v2691 = vsel %vm2608, %v2690, %v2689
    %v2692 = vsub.s32 4, %v2668
    %v2693 = vsel %vm2608, %v2692, %v2668
    %v2694 = vsel %vm2607, %v2077, %v2691
    %v2695 = vsel %vm2607, 0, %v2693
    %v2696 = vcosq.f32.pop %v2694
    %v2697 = vsinq.f32.pop %v2694
    %vm2698 = vweird.f32 %v2077
    %v2699 = vadd.s32 %v2695, 3
    %v2700 = vand.u32 %v2699, 3
    %vm2701 = vcmp.lt.s32.totalorder %v2700, 2
    %vm2702 = vcmp.eq.s32.totalorder %v2700, 0
    %v2703 = vxor.u32 %v2697, 2147483648
    %v2704 = vsel %vm2702, %v2696, %v2703
    %vm2705 = vcmp.eq.s32.totalorder %v2700, 2
    %v2706 = vxor.u32 %v2696, 2147483648
    %v2707 = vsel %vm2705, %v2706, %v2697
    %v2708 = vsel %vm2701, %v2704, %v2707
    %v2709 = vsel %vm2698, nan, %v2708
    %v2710 = vand.u32 2147483647, %v2078
    %vm2711 = vcmp.le.f32.partialorder %v2710, 0.7853982
    %vm2712 = vcmp.lt.s32.totalorder %v2078, 0
    %v2713 = vand.u32 %v2078, 2139095040
    %v2714 = vshrl.u32 %v2713, 23
    %v2715 = vsub.s32 %v2714, 127
    %v2716 = vand.u32 2147483647, %v2078
    %v2717 = vand.u32 %v2716, 8388607
    %v2718 = vor.u32 %v2717, 8388608
    %v2719 = vsub.s32 0, %v2718
    %v2720 = vadd.s32 %v2715, 1
    %vm2721 = vcmp.gt.s32.totalorder %v2720, 0
    %v2722 = vsel %vm2721, %v2720, 0
    %v2723 = vshrl.u32 %v2722, 5
    %v2724 = vand.u32 %v2722, 31
    %v2725 = vsub.s32 32, %v2724
    %v2726 = vshrl.u32 683565275, %v2725
    %v2727 = vshll.u32 683565275, %v2724
    %v2728 = vshrl.u32 2475754826, %v2725
    %v2729 = vor.u32 %v2727, %v2728
    %v2730 = vshll.u32 2475754826, %v2724
    %v2731 = vshrl.u32 2131351028, %v2725
    %v2732 = vor.u32 %v2730, %v2731
    %v2733 = vshll.u32 2131351028, %v2724
    %v2734 = vshrl.u32 2102212464, %v2725
    %v2735 = vor.u32 %v2733, %v2734
    %v2736 = vshll.u32 2102212464, %v2724
    %v2737 = vshrl.u32 920167782, %v2725
    %v2738 = vor.u32 %v2736, %v2737
    %v2739 = vshll.u32 920167782, %v2724
    %v2740 = vshrl.u32 1326507024, %v2725
    %v2741 = vor.u32 %v2739, %v2740
    %vm2742 = vcmp.lt.s32.totalorder %v2723, 1
    %vm2743 = vcmp.lt.s32.totalorder %v2723, 2
    %vm2744 = vcmp.lt.s32.totalorder %v2723, 3
    %vm2745 = vcmp.lt.s32.totalorder %v2723, 4
    %v2746 = vsel %vm2742, %v2726, %v2729
    %v2747 = vsel %vm2745, %v2735, 2102212464
    %v2748 = vsel %vm2744, %v2732, %v2747
    %v2749 = vsel %vm2743, %v2746, %v2748
    %v2750 = vsel %vm2742, %v2729, %v2732
    %v2751 = vsel %vm2745, %v2738, 920167782
    %v2752 = vsel %vm2744, %v2735, %v2751
    %v2753 = vsel %vm2743, %v2750, %v2752
    %v2754 = vsel %vm2742, %v2732, %v2735
    %v2755 = vsel %vm2745, %v2741, 1326507024
    %v2756 = vsel %vm2744, %v2738, %v2755
    %v2757 = vsel %vm2743, %v2754, %v2756
    %v2758 = vshll.u32 %v2718, 8
    %v2759 = vmul.u32.u64.compose %v2758, %v2757
    %v2760 = vextract.low.u32 %v2759
    %v2761 = vextract.high.u32 %v2759
    %v2762 = vmul.u32.u64.compose %v2758, %v2753
    %v2763 = vextract.low.u32 %v2762
    %v2764 = vextract.high.u32 %v2762
    %v2765 = vmul.u32 %v2758, %v2749
    %v2766 = vadd.s32 %v2761, %v2763
    %vm2767 = vc.u32 %v2761, %v2763
    %v2768 = vadd.s32 %v2764, 1
    %v2769 = vsel %vm2767, %v2768, %v2764
    %v2770 = vadd.s32 %v2765, %v2769
    %v2771 = vadd.s32 %v2770, 536870912
    %v2772 = vshrl.u32 %v2771, 30
    %v2773 = vshll.u32 %v2772, 30
    %v2774 = vsub.s32 %v2770, %v2773
    %vm2775 = vcmp.lt.s32.totalorder %v2774, 0
    %v2776 = vsub.s32 0, %v2774
    %v2777 = vsel %vm2775, %v2776, %v2774
    %v2778 = vclz %v2777
    %v2779 = vsub.s32 %v2778, 2
    %vm2780 = vcmp.gt.s32.totalorder 0, %v2779
    %v2781 = vsel %vm2780, 0, %v2779
    %v2782 = vsub.s32 32, %v2781
    %v2783 = vshll.u32 %v2774, %v2781
    %v2784 = vshrl.u32 %v2766, %v2782
    %v2785 = vor.u32 %v2783, %v2784
    %v2786 = vsub.s32 4294967266, %v2781
    %v2787 = vadd.s32 %v2786, 127
    %v2788 = vshll.u32 %v2787, 23
    %v2789 = vor.u32 4788187, %v2788
    %v2790 = vand.u32 2147483647, %v2789
    %v2792 = vcvt.s32.f32 %v2785
    %v2793 = vmul.f32 %v2792, %v2790
    %v2794 = vxor.u32 %v2793, 2147483648
    %v2795 = vsel %vm2712, %v2794, %v2793
    %v2796 = vsub.s32 4, %v2772
    %v2797 = vsel %vm2712, %v2796, %v2772
    %v2798 = vsel %vm2711, %v2078, %v2795
    %v2799 = vsel %vm2711, 0, %v2797
    %v2800 = vcosq.f32.pop %v2798
    %v2801 = vsinq.f32.pop %v2798
    %vm2802 = vweird.f32 %v2078
    %v2803 = vadd.s32 %v2799, 3
    %v2804 = vand.u32 %v2803, 3
    %vm2805 = vcmp.lt.s32.totalorder %v2804, 2
    %vm2806 = vcmp.eq.s32.totalorder %v2804, 0
    %v2807 = vxor.u32 %v2801, 2147483648
    %v2808 = vsel %vm2806, %v2800, %v2807
    %vm2809 = vcmp.eq.s32.totalorder %v2804, 2
    %v2810 = vxor.u32 %v2800, 2147483648
    %v2811 = vsel %vm2809, %v2810, %v2801
    %v2812 = vsel %vm2805, %v2808, %v2811
    %v2813 = vsel %vm2802, nan, %v2812
    %v2814 = vand.u32 2147483647, %v2079
    %vm2815 = vcmp.le.f32.partialorder %v2814, 0.7853982
    %vm2816 = vcmp.lt.s32.totalorder %v2079, 0
    %v2817 = vand.u32 %v2079, 2139095040
    %v2818 = vshrl.u32 %v2817, 23
    %v2819 = vsub.s32 %v2818, 127
    %v2820 = vand.u32 2147483647, %v2079
    %v2821 = vand.u32 %v2820, 8388607
    %v2822 = vor.u32 %v2821, 8388608
    %v2823 = vsub.s32 0, %v2822
    %v2824 = vadd.s32 %v2819, 1
    %vm2825 = vcmp.gt.s32.totalorder %v2824, 0
    %v2826 = vsel %vm2825, %v2824, 0
    %v2827 = vshrl.u32 %v2826, 5
    %v2828 = vand.u32 %v2826, 31
    %v2829 = vsub.s32 32, %v2828
    %v2830 = vshrl.u32 683565275, %v2829
    %v2831 = vshll.u32 683565275, %v2828
    %v2832 = vshrl.u32 2475754826, %v2829
    %v2833 = vor.u32 %v2831, %v2832
    %v2834 = vshll.u32 2475754826, %v2828
    %v2835 = vshrl.u32 2131351028, %v2829
    %v2836 = vor.u32 %v2834, %v2835
    %v2837 = vshll.u32 2131351028, %v2828
    %v2838 = vshrl.u32 2102212464, %v2829
    %v2839 = vor.u32 %v2837, %v2838
    %v2840 = vshll.u32 2102212464, %v2828
    %v2841 = vshrl.u32 920167782, %v2829
    %v2842 = vor.u32 %v2840, %v2841
    %v2843 = vshll.u32 920167782, %v2828
    %v2844 = vshrl.u32 1326507024, %v2829
    %v2845 = vor.u32 %v2843, %v2844
    %vm2846 = vcmp.lt.s32.totalorder %v2827, 1
    %vm2847 = vcmp.lt.s32.totalorder %v2827, 2
    %vm2848 = vcmp.lt.s32.totalorder %v2827, 3
    %vm2849 = vcmp.lt.s32.totalorder %v2827, 4
    %v2850 = vsel %vm2846, %v2830, %v2833
    %v2851 = vsel %vm2849, %v2839, 2102212464
    %v2852 = vsel %vm2848, %v2836, %v2851
    %v2853 = vsel %vm2847, %v2850, %v2852
    %v2854 = vsel %vm2846, %v2833, %v2836
    %v2855 = vsel %vm2849, %v2842, 920167782
    %v2856 = vsel %vm2848, %v2839, %v2855
    %v2857 = vsel %vm2847, %v2854, %v2856
    %v2858 = vsel %vm2846, %v2836, %v2839
    %v2859 = vsel %vm2849, %v2845, 1326507024
    %v2860 = vsel %vm2848, %v2842, %v2859
    %v2861 = vsel %vm2847, %v2858, %v2860
    %v2862 = vshll.u32 %v2822, 8
    %v2863 = vmul.u32.u64.compose %v2862, %v2861
    %v2864 = vextract.low.u32 %v2863
    %v2865 = vextract.high.u32 %v2863
    %v2866 = vmul.u32.u64.compose %v2862, %v2857
    %v2867 = vextract.low.u32 %v2866
    %v2868 = vextract.high.u32 %v2866
    %v2869 = vmul.u32 %v2862, %v2853
    %v2870 = vadd.s32 %v2865, %v2867
    %vm2871 = vc.u32 %v2865, %v2867
    %v2872 = vadd.s32 %v2868, 1
    %v2873 = vsel %vm2871, %v2872, %v2868
    %v2874 = vadd.s32 %v2869, %v2873
    %v2875 = vadd.s32 %v2874, 536870912
    %v2876 = vshrl.u32 %v2875, 30
    %v2877 = vshll.u32 %v2876, 30
    %v2878 = vsub.s32 %v2874, %v2877
    %vm2879 = vcmp.lt.s32.totalorder %v2878, 0
    %v2880 = vsub.s32 0, %v2878
    %v2881 = vsel %vm2879, %v2880, %v2878
    %v2882 = vclz %v2881
    %v2883 = vsub.s32 %v2882, 2
    %vm2884 = vcmp.gt.s32.totalorder 0, %v2883
    %v2885 = vsel %vm2884, 0, %v2883
    %v2886 = vsub.s32 32, %v2885
    %v2887 = vshll.u32 %v2878, %v2885
    %v2888 = vshrl.u32 %v2870, %v2886
    %v2889 = vor.u32 %v2887, %v2888
    %v2890 = vsub.s32 4294967266, %v2885
    %v2891 = vadd.s32 %v2890, 127
    %v2892 = vshll.u32 %v2891, 23
    %v2893 = vor.u32 4788187, %v2892
    %v2894 = vand.u32 2147483647, %v2893
    %v2896 = vcvt.s32.f32 %v2889
    %v2897 = vmul.f32 %v2896, %v2894
    %v2898 = vxor.u32 %v2897, 2147483648
    %v2899 = vsel %vm2816, %v2898, %v2897
    %v2900 = vsub.s32 4, %v2876
    %v2901 = vsel %vm2816, %v2900, %v2876
    %v2902 = vsel %vm2815, %v2079, %v2899
    %v2903 = vsel %vm2815, 0, %v2901
    %v2904 = vcosq.f32.pop %v2902
    %v2905 = vsinq.f32.pop %v2902
    %vm2906 = vweird.f32 %v2079
    %v2907 = vadd.s32 %v2903, 3
    %v2908 = vand.u32 %v2907, 3
    %vm2909 = vcmp.lt.s32.totalorder %v2908, 2
    %vm2910 = vcmp.eq.s32.totalorder %v2908, 0
    %v2911 = vxor.u32 %v2905, 2147483648
    %v2912 = vsel %vm2910, %v2904, %v2911
    %vm2913 = vcmp.eq.s32.totalorder %v2908, 2
    %v2914 = vxor.u32 %v2904, 2147483648
    %v2915 = vsel %vm2913, %v2914, %v2905
    %v2916 = vsel %vm2909, %v2912, %v2915
    %v2917 = vsel %vm2906, nan, %v2916
    %v2918 = vand.u32 2147483647, %v2080
    %vm2919 = vcmp.le.f32.partialorder %v2918, 0.7853982
    %vm2920 = vcmp.lt.s32.totalorder %v2080, 0
    %v2921 = vand.u32 %v2080, 2139095040
    %v2922 = vshrl.u32 %v2921, 23
    %v2923 = vsub.s32 %v2922, 127
    %v2924 = vand.u32 2147483647, %v2080
    %v2925 = vand.u32 %v2924, 8388607
    %v2926 = vor.u32 %v2925, 8388608
    %v2927 = vsub.s32 0, %v2926
    %v2928 = vadd.s32 %v2923, 1
    %vm2929 = vcmp.gt.s32.totalorder %v2928, 0
    %v2930 = vsel %vm2929, %v2928, 0
    %v2931 = vshrl.u32 %v2930, 5
    %v2932 = vand.u32 %v2930, 31
    %v2933 = vsub.s32 32, %v2932
    %v2934 = vshrl.u32 683565275, %v2933
    %v2935 = vshll.u32 683565275, %v2932
    %v2936 = vshrl.u32 2475754826, %v2933
    %v2937 = vor.u32 %v2935, %v2936
    %v2938 = vshll.u32 2475754826, %v2932
    %v2939 = vshrl.u32 2131351028, %v2933
    %v2940 = vor.u32 %v2938, %v2939
    %v2941 = vshll.u32 2131351028, %v2932
    %v2942 = vshrl.u32 2102212464, %v2933
    %v2943 = vor.u32 %v2941, %v2942
    %v2944 = vshll.u32 2102212464, %v2932
    %v2945 = vshrl.u32 920167782, %v2933
    %v2946 = vor.u32 %v2944, %v2945
    %v2947 = vshll.u32 920167782, %v2932
    %v2948 = vshrl.u32 1326507024, %v2933
    %v2949 = vor.u32 %v2947, %v2948
    %vm2950 = vcmp.lt.s32.totalorder %v2931, 1
    %vm2951 = vcmp.lt.s32.totalorder %v2931, 2
    %vm2952 = vcmp.lt.s32.totalorder %v2931, 3
    %vm2953 = vcmp.lt.s32.totalorder %v2931, 4
    %v2954 = vsel %vm2950, %v2934, %v2937
    %v2955 = vsel %vm2953, %v2943, 2102212464
    %v2956 = vsel %vm2952, %v2940, %v2955
    %v2957 = vsel %vm2951, %v2954, %v2956
    %v2958 = vsel %vm2950, %v2937, %v2940
    %v2959 = vsel %vm2953, %v2946, 920167782
    %v2960 = vsel %vm2952, %v2943, %v2959
    %v2961 = vsel %vm2951, %v2958, %v2960
    %v2962 = vsel %vm2950, %v2940, %v2943
    %v2963 = vsel %vm2953, %v2949, 1326507024
    %v2964 = vsel %vm2952, %v2946, %v2963
    %v2965 = vsel %vm2951, %v2962, %v2964
    %v2966 = vshll.u32 %v2926, 8
    %v2967 = vmul.u32.u64.compose %v2966, %v2965
    %v2968 = vextract.low.u32 %v2967
    %v2969 = vextract.high.u32 %v2967
    %v2970 = vmul.u32.u64.compose %v2966, %v2961
    %v2971 = vextract.low.u32 %v2970
    %v2972 = vextract.high.u32 %v2970
    %v2973 = vmul.u32 %v2966, %v2957
    %v2974 = vadd.s32 %v2969, %v2971
    %vm2975 = vc.u32 %v2969, %v2971
    %v2976 = vadd.s32 %v2972, 1
    %v2977 = vsel %vm2975, %v2976, %v2972
    %v2978 = vadd.s32 %v2973, %v2977
    %v2979 = vadd.s32 %v2978, 536870912
    %v2980 = vshrl.u32 %v2979, 30
    %v2981 = vshll.u32 %v2980, 30
    %v2982 = vsub.s32 %v2978, %v2981
    %vm2983 = vcmp.lt.s32.totalorder %v2982, 0
    %v2984 = vsub.s32 0, %v2982
    %v2985 = vsel %vm2983, %v2984, %v2982
    %v2986 = vclz %v2985
    %v2987 = vsub.s32 %v2986, 2
    %vm2988 = vcmp.gt.s32.totalorder 0, %v2987
    %v2989 = vsel %vm2988, 0, %v2987
    %v2990 = vsub.s32 32, %v2989
    %v2991 = vshll.u32 %v2982, %v2989
    %v2992 = vshrl.u32 %v2974, %v2990
    %v2993 = vor.u32 %v2991, %v2992
    %v2994 = vsub.s32 4294967266, %v2989
    %v2995 = vadd.s32 %v2994, 127
    %v2996 = vshll.u32 %v2995, 23
    %v2997 = vor.u32 4788187, %v2996
    %v2998 = vand.u32 2147483647, %v2997
    %v3000 = vcvt.s32.f32 %v2993
    %v3001 = vmul.f32 %v3000, %v2998
    %v3002 = vxor.u32 %v3001, 2147483648
    %v3003 = vsel %vm2920, %v3002, %v3001
    %v3004 = vsub.s32 4, %v2980
    %v3005 = vsel %vm2920, %v3004, %v2980
    %v3006 = vsel %vm2919, %v2080, %v3003
    %v3007 = vsel %vm2919, 0, %v3005
    %v3008 = vcosq.f32.pop %v3006
    %v3009 = vsinq.f32.pop %v3006
    %vm3010 = vweird.f32 %v2080
    %v3011 = vadd.s32 %v3007, 3
    %v3012 = vand.u32 %v3011, 3
    %vm3013 = vcmp.lt.s32.totalorder %v3012, 2
    %vm3014 = vcmp.eq.s32.totalorder %v3012, 0
    %v3015 = vxor.u32 %v3009, 2147483648
    %v3016 = vsel %vm3014, %v3008, %v3015
    %vm3017 = vcmp.eq.s32.totalorder %v3012, 2
    %v3018 = vxor.u32 %v3008, 2147483648
    %v3019 = vsel %vm3017, %v3018, %v3009
    %v3020 = vsel %vm3013, %v3016, %v3019
    %v3021 = vsel %vm3010, nan, %v3020
    %v3022 = vand.u32 2147483647, %v2081
    %vm3023 = vcmp.le.f32.partialorder %v3022, 0.7853982
    %vm3024 = vcmp.lt.s32.totalorder %v2081, 0
    %v3025 = vand.u32 %v2081, 2139095040
    %v3026 = vshrl.u32 %v3025, 23
    %v3027 = vsub.s32 %v3026, 127
    %v3028 = vand.u32 2147483647, %v2081
    %v3029 = vand.u32 %v3028, 8388607
    %v3030 = vor.u32 %v3029, 8388608
    %v3031 = vsub.s32 0, %v3030
    %v3032 = vadd.s32 %v3027, 1
    %vm3033 = vcmp.gt.s32.totalorder %v3032, 0
    %v3034 = vsel %vm3033, %v3032, 0
    %v3035 = vshrl.u32 %v3034, 5
    %v3036 = vand.u32 %v3034, 31
    %v3037 = vsub.s32 32, %v3036
    %v3038 = vshrl.u32 683565275, %v3037
    %v3039 = vshll.u32 683565275, %v3036
    %v3040 = vshrl.u32 2475754826, %v3037
    %v3041 = vor.u32 %v3039, %v3040
    %v3042 = vshll.u32 2475754826, %v3036
    %v3043 = vshrl.u32 2131351028, %v3037
    %v3044 = vor.u32 %v3042, %v3043
    %v3045 = vshll.u32 2131351028, %v3036
    %v3046 = vshrl.u32 2102212464, %v3037
    %v3047 = vor.u32 %v3045, %v3046
    %v3048 = vshll.u32 2102212464, %v3036
    %v3049 = vshrl.u32 920167782, %v3037
    %v3050 = vor.u32 %v3048, %v3049
    %v3051 = vshll.u32 920167782, %v3036
    %v3052 = vshrl.u32 1326507024, %v3037
    %v3053 = vor.u32 %v3051, %v3052
    %vm3054 = vcmp.lt.s32.totalorder %v3035, 1
    %vm3055 = vcmp.lt.s32.totalorder %v3035, 2
    %vm3056 = vcmp.lt.s32.totalorder %v3035, 3
    %vm3057 = vcmp.lt.s32.totalorder %v3035, 4
    %v3058 = vsel %vm3054, %v3038, %v3041
    %v3059 = vsel %vm3057, %v3047, 2102212464
    %v3060 = vsel %vm3056, %v3044, %v3059
    %v3061 = vsel %vm3055, %v3058, %v3060
    %v3062 = vsel %vm3054, %v3041, %v3044
    %v3063 = vsel %vm3057, %v3050, 920167782
    %v3064 = vsel %vm3056, %v3047, %v3063
    %v3065 = vsel %vm3055, %v3062, %v3064
    %v3066 = vsel %vm3054, %v3044, %v3047
    %v3067 = vsel %vm3057, %v3053, 1326507024
    %v3068 = vsel %vm3056, %v3050, %v3067
    %v3069 = vsel %vm3055, %v3066, %v3068
    %v3070 = vshll.u32 %v3030, 8
    %v3071 = vmul.u32.u64.compose %v3070, %v3069
    %v3072 = vextract.low.u32 %v3071
    %v3073 = vextract.high.u32 %v3071
    %v3074 = vmul.u32.u64.compose %v3070, %v3065
    %v3075 = vextract.low.u32 %v3074
    %v3076 = vextract.high.u32 %v3074
    %v3077 = vmul.u32 %v3070, %v3061
    %v3078 = vadd.s32 %v3073, %v3075
    %vm3079 = vc.u32 %v3073, %v3075
    %v3080 = vadd.s32 %v3076, 1
    %v3081 = vsel %vm3079, %v3080, %v3076
    %v3082 = vadd.s32 %v3077, %v3081
    %v3083 = vadd.s32 %v3082, 536870912
    %v3084 = vshrl.u32 %v3083, 30
    %v3085 = vshll.u32 %v3084, 30
    %v3086 = vsub.s32 %v3082, %v3085
    %vm3087 = vcmp.lt.s32.totalorder %v3086, 0
    %v3088 = vsub.s32 0, %v3086
    %v3089 = vsel %vm3087, %v3088, %v3086
    %v3090 = vclz %v3089
    %v3091 = vsub.s32 %v3090, 2
    %vm3092 = vcmp.gt.s32.totalorder 0, %v3091
    %v3093 = vsel %vm3092, 0, %v3091
    %v3094 = vsub.s32 32, %v3093
    %v3095 = vshll.u32 %v3086, %v3093
    %v3096 = vshrl.u32 %v3078, %v3094
    %v3097 = vor.u32 %v3095, %v3096
    %v3098 = vsub.s32 4294967266, %v3093
    %v3099 = vadd.s32 %v3098, 127
    %v3100 = vshll.u32 %v3099, 23
    %v3101 = vor.u32 4788187, %v3100
    %v3102 = vand.u32 2147483647, %v3101
    %v3104 = vcvt.s32.f32 %v3097
    %v3105 = vmul.f32 %v3104, %v3102
    %v3106 = vxor.u32 %v3105, 2147483648
    %v3107 = vsel %vm3024, %v3106, %v3105
    %v3108 = vsub.s32 4, %v3084
    %v3109 = vsel %vm3024, %v3108, %v3084
    %v3110 = vsel %vm3023, %v2081, %v3107
    %v3111 = vsel %vm3023, 0, %v3109
    %v3112 = vcosq.f32.pop %v3110
    %v3113 = vsinq.f32.pop %v3110
    %vm3114 = vweird.f32 %v2081
    %v3115 = vadd.s32 %v3111, 3
    %v3116 = vand.u32 %v3115, 3
    %vm3117 = vcmp.lt.s32.totalorder %v3116, 2
    %vm3118 = vcmp.eq.s32.totalorder %v3116, 0
    %v3119 = vxor.u32 %v3113, 2147483648
    %v3120 = vsel %vm3118, %v3112, %v3119
    %vm3121 = vcmp.eq.s32.totalorder %v3116, 2
    %v3122 = vxor.u32 %v3112, 2147483648
    %v3123 = vsel %vm3121, %v3122, %v3113
    %v3124 = vsel %vm3117, %v3120, %v3123
    %v3125 = vsel %vm3114, nan, %v3124
    %v3126 = vand.u32 2147483647, %v2082
    %vm3127 = vcmp.le.f32.partialorder %v3126, 0.7853982
    %vm3128 = vcmp.lt.s32.totalorder %v2082, 0
    %v3129 = vand.u32 %v2082, 2139095040
    %v3130 = vshrl.u32 %v3129, 23
    %v3131 = vsub.s32 %v3130, 127
    %v3132 = vand.u32 2147483647, %v2082
    %v3133 = vand.u32 %v3132, 8388607
    %v3134 = vor.u32 %v3133, 8388608
    %v3135 = vsub.s32 0, %v3134
    %v3136 = vadd.s32 %v3131, 1
    %vm3137 = vcmp.gt.s32.totalorder %v3136, 0
    %v3138 = vsel %vm3137, %v3136, 0
    %v3139 = vshrl.u32 %v3138, 5
    %v3140 = vand.u32 %v3138, 31
    %v3141 = vsub.s32 32, %v3140
    %v3142 = vshrl.u32 683565275, %v3141
    %v3143 = vshll.u32 683565275, %v3140
    %v3144 = vshrl.u32 2475754826, %v3141
    %v3145 = vor.u32 %v3143, %v3144
    %v3146 = vshll.u32 2475754826, %v3140
    %v3147 = vshrl.u32 2131351028, %v3141
    %v3148 = vor.u32 %v3146, %v3147
    %v3149 = vshll.u32 2131351028, %v3140
    %v3150 = vshrl.u32 2102212464, %v3141
    %v3151 = vor.u32 %v3149, %v3150
    %v3152 = vshll.u32 2102212464, %v3140
    %v3153 = vshrl.u32 920167782, %v3141
    %v3154 = vor.u32 %v3152, %v3153
    %v3155 = vshll.u32 920167782, %v3140
    %v3156 = vshrl.u32 1326507024, %v3141
    %v3157 = vor.u32 %v3155, %v3156
    %vm3158 = vcmp.lt.s32.totalorder %v3139, 1
    %vm3159 = vcmp.lt.s32.totalorder %v3139, 2
    %vm3160 = vcmp.lt.s32.totalorder %v3139, 3
    %vm3161 = vcmp.lt.s32.totalorder %v3139, 4
    %v3162 = vsel %vm3158, %v3142, %v3145
    %v3163 = vsel %vm3161, %v3151, 2102212464
    %v3164 = vsel %vm3160, %v3148, %v3163
    %v3165 = vsel %vm3159, %v3162, %v3164
    %v3166 = vsel %vm3158, %v3145, %v3148
    %v3167 = vsel %vm3161, %v3154, 920167782
    %v3168 = vsel %vm3160, %v3151, %v3167
    %v3169 = vsel %vm3159, %v3166, %v3168
    %v3170 = vsel %vm3158, %v3148, %v3151
    %v3171 = vsel %vm3161, %v3157, 1326507024
    %v3172 = vsel %vm3160, %v3154, %v3171
    %v3173 = vsel %vm3159, %v3170, %v3172
    %v3174 = vshll.u32 %v3134, 8
    %v3175 = vmul.u32.u64.compose %v3174, %v3173
    %v3176 = vextract.low.u32 %v3175
    %v3177 = vextract.high.u32 %v3175
    %v3178 = vmul.u32.u64.compose %v3174, %v3169
    %v3179 = vextract.low.u32 %v3178
    %v3180 = vextract.high.u32 %v3178
    %v3181 = vmul.u32 %v3174, %v3165
    %v3182 = vadd.s32 %v3177, %v3179
    %vm3183 = vc.u32 %v3177, %v3179
    %v3184 = vadd.s32 %v3180, 1
    %v3185 = vsel %vm3183, %v3184, %v3180
    %v3186 = vadd.s32 %v3181, %v3185
    %v3187 = vadd.s32 %v3186, 536870912
    %v3188 = vshrl.u32 %v3187, 30
    %v3189 = vshll.u32 %v3188, 30
    %v3190 = vsub.s32 %v3186, %v3189
    %vm3191 = vcmp.lt.s32.totalorder %v3190, 0
    %v3192 = vsub.s32 0, %v3190
    %v3193 = vsel %vm3191, %v3192, %v3190
    %v3194 = vclz %v3193
    %v3195 = vsub.s32 %v3194, 2
    %vm3196 = vcmp.gt.s32.totalorder 0, %v3195
    %v3197 = vsel %vm3196, 0, %v3195
    %v3198 = vsub.s32 32, %v3197
    %v3199 = vshll.u32 %v3190, %v3197
    %v3200 = vshrl.u32 %v3182, %v3198
    %v3201 = vor.u32 %v3199, %v3200
    %v3202 = vsub.s32 4294967266, %v3197
    %v3203 = vadd.s32 %v3202, 127
    %v3204 = vshll.u32 %v3203, 23
    %v3205 = vor.u32 4788187, %v3204
    %v3206 = vand.u32 2147483647, %v3205
    %v3208 = vcvt.s32.f32 %v3201
    %v3209 = vmul.f32 %v3208, %v3206
    %v3210 = vxor.u32 %v3209, 2147483648
    %v3211 = vsel %vm3128, %v3210, %v3209
    %v3212 = vsub.s32 4, %v3188
    %v3213 = vsel %vm3128, %v3212, %v3188
    %v3214 = vsel %vm3127, %v2082, %v3211
    %v3215 = vsel %vm3127, 0, %v3213
    %v3216 = vcosq.f32.pop %v3214
    %v3217 = vsinq.f32.pop %v3214
    %vm3218 = vweird.f32 %v2082
    %v3219 = vadd.s32 %v3215, 3
    %v3220 = vand.u32 %v3219, 3
    %vm3221 = vcmp.lt.s32.totalorder %v3220, 2
    %vm3222 = vcmp.eq.s32.totalorder %v3220, 0
    %v3223 = vxor.u32 %v3217, 2147483648
    %v3224 = vsel %vm3222, %v3216, %v3223
    %vm3225 = vcmp.eq.s32.totalorder %v3220, 2
    %v3226 = vxor.u32 %v3216, 2147483648
    %v3227 = vsel %vm3225, %v3226, %v3217
    %v3228 = vsel %vm3221, %v3224, %v3227
    %v3229 = vsel %vm3218, nan, %v3228
    %v3230 = vand.u32 2147483647, %v2083
    %vm3231 = vcmp.le.f32.partialorder %v3230, 0.7853982
    %vm3232 = vcmp.lt.s32.totalorder %v2083, 0
    %v3233 = vand.u32 %v2083, 2139095040
    %v3234 = vshrl.u32 %v3233, 23
    %v3235 = vsub.s32 %v3234, 127
    %v3236 = vand.u32 2147483647, %v2083
    %v3237 = vand.u32 %v3236, 8388607
    %v3238 = vor.u32 %v3237, 8388608
    %v3239 = vsub.s32 0, %v3238
    %v3240 = vadd.s32 %v3235, 1
    %vm3241 = vcmp.gt.s32.totalorder %v3240, 0
    %v3242 = vsel %vm3241, %v3240, 0
    %v3243 = vshrl.u32 %v3242, 5
    %v3244 = vand.u32 %v3242, 31
    %v3245 = vsub.s32 32, %v3244
    %v3246 = vshrl.u32 683565275, %v3245
    %v3247 = vshll.u32 683565275, %v3244
    %v3248 = vshrl.u32 2475754826, %v3245
    %v3249 = vor.u32 %v3247, %v3248
    %v3250 = vshll.u32 2475754826, %v3244
    %v3251 = vshrl.u32 2131351028, %v3245
    %v3252 = vor.u32 %v3250, %v3251
    %v3253 = vshll.u32 2131351028, %v3244
    %v3254 = vshrl.u32 2102212464, %v3245
    %v3255 = vor.u32 %v3253, %v3254
    %v3256 = vshll.u32 2102212464, %v3244
    %v3257 = vshrl.u32 920167782, %v3245
    %v3258 = vor.u32 %v3256, %v3257
    %v3259 = vshll.u32 920167782, %v3244
    %v3260 = vshrl.u32 1326507024, %v3245
    %v3261 = vor.u32 %v3259, %v3260
    %vm3262 = vcmp.lt.s32.totalorder %v3243, 1
    %vm3263 = vcmp.lt.s32.totalorder %v3243, 2
    %vm3264 = vcmp.lt.s32.totalorder %v3243, 3
    %vm3265 = vcmp.lt.s32.totalorder %v3243, 4
    %v3266 = vsel %vm3262, %v3246, %v3249
    %v3267 = vsel %vm3265, %v3255, 2102212464
    %v3268 = vsel %vm3264, %v3252, %v3267
    %v3269 = vsel %vm3263, %v3266, %v3268
    %v3270 = vsel %vm3262, %v3249, %v3252
    %v3271 = vsel %vm3265, %v3258, 920167782
    %v3272 = vsel %vm3264, %v3255, %v3271
    %v3273 = vsel %vm3263, %v3270, %v3272
    %v3274 = vsel %vm3262, %v3252, %v3255
    %v3275 = vsel %vm3265, %v3261, 1326507024
    %v3276 = vsel %vm3264, %v3258, %v3275
    %v3277 = vsel %vm3263, %v3274, %v3276
    %v3278 = vshll.u32 %v3238, 8
    %v3279 = vmul.u32.u64.compose %v3278, %v3277
    %v3280 = vextract.low.u32 %v3279
    %v3281 = vextract.high.u32 %v3279
    %v3282 = vmul.u32.u64.compose %v3278, %v3273
    %v3283 = vextract.low.u32 %v3282
    %v3284 = vextract.high.u32 %v3282
    %v3285 = vmul.u32 %v3278, %v3269
    %v3286 = vadd.s32 %v3281, %v3283
    %vm3287 = vc.u32 %v3281, %v3283
    %v3288 = vadd.s32 %v3284, 1
    %v3289 = vsel %vm3287, %v3288, %v3284
    %v3290 = vadd.s32 %v3285, %v3289
    %v3291 = vadd.s32 %v3290, 536870912
    %v3292 = vshrl.u32 %v3291, 30
    %v3293 = vshll.u32 %v3292, 30
    %v3294 = vsub.s32 %v3290, %v3293
    %vm3295 = vcmp.lt.s32.totalorder %v3294, 0
    %v3296 = vsub.s32 0, %v3294
    %v3297 = vsel %vm3295, %v3296, %v3294
    %v3298 = vclz %v3297
    %v3299 = vsub.s32 %v3298, 2
    %vm3300 = vcmp.gt.s32.totalorder 0, %v3299
    %v3301 = vsel %vm3300, 0, %v3299
    %v3302 = vsub.s32 32, %v3301
    %v3303 = vshll.u32 %v3294, %v3301
    %v3304 = vshrl.u32 %v3286, %v3302
    %v3305 = vor.u32 %v3303, %v3304
    %v3306 = vsub.s32 4294967266, %v3301
    %v3307 = vadd.s32 %v3306, 127
    %v3308 = vshll.u32 %v3307, 23
    %v3309 = vor.u32 4788187, %v3308
    %v3310 = vand.u32 2147483647, %v3309
    %v3312 = vcvt.s32.f32 %v3305
    %v3313 = vmul.f32 %v3312, %v3310
    %v3314 = vxor.u32 %v3313, 2147483648
    %v3315 = vsel %vm3232, %v3314, %v3313
    %v3316 = vsub.s32 4, %v3292
    %v3317 = vsel %vm3232, %v3316, %v3292
    %v3318 = vsel %vm3231, %v2083, %v3315
    %v3319 = vsel %vm3231, 0, %v3317
    %v3320 = vcosq.f32.pop %v3318
    %v3321 = vsinq.f32.pop %v3318
    %vm3322 = vweird.f32 %v2083
    %v3323 = vadd.s32 %v3319, 3
    %v3324 = vand.u32 %v3323, 3
    %vm3325 = vcmp.lt.s32.totalorder %v3324, 2
    %vm3326 = vcmp.eq.s32.totalorder %v3324, 0
    %v3327 = vxor.u32 %v3321, 2147483648
    %v3328 = vsel %vm3326, %v3320, %v3327
    %vm3329 = vcmp.eq.s32.totalorder %v3324, 2
    %v3330 = vxor.u32 %v3320, 2147483648
    %v3331 = vsel %vm3329, %v3330, %v3321
    %v3332 = vsel %vm3325, %v3328, %v3331
    %v3333 = vsel %vm3322, nan, %v3332
    %v3334 = vand.u32 2147483647, %v2084
    %vm3335 = vcmp.le.f32.partialorder %v3334, 0.7853982
    %vm3336 = vcmp.lt.s32.totalorder %v2084, 0
    %v3337 = vand.u32 %v2084, 2139095040
    %v3338 = vshrl.u32 %v3337, 23
    %v3339 = vsub.s32 %v3338, 127
    %v3340 = vand.u32 2147483647, %v2084
    %v3341 = vand.u32 %v3340, 8388607
    %v3342 = vor.u32 %v3341, 8388608
    %v3343 = vsub.s32 0, %v3342
    %v3344 = vadd.s32 %v3339, 1
    %vm3345 = vcmp.gt.s32.totalorder %v3344, 0
    %v3346 = vsel %vm3345, %v3344, 0
    %v3347 = vshrl.u32 %v3346, 5
    %v3348 = vand.u32 %v3346, 31
    %v3349 = vsub.s32 32, %v3348
    %v3350 = vshrl.u32 683565275, %v3349
    %v3351 = vshll.u32 683565275, %v3348
    %v3352 = vshrl.u32 2475754826, %v3349
    %v3353 = vor.u32 %v3351, %v3352
    %v3354 = vshll.u32 2475754826, %v3348
    %v3355 = vshrl.u32 2131351028, %v3349
    %v3356 = vor.u32 %v3354, %v3355
    %v3357 = vshll.u32 2131351028, %v3348
    %v3358 = vshrl.u32 2102212464, %v3349
    %v3359 = vor.u32 %v3357, %v3358
    %v3360 = vshll.u32 2102212464, %v3348
    %v3361 = vshrl.u32 920167782, %v3349
    %v3362 = vor.u32 %v3360, %v3361
    %v3363 = vshll.u32 920167782, %v3348
    %v3364 = vshrl.u32 1326507024, %v3349
    %v3365 = vor.u32 %v3363, %v3364
    %vm3366 = vcmp.lt.s32.totalorder %v3347, 1
    %vm3367 = vcmp.lt.s32.totalorder %v3347, 2
    %vm3368 = vcmp.lt.s32.totalorder %v3347, 3
    %vm3369 = vcmp.lt.s32.totalorder %v3347, 4
    %v3370 = vsel %vm3366, %v3350, %v3353
    %v3371 = vsel %vm3369, %v3359, 2102212464
    %v3372 = vsel %vm3368, %v3356, %v3371
    %v3373 = vsel %vm3367, %v3370, %v3372
    %v3374 = vsel %vm3366, %v3353, %v3356
    %v3375 = vsel %vm3369, %v3362, 920167782
    %v3376 = vsel %vm3368, %v3359, %v3375
    %v3377 = vsel %vm3367, %v3374, %v3376
    %v3378 = vsel %vm3366, %v3356, %v3359
    %v3379 = vsel %vm3369, %v3365, 1326507024
    %v3380 = vsel %vm3368, %v3362, %v3379
    %v3381 = vsel %vm3367, %v3378, %v3380
    %v3382 = vshll.u32 %v3342, 8
    %v3383 = vmul.u32.u64.compose %v3382, %v3381
    %v3384 = vextract.low.u32 %v3383
    %v3385 = vextract.high.u32 %v3383
    %v3386 = vmul.u32.u64.compose %v3382, %v3377
    %v3387 = vextract.low.u32 %v3386
    %v3388 = vextract.high.u32 %v3386
    %v3389 = vmul.u32 %v3382, %v3373
    %v3390 = vadd.s32 %v3385, %v3387
    %vm3391 = vc.u32 %v3385, %v3387
    %v3392 = vadd.s32 %v3388, 1
    %v3393 = vsel %vm3391, %v3392, %v3388
    %v3394 = vadd.s32 %v3389, %v3393
    %v3395 = vadd.s32 %v3394, 536870912
    %v3396 = vshrl.u32 %v3395, 30
    %v3397 = vshll.u32 %v3396, 30
    %v3398 = vsub.s32 %v3394, %v3397
    %vm3399 = vcmp.lt.s32.totalorder %v3398, 0
    %v3400 = vsub.s32 0, %v3398
    %v3401 = vsel %vm3399, %v3400, %v3398
    %v3402 = vclz %v3401
    %v3403 = vsub.s32 %v3402, 2
    %vm3404 = vcmp.gt.s32.totalorder 0, %v3403
    %v3405 = vsel %vm3404, 0, %v3403
    %v3406 = vsub.s32 32, %v3405
    %v3407 = vshll.u32 %v3398, %v3405
    %v3408 = vshrl.u32 %v3390, %v3406
    %v3409 = vor.u32 %v3407, %v3408
    %v3410 = vsub.s32 4294967266, %v3405
    %v3411 = vadd.s32 %v3410, 127
    %v3412 = vshll.u32 %v3411, 23
    %v3413 = vor.u32 4788187, %v3412
    %v3414 = vand.u32 2147483647, %v3413
    %v3416 = vcvt.s32.f32 %v3409
    %v3417 = vmul.f32 %v3416, %v3414
    %v3418 = vxor.u32 %v3417, 2147483648
    %v3419 = vsel %vm3336, %v3418, %v3417
    %v3420 = vsub.s32 4, %v3396
    %v3421 = vsel %vm3336, %v3420, %v3396
    %v3422 = vsel %vm3335, %v2084, %v3419
    %v3423 = vsel %vm3335, 0, %v3421
    %v3424 = vcosq.f32.pop %v3422
    %v3425 = vsinq.f32.pop %v3422
    %vm3426 = vweird.f32 %v2084
    %v3427 = vadd.s32 %v3423, 3
    %v3428 = vand.u32 %v3427, 3
    %vm3429 = vcmp.lt.s32.totalorder %v3428, 2
    %vm3430 = vcmp.eq.s32.totalorder %v3428, 0
    %v3431 = vxor.u32 %v3425, 2147483648
    %v3432 = vsel %vm3430, %v3424, %v3431
    %vm3433 = vcmp.eq.s32.totalorder %v3428, 2
    %v3434 = vxor.u32 %v3424, 2147483648
    %v3435 = vsel %vm3433, %v3434, %v3425
    %v3436 = vsel %vm3429, %v3432, %v3435
    %v3437 = vsel %vm3426, nan, %v3436
    %v3438 = vand.u32 2147483647, %v2085
    %vm3439 = vcmp.le.f32.partialorder %v3438, 0.7853982
    %vm3440 = vcmp.lt.s32.totalorder %v2085, 0
    %v3441 = vand.u32 %v2085, 2139095040
    %v3442 = vshrl.u32 %v3441, 23
    %v3443 = vsub.s32 %v3442, 127
    %v3444 = vand.u32 2147483647, %v2085
    %v3445 = vand.u32 %v3444, 8388607
    %v3446 = vor.u32 %v3445, 8388608
    %v3447 = vsub.s32 0, %v3446
    %v3448 = vadd.s32 %v3443, 1
    %vm3449 = vcmp.gt.s32.totalorder %v3448, 0
    %v3450 = vsel %vm3449, %v3448, 0
    %v3451 = vshrl.u32 %v3450, 5
    %v3452 = vand.u32 %v3450, 31
    %v3453 = vsub.s32 32, %v3452
    %v3454 = vshrl.u32 683565275, %v3453
    %v3455 = vshll.u32 683565275, %v3452
    %v3456 = vshrl.u32 2475754826, %v3453
    %v3457 = vor.u32 %v3455, %v3456
    %v3458 = vshll.u32 2475754826, %v3452
    %v3459 = vshrl.u32 2131351028, %v3453
    %v3460 = vor.u32 %v3458, %v3459
    %v3461 = vshll.u32 2131351028, %v3452
    %v3462 = vshrl.u32 2102212464, %v3453
    %v3463 = vor.u32 %v3461, %v3462
    %v3464 = vshll.u32 2102212464, %v3452
    %v3465 = vshrl.u32 920167782, %v3453
    %v3466 = vor.u32 %v3464, %v3465
    %v3467 = vshll.u32 920167782, %v3452
    %v3468 = vshrl.u32 1326507024, %v3453
    %v3469 = vor.u32 %v3467, %v3468
    %vm3470 = vcmp.lt.s32.totalorder %v3451, 1
    %vm3471 = vcmp.lt.s32.totalorder %v3451, 2
    %vm3472 = vcmp.lt.s32.totalorder %v3451, 3
    %vm3473 = vcmp.lt.s32.totalorder %v3451, 4
    %v3474 = vsel %vm3470, %v3454, %v3457
    %v3475 = vsel %vm3473, %v3463, 2102212464
    %v3476 = vsel %vm3472, %v3460, %v3475
    %v3477 = vsel %vm3471, %v3474, %v3476
    %v3478 = vsel %vm3470, %v3457, %v3460
    %v3479 = vsel %vm3473, %v3466, 920167782
    %v3480 = vsel %vm3472, %v3463, %v3479
    %v3481 = vsel %vm3471, %v3478, %v3480
    %v3482 = vsel %vm3470, %v3460, %v3463
    %v3483 = vsel %vm3473, %v3469, 1326507024
    %v3484 = vsel %vm3472, %v3466, %v3483
    %v3485 = vsel %vm3471, %v3482, %v3484
    %v3486 = vshll.u32 %v3446, 8
    %v3487 = vmul.u32.u64.compose %v3486, %v3485
    %v3488 = vextract.low.u32 %v3487
    %v3489 = vextract.high.u32 %v3487
    %v3490 = vmul.u32.u64.compose %v3486, %v3481
    %v3491 = vextract.low.u32 %v3490
    %v3492 = vextract.high.u32 %v3490
    %v3493 = vmul.u32 %v3486, %v3477
    %v3494 = vadd.s32 %v3489, %v3491
    %vm3495 = vc.u32 %v3489, %v3491
    %v3496 = vadd.s32 %v3492, 1
    %v3497 = vsel %vm3495, %v3496, %v3492
    %v3498 = vadd.s32 %v3493, %v3497
    %v3499 = vadd.s32 %v3498, 536870912
    %v3500 = vshrl.u32 %v3499, 30
    %v3501 = vshll.u32 %v3500, 30
    %v3502 = vsub.s32 %v3498, %v3501
    %vm3503 = vcmp.lt.s32.totalorder %v3502, 0
    %v3504 = vsub.s32 0, %v3502
    %v3505 = vsel %vm3503, %v3504, %v3502
    %v3506 = vclz %v3505
    %v3507 = vsub.s32 %v3506, 2
    %vm3508 = vcmp.gt.s32.totalorder 0, %v3507
    %v3509 = vsel %vm3508, 0, %v3507
    %v3510 = vsub.s32 32, %v3509
    %v3511 = vshll.u32 %v3502, %v3509
    %v3512 = vshrl.u32 %v3494, %v3510
    %v3513 = vor.u32 %v3511, %v3512
    %v3514 = vsub.s32 4294967266, %v3509
    %v3515 = vadd.s32 %v3514, 127
    %v3516 = vshll.u32 %v3515, 23
    %v3517 = vor.u32 4788187, %v3516
    %v3518 = vand.u32 2147483647, %v3517
    %v3520 = vcvt.s32.f32 %v3513
    %v3521 = vmul.f32 %v3520, %v3518
    %v3522 = vxor.u32 %v3521, 2147483648
    %v3523 = vsel %vm3440, %v3522, %v3521
    %v3524 = vsub.s32 4, %v3500
    %v3525 = vsel %vm3440, %v3524, %v3500
    %v3526 = vsel %vm3439, %v2085, %v3523
    %v3527 = vsel %vm3439, 0, %v3525
    %v3528 = vcosq.f32.pop %v3526
    %v3529 = vsinq.f32.pop %v3526
    %vm3530 = vweird.f32 %v2085
    %v3531 = vadd.s32 %v3527, 3
    %v3532 = vand.u32 %v3531, 3
    %vm3533 = vcmp.lt.s32.totalorder %v3532, 2
    %vm3534 = vcmp.eq.s32.totalorder %v3532, 0
    %v3535 = vxor.u32 %v3529, 2147483648
    %v3536 = vsel %vm3534, %v3528, %v3535
    %vm3537 = vcmp.eq.s32.totalorder %v3532, 2
    %v3538 = vxor.u32 %v3528, 2147483648
    %v3539 = vsel %vm3537, %v3538, %v3529
    %v3540 = vsel %vm3533, %v3536, %v3539
    %v3541 = vsel %vm3530, nan, %v3540
    %s3542 = scalar_lea.vmem %s3, 56
    %v3543 = vld [vmem:[%s3542] sm:$0xff]
    %v3544 = vld [vmem:[%s3542 + $0x8] sm:$0xff]
    %v3545 = vld [vmem:[%s3542 + $0x10] sm:$0xff]
    %v3546 = vld [vmem:[%s3542 + $0x18] sm:$0xff]
    %v3547 = vld [vmem:[%s3542 + $0x20] sm:$0xff]
    %v3548 = vld [vmem:[%s3542 + $0x28] sm:$0xff]
    %v3549 = vld [vmem:[%s3542 + $0x30] sm:$0x3]
    %s3550 = scalar_lea.vmem %s4, 56
    %v3551 = vld [vmem:[%s3550] sm:$0xff]
    %v3552 = vld [vmem:[%s3550 + $0x8] sm:$0xff]
    %v3553 = vld [vmem:[%s3550 + $0x10] sm:$0xff]
    %v3554 = vld [vmem:[%s3550 + $0x18] sm:$0xff]
    %v3555 = vld [vmem:[%s3550 + $0x20] sm:$0xff]
    %v3556 = vld [vmem:[%s3550 + $0x28] sm:$0xff]
    %v3557 = vld [vmem:[%s3550 + $0x30] sm:$0x3]
    %v3558 = vpack.c.bf16 %v3544, %v3543
    %v3559 = vpack.c.bf16 %v3546, %v3545
    %v3560 = vpack.c.bf16 %v3548, %v3547
    %v3561 = vpack.c.bf16 %v3549, %v3549
    %v3562 = vunpack.c.l.bf16 %v3558
    %v3563 = vunpack.c.h.bf16 %v3558
    %v3564 = vunpack.c.l.bf16 %v3559
    %v3565 = vunpack.c.h.bf16 %v3559
    %v3566 = vunpack.c.l.bf16 %v3560
    %v3567 = vunpack.c.h.bf16 %v3560
    %v3568 = vunpack.c.l.bf16 %v3561
    %v3569 = vsub.f32 %v3543, %v3562
    %v3570 = vsub.f32 %v3544, %v3563
    %v3571 = vsub.f32 %v3545, %v3564
    %v3572 = vsub.f32 %v3546, %v3565
    %v3573 = vsub.f32 %v3547, %v3566
    %v3574 = vsub.f32 %v3548, %v3567
    %v3575 = vsub.f32 %v3549, %v3568
    %v3576 = vpack.c.bf16 %v3570, %v3569
    %v3577 = vpack.c.bf16 %v3572, %v3571
    %v3578 = vpack.c.bf16 %v3574, %v3573
    %v3579 = vpack.c.bf16 %v3575, %v3575
    %v3580 = vpack.c.bf16 %v2397, %v2189
    %v3581 = vpack.c.bf16 %v2501, %v2293
    %v3582 = vpack.c.bf16 %v2813, %v2605
    %v3583 = vpack.c.bf16 %v2917, %v2709
    %v3584 = vpack.c.bf16 %v3229, %v3021
    %v3585 = vpack.c.bf16 %v3333, %v3125
    %v3586 = vpack.c.bf16 %v3437, %v3437
    %v3587 = vpack.c.bf16 %v3541, %v3541
    %v3588 = vunpack.c.l.bf16 %v3580
    %v3589 = vunpack.c.l.bf16 %v3581
    %v3590 = vunpack.c.h.bf16 %v3580
    %v3591 = vunpack.c.h.bf16 %v3581
    %v3592 = vunpack.c.l.bf16 %v3582
    %v3593 = vunpack.c.l.bf16 %v3583
    %v3594 = vunpack.c.h.bf16 %v3582
    %v3595 = vunpack.c.h.bf16 %v3583
    %v3596 = vunpack.c.l.bf16 %v3584
    %v3597 = vunpack.c.l.bf16 %v3585
    %v3598 = vunpack.c.h.bf16 %v3584
    %v3599 = vunpack.c.h.bf16 %v3585
    %v3600 = vunpack.c.l.bf16 %v3586
    %v3601 = vunpack.c.l.bf16 %v3587
    %v3602 = vsub.f32 %v2189, %v3588
    %v3603 = vsub.f32 %v2293, %v3589
    %v3604 = vsub.f32 %v2397, %v3590
    %v3605 = vsub.f32 %v2501, %v3591
    %v3606 = vsub.f32 %v2605, %v3592
    %v3607 = vsub.f32 %v2709, %v3593
    %v3608 = vsub.f32 %v2813, %v3594
    %v3609 = vsub.f32 %v2917, %v3595
    %v3610 = vsub.f32 %v3021, %v3596
    %v3611 = vsub.f32 %v3125, %v3597
    %v3612 = vsub.f32 %v3229, %v3598
    %v3613 = vsub.f32 %v3333, %v3599
    %v3614 = vsub.f32 %v3437, %v3600
    %v3615 = vsub.f32 %v3541, %v3601
    %v3616 = vpack.c.bf16 %v3604, %v3602
    %v3617 = vpack.c.bf16 %v3605, %v3603
    %v3618 = vpack.c.bf16 %v3608, %v3606
    %v3619 = vpack.c.bf16 %v3609, %v3607
    %v3620 = vpack.c.bf16 %v3612, %v3610
    %v3621 = vpack.c.bf16 %v3613, %v3611
    %v3622 = vpack.c.bf16 %v3614, %v3614
    %v3623 = vpack.c.bf16 %v3615, %v3615
    %v3625 = vsel %vm1772, %v3558, 0
    %v3628 = vsel %vm1772, %v3559, 0
    %v3631 = vsel %vm1772, %v3560, 0
    %v3634 = vsel %vm1772, %v3561, 0
    %v3637 = vsel %vm1785, %v3622, 0
    %v3640 = vsel %vm1785, %v3623, 0
    %3642 = vmatprep.subr.bf16.mxu0 %v3617
    %3643 = vmatpush1.bf16.msra.mxu0 %v3616
    %3644 = vmatprep.subr.bf16.mxu0 %v3619
    %3645 = vmatpush1.bf16.msra.mxu0 %v3618
    %3646 = vmatprep.subr.bf16.mxu0 %v3621
    %3647 = vmatpush1.bf16.msra.mxu0 %v3620
    %3648 = vmatprep.subr.bf16.mxu0 %v3640
    %3649 = vmatpush1.bf16.msra.mxu0 %v3637
    %3650 = vmatprep.subr.bf16.mxu0 0
    %3651 = vmatpush1.bf16.msra.mxu0 0
    %3652 = vmatprep.subr.bf16.mxu0 0
    %3653 = vmatpush1.bf16.msra.mxu0 0
    %3654 = vmatprep.subr.bf16.mxu0 0
    %3655 = vmatpush1.bf16.msra.mxu0 0
    %3656 = vmatprep.subr.bf16.mxu0 0
    %3657 = vmatpush1.bf16.msra.mxu0 0
    %3658 = vmatprep.subr.bf16.mxu0 0
    %3659 = vmatpush1.bf16.msra.mxu0 0
    %3660 = vmatprep.subr.bf16.mxu0 0
    %3661 = vmatpush1.bf16.msra.mxu0 0
    %3662 = vmatprep.subr.bf16.mxu0 0
    %3663 = vmatpush1.bf16.msra.mxu0 0
    %3664 = vmatprep.subr.bf16.mxu0 0
    %3665 = vmatpush1.bf16.msra.mxu0 0
    %3666 = vmatprep.subr.bf16.mxu0 0
    %3667 = vmatpush1.bf16.msra.mxu0 0
    %3668 = vmatprep.subr.bf16.mxu0 0
    %3669 = vmatpush1.bf16.msra.mxu0 0
    %3670 = vmatprep.subr.bf16.mxu0 0
    %3671 = vmatpush1.bf16.msra.mxu0 0
    %3672 = vmatprep.subr.bf16.mxu0 0
    %3673 = vmatpush1.bf16.msra.mxu0 0
    %3674 = vmatprep.mubr.bf16.mxu0 0
    %3675 = vmatmul.mubr.bf16.gmra.mrb[0].mxu0 %v3625
    %v3676 = vpop.f32.mrb[0].mxu0
    %v3677 = vadd.f32 0.0, %v3676
    %v3678 = vpop.f32.mrb[0].mxu0
    %v3679 = vadd.f32 0.0, %v3678
    %v3680 = vpop.f32.mrb[0].mxu0
    %v3681 = vadd.f32 0.0, %v3680
    %v3682 = vpop.f32.mrb[0].mxu0
    %v3683 = vadd.f32 0.0, %v3682
    %3684 = vmatprep.mubr.bf16.mxu0 0
    %3685 = vmatmul.mubr.bf16.gmra.mrb[0].mxu0 %v3628
    %v3686 = vpop.f32.mrb[0].mxu0
    %v3687 = vadd.f32 0.0, %v3686
    %v3688 = vpop.f32.mrb[0].mxu0
    %v3689 = vadd.f32 0.0, %v3688
    %v3690 = vpop.f32.mrb[0].mxu0
    %v3691 = vadd.f32 0.0, %v3690
    %v3692 = vpop.f32.mrb[0].mxu0
    %v3693 = vadd.f32 0.0, %v3692
    %3694 = vmatprep.mubr.bf16.mxu0 0
    %3695 = vmatmul.mubr.bf16.gmra.mrb[0].mxu0 %v3631
    %v3696 = vpop.f32.mrb[0].mxu0
    %v3697 = vadd.f32 0.0, %v3696
    %v3698 = vpop.f32.mrb[0].mxu0
    %v3699 = vadd.f32 0.0, %v3698
    %v3700 = vpop.f32.mrb[0].mxu0
    %v3701 = vadd.f32 0.0, %v3700
    %v3702 = vpop.f32.mrb[0].mxu0
    %v3703 = vadd.f32 0.0, %v3702
    %3704 = vmatprep.mubr.bf16.mxu0 0
    %3705 = vmatmul.mubr.bf16.gmra.mrb[0].mxu0 %v3634
    %v3706 = vpop.f32.mrb[0].mxu0
    %v3707 = vadd.f32 0.0, %v3706
    %v3708 = vpop.f32.mrb[0].mxu0
    %v3709 = vadd.f32 0.0, %v3708
    %v3710 = vpop.f32.mrb[0].mxu0
    %v3711 = vpop.f32.mrb[0].mxu0
    %3712 = vdwg.mxu0
    %v3714 = vsel %vm1785, %v3586, 0
    %v3717 = vsel %vm1785, %v3587, 0
    %3719 = vmatprep.subr.bf16.mxu0 %v3581
    %3720 = vmatpush1.bf16.msra.mxu0 %v3580
    %3721 = vmatprep.subr.bf16.mxu0 %v3583
    %3722 = vmatpush1.bf16.msra.mxu0 %v3582
    %3723 = vmatprep.subr.bf16.mxu0 %v3585
    %3724 = vmatpush1.bf16.msra.mxu0 %v3584
    %3725 = vmatprep.subr.bf16.mxu0 %v3717
    %3726 = vmatpush1.bf16.msra.mxu0 %v3714
    %3727 = vmatprep.subr.bf16.mxu0 0
    %3728 = vmatpush1.bf16.msra.mxu0 0
    %3729 = vmatprep.subr.bf16.mxu0 0
    %3730 = vmatpush1.bf16.msra.mxu0 0
    %3731 = vmatprep.subr.bf16.mxu0 0
    %3732 = vmatpush1.bf16.msra.mxu0 0
    %3733 = vmatprep.subr.bf16.mxu0 0
    %3734 = vmatpush1.bf16.msra.mxu0 0
    %3735 = vmatprep.subr.bf16.mxu0 0
    %3736 = vmatpush1.bf16.msra.mxu0 0
    %3737 = vmatprep.subr.bf16.mxu0 0
    %3738 = vmatpush1.bf16.msra.mxu0 0
    %3739 = vmatprep.subr.bf16.mxu0 0
    %3740 = vmatpush1.bf16.msra.mxu0 0
    %3741 = vmatprep.subr.bf16.mxu0 0
    %3742 = vmatpush1.bf16.msra.mxu0 0
    %3743 = vmatprep.subr.bf16.mxu0 0
    %3744 = vmatpush1.bf16.msra.mxu0 0
    %3745 = vmatprep.subr.bf16.mxu0 0
    %3746 = vmatpush1.bf16.msra.mxu0 0
    %3747 = vmatprep.subr.bf16.mxu0 0
    %3748 = vmatpush1.bf16.msra.mxu0 0
    %3749 = vmatprep.subr.bf16.mxu0 0
    %3750 = vmatpush1.bf16.msra.mxu0 0
    %3751 = vmatprep.mubr.bf16.mxu0 0
    %3752 = vmatmul.mubr.bf16.gmra.mrb[0].mxu0 %v3625
    %v3753 = vpop.f32.mrb[0].mxu0
    %v3754 = vadd.f32 %v3677, %v3753
    %v3755 = vpop.f32.mrb[0].mxu0
    %v3756 = vadd.f32 %v3679, %v3755
    %v3757 = vpop.f32.mrb[0].mxu0
    %v3758 = vadd.f32 %v3681, %v3757
    %v3759 = vpop.f32.mrb[0].mxu0
    %v3760 = vadd.f32 %v3683, %v3759
    %3761 = vmatprep.mubr.bf16.mxu0 0
    %3762 = vmatmul.mubr.bf16.gmra.mrb[0].mxu0 %v3628
    %v3763 = vpop.f32.mrb[0].mxu0
    %v3764 = vadd.f32 %v3687, %v3763
    %v3765 = vpop.f32.mrb[0].mxu0
    %v3766 = vadd.f32 %v3689, %v3765
    %v3767 = vpop.f32.mrb[0].mxu0
    %v3768 = vadd.f32 %v3691, %v3767
    %v3769 = vpop.f32.mrb[0].mxu0
    %v3770 = vadd.f32 %v3693, %v3769
    %3771 = vmatprep.mubr.bf16.mxu0 0
    %3772 = vmatmul.mubr.bf16.gmra.mrb[0].mxu0 %v3631
    %v3773 = vpop.f32.mrb[0].mxu0
    %v3774 = vadd.f32 %v3697, %v3773
    %v3775 = vpop.f32.mrb[0].mxu0
    %v3776 = vadd.f32 %v3699, %v3775
    %v3777 = vpop.f32.mrb[0].mxu0
    %v3778 = vadd.f32 %v3701, %v3777
    %v3779 = vpop.f32.mrb[0].mxu0
    %v3780 = vadd.f32 %v3703, %v3779
    %3781 = vmatprep.mubr.bf16.mxu0 0
    %3782 = vmatmul.mubr.bf16.gmra.mrb[0].mxu0 %v3634
    %v3783 = vpop.f32.mrb[0].mxu0
    %v3784 = vadd.f32 %v3707, %v3783
    %v3785 = vpop.f32.mrb[0].mxu0
    %v3786 = vadd.f32 %v3709, %v3785
    %v3787 = vpop.f32.mrb[0].mxu0
    %v3788 = vpop.f32.mrb[0].mxu0
    %3789 = vdwg.mxu0
    %v3791 = vsel %vm1772, %v3576, 0
    %v3794 = vsel %vm1772, %v3577, 0
    %v3797 = vsel %vm1772, %v3578, 0
    %v3800 = vsel %vm1772, %v3579, 0
    %3802 = vmatprep.subr.bf16.mxu0 %v3581
    %3803 = vmatpush1.bf16.msra.mxu0 %v3580
    %3804 = vmatprep.subr.bf16.mxu0 %v3583
    %3805 = vmatpush1.bf16.msra.mxu0 %v3582
    %3806 = vmatprep.subr.bf16.mxu0 %v3585
    %3807 = vmatpush1.bf16.msra.mxu0 %v3584
    %3808 = vmatprep.subr.bf16.mxu0 %v3717
    %3809 = vmatpush1.bf16.msra.mxu0 %v3714
    %3810 = vmatprep.subr.bf16.mxu0 0
    %3811 = vmatpush1.bf16.msra.mxu0 0
    %3812 = vmatprep.subr.bf16.mxu0 0
    %3813 = vmatpush1.bf16.msra.mxu0 0
    %3814 = vmatprep.subr.bf16.mxu0 0
    %3815 = vmatpush1.bf16.msra.mxu0 0
    %3816 = vmatprep.subr.bf16.mxu0 0
    %3817 = vmatpush1.bf16.msra.mxu0 0
    %3818 = vmatprep.subr.bf16.mxu0 0
    %3819 = vmatpush1.bf16.msra.mxu0 0
    %3820 = vmatprep.subr.bf16.mxu0 0
    %3821 = vmatpush1.bf16.msra.mxu0 0
    %3822 = vmatprep.subr.bf16.mxu0 0
    %3823 = vmatpush1.bf16.msra.mxu0 0
    %3824 = vmatprep.subr.bf16.mxu0 0
    %3825 = vmatpush1.bf16.msra.mxu0 0
    %3826 = vmatprep.subr.bf16.mxu0 0
    %3827 = vmatpush1.bf16.msra.mxu0 0
    %3828 = vmatprep.subr.bf16.mxu0 0
    %3829 = vmatpush1.bf16.msra.mxu0 0
    %3830 = vmatprep.subr.bf16.mxu0 0
    %3831 = vmatpush1.bf16.msra.mxu0 0
    %3832 = vmatprep.subr.bf16.mxu0 0
    %3833 = vmatpush1.bf16.msra.mxu0 0
    %3834 = vmatprep.mubr.bf16.mxu0 0
    %3835 = vmatmul.mubr.bf16.gmra.mrb[0].mxu0 %v3791
    %v3836 = vpop.f32.mrb[0].mxu0
    %v3837 = vadd.f32 0.0, %v3836
    %v3838 = vpop.f32.mrb[0].mxu0
    %v3839 = vadd.f32 0.0, %v3838
    %v3840 = vpop.f32.mrb[0].mxu0
    %v3841 = vadd.f32 0.0, %v3840
    %v3842 = vpop.f32.mrb[0].mxu0
    %v3843 = vadd.f32 0.0, %v3842
    %3844 = vmatprep.mubr.bf16.mxu0 0
    %3845 = vmatmul.mubr.bf16.gmra.mrb[0].mxu0 %v3794
    %v3846 = vpop.f32.mrb[0].mxu0
    %v3847 = vadd.f32 0.0, %v3846
    %v3848 = vpop.f32.mrb[0].mxu0
    %v3849 = vadd.f32 0.0, %v3848
    %v3850 = vpop.f32.mrb[0].mxu0
    %v3851 = vadd.f32 0.0, %v3850
    %v3852 = vpop.f32.mrb[0].mxu0
    %v3853 = vadd.f32 0.0, %v3852
    %3854 = vmatprep.mubr.bf16.mxu0 0
    %3855 = vmatmul.mubr.bf16.gmra.mrb[0].mxu0 %v3797
    %v3856 = vpop.f32.mrb[0].mxu0
    %v3857 = vadd.f32 0.0, %v3856
    %v3858 = vpop.f32.mrb[0].mxu0
    %v3859 = vadd.f32 0.0, %v3858
    %v3860 = vpop.f32.mrb[0].mxu0
    %v3861 = vadd.f32 0.0, %v3860
    %v3862 = vpop.f32.mrb[0].mxu0
    %v3863 = vadd.f32 0.0, %v3862
    %3864 = vmatprep.mubr.bf16.mxu0 0
    %3865 = vmatmul.mubr.bf16.gmra.mrb[0].mxu0 %v3800
    %v3866 = vpop.f32.mrb[0].mxu0
    %v3867 = vadd.f32 0.0, %v3866
    %v3868 = vpop.f32.mrb[0].mxu0
    %v3869 = vadd.f32 0.0, %v3868
    %v3870 = vpop.f32.mrb[0].mxu0
    %v3871 = vpop.f32.mrb[0].mxu0
    %3872 = vdwg.mxu0
    %v3873 = vadd.f32 %v3754, %v3837
    %v3874 = vadd.f32 %v3756, %v3839
    %v3875 = vadd.f32 %v3758, %v3841
    %v3876 = vadd.f32 %v3760, %v3843
    %v3877 = vadd.f32 %v3764, %v3847
    %v3878 = vadd.f32 %v3766, %v3849
    %v3879 = vadd.f32 %v3768, %v3851
    %v3880 = vadd.f32 %v3770, %v3853
    %v3881 = vadd.f32 %v3774, %v3857
    %v3882 = vadd.f32 %v3776, %v3859
    %v3883 = vadd.f32 %v3778, %v3861
    %v3884 = vadd.f32 %v3780, %v3863
    %v3885 = vadd.f32 %v3784, %v3867
    %v3886 = vadd.f32 %v3786, %v3869
    %3888 = vset.pattern.permute.xlu0 0
    %3889 = vperm.xlu0 %3888, %v3551
    %v3890 = vpop.permute.xlu0 %3889
    %3893 = vset.pattern.permute.xlu0 0
    %3894 = vperm.xlu0 %3893, %v3552
    %v3895 = vpop.permute.xlu0 %3894
    %3898 = vset.pattern.permute.xlu0 0
    %3899 = vperm.xlu0 %3898, %v3553
    %v3900 = vpop.permute.xlu0 %3899
    %3903 = vset.pattern.permute.xlu0 0
    %3904 = vperm.xlu0 %3903, %v3554
    %v3905 = vpop.permute.xlu0 %3904
    %3908 = vset.pattern.permute.xlu0 0
    %3909 = vperm.xlu0 %3908, %v3555
    %v3910 = vpop.permute.xlu0 %3909
    %3913 = vset.pattern.permute.xlu0 0
    %3914 = vperm.xlu0 %3913, %v3556
    %v3915 = vpop.permute.xlu0 %3914
    %3918 = vset.pattern.permute.xlu0 0
    %3919 = vperm.xlu0 %3918, %v3557
    %v3920 = vpop.permute.xlu0 %3919
    %v3922 = vadd.f32 %v3873, %v3890
    %v3923 = vadd.f32 %v3874, %v3890
    %v3924 = vadd.f32 %v3875, %v3895
    %v3925 = vadd.f32 %v3876, %v3895
    %v3926 = vadd.f32 %v3877, %v3900
    %v3927 = vadd.f32 %v3878, %v3900
    %v3928 = vadd.f32 %v3879, %v3905
    %v3929 = vadd.f32 %v3880, %v3905
    %v3930 = vadd.f32 %v3881, %v3910
    %v3931 = vadd.f32 %v3882, %v3910
    %v3932 = vadd.f32 %v3883, %v3915
    %v3933 = vadd.f32 %v3884, %v3915
    %v3934 = vadd.f32 %v3885, %v3920
    %v3935 = vadd.f32 %v3886, %v3920
    %v3936 = vand.u32 2147483647, %v3922
    %vm3937 = vcmp.le.f32.partialorder %v3936, 0.7853982
    %vm3938 = vcmp.lt.s32.totalorder %v3922, 0
    %v3939 = vand.u32 %v3922, 2139095040
    %v3940 = vshrl.u32 %v3939, 23
    %v3941 = vsub.s32 %v3940, 127
    %v3942 = vand.u32 2147483647, %v3922
    %v3943 = vand.u32 %v3942, 8388607
    %v3944 = vor.u32 %v3943, 8388608
    %v3945 = vsub.s32 0, %v3944
    %v3946 = vadd.s32 %v3941, 1
    %vm3947 = vcmp.gt.s32.totalorder %v3946, 0
    %v3948 = vsel %vm3947, %v3946, 0
    %v3949 = vshrl.u32 %v3948, 5
    %v3950 = vand.u32 %v3948, 31
    %v3951 = vsub.s32 32, %v3950
    %v3952 = vshrl.u32 683565275, %v3951
    %v3953 = vshll.u32 683565275, %v3950
    %v3954 = vshrl.u32 2475754826, %v3951
    %v3955 = vor.u32 %v3953, %v3954
    %v3956 = vshll.u32 2475754826, %v3950
    %v3957 = vshrl.u32 2131351028, %v3951
    %v3958 = vor.u32 %v3956, %v3957
    %v3959 = vshll.u32 2131351028, %v3950
    %v3960 = vshrl.u32 2102212464, %v3951
    %v3961 = vor.u32 %v3959, %v3960
    %v3962 = vshll.u32 2102212464, %v3950
    %v3963 = vshrl.u32 920167782, %v3951
    %v3964 = vor.u32 %v3962, %v3963
    %v3965 = vshll.u32 920167782, %v3950
    %v3966 = vshrl.u32 1326507024, %v3951
    %v3967 = vor.u32 %v3965, %v3966
    %vm3968 = vcmp.lt.s32.totalorder %v3949, 1
    %vm3969 = vcmp.lt.s32.totalorder %v3949, 2
    %vm3970 = vcmp.lt.s32.totalorder %v3949, 3
    %vm3971 = vcmp.lt.s32.totalorder %v3949, 4
    %v3972 = vsel %vm3968, %v3952, %v3955
    %v3973 = vsel %vm3971, %v3961, 2102212464
    %v3974 = vsel %vm3970, %v3958, %v3973
    %v3975 = vsel %vm3969, %v3972, %v3974
    %v3976 = vsel %vm3968, %v3955, %v3958
    %v3977 = vsel %vm3971, %v3964, 920167782
    %v3978 = vsel %vm3970, %v3961, %v3977
    %v3979 = vsel %vm3969, %v3976, %v3978
    %v3980 = vsel %vm3968, %v3958, %v3961
    %v3981 = vsel %vm3971, %v3967, 1326507024
    %v3982 = vsel %vm3970, %v3964, %v3981
    %v3983 = vsel %vm3969, %v3980, %v3982
    %v3984 = vshll.u32 %v3944, 8
    %v3985 = vmul.u32.u64.compose %v3984, %v3983
    %v3986 = vextract.low.u32 %v3985
    %v3987 = vextract.high.u32 %v3985
    %v3988 = vmul.u32.u64.compose %v3984, %v3979
    %v3989 = vextract.low.u32 %v3988
    %v3990 = vextract.high.u32 %v3988
    %v3991 = vmul.u32 %v3984, %v3975
    %v3992 = vadd.s32 %v3987, %v3989
    %vm3993 = vc.u32 %v3987, %v3989
    %v3994 = vadd.s32 %v3990, 1
    %v3995 = vsel %vm3993, %v3994, %v3990
    %v3996 = vadd.s32 %v3991, %v3995
    %v3997 = vadd.s32 %v3996, 536870912
    %v3998 = vshrl.u32 %v3997, 30
    %v3999 = vshll.u32 %v3998, 30
    %v4000 = vsub.s32 %v3996, %v3999
    %vm4001 = vcmp.lt.s32.totalorder %v4000, 0
    %v4002 = vsub.s32 0, %v4000
    %v4003 = vsel %vm4001, %v4002, %v4000
    %v4004 = vclz %v4003
    %v4005 = vsub.s32 %v4004, 2
    %vm4006 = vcmp.gt.s32.totalorder 0, %v4005
    %v4007 = vsel %vm4006, 0, %v4005
    %v4008 = vsub.s32 32, %v4007
    %v4009 = vshll.u32 %v4000, %v4007
    %v4010 = vshrl.u32 %v3992, %v4008
    %v4011 = vor.u32 %v4009, %v4010
    %v4012 = vsub.s32 4294967266, %v4007
    %v4013 = vadd.s32 %v4012, 127
    %v4014 = vshll.u32 %v4013, 23
    %v4015 = vor.u32 4788187, %v4014
    %v4016 = vand.u32 2147483647, %v4015
    %v4018 = vcvt.s32.f32 %v4011
    %v4019 = vmul.f32 %v4018, %v4016
    %v4020 = vxor.u32 %v4019, 2147483648
    %v4021 = vsel %vm3938, %v4020, %v4019
    %v4022 = vsub.s32 4, %v3998
    %v4023 = vsel %vm3938, %v4022, %v3998
    %v4024 = vsel %vm3937, %v3922, %v4021
    %v4025 = vsel %vm3937, 0, %v4023
    %v4026 = vcosq.f32.pop %v4024
    %v4027 = vsinq.f32.pop %v4024
    %vm4028 = vweird.f32 %v3922
    %v4029 = vadd.s32 %v4025, 3
    %v4030 = vand.u32 %v4029, 3
    %vm4031 = vcmp.lt.s32.totalorder %v4030, 2
    %vm4032 = vcmp.eq.s32.totalorder %v4030, 0
    %v4033 = vxor.u32 %v4027, 2147483648
    %v4034 = vsel %vm4032, %v4026, %v4033
    %vm4035 = vcmp.eq.s32.totalorder %v4030, 2
    %v4036 = vxor.u32 %v4026, 2147483648
    %v4037 = vsel %vm4035, %v4036, %v4027
    %v4038 = vsel %vm4031, %v4034, %v4037
    %v4039 = vsel %vm4028, nan, %v4038
    %v4040 = vand.u32 2147483647, %v3923
    %vm4041 = vcmp.le.f32.partialorder %v4040, 0.7853982
    %vm4042 = vcmp.lt.s32.totalorder %v3923, 0
    %v4043 = vand.u32 %v3923, 2139095040
    %v4044 = vshrl.u32 %v4043, 23
    %v4045 = vsub.s32 %v4044, 127
    %v4046 = vand.u32 2147483647, %v3923
    %v4047 = vand.u32 %v4046, 8388607
    %v4048 = vor.u32 %v4047, 8388608
    %v4049 = vsub.s32 0, %v4048
    %v4050 = vadd.s32 %v4045, 1
    %vm4051 = vcmp.gt.s32.totalorder %v4050, 0
    %v4052 = vsel %vm4051, %v4050, 0
    %v4053 = vshrl.u32 %v4052, 5
    %v4054 = vand.u32 %v4052, 31
    %v4055 = vsub.s32 32, %v4054
    %v4056 = vshrl.u32 683565275, %v4055
    %v4057 = vshll.u32 683565275, %v4054
    %v4058 = vshrl.u32 2475754826, %v4055
    %v4059 = vor.u32 %v4057, %v4058
    %v4060 = vshll.u32 2475754826, %v4054
    %v4061 = vshrl.u32 2131351028, %v4055
    %v4062 = vor.u32 %v4060, %v4061
    %v4063 = vshll.u32 2131351028, %v4054
    %v4064 = vshrl.u32 2102212464, %v4055
    %v4065 = vor.u32 %v4063, %v4064
    %v4066 = vshll.u32 2102212464, %v4054
    %v4067 = vshrl.u32 920167782, %v4055
    %v4068 = vor.u32 %v4066, %v4067
    %v4069 = vshll.u32 920167782, %v4054
    %v4070 = vshrl.u32 1326507024, %v4055
    %v4071 = vor.u32 %v4069, %v4070
    %vm4072 = vcmp.lt.s32.totalorder %v4053, 1
    %vm4073 = vcmp.lt.s32.totalorder %v4053, 2
    %vm4074 = vcmp.lt.s32.totalorder %v4053, 3
    %vm4075 = vcmp.lt.s32.totalorder %v4053, 4
    %v4076 = vsel %vm4072, %v4056, %v4059
    %v4077 = vsel %vm4075, %v4065, 2102212464
    %v4078 = vsel %vm4074, %v4062, %v4077
    %v4079 = vsel %vm4073, %v4076, %v4078
    %v4080 = vsel %vm4072, %v4059, %v4062
    %v4081 = vsel %vm4075, %v4068, 920167782
    %v4082 = vsel %vm4074, %v4065, %v4081
    %v4083 = vsel %vm4073, %v4080, %v4082
    %v4084 = vsel %vm4072, %v4062, %v4065
    %v4085 = vsel %vm4075, %v4071, 1326507024
    %v4086 = vsel %vm4074, %v4068, %v4085
    %v4087 = vsel %vm4073, %v4084, %v4086
    %v4088 = vshll.u32 %v4048, 8
    %v4089 = vmul.u32.u64.compose %v4088, %v4087
    %v4090 = vextract.low.u32 %v4089
    %v4091 = vextract.high.u32 %v4089
    %v4092 = vmul.u32.u64.compose %v4088, %v4083
    %v4093 = vextract.low.u32 %v4092
    %v4094 = vextract.high.u32 %v4092
    %v4095 = vmul.u32 %v4088, %v4079
    %v4096 = vadd.s32 %v4091, %v4093
    %vm4097 = vc.u32 %v4091, %v4093
    %v4098 = vadd.s32 %v4094, 1
    %v4099 = vsel %vm4097, %v4098, %v4094
    %v4100 = vadd.s32 %v4095, %v4099
    %v4101 = vadd.s32 %v4100, 536870912
    %v4102 = vshrl.u32 %v4101, 30
    %v4103 = vshll.u32 %v4102, 30
    %v4104 = vsub.s32 %v4100, %v4103
    %vm4105 = vcmp.lt.s32.totalorder %v4104, 0
    %v4106 = vsub.s32 0, %v4104
    %v4107 = vsel %vm4105, %v4106, %v4104
    %v4108 = vclz %v4107
    %v4109 = vsub.s32 %v4108, 2
    %vm4110 = vcmp.gt.s32.totalorder 0, %v4109
    %v4111 = vsel %vm4110, 0, %v4109
    %v4112 = vsub.s32 32, %v4111
    %v4113 = vshll.u32 %v4104, %v4111
    %v4114 = vshrl.u32 %v4096, %v4112
    %v4115 = vor.u32 %v4113, %v4114
    %v4116 = vsub.s32 4294967266, %v4111
    %v4117 = vadd.s32 %v4116, 127
    %v4118 = vshll.u32 %v4117, 23
    %v4119 = vor.u32 4788187, %v4118
    %v4120 = vand.u32 2147483647, %v4119
    %v4122 = vcvt.s32.f32 %v4115
    %v4123 = vmul.f32 %v4122, %v4120
    %v4124 = vxor.u32 %v4123, 2147483648
    %v4125 = vsel %vm4042, %v4124, %v4123
    %v4126 = vsub.s32 4, %v4102
    %v4127 = vsel %vm4042, %v4126, %v4102
    %v4128 = vsel %vm4041, %v3923, %v4125
    %v4129 = vsel %vm4041, 0, %v4127
    %v4130 = vcosq.f32.pop %v4128
    %v4131 = vsinq.f32.pop %v4128
    %vm4132 = vweird.f32 %v3923
    %v4133 = vadd.s32 %v4129, 3
    %v4134 = vand.u32 %v4133, 3
    %vm4135 = vcmp.lt.s32.totalorder %v4134, 2
    %vm4136 = vcmp.eq.s32.totalorder %v4134, 0
    %v4137 = vxor.u32 %v4131, 2147483648
    %v4138 = vsel %vm4136, %v4130, %v4137
    %vm4139 = vcmp.eq.s32.totalorder %v4134, 2
    %v4140 = vxor.u32 %v4130, 2147483648
    %v4141 = vsel %vm4139, %v4140, %v4131
    %v4142 = vsel %vm4135, %v4138, %v4141
    %v4143 = vsel %vm4132, nan, %v4142
    %v4144 = vand.u32 2147483647, %v3924
    %vm4145 = vcmp.le.f32.partialorder %v4144, 0.7853982
    %vm4146 = vcmp.lt.s32.totalorder %v3924, 0
    %v4147 = vand.u32 %v3924, 2139095040
    %v4148 = vshrl.u32 %v4147, 23
    %v4149 = vsub.s32 %v4148, 127
    %v4150 = vand.u32 2147483647, %v3924
    %v4151 = vand.u32 %v4150, 8388607
    %v4152 = vor.u32 %v4151, 8388608
    %v4153 = vsub.s32 0, %v4152
    %v4154 = vadd.s32 %v4149, 1
    %vm4155 = vcmp.gt.s32.totalorder %v4154, 0
    %v4156 = vsel %vm4155, %v4154, 0
    %v4157 = vshrl.u32 %v4156, 5
    %v4158 = vand.u32 %v4156, 31
    %v4159 = vsub.s32 32, %v4158
    %v4160 = vshrl.u32 683565275, %v4159
    %v4161 = vshll.u32 683565275, %v4158
    %v4162 = vshrl.u32 2475754826, %v4159
    %v4163 = vor.u32 %v4161, %v4162
    %v4164 = vshll.u32 2475754826, %v4158
    %v4165 = vshrl.u32 2131351028, %v4159
    %v4166 = vor.u32 %v4164, %v4165
    %v4167 = vshll.u32 2131351028, %v4158
    %v4168 = vshrl.u32 2102212464, %v4159
    %v4169 = vor.u32 %v4167, %v4168
    %v4170 = vshll.u32 2102212464, %v4158
    %v4171 = vshrl.u32 920167782, %v4159
    %v4172 = vor.u32 %v4170, %v4171
    %v4173 = vshll.u32 920167782, %v4158
    %v4174 = vshrl.u32 1326507024, %v4159
    %v4175 = vor.u32 %v4173, %v4174
    %vm4176 = vcmp.lt.s32.totalorder %v4157, 1
    %vm4177 = vcmp.lt.s32.totalorder %v4157, 2
    %vm4178 = vcmp.lt.s32.totalorder %v4157, 3
    %vm4179 = vcmp.lt.s32.totalorder %v4157, 4
    %v4180 = vsel %vm4176, %v4160, %v4163
    %v4181 = vsel %vm4179, %v4169, 2102212464
    %v4182 = vsel %vm4178, %v4166, %v4181
    %v4183 = vsel %vm4177, %v4180, %v4182
    %v4184 = vsel %vm4176, %v4163, %v4166
    %v4185 = vsel %vm4179, %v4172, 920167782
    %v4186 = vsel %vm4178, %v4169, %v4185
    %v4187 = vsel %vm4177, %v4184, %v4186
    %v4188 = vsel %vm4176, %v4166, %v4169
    %v4189 = vsel %vm4179, %v4175, 1326507024
    %v4190 = vsel %vm4178, %v4172, %v4189
    %v4191 = vsel %vm4177, %v4188, %v4190
    %v4192 = vshll.u32 %v4152, 8
    %v4193 = vmul.u32.u64.compose %v4192, %v4191
    %v4194 = vextract.low.u32 %v4193
    %v4195 = vextract.high.u32 %v4193
    %v4196 = vmul.u32.u64.compose %v4192, %v4187
    %v4197 = vextract.low.u32 %v4196
    %v4198 = vextract.high.u32 %v4196
    %v4199 = vmul.u32 %v4192, %v4183
    %v4200 = vadd.s32 %v4195, %v4197
    %vm4201 = vc.u32 %v4195, %v4197
    %v4202 = vadd.s32 %v4198, 1
    %v4203 = vsel %vm4201, %v4202, %v4198
    %v4204 = vadd.s32 %v4199, %v4203
    %v4205 = vadd.s32 %v4204, 536870912
    %v4206 = vshrl.u32 %v4205, 30
    %v4207 = vshll.u32 %v4206, 30
    %v4208 = vsub.s32 %v4204, %v4207
    %vm4209 = vcmp.lt.s32.totalorder %v4208, 0
    %v4210 = vsub.s32 0, %v4208
    %v4211 = vsel %vm4209, %v4210, %v4208
    %v4212 = vclz %v4211
    %v4213 = vsub.s32 %v4212, 2
    %vm4214 = vcmp.gt.s32.totalorder 0, %v4213
    %v4215 = vsel %vm4214, 0, %v4213
    %v4216 = vsub.s32 32, %v4215
    %v4217 = vshll.u32 %v4208, %v4215
    %v4218 = vshrl.u32 %v4200, %v4216
    %v4219 = vor.u32 %v4217, %v4218
    %v4220 = vsub.s32 4294967266, %v4215
    %v4221 = vadd.s32 %v4220, 127
    %v4222 = vshll.u32 %v4221, 23
    %v4223 = vor.u32 4788187, %v4222
    %v4224 = vand.u32 2147483647, %v4223
    %v4226 = vcvt.s32.f32 %v4219
    %v4227 = vmul.f32 %v4226, %v4224
    %v4228 = vxor.u32 %v4227, 2147483648
    %v4229 = vsel %vm4146, %v4228, %v4227
    %v4230 = vsub.s32 4, %v4206
    %v4231 = vsel %vm4146, %v4230, %v4206
    %v4232 = vsel %vm4145, %v3924, %v4229
    %v4233 = vsel %vm4145, 0, %v4231
    %v4234 = vcosq.f32.pop %v4232
    %v4235 = vsinq.f32.pop %v4232
    %vm4236 = vweird.f32 %v3924
    %v4237 = vadd.s32 %v4233, 3
    %v4238 = vand.u32 %v4237, 3
    %vm4239 = vcmp.lt.s32.totalorder %v4238, 2
    %vm4240 = vcmp.eq.s32.totalorder %v4238, 0
    %v4241 = vxor.u32 %v4235, 2147483648
    %v4242 = vsel %vm4240, %v4234, %v4241
    %vm4243 = vcmp.eq.s32.totalorder %v4238, 2
    %v4244 = vxor.u32 %v4234, 2147483648
    %v4245 = vsel %vm4243, %v4244, %v4235
    %v4246 = vsel %vm4239, %v4242, %v4245
    %v4247 = vsel %vm4236, nan, %v4246
    %v4248 = vand.u32 2147483647, %v3925
    %vm4249 = vcmp.le.f32.partialorder %v4248, 0.7853982
    %vm4250 = vcmp.lt.s32.totalorder %v3925, 0
    %v4251 = vand.u32 %v3925, 2139095040
    %v4252 = vshrl.u32 %v4251, 23
    %v4253 = vsub.s32 %v4252, 127
    %v4254 = vand.u32 2147483647, %v3925
    %v4255 = vand.u32 %v4254, 8388607
    %v4256 = vor.u32 %v4255, 8388608
    %v4257 = vsub.s32 0, %v4256
    %v4258 = vadd.s32 %v4253, 1
    %vm4259 = vcmp.gt.s32.totalorder %v4258, 0
    %v4260 = vsel %vm4259, %v4258, 0
    %v4261 = vshrl.u32 %v4260, 5
    %v4262 = vand.u32 %v4260, 31
    %v4263 = vsub.s32 32, %v4262
    %v4264 = vshrl.u32 683565275, %v4263
    %v4265 = vshll.u32 683565275, %v4262
    %v4266 = vshrl.u32 2475754826, %v4263
    %v4267 = vor.u32 %v4265, %v4266
    %v4268 = vshll.u32 2475754826, %v4262
    %v4269 = vshrl.u32 2131351028, %v4263
    %v4270 = vor.u32 %v4268, %v4269
    %v4271 = vshll.u32 2131351028, %v4262
    %v4272 = vshrl.u32 2102212464, %v4263
    %v4273 = vor.u32 %v4271, %v4272
    %v4274 = vshll.u32 2102212464, %v4262
    %v4275 = vshrl.u32 920167782, %v4263
    %v4276 = vor.u32 %v4274, %v4275
    %v4277 = vshll.u32 920167782, %v4262
    %v4278 = vshrl.u32 1326507024, %v4263
    %v4279 = vor.u32 %v4277, %v4278
    %vm4280 = vcmp.lt.s32.totalorder %v4261, 1
    %vm4281 = vcmp.lt.s32.totalorder %v4261, 2
    %vm4282 = vcmp.lt.s32.totalorder %v4261, 3
    %vm4283 = vcmp.lt.s32.totalorder %v4261, 4
    %v4284 = vsel %vm4280, %v4264, %v4267
    %v4285 = vsel %vm4283, %v4273, 2102212464
    %v4286 = vsel %vm4282, %v4270, %v4285
    %v4287 = vsel %vm4281, %v4284, %v4286
    %v4288 = vsel %vm4280, %v4267, %v4270
    %v4289 = vsel %vm4283, %v4276, 920167782
    %v4290 = vsel %vm4282, %v4273, %v4289
    %v4291 = vsel %vm4281, %v4288, %v4290
    %v4292 = vsel %vm4280, %v4270, %v4273
    %v4293 = vsel %vm4283, %v4279, 1326507024
    %v4294 = vsel %vm4282, %v4276, %v4293
    %v4295 = vsel %vm4281, %v4292, %v4294
    %v4296 = vshll.u32 %v4256, 8
    %v4297 = vmul.u32.u64.compose %v4296, %v4295
    %v4298 = vextract.low.u32 %v4297
    %v4299 = vextract.high.u32 %v4297
    %v4300 = vmul.u32.u64.compose %v4296, %v4291
    %v4301 = vextract.low.u32 %v4300
    %v4302 = vextract.high.u32 %v4300
    %v4303 = vmul.u32 %v4296, %v4287
    %v4304 = vadd.s32 %v4299, %v4301
    %vm4305 = vc.u32 %v4299, %v4301
    %v4306 = vadd.s32 %v4302, 1
    %v4307 = vsel %vm4305, %v4306, %v4302
    %v4308 = vadd.s32 %v4303, %v4307
    %v4309 = vadd.s32 %v4308, 536870912
    %v4310 = vshrl.u32 %v4309, 30
    %v4311 = vshll.u32 %v4310, 30
    %v4312 = vsub.s32 %v4308, %v4311
    %vm4313 = vcmp.lt.s32.totalorder %v4312, 0
    %v4314 = vsub.s32 0, %v4312
    %v4315 = vsel %vm4313, %v4314, %v4312
    %v4316 = vclz %v4315
    %v4317 = vsub.s32 %v4316, 2
    %vm4318 = vcmp.gt.s32.totalorder 0, %v4317
    %v4319 = vsel %vm4318, 0, %v4317
    %v4320 = vsub.s32 32, %v4319
    %v4321 = vshll.u32 %v4312, %v4319
    %v4322 = vshrl.u32 %v4304, %v4320
    %v4323 = vor.u32 %v4321, %v4322
    %v4324 = vsub.s32 4294967266, %v4319
    %v4325 = vadd.s32 %v4324, 127
    %v4326 = vshll.u32 %v4325, 23
    %v4327 = vor.u32 4788187, %v4326
    %v4328 = vand.u32 2147483647, %v4327
    %v4330 = vcvt.s32.f32 %v4323
    %v4331 = vmul.f32 %v4330, %v4328
    %v4332 = vxor.u32 %v4331, 2147483648
    %v4333 = vsel %vm4250, %v4332, %v4331
    %v4334 = vsub.s32 4, %v4310
    %v4335 = vsel %vm4250, %v4334, %v4310
    %v4336 = vsel %vm4249, %v3925, %v4333
    %v4337 = vsel %vm4249, 0, %v4335
    %v4338 = vcosq.f32.pop %v4336
    %v4339 = vsinq.f32.pop %v4336
    %vm4340 = vweird.f32 %v3925
    %v4341 = vadd.s32 %v4337, 3
    %v4342 = vand.u32 %v4341, 3
    %vm4343 = vcmp.lt.s32.totalorder %v4342, 2
    %vm4344 = vcmp.eq.s32.totalorder %v4342, 0
    %v4345 = vxor.u32 %v4339, 2147483648
    %v4346 = vsel %vm4344, %v4338, %v4345
    %vm4347 = vcmp.eq.s32.totalorder %v4342, 2
    %v4348 = vxor.u32 %v4338, 2147483648
    %v4349 = vsel %vm4347, %v4348, %v4339
    %v4350 = vsel %vm4343, %v4346, %v4349
    %v4351 = vsel %vm4340, nan, %v4350
    %v4352 = vand.u32 2147483647, %v3926
    %vm4353 = vcmp.le.f32.partialorder %v4352, 0.7853982
    %vm4354 = vcmp.lt.s32.totalorder %v3926, 0
    %v4355 = vand.u32 %v3926, 2139095040
    %v4356 = vshrl.u32 %v4355, 23
    %v4357 = vsub.s32 %v4356, 127
    %v4358 = vand.u32 2147483647, %v3926
    %v4359 = vand.u32 %v4358, 8388607
    %v4360 = vor.u32 %v4359, 8388608
    %v4361 = vsub.s32 0, %v4360
    %v4362 = vadd.s32 %v4357, 1
    %vm4363 = vcmp.gt.s32.totalorder %v4362, 0
    %v4364 = vsel %vm4363, %v4362, 0
    %v4365 = vshrl.u32 %v4364, 5
    %v4366 = vand.u32 %v4364, 31
    %v4367 = vsub.s32 32, %v4366
    %v4368 = vshrl.u32 683565275, %v4367
    %v4369 = vshll.u32 683565275, %v4366
    %v4370 = vshrl.u32 2475754826, %v4367
    %v4371 = vor.u32 %v4369, %v4370
    %v4372 = vshll.u32 2475754826, %v4366
    %v4373 = vshrl.u32 2131351028, %v4367
    %v4374 = vor.u32 %v4372, %v4373
    %v4375 = vshll.u32 2131351028, %v4366
    %v4376 = vshrl.u32 2102212464, %v4367
    %v4377 = vor.u32 %v4375, %v4376
    %v4378 = vshll.u32 2102212464, %v4366
    %v4379 = vshrl.u32 920167782, %v4367
    %v4380 = vor.u32 %v4378, %v4379
    %v4381 = vshll.u32 920167782, %v4366
    %v4382 = vshrl.u32 1326507024, %v4367
    %v4383 = vor.u32 %v4381, %v4382
    %vm4384 = vcmp.lt.s32.totalorder %v4365, 1
    %vm4385 = vcmp.lt.s32.totalorder %v4365, 2
    %vm4386 = vcmp.lt.s32.totalorder %v4365, 3
    %vm4387 = vcmp.lt.s32.totalorder %v4365, 4
    %v4388 = vsel %vm4384, %v4368, %v4371
    %v4389 = vsel %vm4387, %v4377, 2102212464
    %v4390 = vsel %vm4386, %v4374, %v4389
    %v4391 = vsel %vm4385, %v4388, %v4390
    %v4392 = vsel %vm4384, %v4371, %v4374
    %v4393 = vsel %vm4387, %v4380, 920167782
    %v4394 = vsel %vm4386, %v4377, %v4393
    %v4395 = vsel %vm4385, %v4392, %v4394
    %v4396 = vsel %vm4384, %v4374, %v4377
    %v4397 = vsel %vm4387, %v4383, 1326507024
    %v4398 = vsel %vm4386, %v4380, %v4397
    %v4399 = vsel %vm4385, %v4396, %v4398
    %v4400 = vshll.u32 %v4360, 8
    %v4401 = vmul.u32.u64.compose %v4400, %v4399
    %v4402 = vextract.low.u32 %v4401
    %v4403 = vextract.high.u32 %v4401
    %v4404 = vmul.u32.u64.compose %v4400, %v4395
    %v4405 = vextract.low.u32 %v4404
    %v4406 = vextract.high.u32 %v4404
    %v4407 = vmul.u32 %v4400, %v4391
    %v4408 = vadd.s32 %v4403, %v4405
    %vm4409 = vc.u32 %v4403, %v4405
    %v4410 = vadd.s32 %v4406, 1
    %v4411 = vsel %vm4409, %v4410, %v4406
    %v4412 = vadd.s32 %v4407, %v4411
    %v4413 = vadd.s32 %v4412, 536870912
    %v4414 = vshrl.u32 %v4413, 30
    %v4415 = vshll.u32 %v4414, 30
    %v4416 = vsub.s32 %v4412, %v4415
    %vm4417 = vcmp.lt.s32.totalorder %v4416, 0
    %v4418 = vsub.s32 0, %v4416
    %v4419 = vsel %vm4417, %v4418, %v4416
    %v4420 = vclz %v4419
    %v4421 = vsub.s32 %v4420, 2
    %vm4422 = vcmp.gt.s32.totalorder 0, %v4421
    %v4423 = vsel %vm4422, 0, %v4421
    %v4424 = vsub.s32 32, %v4423
    %v4425 = vshll.u32 %v4416, %v4423
    %v4426 = vshrl.u32 %v4408, %v4424
    %v4427 = vor.u32 %v4425, %v4426
    %v4428 = vsub.s32 4294967266, %v4423
    %v4429 = vadd.s32 %v4428, 127
    %v4430 = vshll.u32 %v4429, 23
    %v4431 = vor.u32 4788187, %v4430
    %v4432 = vand.u32 2147483647, %v4431
    %v4434 = vcvt.s32.f32 %v4427
    %v4435 = vmul.f32 %v4434, %v4432
    %v4436 = vxor.u32 %v4435, 2147483648
    %v4437 = vsel %vm4354, %v4436, %v4435
    %v4438 = vsub.s32 4, %v4414
    %v4439 = vsel %vm4354, %v4438, %v4414
    %v4440 = vsel %vm4353, %v3926, %v4437
    %v4441 = vsel %vm4353, 0, %v4439
    %v4442 = vcosq.f32.pop %v4440
    %v4443 = vsinq.f32.pop %v4440
    %vm4444 = vweird.f32 %v3926
    %v4445 = vadd.s32 %v4441, 3
    %v4446 = vand.u32 %v4445, 3
    %vm4447 = vcmp.lt.s32.totalorder %v4446, 2
    %vm4448 = vcmp.eq.s32.totalorder %v4446, 0
    %v4449 = vxor.u32 %v4443, 2147483648
    %v4450 = vsel %vm4448, %v4442, %v4449
    %vm4451 = vcmp.eq.s32.totalorder %v4446, 2
    %v4452 = vxor.u32 %v4442, 2147483648
    %v4453 = vsel %vm4451, %v4452, %v4443
    %v4454 = vsel %vm4447, %v4450, %v4453
    %v4455 = vsel %vm4444, nan, %v4454
    %v4456 = vand.u32 2147483647, %v3927
    %vm4457 = vcmp.le.f32.partialorder %v4456, 0.7853982
    %vm4458 = vcmp.lt.s32.totalorder %v3927, 0
    %v4459 = vand.u32 %v3927, 2139095040
    %v4460 = vshrl.u32 %v4459, 23
    %v4461 = vsub.s32 %v4460, 127
    %v4462 = vand.u32 2147483647, %v3927
    %v4463 = vand.u32 %v4462, 8388607
    %v4464 = vor.u32 %v4463, 8388608
    %v4465 = vsub.s32 0, %v4464
    %v4466 = vadd.s32 %v4461, 1
    %vm4467 = vcmp.gt.s32.totalorder %v4466, 0
    %v4468 = vsel %vm4467, %v4466, 0
    %v4469 = vshrl.u32 %v4468, 5
    %v4470 = vand.u32 %v4468, 31
    %v4471 = vsub.s32 32, %v4470
    %v4472 = vshrl.u32 683565275, %v4471
    %v4473 = vshll.u32 683565275, %v4470
    %v4474 = vshrl.u32 2475754826, %v4471
    %v4475 = vor.u32 %v4473, %v4474
    %v4476 = vshll.u32 2475754826, %v4470
    %v4477 = vshrl.u32 2131351028, %v4471
    %v4478 = vor.u32 %v4476, %v4477
    %v4479 = vshll.u32 2131351028, %v4470
    %v4480 = vshrl.u32 2102212464, %v4471
    %v4481 = vor.u32 %v4479, %v4480
    %v4482 = vshll.u32 2102212464, %v4470
    %v4483 = vshrl.u32 920167782, %v4471
    %v4484 = vor.u32 %v4482, %v4483
    %v4485 = vshll.u32 920167782, %v4470
    %v4486 = vshrl.u32 1326507024, %v4471
    %v4487 = vor.u32 %v4485, %v4486
    %vm4488 = vcmp.lt.s32.totalorder %v4469, 1
    %vm4489 = vcmp.lt.s32.totalorder %v4469, 2
    %vm4490 = vcmp.lt.s32.totalorder %v4469, 3
    %vm4491 = vcmp.lt.s32.totalorder %v4469, 4
    %v4492 = vsel %vm4488, %v4472, %v4475
    %v4493 = vsel %vm4491, %v4481, 2102212464
    %v4494 = vsel %vm4490, %v4478, %v4493
    %v4495 = vsel %vm4489, %v4492, %v4494
    %v4496 = vsel %vm4488, %v4475, %v4478
    %v4497 = vsel %vm4491, %v4484, 920167782
    %v4498 = vsel %vm4490, %v4481, %v4497
    %v4499 = vsel %vm4489, %v4496, %v4498
    %v4500 = vsel %vm4488, %v4478, %v4481
    %v4501 = vsel %vm4491, %v4487, 1326507024
    %v4502 = vsel %vm4490, %v4484, %v4501
    %v4503 = vsel %vm4489, %v4500, %v4502
    %v4504 = vshll.u32 %v4464, 8
    %v4505 = vmul.u32.u64.compose %v4504, %v4503
    %v4506 = vextract.low.u32 %v4505
    %v4507 = vextract.high.u32 %v4505
    %v4508 = vmul.u32.u64.compose %v4504, %v4499
    %v4509 = vextract.low.u32 %v4508
    %v4510 = vextract.high.u32 %v4508
    %v4511 = vmul.u32 %v4504, %v4495
    %v4512 = vadd.s32 %v4507, %v4509
    %vm4513 = vc.u32 %v4507, %v4509
    %v4514 = vadd.s32 %v4510, 1
    %v4515 = vsel %vm4513, %v4514, %v4510
    %v4516 = vadd.s32 %v4511, %v4515
    %v4517 = vadd.s32 %v4516, 536870912
    %v4518 = vshrl.u32 %v4517, 30
    %v4519 = vshll.u32 %v4518, 30
    %v4520 = vsub.s32 %v4516, %v4519
    %vm4521 = vcmp.lt.s32.totalorder %v4520, 0
    %v4522 = vsub.s32 0, %v4520
    %v4523 = vsel %vm4521, %v4522, %v4520
    %v4524 = vclz %v4523
    %v4525 = vsub.s32 %v4524, 2
    %vm4526 = vcmp.gt.s32.totalorder 0, %v4525
    %v4527 = vsel %vm4526, 0, %v4525
    %v4528 = vsub.s32 32, %v4527
    %v4529 = vshll.u32 %v4520, %v4527
    %v4530 = vshrl.u32 %v4512, %v4528
    %v4531 = vor.u32 %v4529, %v4530
    %v4532 = vsub.s32 4294967266, %v4527
    %v4533 = vadd.s32 %v4532, 127
    %v4534 = vshll.u32 %v4533, 23
    %v4535 = vor.u32 4788187, %v4534
    %v4536 = vand.u32 2147483647, %v4535
    %v4538 = vcvt.s32.f32 %v4531
    %v4539 = vmul.f32 %v4538, %v4536
    %v4540 = vxor.u32 %v4539, 2147483648
    %v4541 = vsel %vm4458, %v4540, %v4539
    %v4542 = vsub.s32 4, %v4518
    %v4543 = vsel %vm4458, %v4542, %v4518
    %v4544 = vsel %vm4457, %v3927, %v4541
    %v4545 = vsel %vm4457, 0, %v4543
    %v4546 = vcosq.f32.pop %v4544
    %v4547 = vsinq.f32.pop %v4544
    %vm4548 = vweird.f32 %v3927
    %v4549 = vadd.s32 %v4545, 3
    %v4550 = vand.u32 %v4549, 3
    %vm4551 = vcmp.lt.s32.totalorder %v4550, 2
    %vm4552 = vcmp.eq.s32.totalorder %v4550, 0
    %v4553 = vxor.u32 %v4547, 2147483648
    %v4554 = vsel %vm4552, %v4546, %v4553
    %vm4555 = vcmp.eq.s32.totalorder %v4550, 2
    %v4556 = vxor.u32 %v4546, 2147483648
    %v4557 = vsel %vm4555, %v4556, %v4547
    %v4558 = vsel %vm4551, %v4554, %v4557
    %v4559 = vsel %vm4548, nan, %v4558
    %v4560 = vand.u32 2147483647, %v3928
    %vm4561 = vcmp.le.f32.partialorder %v4560, 0.7853982
    %vm4562 = vcmp.lt.s32.totalorder %v3928, 0
    %v4563 = vand.u32 %v3928, 2139095040
    %v4564 = vshrl.u32 %v4563, 23
    %v4565 = vsub.s32 %v4564, 127
    %v4566 = vand.u32 2147483647, %v3928
    %v4567 = vand.u32 %v4566, 8388607
    %v4568 = vor.u32 %v4567, 8388608
    %v4569 = vsub.s32 0, %v4568
    %v4570 = vadd.s32 %v4565, 1
    %vm4571 = vcmp.gt.s32.totalorder %v4570, 0
    %v4572 = vsel %vm4571, %v4570, 0
    %v4573 = vshrl.u32 %v4572, 5
    %v4574 = vand.u32 %v4572, 31
    %v4575 = vsub.s32 32, %v4574
    %v4576 = vshrl.u32 683565275, %v4575
    %v4577 = vshll.u32 683565275, %v4574
    %v4578 = vshrl.u32 2475754826, %v4575
    %v4579 = vor.u32 %v4577, %v4578
    %v4580 = vshll.u32 2475754826, %v4574
    %v4581 = vshrl.u32 2131351028, %v4575
    %v4582 = vor.u32 %v4580, %v4581
    %v4583 = vshll.u32 2131351028, %v4574
    %v4584 = vshrl.u32 2102212464, %v4575
    %v4585 = vor.u32 %v4583, %v4584
    %v4586 = vshll.u32 2102212464, %v4574
    %v4587 = vshrl.u32 920167782, %v4575
    %v4588 = vor.u32 %v4586, %v4587
    %v4589 = vshll.u32 920167782, %v4574
    %v4590 = vshrl.u32 1326507024, %v4575
    %v4591 = vor.u32 %v4589, %v4590
    %vm4592 = vcmp.lt.s32.totalorder %v4573, 1
    %vm4593 = vcmp.lt.s32.totalorder %v4573, 2
    %vm4594 = vcmp.lt.s32.totalorder %v4573, 3
    %vm4595 = vcmp.lt.s32.totalorder %v4573, 4
    %v4596 = vsel %vm4592, %v4576, %v4579
    %v4597 = vsel %vm4595, %v4585, 2102212464
    %v4598 = vsel %vm4594, %v4582, %v4597
    %v4599 = vsel %vm4593, %v4596, %v4598
    %v4600 = vsel %vm4592, %v4579, %v4582
    %v4601 = vsel %vm4595, %v4588, 920167782
    %v4602 = vsel %vm4594, %v4585, %v4601
    %v4603 = vsel %vm4593, %v4600, %v4602
    %v4604 = vsel %vm4592, %v4582, %v4585
    %v4605 = vsel %vm4595, %v4591, 1326507024
    %v4606 = vsel %vm4594, %v4588, %v4605
    %v4607 = vsel %vm4593, %v4604, %v4606
    %v4608 = vshll.u32 %v4568, 8
    %v4609 = vmul.u32.u64.compose %v4608, %v4607
    %v4610 = vextract.low.u32 %v4609
    %v4611 = vextract.high.u32 %v4609
    %v4612 = vmul.u32.u64.compose %v4608, %v4603
    %v4613 = vextract.low.u32 %v4612
    %v4614 = vextract.high.u32 %v4612
    %v4615 = vmul.u32 %v4608, %v4599
    %v4616 = vadd.s32 %v4611, %v4613
    %vm4617 = vc.u32 %v4611, %v4613
    %v4618 = vadd.s32 %v4614, 1
    %v4619 = vsel %vm4617, %v4618, %v4614
    %v4620 = vadd.s32 %v4615, %v4619
    %v4621 = vadd.s32 %v4620, 536870912
    %v4622 = vshrl.u32 %v4621, 30
    %v4623 = vshll.u32 %v4622, 30
    %v4624 = vsub.s32 %v4620, %v4623
    %vm4625 = vcmp.lt.s32.totalorder %v4624, 0
    %v4626 = vsub.s32 0, %v4624
    %v4627 = vsel %vm4625, %v4626, %v4624
    %v4628 = vclz %v4627
    %v4629 = vsub.s32 %v4628, 2
    %vm4630 = vcmp.gt.s32.totalorder 0, %v4629
    %v4631 = vsel %vm4630, 0, %v4629
    %v4632 = vsub.s32 32, %v4631
    %v4633 = vshll.u32 %v4624, %v4631
    %v4634 = vshrl.u32 %v4616, %v4632
    %v4635 = vor.u32 %v4633, %v4634
    %v4636 = vsub.s32 4294967266, %v4631
    %v4637 = vadd.s32 %v4636, 127
    %v4638 = vshll.u32 %v4637, 23
    %v4639 = vor.u32 4788187, %v4638
    %v4640 = vand.u32 2147483647, %v4639
    %v4642 = vcvt.s32.f32 %v4635
    %v4643 = vmul.f32 %v4642, %v4640
    %v4644 = vxor.u32 %v4643, 2147483648
    %v4645 = vsel %vm4562, %v4644, %v4643
    %v4646 = vsub.s32 4, %v4622
    %v4647 = vsel %vm4562, %v4646, %v4622
    %v4648 = vsel %vm4561, %v3928, %v4645
    %v4649 = vsel %vm4561, 0, %v4647
    %v4650 = vcosq.f32.pop %v4648
    %v4651 = vsinq.f32.pop %v4648
    %vm4652 = vweird.f32 %v3928
    %v4653 = vadd.s32 %v4649, 3
    %v4654 = vand.u32 %v4653, 3
    %vm4655 = vcmp.lt.s32.totalorder %v4654, 2
    %vm4656 = vcmp.eq.s32.totalorder %v4654, 0
    %v4657 = vxor.u32 %v4651, 2147483648
    %v4658 = vsel %vm4656, %v4650, %v4657
    %vm4659 = vcmp.eq.s32.totalorder %v4654, 2
    %v4660 = vxor.u32 %v4650, 2147483648
    %v4661 = vsel %vm4659, %v4660, %v4651
    %v4662 = vsel %vm4655, %v4658, %v4661
    %v4663 = vsel %vm4652, nan, %v4662
    %v4664 = vand.u32 2147483647, %v3929
    %vm4665 = vcmp.le.f32.partialorder %v4664, 0.7853982
    %vm4666 = vcmp.lt.s32.totalorder %v3929, 0
    %v4667 = vand.u32 %v3929, 2139095040
    %v4668 = vshrl.u32 %v4667, 23
    %v4669 = vsub.s32 %v4668, 127
    %v4670 = vand.u32 2147483647, %v3929
    %v4671 = vand.u32 %v4670, 8388607
    %v4672 = vor.u32 %v4671, 8388608
    %v4673 = vsub.s32 0, %v4672
    %v4674 = vadd.s32 %v4669, 1
    %vm4675 = vcmp.gt.s32.totalorder %v4674, 0
    %v4676 = vsel %vm4675, %v4674, 0
    %v4677 = vshrl.u32 %v4676, 5
    %v4678 = vand.u32 %v4676, 31
    %v4679 = vsub.s32 32, %v4678
    %v4680 = vshrl.u32 683565275, %v4679
    %v4681 = vshll.u32 683565275, %v4678
    %v4682 = vshrl.u32 2475754826, %v4679
    %v4683 = vor.u32 %v4681, %v4682
    %v4684 = vshll.u32 2475754826, %v4678
    %v4685 = vshrl.u32 2131351028, %v4679
    %v4686 = vor.u32 %v4684, %v4685
    %v4687 = vshll.u32 2131351028, %v4678
    %v4688 = vshrl.u32 2102212464, %v4679
    %v4689 = vor.u32 %v4687, %v4688
    %v4690 = vshll.u32 2102212464, %v4678
    %v4691 = vshrl.u32 920167782, %v4679
    %v4692 = vor.u32 %v4690, %v4691
    %v4693 = vshll.u32 920167782, %v4678
    %v4694 = vshrl.u32 1326507024, %v4679
    %v4695 = vor.u32 %v4693, %v4694
    %vm4696 = vcmp.lt.s32.totalorder %v4677, 1
    %vm4697 = vcmp.lt.s32.totalorder %v4677, 2
    %vm4698 = vcmp.lt.s32.totalorder %v4677, 3
    %vm4699 = vcmp.lt.s32.totalorder %v4677, 4
    %v4700 = vsel %vm4696, %v4680, %v4683
    %v4701 = vsel %vm4699, %v4689, 2102212464
    %v4702 = vsel %vm4698, %v4686, %v4701
    %v4703 = vsel %vm4697, %v4700, %v4702
    %v4704 = vsel %vm4696, %v4683, %v4686
    %v4705 = vsel %vm4699, %v4692, 920167782
    %v4706 = vsel %vm4698, %v4689, %v4705
    %v4707 = vsel %vm4697, %v4704, %v4706
    %v4708 = vsel %vm4696, %v4686, %v4689
    %v4709 = vsel %vm4699, %v4695, 1326507024
    %v4710 = vsel %vm4698, %v4692, %v4709
    %v4711 = vsel %vm4697, %v4708, %v4710
    %v4712 = vshll.u32 %v4672, 8
    %v4713 = vmul.u32.u64.compose %v4712, %v4711
    %v4714 = vextract.low.u32 %v4713
    %v4715 = vextract.high.u32 %v4713
    %v4716 = vmul.u32.u64.compose %v4712, %v4707
    %v4717 = vextract.low.u32 %v4716
    %v4718 = vextract.high.u32 %v4716
    %v4719 = vmul.u32 %v4712, %v4703
    %v4720 = vadd.s32 %v4715, %v4717
    %vm4721 = vc.u32 %v4715, %v4717
    %v4722 = vadd.s32 %v4718, 1
    %v4723 = vsel %vm4721, %v4722, %v4718
    %v4724 = vadd.s32 %v4719, %v4723
    %v4725 = vadd.s32 %v4724, 536870912
    %v4726 = vshrl.u32 %v4725, 30
    %v4727 = vshll.u32 %v4726, 30
    %v4728 = vsub.s32 %v4724, %v4727
    %vm4729 = vcmp.lt.s32.totalorder %v4728, 0
    %v4730 = vsub.s32 0, %v4728
    %v4731 = vsel %vm4729, %v4730, %v4728
    %v4732 = vclz %v4731
    %v4733 = vsub.s32 %v4732, 2
    %vm4734 = vcmp.gt.s32.totalorder 0, %v4733
    %v4735 = vsel %vm4734, 0, %v4733
    %v4736 = vsub.s32 32, %v4735
    %v4737 = vshll.u32 %v4728, %v4735
    %v4738 = vshrl.u32 %v4720, %v4736
    %v4739 = vor.u32 %v4737, %v4738
    %v4740 = vsub.s32 4294967266, %v4735
    %v4741 = vadd.s32 %v4740, 127
    %v4742 = vshll.u32 %v4741, 23
    %v4743 = vor.u32 4788187, %v4742
    %v4744 = vand.u32 2147483647, %v4743
    %v4746 = vcvt.s32.f32 %v4739
    %v4747 = vmul.f32 %v4746, %v4744
    %v4748 = vxor.u32 %v4747, 2147483648
    %v4749 = vsel %vm4666, %v4748, %v4747
    %v4750 = vsub.s32 4, %v4726
    %v4751 = vsel %vm4666, %v4750, %v4726
    %v4752 = vsel %vm4665, %v3929, %v4749
    %v4753 = vsel %vm4665, 0, %v4751
    %v4754 = vcosq.f32.pop %v4752
    %v4755 = vsinq.f32.pop %v4752
    %vm4756 = vweird.f32 %v3929
    %v4757 = vadd.s32 %v4753, 3
    %v4758 = vand.u32 %v4757, 3
    %vm4759 = vcmp.lt.s32.totalorder %v4758, 2
    %vm4760 = vcmp.eq.s32.totalorder %v4758, 0
    %v4761 = vxor.u32 %v4755, 2147483648
    %v4762 = vsel %vm4760, %v4754, %v4761
    %vm4763 = vcmp.eq.s32.totalorder %v4758, 2
    %v4764 = vxor.u32 %v4754, 2147483648
    %v4765 = vsel %vm4763, %v4764, %v4755
    %v4766 = vsel %vm4759, %v4762, %v4765
    %v4767 = vsel %vm4756, nan, %v4766
    %v4768 = vand.u32 2147483647, %v3930
    %vm4769 = vcmp.le.f32.partialorder %v4768, 0.7853982
    %vm4770 = vcmp.lt.s32.totalorder %v3930, 0
    %v4771 = vand.u32 %v3930, 2139095040
    %v4772 = vshrl.u32 %v4771, 23
    %v4773 = vsub.s32 %v4772, 127
    %v4774 = vand.u32 2147483647, %v3930
    %v4775 = vand.u32 %v4774, 8388607
    %v4776 = vor.u32 %v4775, 8388608
    %v4777 = vsub.s32 0, %v4776
    %v4778 = vadd.s32 %v4773, 1
    %vm4779 = vcmp.gt.s32.totalorder %v4778, 0
    %v4780 = vsel %vm4779, %v4778, 0
    %v4781 = vshrl.u32 %v4780, 5
    %v4782 = vand.u32 %v4780, 31
    %v4783 = vsub.s32 32, %v4782
    %v4784 = vshrl.u32 683565275, %v4783
    %v4785 = vshll.u32 683565275, %v4782
    %v4786 = vshrl.u32 2475754826, %v4783
    %v4787 = vor.u32 %v4785, %v4786
    %v4788 = vshll.u32 2475754826, %v4782
    %v4789 = vshrl.u32 2131351028, %v4783
    %v4790 = vor.u32 %v4788, %v4789
    %v4791 = vshll.u32 2131351028, %v4782
    %v4792 = vshrl.u32 2102212464, %v4783
    %v4793 = vor.u32 %v4791, %v4792
    %v4794 = vshll.u32 2102212464, %v4782
    %v4795 = vshrl.u32 920167782, %v4783
    %v4796 = vor.u32 %v4794, %v4795
    %v4797 = vshll.u32 920167782, %v4782
    %v4798 = vshrl.u32 1326507024, %v4783
    %v4799 = vor.u32 %v4797, %v4798
    %vm4800 = vcmp.lt.s32.totalorder %v4781, 1
    %vm4801 = vcmp.lt.s32.totalorder %v4781, 2
    %vm4802 = vcmp.lt.s32.totalorder %v4781, 3
    %vm4803 = vcmp.lt.s32.totalorder %v4781, 4
    %v4804 = vsel %vm4800, %v4784, %v4787
    %v4805 = vsel %vm4803, %v4793, 2102212464
    %v4806 = vsel %vm4802, %v4790, %v4805
    %v4807 = vsel %vm4801, %v4804, %v4806
    %v4808 = vsel %vm4800, %v4787, %v4790
    %v4809 = vsel %vm4803, %v4796, 920167782
    %v4810 = vsel %vm4802, %v4793, %v4809
    %v4811 = vsel %vm4801, %v4808, %v4810
    %v4812 = vsel %vm4800, %v4790, %v4793
    %v4813 = vsel %vm4803, %v4799, 1326507024
    %v4814 = vsel %vm4802, %v4796, %v4813
    %v4815 = vsel %vm4801, %v4812, %v4814
    %v4816 = vshll.u32 %v4776, 8
    %v4817 = vmul.u32.u64.compose %v4816, %v4815
    %v4818 = vextract.low.u32 %v4817
    %v4819 = vextract.high.u32 %v4817
    %v4820 = vmul.u32.u64.compose %v4816, %v4811
    %v4821 = vextract.low.u32 %v4820
    %v4822 = vextract.high.u32 %v4820
    %v4823 = vmul.u32 %v4816, %v4807
    %v4824 = vadd.s32 %v4819, %v4821
    %vm4825 = vc.u32 %v4819, %v4821
    %v4826 = vadd.s32 %v4822, 1
    %v4827 = vsel %vm4825, %v4826, %v4822
    %v4828 = vadd.s32 %v4823, %v4827
    %v4829 = vadd.s32 %v4828, 536870912
    %v4830 = vshrl.u32 %v4829, 30
    %v4831 = vshll.u32 %v4830, 30
    %v4832 = vsub.s32 %v4828, %v4831
    %vm4833 = vcmp.lt.s32.totalorder %v4832, 0
    %v4834 = vsub.s32 0, %v4832
    %v4835 = vsel %vm4833, %v4834, %v4832
    %v4836 = vclz %v4835
    %v4837 = vsub.s32 %v4836, 2
    %vm4838 = vcmp.gt.s32.totalorder 0, %v4837
    %v4839 = vsel %vm4838, 0, %v4837
    %v4840 = vsub.s32 32, %v4839
    %v4841 = vshll.u32 %v4832, %v4839
    %v4842 = vshrl.u32 %v4824, %v4840
    %v4843 = vor.u32 %v4841, %v4842
    %v4844 = vsub.s32 4294967266, %v4839
    %v4845 = vadd.s32 %v4844, 127
    %v4846 = vshll.u32 %v4845, 23
    %v4847 = vor.u32 4788187, %v4846
    %v4848 = vand.u32 2147483647, %v4847
    %v4850 = vcvt.s32.f32 %v4843
    %v4851 = vmul.f32 %v4850, %v4848
    %v4852 = vxor.u32 %v4851, 2147483648
    %v4853 = vsel %vm4770, %v4852, %v4851
    %v4854 = vsub.s32 4, %v4830
    %v4855 = vsel %vm4770, %v4854, %v4830
    %v4856 = vsel %vm4769, %v3930, %v4853
    %v4857 = vsel %vm4769, 0, %v4855
    %v4858 = vcosq.f32.pop %v4856
    %v4859 = vsinq.f32.pop %v4856
    %vm4860 = vweird.f32 %v3930
    %v4861 = vadd.s32 %v4857, 3
    %v4862 = vand.u32 %v4861, 3
    %vm4863 = vcmp.lt.s32.totalorder %v4862, 2
    %vm4864 = vcmp.eq.s32.totalorder %v4862, 0
    %v4865 = vxor.u32 %v4859, 2147483648
    %v4866 = vsel %vm4864, %v4858, %v4865
    %vm4867 = vcmp.eq.s32.totalorder %v4862, 2
    %v4868 = vxor.u32 %v4858, 2147483648
    %v4869 = vsel %vm4867, %v4868, %v4859
    %v4870 = vsel %vm4863, %v4866, %v4869
    %v4871 = vsel %vm4860, nan, %v4870
    %v4872 = vand.u32 2147483647, %v3931
    %vm4873 = vcmp.le.f32.partialorder %v4872, 0.7853982
    %vm4874 = vcmp.lt.s32.totalorder %v3931, 0
    %v4875 = vand.u32 %v3931, 2139095040
    %v4876 = vshrl.u32 %v4875, 23
    %v4877 = vsub.s32 %v4876, 127
    %v4878 = vand.u32 2147483647, %v3931
    %v4879 = vand.u32 %v4878, 8388607
    %v4880 = vor.u32 %v4879, 8388608
    %v4881 = vsub.s32 0, %v4880
    %v4882 = vadd.s32 %v4877, 1
    %vm4883 = vcmp.gt.s32.totalorder %v4882, 0
    %v4884 = vsel %vm4883, %v4882, 0
    %v4885 = vshrl.u32 %v4884, 5
    %v4886 = vand.u32 %v4884, 31
    %v4887 = vsub.s32 32, %v4886
    %v4888 = vshrl.u32 683565275, %v4887
    %v4889 = vshll.u32 683565275, %v4886
    %v4890 = vshrl.u32 2475754826, %v4887
    %v4891 = vor.u32 %v4889, %v4890
    %v4892 = vshll.u32 2475754826, %v4886
    %v4893 = vshrl.u32 2131351028, %v4887
    %v4894 = vor.u32 %v4892, %v4893
    %v4895 = vshll.u32 2131351028, %v4886
    %v4896 = vshrl.u32 2102212464, %v4887
    %v4897 = vor.u32 %v4895, %v4896
    %v4898 = vshll.u32 2102212464, %v4886
    %v4899 = vshrl.u32 920167782, %v4887
    %v4900 = vor.u32 %v4898, %v4899
    %v4901 = vshll.u32 920167782, %v4886
    %v4902 = vshrl.u32 1326507024, %v4887
    %v4903 = vor.u32 %v4901, %v4902
    %vm4904 = vcmp.lt.s32.totalorder %v4885, 1
    %vm4905 = vcmp.lt.s32.totalorder %v4885, 2
    %vm4906 = vcmp.lt.s32.totalorder %v4885, 3
    %vm4907 = vcmp.lt.s32.totalorder %v4885, 4
    %v4908 = vsel %vm4904, %v4888, %v4891
    %v4909 = vsel %vm4907, %v4897, 2102212464
    %v4910 = vsel %vm4906, %v4894, %v4909
    %v4911 = vsel %vm4905, %v4908, %v4910
    %v4912 = vsel %vm4904, %v4891, %v4894
    %v4913 = vsel %vm4907, %v4900, 920167782
    %v4914 = vsel %vm4906, %v4897, %v4913
    %v4915 = vsel %vm4905, %v4912, %v4914
    %v4916 = vsel %vm4904, %v4894, %v4897
    %v4917 = vsel %vm4907, %v4903, 1326507024
    %v4918 = vsel %vm4906, %v4900, %v4917
    %v4919 = vsel %vm4905, %v4916, %v4918
    %v4920 = vshll.u32 %v4880, 8
    %v4921 = vmul.u32.u64.compose %v4920, %v4919
    %v4922 = vextract.low.u32 %v4921
    %v4923 = vextract.high.u32 %v4921
    %v4924 = vmul.u32.u64.compose %v4920, %v4915
    %v4925 = vextract.low.u32 %v4924
    %v4926 = vextract.high.u32 %v4924
    %v4927 = vmul.u32 %v4920, %v4911
    %v4928 = vadd.s32 %v4923, %v4925
    %vm4929 = vc.u32 %v4923, %v4925
    %v4930 = vadd.s32 %v4926, 1
    %v4931 = vsel %vm4929, %v4930, %v4926
    %v4932 = vadd.s32 %v4927, %v4931
    %v4933 = vadd.s32 %v4932, 536870912
    %v4934 = vshrl.u32 %v4933, 30
    %v4935 = vshll.u32 %v4934, 30
    %v4936 = vsub.s32 %v4932, %v4935
    %vm4937 = vcmp.lt.s32.totalorder %v4936, 0
    %v4938 = vsub.s32 0, %v4936
    %v4939 = vsel %vm4937, %v4938, %v4936
    %v4940 = vclz %v4939
    %v4941 = vsub.s32 %v4940, 2
    %vm4942 = vcmp.gt.s32.totalorder 0, %v4941
    %v4943 = vsel %vm4942, 0, %v4941
    %v4944 = vsub.s32 32, %v4943
    %v4945 = vshll.u32 %v4936, %v4943
    %v4946 = vshrl.u32 %v4928, %v4944
    %v4947 = vor.u32 %v4945, %v4946
    %v4948 = vsub.s32 4294967266, %v4943
    %v4949 = vadd.s32 %v4948, 127
    %v4950 = vshll.u32 %v4949, 23
    %v4951 = vor.u32 4788187, %v4950
    %v4952 = vand.u32 2147483647, %v4951
    %v4954 = vcvt.s32.f32 %v4947
    %v4955 = vmul.f32 %v4954, %v4952
    %v4956 = vxor.u32 %v4955, 2147483648
    %v4957 = vsel %vm4874, %v4956, %v4955
    %v4958 = vsub.s32 4, %v4934
    %v4959 = vsel %vm4874, %v4958, %v4934
    %v4960 = vsel %vm4873, %v3931, %v4957
    %v4961 = vsel %vm4873, 0, %v4959
    %v4962 = vcosq.f32.pop %v4960
    %v4963 = vsinq.f32.pop %v4960
    %vm4964 = vweird.f32 %v3931
    %v4965 = vadd.s32 %v4961, 3
    %v4966 = vand.u32 %v4965, 3
    %vm4967 = vcmp.lt.s32.totalorder %v4966, 2
    %vm4968 = vcmp.eq.s32.totalorder %v4966, 0
    %v4969 = vxor.u32 %v4963, 2147483648
    %v4970 = vsel %vm4968, %v4962, %v4969
    %vm4971 = vcmp.eq.s32.totalorder %v4966, 2
    %v4972 = vxor.u32 %v4962, 2147483648
    %v4973 = vsel %vm4971, %v4972, %v4963
    %v4974 = vsel %vm4967, %v4970, %v4973
    %v4975 = vsel %vm4964, nan, %v4974
    %v4976 = vand.u32 2147483647, %v3932
    %vm4977 = vcmp.le.f32.partialorder %v4976, 0.7853982
    %vm4978 = vcmp.lt.s32.totalorder %v3932, 0
    %v4979 = vand.u32 %v3932, 2139095040
    %v4980 = vshrl.u32 %v4979, 23
    %v4981 = vsub.s32 %v4980, 127
    %v4982 = vand.u32 2147483647, %v3932
    %v4983 = vand.u32 %v4982, 8388607
    %v4984 = vor.u32 %v4983, 8388608
    %v4985 = vsub.s32 0, %v4984
    %v4986 = vadd.s32 %v4981, 1
    %vm4987 = vcmp.gt.s32.totalorder %v4986, 0
    %v4988 = vsel %vm4987, %v4986, 0
    %v4989 = vshrl.u32 %v4988, 5
    %v4990 = vand.u32 %v4988, 31
    %v4991 = vsub.s32 32, %v4990
    %v4992 = vshrl.u32 683565275, %v4991
    %v4993 = vshll.u32 683565275, %v4990
    %v4994 = vshrl.u32 2475754826, %v4991
    %v4995 = vor.u32 %v4993, %v4994
    %v4996 = vshll.u32 2475754826, %v4990
    %v4997 = vshrl.u32 2131351028, %v4991
    %v4998 = vor.u32 %v4996, %v4997
    %v4999 = vshll.u32 2131351028, %v4990
    %v5000 = vshrl.u32 2102212464, %v4991
    %v5001 = vor.u32 %v4999, %v5000
    %v5002 = vshll.u32 2102212464, %v4990
    %v5003 = vshrl.u32 920167782, %v4991
    %v5004 = vor.u32 %v5002, %v5003
    %v5005 = vshll.u32 920167782, %v4990
    %v5006 = vshrl.u32 1326507024, %v4991
    %v5007 = vor.u32 %v5005, %v5006
    %vm5008 = vcmp.lt.s32.totalorder %v4989, 1
    %vm5009 = vcmp.lt.s32.totalorder %v4989, 2
    %vm5010 = vcmp.lt.s32.totalorder %v4989, 3
    %vm5011 = vcmp.lt.s32.totalorder %v4989, 4
    %v5012 = vsel %vm5008, %v4992, %v4995
    %v5013 = vsel %vm5011, %v5001, 2102212464
    %v5014 = vsel %vm5010, %v4998, %v5013
    %v5015 = vsel %vm5009, %v5012, %v5014
    %v5016 = vsel %vm5008, %v4995, %v4998
    %v5017 = vsel %vm5011, %v5004, 920167782
    %v5018 = vsel %vm5010, %v5001, %v5017
    %v5019 = vsel %vm5009, %v5016, %v5018
    %v5020 = vsel %vm5008, %v4998, %v5001
    %v5021 = vsel %vm5011, %v5007, 1326507024
    %v5022 = vsel %vm5010, %v5004, %v5021
    %v5023 = vsel %vm5009, %v5020, %v5022
    %v5024 = vshll.u32 %v4984, 8
    %v5025 = vmul.u32.u64.compose %v5024, %v5023
    %v5026 = vextract.low.u32 %v5025
    %v5027 = vextract.high.u32 %v5025
    %v5028 = vmul.u32.u64.compose %v5024, %v5019
    %v5029 = vextract.low.u32 %v5028
    %v5030 = vextract.high.u32 %v5028
    %v5031 = vmul.u32 %v5024, %v5015
    %v5032 = vadd.s32 %v5027, %v5029
    %vm5033 = vc.u32 %v5027, %v5029
    %v5034 = vadd.s32 %v5030, 1
    %v5035 = vsel %vm5033, %v5034, %v5030
    %v5036 = vadd.s32 %v5031, %v5035
    %v5037 = vadd.s32 %v5036, 536870912
    %v5038 = vshrl.u32 %v5037, 30
    %v5039 = vshll.u32 %v5038, 30
    %v5040 = vsub.s32 %v5036, %v5039
    %vm5041 = vcmp.lt.s32.totalorder %v5040, 0
    %v5042 = vsub.s32 0, %v5040
    %v5043 = vsel %vm5041, %v5042, %v5040
    %v5044 = vclz %v5043
    %v5045 = vsub.s32 %v5044, 2
    %vm5046 = vcmp.gt.s32.totalorder 0, %v5045
    %v5047 = vsel %vm5046, 0, %v5045
    %v5048 = vsub.s32 32, %v5047
    %v5049 = vshll.u32 %v5040, %v5047
    %v5050 = vshrl.u32 %v5032, %v5048
    %v5051 = vor.u32 %v5049, %v5050
    %v5052 = vsub.s32 4294967266, %v5047
    %v5053 = vadd.s32 %v5052, 127
    %v5054 = vshll.u32 %v5053, 23
    %v5055 = vor.u32 4788187, %v5054
    %v5056 = vand.u32 2147483647, %v5055
    %v5058 = vcvt.s32.f32 %v5051
    %v5059 = vmul.f32 %v5058, %v5056
    %v5060 = vxor.u32 %v5059, 2147483648
    %v5061 = vsel %vm4978, %v5060, %v5059
    %v5062 = vsub.s32 4, %v5038
    %v5063 = vsel %vm4978, %v5062, %v5038
    %v5064 = vsel %vm4977, %v3932, %v5061
    %v5065 = vsel %vm4977, 0, %v5063
    %v5066 = vcosq.f32.pop %v5064
    %v5067 = vsinq.f32.pop %v5064
    %vm5068 = vweird.f32 %v3932
    %v5069 = vadd.s32 %v5065, 3
    %v5070 = vand.u32 %v5069, 3
    %vm5071 = vcmp.lt.s32.totalorder %v5070, 2
    %vm5072 = vcmp.eq.s32.totalorder %v5070, 0
    %v5073 = vxor.u32 %v5067, 2147483648
    %v5074 = vsel %vm5072, %v5066, %v5073
    %vm5075 = vcmp.eq.s32.totalorder %v5070, 2
    %v5076 = vxor.u32 %v5066, 2147483648
    %v5077 = vsel %vm5075, %v5076, %v5067
    %v5078 = vsel %vm5071, %v5074, %v5077
    %v5079 = vsel %vm5068, nan, %v5078
    %v5080 = vand.u32 2147483647, %v3933
    %vm5081 = vcmp.le.f32.partialorder %v5080, 0.7853982
    %vm5082 = vcmp.lt.s32.totalorder %v3933, 0
    %v5083 = vand.u32 %v3933, 2139095040
    %v5084 = vshrl.u32 %v5083, 23
    %v5085 = vsub.s32 %v5084, 127
    %v5086 = vand.u32 2147483647, %v3933
    %v5087 = vand.u32 %v5086, 8388607
    %v5088 = vor.u32 %v5087, 8388608
    %v5089 = vsub.s32 0, %v5088
    %v5090 = vadd.s32 %v5085, 1
    %vm5091 = vcmp.gt.s32.totalorder %v5090, 0
    %v5092 = vsel %vm5091, %v5090, 0
    %v5093 = vshrl.u32 %v5092, 5
    %v5094 = vand.u32 %v5092, 31
    %v5095 = vsub.s32 32, %v5094
    %v5096 = vshrl.u32 683565275, %v5095
    %v5097 = vshll.u32 683565275, %v5094
    %v5098 = vshrl.u32 2475754826, %v5095
    %v5099 = vor.u32 %v5097, %v5098
    %v5100 = vshll.u32 2475754826, %v5094
    %v5101 = vshrl.u32 2131351028, %v5095
    %v5102 = vor.u32 %v5100, %v5101
    %v5103 = vshll.u32 2131351028, %v5094
    %v5104 = vshrl.u32 2102212464, %v5095
    %v5105 = vor.u32 %v5103, %v5104
    %v5106 = vshll.u32 2102212464, %v5094
    %v5107 = vshrl.u32 920167782, %v5095
    %v5108 = vor.u32 %v5106, %v5107
    %v5109 = vshll.u32 920167782, %v5094
    %v5110 = vshrl.u32 1326507024, %v5095
    %v5111 = vor.u32 %v5109, %v5110
    %vm5112 = vcmp.lt.s32.totalorder %v5093, 1
    %vm5113 = vcmp.lt.s32.totalorder %v5093, 2
    %vm5114 = vcmp.lt.s32.totalorder %v5093, 3
    %vm5115 = vcmp.lt.s32.totalorder %v5093, 4
    %v5116 = vsel %vm5112, %v5096, %v5099
    %v5117 = vsel %vm5115, %v5105, 2102212464
    %v5118 = vsel %vm5114, %v5102, %v5117
    %v5119 = vsel %vm5113, %v5116, %v5118
    %v5120 = vsel %vm5112, %v5099, %v5102
    %v5121 = vsel %vm5115, %v5108, 920167782
    %v5122 = vsel %vm5114, %v5105, %v5121
    %v5123 = vsel %vm5113, %v5120, %v5122
    %v5124 = vsel %vm5112, %v5102, %v5105
    %v5125 = vsel %vm5115, %v5111, 1326507024
    %v5126 = vsel %vm5114, %v5108, %v5125
    %v5127 = vsel %vm5113, %v5124, %v5126
    %v5128 = vshll.u32 %v5088, 8
    %v5129 = vmul.u32.u64.compose %v5128, %v5127
    %v5130 = vextract.low.u32 %v5129
    %v5131 = vextract.high.u32 %v5129
    %v5132 = vmul.u32.u64.compose %v5128, %v5123
    %v5133 = vextract.low.u32 %v5132
    %v5134 = vextract.high.u32 %v5132
    %v5135 = vmul.u32 %v5128, %v5119
    %v5136 = vadd.s32 %v5131, %v5133
    %vm5137 = vc.u32 %v5131, %v5133
    %v5138 = vadd.s32 %v5134, 1
    %v5139 = vsel %vm5137, %v5138, %v5134
    %v5140 = vadd.s32 %v5135, %v5139
    %v5141 = vadd.s32 %v5140, 536870912
    %v5142 = vshrl.u32 %v5141, 30
    %v5143 = vshll.u32 %v5142, 30
    %v5144 = vsub.s32 %v5140, %v5143
    %vm5145 = vcmp.lt.s32.totalorder %v5144, 0
    %v5146 = vsub.s32 0, %v5144
    %v5147 = vsel %vm5145, %v5146, %v5144
    %v5148 = vclz %v5147
    %v5149 = vsub.s32 %v5148, 2
    %vm5150 = vcmp.gt.s32.totalorder 0, %v5149
    %v5151 = vsel %vm5150, 0, %v5149
    %v5152 = vsub.s32 32, %v5151
    %v5153 = vshll.u32 %v5144, %v5151
    %v5154 = vshrl.u32 %v5136, %v5152
    %v5155 = vor.u32 %v5153, %v5154
    %v5156 = vsub.s32 4294967266, %v5151
    %v5157 = vadd.s32 %v5156, 127
    %v5158 = vshll.u32 %v5157, 23
    %v5159 = vor.u32 4788187, %v5158
    %v5160 = vand.u32 2147483647, %v5159
    %v5162 = vcvt.s32.f32 %v5155
    %v5163 = vmul.f32 %v5162, %v5160
    %v5164 = vxor.u32 %v5163, 2147483648
    %v5165 = vsel %vm5082, %v5164, %v5163
    %v5166 = vsub.s32 4, %v5142
    %v5167 = vsel %vm5082, %v5166, %v5142
    %v5168 = vsel %vm5081, %v3933, %v5165
    %v5169 = vsel %vm5081, 0, %v5167
    %v5170 = vcosq.f32.pop %v5168
    %v5171 = vsinq.f32.pop %v5168
    %vm5172 = vweird.f32 %v3933
    %v5173 = vadd.s32 %v5169, 3
    %v5174 = vand.u32 %v5173, 3
    %vm5175 = vcmp.lt.s32.totalorder %v5174, 2
    %vm5176 = vcmp.eq.s32.totalorder %v5174, 0
    %v5177 = vxor.u32 %v5171, 2147483648
    %v5178 = vsel %vm5176, %v5170, %v5177
    %vm5179 = vcmp.eq.s32.totalorder %v5174, 2
    %v5180 = vxor.u32 %v5170, 2147483648
    %v5181 = vsel %vm5179, %v5180, %v5171
    %v5182 = vsel %vm5175, %v5178, %v5181
    %v5183 = vsel %vm5172, nan, %v5182
    %v5184 = vand.u32 2147483647, %v3934
    %vm5185 = vcmp.le.f32.partialorder %v5184, 0.7853982
    %vm5186 = vcmp.lt.s32.totalorder %v3934, 0
    %v5187 = vand.u32 %v3934, 2139095040
    %v5188 = vshrl.u32 %v5187, 23
    %v5189 = vsub.s32 %v5188, 127
    %v5190 = vand.u32 2147483647, %v3934
    %v5191 = vand.u32 %v5190, 8388607
    %v5192 = vor.u32 %v5191, 8388608
    %v5193 = vsub.s32 0, %v5192
    %v5194 = vadd.s32 %v5189, 1
    %vm5195 = vcmp.gt.s32.totalorder %v5194, 0
    %v5196 = vsel %vm5195, %v5194, 0
    %v5197 = vshrl.u32 %v5196, 5
    %v5198 = vand.u32 %v5196, 31
    %v5199 = vsub.s32 32, %v5198
    %v5200 = vshrl.u32 683565275, %v5199
    %v5201 = vshll.u32 683565275, %v5198
    %v5202 = vshrl.u32 2475754826, %v5199
    %v5203 = vor.u32 %v5201, %v5202
    %v5204 = vshll.u32 2475754826, %v5198
    %v5205 = vshrl.u32 2131351028, %v5199
    %v5206 = vor.u32 %v5204, %v5205
    %v5207 = vshll.u32 2131351028, %v5198
    %v5208 = vshrl.u32 2102212464, %v5199
    %v5209 = vor.u32 %v5207, %v5208
    %v5210 = vshll.u32 2102212464, %v5198
    %v5211 = vshrl.u32 920167782, %v5199
    %v5212 = vor.u32 %v5210, %v5211
    %v5213 = vshll.u32 920167782, %v5198
    %v5214 = vshrl.u32 1326507024, %v5199
    %v5215 = vor.u32 %v5213, %v5214
    %vm5216 = vcmp.lt.s32.totalorder %v5197, 1
    %vm5217 = vcmp.lt.s32.totalorder %v5197, 2
    %vm5218 = vcmp.lt.s32.totalorder %v5197, 3
    %vm5219 = vcmp.lt.s32.totalorder %v5197, 4
    %v5220 = vsel %vm5216, %v5200, %v5203
    %v5221 = vsel %vm5219, %v5209, 2102212464
    %v5222 = vsel %vm5218, %v5206, %v5221
    %v5223 = vsel %vm5217, %v5220, %v5222
    %v5224 = vsel %vm5216, %v5203, %v5206
    %v5225 = vsel %vm5219, %v5212, 920167782
    %v5226 = vsel %vm5218, %v5209, %v5225
    %v5227 = vsel %vm5217, %v5224, %v5226
    %v5228 = vsel %vm5216, %v5206, %v5209
    %v5229 = vsel %vm5219, %v5215, 1326507024
    %v5230 = vsel %vm5218, %v5212, %v5229
    %v5231 = vsel %vm5217, %v5228, %v5230
    %v5232 = vshll.u32 %v5192, 8
    %v5233 = vmul.u32.u64.compose %v5232, %v5231
    %v5234 = vextract.low.u32 %v5233
    %v5235 = vextract.high.u32 %v5233
    %v5236 = vmul.u32.u64.compose %v5232, %v5227
    %v5237 = vextract.low.u32 %v5236
    %v5238 = vextract.high.u32 %v5236
    %v5239 = vmul.u32 %v5232, %v5223
    %v5240 = vadd.s32 %v5235, %v5237
    %vm5241 = vc.u32 %v5235, %v5237
    %v5242 = vadd.s32 %v5238, 1
    %v5243 = vsel %vm5241, %v5242, %v5238
    %v5244 = vadd.s32 %v5239, %v5243
    %v5245 = vadd.s32 %v5244, 536870912
    %v5246 = vshrl.u32 %v5245, 30
    %v5247 = vshll.u32 %v5246, 30
    %v5248 = vsub.s32 %v5244, %v5247
    %vm5249 = vcmp.lt.s32.totalorder %v5248, 0
    %v5250 = vsub.s32 0, %v5248
    %v5251 = vsel %vm5249, %v5250, %v5248
    %v5252 = vclz %v5251
    %v5253 = vsub.s32 %v5252, 2
    %vm5254 = vcmp.gt.s32.totalorder 0, %v5253
    %v5255 = vsel %vm5254, 0, %v5253
    %v5256 = vsub.s32 32, %v5255
    %v5257 = vshll.u32 %v5248, %v5255
    %v5258 = vshrl.u32 %v5240, %v5256
    %v5259 = vor.u32 %v5257, %v5258
    %v5260 = vsub.s32 4294967266, %v5255
    %v5261 = vadd.s32 %v5260, 127
    %v5262 = vshll.u32 %v5261, 23
    %v5263 = vor.u32 4788187, %v5262
    %v5264 = vand.u32 2147483647, %v5263
    %v5266 = vcvt.s32.f32 %v5259
    %v5267 = vmul.f32 %v5266, %v5264
    %v5268 = vxor.u32 %v5267, 2147483648
    %v5269 = vsel %vm5186, %v5268, %v5267
    %v5270 = vsub.s32 4, %v5246
    %v5271 = vsel %vm5186, %v5270, %v5246
    %v5272 = vsel %vm5185, %v3934, %v5269
    %v5273 = vsel %vm5185, 0, %v5271
    %v5274 = vcosq.f32.pop %v5272
    %v5275 = vsinq.f32.pop %v5272
    %vm5276 = vweird.f32 %v3934
    %v5277 = vadd.s32 %v5273, 3
    %v5278 = vand.u32 %v5277, 3
    %vm5279 = vcmp.lt.s32.totalorder %v5278, 2
    %vm5280 = vcmp.eq.s32.totalorder %v5278, 0
    %v5281 = vxor.u32 %v5275, 2147483648
    %v5282 = vsel %vm5280, %v5274, %v5281
    %vm5283 = vcmp.eq.s32.totalorder %v5278, 2
    %v5284 = vxor.u32 %v5274, 2147483648
    %v5285 = vsel %vm5283, %v5284, %v5275
    %v5286 = vsel %vm5279, %v5282, %v5285
    %v5287 = vsel %vm5276, nan, %v5286
    %v5288 = vand.u32 2147483647, %v3935
    %vm5289 = vcmp.le.f32.partialorder %v5288, 0.7853982
    %vm5290 = vcmp.lt.s32.totalorder %v3935, 0
    %v5291 = vand.u32 %v3935, 2139095040
    %v5292 = vshrl.u32 %v5291, 23
    %v5293 = vsub.s32 %v5292, 127
    %v5294 = vand.u32 2147483647, %v3935
    %v5295 = vand.u32 %v5294, 8388607
    %v5296 = vor.u32 %v5295, 8388608
    %v5297 = vsub.s32 0, %v5296
    %v5298 = vadd.s32 %v5293, 1
    %vm5299 = vcmp.gt.s32.totalorder %v5298, 0
    %v5300 = vsel %vm5299, %v5298, 0
    %v5301 = vshrl.u32 %v5300, 5
    %v5302 = vand.u32 %v5300, 31
    %v5303 = vsub.s32 32, %v5302
    %v5304 = vshrl.u32 683565275, %v5303
    %v5305 = vshll.u32 683565275, %v5302
    %v5306 = vshrl.u32 2475754826, %v5303
    %v5307 = vor.u32 %v5305, %v5306
    %v5308 = vshll.u32 2475754826, %v5302
    %v5309 = vshrl.u32 2131351028, %v5303
    %v5310 = vor.u32 %v5308, %v5309
    %v5311 = vshll.u32 2131351028, %v5302
    %v5312 = vshrl.u32 2102212464, %v5303
    %v5313 = vor.u32 %v5311, %v5312
    %v5314 = vshll.u32 2102212464, %v5302
    %v5315 = vshrl.u32 920167782, %v5303
    %v5316 = vor.u32 %v5314, %v5315
    %v5317 = vshll.u32 920167782, %v5302
    %v5318 = vshrl.u32 1326507024, %v5303
    %v5319 = vor.u32 %v5317, %v5318
    %vm5320 = vcmp.lt.s32.totalorder %v5301, 1
    %vm5321 = vcmp.lt.s32.totalorder %v5301, 2
    %vm5322 = vcmp.lt.s32.totalorder %v5301, 3
    %vm5323 = vcmp.lt.s32.totalorder %v5301, 4
    %v5324 = vsel %vm5320, %v5304, %v5307
    %v5325 = vsel %vm5323, %v5313, 2102212464
    %v5326 = vsel %vm5322, %v5310, %v5325
    %v5327 = vsel %vm5321, %v5324, %v5326
    %v5328 = vsel %vm5320, %v5307, %v5310
    %v5329 = vsel %vm5323, %v5316, 920167782
    %v5330 = vsel %vm5322, %v5313, %v5329
    %v5331 = vsel %vm5321, %v5328, %v5330
    %v5332 = vsel %vm5320, %v5310, %v5313
    %v5333 = vsel %vm5323, %v5319, 1326507024
    %v5334 = vsel %vm5322, %v5316, %v5333
    %v5335 = vsel %vm5321, %v5332, %v5334
    %v5336 = vshll.u32 %v5296, 8
    %v5337 = vmul.u32.u64.compose %v5336, %v5335
    %v5338 = vextract.low.u32 %v5337
    %v5339 = vextract.high.u32 %v5337
    %v5340 = vmul.u32.u64.compose %v5336, %v5331
    %v5341 = vextract.low.u32 %v5340
    %v5342 = vextract.high.u32 %v5340
    %v5343 = vmul.u32 %v5336, %v5327
    %v5344 = vadd.s32 %v5339, %v5341
    %vm5345 = vc.u32 %v5339, %v5341
    %v5346 = vadd.s32 %v5342, 1
    %v5347 = vsel %vm5345, %v5346, %v5342
    %v5348 = vadd.s32 %v5343, %v5347
    %v5349 = vadd.s32 %v5348, 536870912
    %v5350 = vshrl.u32 %v5349, 30
    %v5351 = vshll.u32 %v5350, 30
    %v5352 = vsub.s32 %v5348, %v5351
    %vm5353 = vcmp.lt.s32.totalorder %v5352, 0
    %v5354 = vsub.s32 0, %v5352
    %v5355 = vsel %vm5353, %v5354, %v5352
    %v5356 = vclz %v5355
    %v5357 = vsub.s32 %v5356, 2
    %vm5358 = vcmp.gt.s32.totalorder 0, %v5357
    %v5359 = vsel %vm5358, 0, %v5357
    %v5360 = vsub.s32 32, %v5359
    %v5361 = vshll.u32 %v5352, %v5359
    %v5362 = vshrl.u32 %v5344, %v5360
    %v5363 = vor.u32 %v5361, %v5362
    %v5364 = vsub.s32 4294967266, %v5359
    %v5365 = vadd.s32 %v5364, 127
    %v5366 = vshll.u32 %v5365, 23
    %v5367 = vor.u32 4788187, %v5366
    %v5368 = vand.u32 2147483647, %v5367
    %v5370 = vcvt.s32.f32 %v5363
    %v5371 = vmul.f32 %v5370, %v5368
    %v5372 = vxor.u32 %v5371, 2147483648
    %v5373 = vsel %vm5290, %v5372, %v5371
    %v5374 = vsub.s32 4, %v5350
    %v5375 = vsel %vm5290, %v5374, %v5350
    %v5376 = vsel %vm5289, %v3935, %v5373
    %v5377 = vsel %vm5289, 0, %v5375
    %v5378 = vcosq.f32.pop %v5376
    %v5379 = vsinq.f32.pop %v5376
    %vm5380 = vweird.f32 %v3935
    %v5381 = vadd.s32 %v5377, 3
    %v5382 = vand.u32 %v5381, 3
    %vm5383 = vcmp.lt.s32.totalorder %v5382, 2
    %vm5384 = vcmp.eq.s32.totalorder %v5382, 0
    %v5385 = vxor.u32 %v5379, 2147483648
    %v5386 = vsel %vm5384, %v5378, %v5385
    %vm5387 = vcmp.eq.s32.totalorder %v5382, 2
    %v5388 = vxor.u32 %v5378, 2147483648
    %v5389 = vsel %vm5387, %v5388, %v5379
    %v5390 = vsel %vm5383, %v5386, %v5389
    %v5391 = vsel %vm5380, nan, %v5390
    %s5392 = scalar_lea.vmem %s3, 112
    %v5393 = vld [vmem:[%s5392] sm:$0xff]
    %v5394 = vld [vmem:[%s5392 + $0x8] sm:$0xff]
    %v5395 = vld [vmem:[%s5392 + $0x10] sm:$0xff]
    %v5396 = vld [vmem:[%s5392 + $0x18] sm:$0xff]
    %v5397 = vld [vmem:[%s5392 + $0x20] sm:$0xff]
    %v5398 = vld [vmem:[%s5392 + $0x28] sm:$0xff]
    %v5399 = vld [vmem:[%s5392 + $0x30] sm:$0x3]
    %s5400 = scalar_lea.vmem %s4, 112
    %v5401 = vld [vmem:[%s5400] sm:$0xff]
    %v5402 = vld [vmem:[%s5400 + $0x8] sm:$0xff]
    %v5403 = vld [vmem:[%s5400 + $0x10] sm:$0xff]
    %v5404 = vld [vmem:[%s5400 + $0x18] sm:$0xff]
    %v5405 = vld [vmem:[%s5400 + $0x20] sm:$0xff]
    %v5406 = vld [vmem:[%s5400 + $0x28] sm:$0xff]
    %v5407 = vld [vmem:[%s5400 + $0x30] sm:$0x3]
    %v5408 = vpack.c.bf16 %v5394, %v5393
    %v5409 = vpack.c.bf16 %v5396, %v5395
    %v5410 = vpack.c.bf16 %v5398, %v5397
    %v5411 = vpack.c.bf16 %v5399, %v5399
    %v5412 = vunpack.c.l.bf16 %v5408
    %v5413 = vunpack.c.h.bf16 %v5408
    %v5414 = vunpack.c.l.bf16 %v5409
    %v5415 = vunpack.c.h.bf16 %v5409
    %v5416 = vunpack.c.l.bf16 %v5410
    %v5417 = vunpack.c.h.bf16 %v5410
    %v5418 = vunpack.c.l.bf16 %v5411
    %v5419 = vsub.f32 %v5393, %v5412
    %v5420 = vsub.f32 %v5394, %v5413
    %v5421 = vsub.f32 %v5395, %v5414
    %v5422 = vsub.f32 %v5396, %v5415
    %v5423 = vsub.f32 %v5397, %v5416
    %v5424 = vsub.f32 %v5398, %v5417
    %v5425 = vsub.f32 %v5399, %v5418
    %v5426 = vpack.c.bf16 %v5420, %v5419
    %v5427 = vpack.c.bf16 %v5422, %v5421
    %v5428 = vpack.c.bf16 %v5424, %v5423
    %v5429 = vpack.c.bf16 %v5425, %v5425
    %v5430 = vpack.c.bf16 %v4247, %v4039
    %v5431 = vpack.c.bf16 %v4351, %v4143
    %v5432 = vpack.c.bf16 %v4663, %v4455
    %v5433 = vpack.c.bf16 %v4767, %v4559
    %v5434 = vpack.c.bf16 %v5079, %v4871
    %v5435 = vpack.c.bf16 %v5183, %v4975
    %v5436 = vpack.c.bf16 %v5287, %v5287
    %v5437 = vpack.c.bf16 %v5391, %v5391
    %v5438 = vunpack.c.l.bf16 %v5430
    %v5439 = vunpack.c.l.bf16 %v5431
    %v5440 = vunpack.c.h.bf16 %v5430
    %v5441 = vunpack.c.h.bf16 %v5431
    %v5442 = vunpack.c.l.bf16 %v5432
    %v5443 = vunpack.c.l.bf16 %v5433
    %v5444 = vunpack.c.h.bf16 %v5432
    %v5445 = vunpack.c.h.bf16 %v5433
    %v5446 = vunpack.c.l.bf16 %v5434
    %v5447 = vunpack.c.l.bf16 %v5435
    %v5448 = vunpack.c.h.bf16 %v5434
    %v5449 = vunpack.c.h.bf16 %v5435
    %v5450 = vunpack.c.l.bf16 %v5436
    %v5451 = vunpack.c.l.bf16 %v5437
    %v5452 = vsub.f32 %v4039, %v5438
    %v5453 = vsub.f32 %v4143, %v5439
    %v5454 = vsub.f32 %v4247, %v5440
    %v5455 = vsub.f32 %v4351, %v5441
    %v5456 = vsub.f32 %v4455, %v5442
    %v5457 = vsub.f32 %v4559, %v5443
    %v5458 = vsub.f32 %v4663, %v5444
    %v5459 = vsub.f32 %v4767, %v5445
    %v5460 = vsub.f32 %v4871, %v5446
    %v5461 = vsub.f32 %v4975, %v5447
    %v5462 = vsub.f32 %v5079, %v5448
    %v5463 = vsub.f32 %v5183, %v5449
    %v5464 = vsub.f32 %v5287, %v5450
    %v5465 = vsub.f32 %v5391, %v5451
    %v5466 = vpack.c.bf16 %v5454, %v5452
    %v5467 = vpack.c.bf16 %v5455, %v5453
    %v5468 = vpack.c.bf16 %v5458, %v5456
    %v5469 = vpack.c.bf16 %v5459, %v5457
    %v5470 = vpack.c.bf16 %v5462, %v5460
    %v5471 = vpack.c.bf16 %v5463, %v5461
    %v5472 = vpack.c.bf16 %v5464, %v5464
    %v5473 = vpack.c.bf16 %v5465, %v5465
    %v5475 = vsel %vm1772, %v5408, 0
    %v5478 = vsel %vm1772, %v5409, 0
    %v5481 = vsel %vm1772, %v5410, 0
    %v5484 = vsel %vm1772, %v5411, 0
    %v5487 = vsel %vm1785, %v5472, 0
    %v5490 = vsel %vm1785, %v5473, 0
    %5492 = vmatprep.subr.bf16.mxu0 %v5467
    %5493 = vmatpush1.bf16.msra.mxu0 %v5466
    %5494 = vmatprep.subr.bf16.mxu0 %v5469
    %5495 = vmatpush1.bf16.msra.mxu0 %v5468
    %5496 = vmatprep.subr.bf16.mxu0 %v5471
    %5497 = vmatpush1.bf16.msra.mxu0 %v5470
    %5498 = vmatprep.subr.bf16.mxu0 %v5490
    %5499 = vmatpush1.bf16.msra.mxu0 %v5487
    %5500 = vmatprep.subr.bf16.mxu0 0
    %5501 = vmatpush1.bf16.msra.mxu0 0
    %5502 = vmatprep.subr.bf16.mxu0 0
    %5503 = vmatpush1.bf16.msra.mxu0 0
    %5504 = vmatprep.subr.bf16.mxu0 0
    %5505 = vmatpush1.bf16.msra.mxu0 0
    %5506 = vmatprep.subr.bf16.mxu0 0
    %5507 = vmatpush1.bf16.msra.mxu0 0
    %5508 = vmatprep.subr.bf16.mxu0 0
    %5509 = vmatpush1.bf16.msra.mxu0 0
    %5510 = vmatprep.subr.bf16.mxu0 0
    %5511 = vmatpush1.bf16.msra.mxu0 0
    %5512 = vmatprep.subr.bf16.mxu0 0
    %5513 = vmatpush1.bf16.msra.mxu0 0
    %5514 = vmatprep.subr.bf16.mxu0 0
    %5515 = vmatpush1.bf16.msra.mxu0 0
    %5516 = vmatprep.subr.bf16.mxu0 0
    %5517 = vmatpush1.bf16.msra.mxu0 0
    %5518 = vmatprep.subr.bf16.mxu0 0
    %5519 = vmatpush1.bf16.msra.mxu0 0
    %5520 = vmatprep.subr.bf16.mxu0 0
    %5521 = vmatpush1.bf16.msra.mxu0 0
    %5522 = vmatprep.subr.bf16.mxu0 0
    %5523 = vmatpush1.bf16.msra.mxu0 0
    %5524 = vmatprep.mubr.bf16.mxu0 0
    %5525 = vmatmul.mubr.bf16.gmra.mrb[0].mxu0 %v5475
    %v5526 = vpop.f32.mrb[0].mxu0
    %v5527 = vadd.f32 0.0, %v5526
    %v5528 = vpop.f32.mrb[0].mxu0
    %v5529 = vadd.f32 0.0, %v5528
    %v5530 = vpop.f32.mrb[0].mxu0
    %v5531 = vadd.f32 0.0, %v5530
    %v5532 = vpop.f32.mrb[0].mxu0
    %v5533 = vadd.f32 0.0, %v5532
    %5534 = vmatprep.mubr.bf16.mxu0 0
    %5535 = vmatmul.mubr.bf16.gmra.mrb[0].mxu0 %v5478
    %v5536 = vpop.f32.mrb[0].mxu0
    %v5537 = vadd.f32 0.0, %v5536
    %v5538 = vpop.f32.mrb[0].mxu0
    %v5539 = vadd.f32 0.0, %v5538
    %v5540 = vpop.f32.mrb[0].mxu0
    %v5541 = vadd.f32 0.0, %v5540
    %v5542 = vpop.f32.mrb[0].mxu0
    %v5543 = vadd.f32 0.0, %v5542
    %5544 = vmatprep.mubr.bf16.mxu0 0
    %5545 = vmatmul.mubr.bf16.gmra.mrb[0].mxu0 %v5481
    %v5546 = vpop.f32.mrb[0].mxu0
    %v5547 = vadd.f32 0.0, %v5546
    %v5548 = vpop.f32.mrb[0].mxu0
    %v5549 = vadd.f32 0.0, %v5548
    %v5550 = vpop.f32.mrb[0].mxu0
    %v5551 = vadd.f32 0.0, %v5550
    %v5552 = vpop.f32.mrb[0].mxu0
    %v5553 = vadd.f32 0.0, %v5552
    %5554 = vmatprep.mubr.bf16.mxu0 0
    %5555 = vmatmul.mubr.bf16.gmra.mrb[0].mxu0 %v5484
    %v5556 = vpop.f32.mrb[0].mxu0
    %v5557 = vadd.f32 0.0, %v5556
    %v5558 = vpop.f32.mrb[0].mxu0
    %v5559 = vadd.f32 0.0, %v5558
    %v5560 = vpop.f32.mrb[0].mxu0
    %v5561 = vpop.f32.mrb[0].mxu0
    %5562 = vdwg.mxu0
    %v5564 = vsel %vm1785, %v5436, 0
    %v5567 = vsel %vm1785, %v5437, 0
    %5569 = vmatprep.subr.bf16.mxu0 %v5431
    %5570 = vmatpush1.bf16.msra.mxu0 %v5430
    %5571 = vmatprep.subr.bf16.mxu0 %v5433
    %5572 = vmatpush1.bf16.msra.mxu0 %v5432
    %5573 = vmatprep.subr.bf16.mxu0 %v5435
    %5574 = vmatpush1.bf16.msra.mxu0 %v5434
    %5575 = vmatprep.subr.bf16.mxu0 %v5567
    %5576 = vmatpush1.bf16.msra.mxu0 %v5564
    %5577 = vmatprep.subr.bf16.mxu0 0
    %5578 = vmatpush1.bf16.msra.mxu0 0
    %5579 = vmatprep.subr.bf16.mxu0 0
    %5580 = vmatpush1.bf16.msra.mxu0 0
    %5581 = vmatprep.subr.bf16.mxu0 0
    %5582 = vmatpush1.bf16.msra.mxu0 0
    %5583 = vmatprep.subr.bf16.mxu0 0
    %5584 = vmatpush1.bf16.msra.mxu0 0
    %5585 = vmatprep.subr.bf16.mxu0 0
    %5586 = vmatpush1.bf16.msra.mxu0 0
    %5587 = vmatprep.subr.bf16.mxu0 0
    %5588 = vmatpush1.bf16.msra.mxu0 0
    %5589 = vmatprep.subr.bf16.mxu0 0
    %5590 = vmatpush1.bf16.msra.mxu0 0
    %5591 = vmatprep.subr.bf16.mxu0 0
    %5592 = vmatpush1.bf16.msra.mxu0 0
    %5593 = vmatprep.subr.bf16.mxu0 0
    %5594 = vmatpush1.bf16.msra.mxu0 0
    %5595 = vmatprep.subr.bf16.mxu0 0
    %5596 = vmatpush1.bf16.msra.mxu0 0
    %5597 = vmatprep.subr.bf16.mxu0 0
    %5598 = vmatpush1.bf16.msra.mxu0 0
    %5599 = vmatprep.subr.bf16.mxu0 0
    %5600 = vmatpush1.bf16.msra.mxu0 0
    %5601 = vmatprep.mubr.bf16.mxu0 0
    %5602 = vmatmul.mubr.bf16.gmra.mrb[0].mxu0 %v5475
    %v5603 = vpop.f32.mrb[0].mxu0
    %v5604 = vadd.f32 %v5527, %v5603
    %v5605 = vpop.f32.mrb[0].mxu0
    %v5606 = vadd.f32 %v5529, %v5605
    %v5607 = vpop.f32.mrb[0].mxu0
    %v5608 = vadd.f32 %v5531, %v5607
    %v5609 = vpop.f32.mrb[0].mxu0
    %v5610 = vadd.f32 %v5533, %v5609
    %5611 = vmatprep.mubr.bf16.mxu0 0
    %5612 = vmatmul.mubr.bf16.gmra.mrb[0].mxu0 %v5478
    %v5613 = vpop.f32.mrb[0].mxu0
    %v5614 = vadd.f32 %v5537, %v5613
    %v5615 = vpop.f32.mrb[0].mxu0
    %v5616 = vadd.f32 %v5539, %v5615
    %v5617 = vpop.f32.mrb[0].mxu0
    %v5618 = vadd.f32 %v5541, %v5617
    %v5619 = vpop.f32.mrb[0].mxu0
    %v5620 = vadd.f32 %v5543, %v5619
    %5621 = vmatprep.mubr.bf16.mxu0 0
    %5622 = vmatmul.mubr.bf16.gmra.mrb[0].mxu0 %v5481
    %v5623 = vpop.f32.mrb[0].mxu0
    %v5624 = vadd.f32 %v5547, %v5623
    %v5625 = vpop.f32.mrb[0].mxu0
    %v5626 = vadd.f32 %v5549, %v5625
    %v5627 = vpop.f32.mrb[0].mxu0
    %v5628 = vadd.f32 %v5551, %v5627
    %v5629 = vpop.f32.mrb[0].mxu0
    %v5630 = vadd.f32 %v5553, %v5629
    %5631 = vmatprep.mubr.bf16.mxu0 0
    %5632 = vmatmul.mubr.bf16.gmra.mrb[0].mxu0 %v5484
    %v5633 = vpop.f32.mrb[0].mxu0
    %v5634 = vadd.f32 %v5557, %v5633
    %v5635 = vpop.f32.mrb[0].mxu0
    %v5636 = vadd.f32 %v5559, %v5635
    %v5637 = vpop.f32.mrb[0].mxu0
    %v5638 = vpop.f32.mrb[0].mxu0
    %5639 = vdwg.mxu0
    %v5641 = vsel %vm1772, %v5426, 0
    %v5644 = vsel %vm1772, %v5427, 0
    %v5647 = vsel %vm1772, %v5428, 0
    %v5650 = vsel %vm1772, %v5429, 0
    %5652 = vmatprep.subr.bf16.mxu0 %v5431
    %5653 = vmatpush1.bf16.msra.mxu0 %v5430
    %5654 = vmatprep.subr.bf16.mxu0 %v5433
    %5655 = vmatpush1.bf16.msra.mxu0 %v5432
    %5656 = vmatprep.subr.bf16.mxu0 %v5435
    %5657 = vmatpush1.bf16.msra.mxu0 %v5434
    %5658 = vmatprep.subr.bf16.mxu0 %v5567
    %5659 = vmatpush1.bf16.msra.mxu0 %v5564
    %5660 = vmatprep.subr.bf16.mxu0 0
    %5661 = vmatpush1.bf16.msra.mxu0 0
    %5662 = vmatprep.subr.bf16.mxu0 0
    %5663 = vmatpush1.bf16.msra.mxu0 0
    %5664 = vmatprep.subr.bf16.mxu0 0
    %5665 = vmatpush1.bf16.msra.mxu0 0
    %5666 = vmatprep.subr.bf16.mxu0 0
    %5667 = vmatpush1.bf16.msra.mxu0 0
    %5668 = vmatprep.subr.bf16.mxu0 0
    %5669 = vmatpush1.bf16.msra.mxu0 0
    %5670 = vmatprep.subr.bf16.mxu0 0
    %5671 = vmatpush1.bf16.msra.mxu0 0
    %5672 = vmatprep.subr.bf16.mxu0 0
    %5673 = vmatpush1.bf16.msra.mxu0 0
    %5674 = vmatprep.subr.bf16.mxu0 0
    %5675 = vmatpush1.bf16.msra.mxu0 0
    %5676 = vmatprep.subr.bf16.mxu0 0
    %5677 = vmatpush1.bf16.msra.mxu0 0
    %5678 = vmatprep.subr.bf16.mxu0 0
    %5679 = vmatpush1.bf16.msra.mxu0 0
    %5680 = vmatprep.subr.bf16.mxu0 0
    %5681 = vmatpush1.bf16.msra.mxu0 0
    %5682 = vmatprep.subr.bf16.mxu0 0
    %5683 = vmatpush1.bf16.msra.mxu0 0
    %5684 = vmatprep.mubr.bf16.mxu0 0
    %5685 = vmatmul.mubr.bf16.gmra.mrb[0].mxu0 %v5641
    %v5686 = vpop.f32.mrb[0].mxu0
    %v5687 = vadd.f32 0.0, %v5686
    %v5688 = vpop.f32.mrb[0].mxu0
    %v5689 = vadd.f32 0.0, %v5688
    %v5690 = vpop.f32.mrb[0].mxu0
    %v5691 = vadd.f32 0.0, %v5690
    %v5692 = vpop.f32.mrb[0].mxu0
    %v5693 = vadd.f32 0.0, %v5692
    %5694 = vmatprep.mubr.bf16.mxu0 0
    %5695 = vmatmul.mubr.bf16.gmra.mrb[0].mxu0 %v5644
    %v5696 = vpop.f32.mrb[0].mxu0
    %v5697 = vadd.f32 0.0, %v5696
    %v5698 = vpop.f32.mrb[0].mxu0
    %v5699 = vadd.f32 0.0, %v5698
    %v5700 = vpop.f32.mrb[0].mxu0
    %v5701 = vadd.f32 0.0, %v5700
    %v5702 = vpop.f32.mrb[0].mxu0
    %v5703 = vadd.f32 0.0, %v5702
    %5704 = vmatprep.mubr.bf16.mxu0 0
    %5705 = vmatmul.mubr.bf16.gmra.mrb[0].mxu0 %v5647
    %v5706 = vpop.f32.mrb[0].mxu0
    %v5707 = vadd.f32 0.0, %v5706
    %v5708 = vpop.f32.mrb[0].mxu0
    %v5709 = vadd.f32 0.0, %v5708
    %v5710 = vpop.f32.mrb[0].mxu0
    %v5711 = vadd.f32 0.0, %v5710
    %v5712 = vpop.f32.mrb[0].mxu0
    %v5713 = vadd.f32 0.0, %v5712
    %5714 = vmatprep.mubr.bf16.mxu0 0
    %5715 = vmatmul.mubr.bf16.gmra.mrb[0].mxu0 %v5650
    %v5716 = vpop.f32.mrb[0].mxu0
    %v5717 = vadd.f32 0.0, %v5716
    %v5718 = vpop.f32.mrb[0].mxu0
    %v5719 = vadd.f32 0.0, %v5718
    %v5720 = vpop.f32.mrb[0].mxu0
    %v5721 = vpop.f32.mrb[0].mxu0
    %5722 = vdwg.mxu0
    %v5723 = vadd.f32 %v5604, %v5687
    %v5724 = vadd.f32 %v5606, %v5689
    %v5725 = vadd.f32 %v5608, %v5691
    %v5726 = vadd.f32 %v5610, %v5693
    %v5727 = vadd.f32 %v5614, %v5697
    %v5728 = vadd.f32 %v5616, %v5699
    %v5729 = vadd.f32 %v5618, %v5701
    %v5730 = vadd.f32 %v5620, %v5703
    %v5731 = vadd.f32 %v5624, %v5707
    %v5732 = vadd.f32 %v5626, %v5709
    %v5733 = vadd.f32 %v5628, %v5711
    %v5734 = vadd.f32 %v5630, %v5713
    %v5735 = vadd.f32 %v5634, %v5717
    %v5736 = vadd.f32 %v5636, %v5719
    %5738 = vset.pattern.permute.xlu0 0
    %5739 = vperm.xlu0 %5738, %v5401
    %v5740 = vpop.permute.xlu0 %5739
    %5743 = vset.pattern.permute.xlu0 0
    %5744 = vperm.xlu0 %5743, %v5402
    %v5745 = vpop.permute.xlu0 %5744
    %5748 = vset.pattern.permute.xlu0 0
    %5749 = vperm.xlu0 %5748, %v5403
    %v5750 = vpop.permute.xlu0 %5749
    %5753 = vset.pattern.permute.xlu0 0
    %5754 = vperm.xlu0 %5753, %v5404
    %v5755 = vpop.permute.xlu0 %5754
    %5758 = vset.pattern.permute.xlu0 0
    %5759 = vperm.xlu0 %5758, %v5405
    %v5760 = vpop.permute.xlu0 %5759
    %5763 = vset.pattern.permute.xlu0 0
    %5764 = vperm.xlu0 %5763, %v5406
    %v5765 = vpop.permute.xlu0 %5764
    %5768 = vset.pattern.permute.xlu0 0
    %5769 = vperm.xlu0 %5768, %v5407
    %v5770 = vpop.permute.xlu0 %5769
    %v5772 = vadd.f32 %v5723, %v5740
    %v5773 = vadd.f32 %v5724, %v5740
    %v5774 = vadd.f32 %v5725, %v5745
    %v5775 = vadd.f32 %v5726, %v5745
    %v5776 = vadd.f32 %v5727, %v5750
    %v5777 = vadd.f32 %v5728, %v5750
    %v5778 = vadd.f32 %v5729, %v5755
    %v5779 = vadd.f32 %v5730, %v5755
    %v5780 = vadd.f32 %v5731, %v5760
    %v5781 = vadd.f32 %v5732, %v5760
    %v5782 = vadd.f32 %v5733, %v5765
    %v5783 = vadd.f32 %v5734, %v5765
    %v5784 = vadd.f32 %v5735, %v5770
    %v5785 = vadd.f32 %v5736, %v5770
    %v5786 = vand.u32 2147483647, %v5772
    %vm5787 = vcmp.le.f32.partialorder %v5786, 0.7853982
    %vm5788 = vcmp.lt.s32.totalorder %v5772, 0
    %v5789 = vand.u32 %v5772, 2139095040
    %v5790 = vshrl.u32 %v5789, 23
    %v5791 = vsub.s32 %v5790, 127
    %v5792 = vand.u32 2147483647, %v5772
    %v5793 = vand.u32 %v5792, 8388607
    %v5794 = vor.u32 %v5793, 8388608
    %v5795 = vsub.s32 0, %v5794
    %v5796 = vadd.s32 %v5791, 1
    %vm5797 = vcmp.gt.s32.totalorder %v5796, 0
    %v5798 = vsel %vm5797, %v5796, 0
    %v5799 = vshrl.u32 %v5798, 5
    %v5800 = vand.u32 %v5798, 31
    %v5801 = vsub.s32 32, %v5800
    %v5802 = vshrl.u32 683565275, %v5801
    %v5803 = vshll.u32 683565275, %v5800
    %v5804 = vshrl.u32 2475754826, %v5801
    %v5805 = vor.u32 %v5803, %v5804
    %v5806 = vshll.u32 2475754826, %v5800
    %v5807 = vshrl.u32 2131351028, %v5801
    %v5808 = vor.u32 %v5806, %v5807
    %v5809 = vshll.u32 2131351028, %v5800
    %v5810 = vshrl.u32 2102212464, %v5801
    %v5811 = vor.u32 %v5809, %v5810
    %v5812 = vshll.u32 2102212464, %v5800
    %v5813 = vshrl.u32 920167782, %v5801
    %v5814 = vor.u32 %v5812, %v5813
    %v5815 = vshll.u32 920167782, %v5800
    %v5816 = vshrl.u32 1326507024, %v5801
    %v5817 = vor.u32 %v5815, %v5816
    %vm5818 = vcmp.lt.s32.totalorder %v5799, 1
    %vm5819 = vcmp.lt.s32.totalorder %v5799, 2
    %vm5820 = vcmp.lt.s32.totalorder %v5799, 3
    %vm5821 = vcmp.lt.s32.totalorder %v5799, 4
    %v5822 = vsel %vm5818, %v5802, %v5805
    %v5823 = vsel %vm5821, %v5811, 2102212464
    %v5824 = vsel %vm5820, %v5808, %v5823
    %v5825 = vsel %vm5819, %v5822, %v5824
    %v5826 = vsel %vm5818, %v5805, %v5808
    %v5827 = vsel %vm5821, %v5814, 920167782
    %v5828 = vsel %vm5820, %v5811, %v5827
    %v5829 = vsel %vm5819, %v5826, %v5828
    %v5830 = vsel %vm5818, %v5808, %v5811
    %v5831 = vsel %vm5821, %v5817, 1326507024
    %v5832 = vsel %vm5820, %v5814, %v5831
    %v5833 = vsel %vm5819, %v5830, %v5832
    %v5834 = vshll.u32 %v5794, 8
    %v5835 = vmul.u32.u64.compose %v5834, %v5833
    %v5836 = vextract.low.u32 %v5835
    %v5837 = vextract.high.u32 %v5835
    %v5838 = vmul.u32.u64.compose %v5834, %v5829
    %v5839 = vextract.low.u32 %v5838
    %v5840 = vextract.high.u32 %v5838
    %v5841 = vmul.u32 %v5834, %v5825
    %v5842 = vadd.s32 %v5837, %v5839
    %vm5843 = vc.u32 %v5837, %v5839
    %v5844 = vadd.s32 %v5840, 1
    %v5845 = vsel %vm5843, %v5844, %v5840
    %v5846 = vadd.s32 %v5841, %v5845
    %v5847 = vadd.s32 %v5846, 536870912
    %v5848 = vshrl.u32 %v5847, 30
    %v5849 = vshll.u32 %v5848, 30
    %v5850 = vsub.s32 %v5846, %v5849
    %vm5851 = vcmp.lt.s32.totalorder %v5850, 0
    %v5852 = vsub.s32 0, %v5850
    %v5853 = vsel %vm5851, %v5852, %v5850
    %v5854 = vclz %v5853
    %v5855 = vsub.s32 %v5854, 2
    %vm5856 = vcmp.gt.s32.totalorder 0, %v5855
    %v5857 = vsel %vm5856, 0, %v5855
    %v5858 = vsub.s32 32, %v5857
    %v5859 = vshll.u32 %v5850, %v5857
    %v5860 = vshrl.u32 %v5842, %v5858
    %v5861 = vor.u32 %v5859, %v5860
    %v5862 = vsub.s32 4294967266, %v5857
    %v5863 = vadd.s32 %v5862, 127
    %v5864 = vshll.u32 %v5863, 23
    %v5865 = vor.u32 4788187, %v5864
    %v5866 = vand.u32 2147483647, %v5865
    %v5868 = vcvt.s32.f32 %v5861
    %v5869 = vmul.f32 %v5868, %v5866
    %v5870 = vxor.u32 %v5869, 2147483648
    %v5871 = vsel %vm5788, %v5870, %v5869
    %v5872 = vsub.s32 4, %v5848
    %v5873 = vsel %vm5788, %v5872, %v5848
    %v5874 = vsel %vm5787, %v5772, %v5871
    %v5875 = vsel %vm5787, 0, %v5873
    %v5876 = vcosq.f32.pop %v5874
    %v5877 = vsinq.f32.pop %v5874
    %vm5878 = vweird.f32 %v5772
    %v5879 = vadd.s32 %v5875, 3
    %v5880 = vand.u32 %v5879, 3
    %vm5881 = vcmp.lt.s32.totalorder %v5880, 2
    %vm5882 = vcmp.eq.s32.totalorder %v5880, 0
    %v5883 = vxor.u32 %v5877, 2147483648
    %v5884 = vsel %vm5882, %v5876, %v5883
    %vm5885 = vcmp.eq.s32.totalorder %v5880, 2
    %v5886 = vxor.u32 %v5876, 2147483648
    %v5887 = vsel %vm5885, %v5886, %v5877
    %v5888 = vsel %vm5881, %v5884, %v5887
    %v5889 = vsel %vm5878, nan, %v5888
    %v5890 = vand.u32 2147483647, %v5773
    %vm5891 = vcmp.le.f32.partialorder %v5890, 0.7853982
    %vm5892 = vcmp.lt.s32.totalorder %v5773, 0
    %v5893 = vand.u32 %v5773, 2139095040
    %v5894 = vshrl.u32 %v5893, 23
    %v5895 = vsub.s32 %v5894, 127
    %v5896 = vand.u32 2147483647, %v5773
    %v5897 = vand.u32 %v5896, 8388607
    %v5898 = vor.u32 %v5897, 8388608
    %v5899 = vsub.s32 0, %v5898
    %v5900 = vadd.s32 %v5895, 1
    %vm5901 = vcmp.gt.s32.totalorder %v5900, 0
    %v5902 = vsel %vm5901, %v5900, 0
    %v5903 = vshrl.u32 %v5902, 5
    %v5904 = vand.u32 %v5902, 31
    %v5905 = vsub.s32 32, %v5904
    %v5906 = vshrl.u32 683565275, %v5905
    %v5907 = vshll.u32 683565275, %v5904
    %v5908 = vshrl.u32 2475754826, %v5905
    %v5909 = vor.u32 %v5907, %v5908
    %v5910 = vshll.u32 2475754826, %v5904
    %v5911 = vshrl.u32 2131351028, %v5905
    %v5912 = vor.u32 %v5910, %v5911
    %v5913 = vshll.u32 2131351028, %v5904
    %v5914 = vshrl.u32 2102212464, %v5905
    %v5915 = vor.u32 %v5913, %v5914
    %v5916 = vshll.u32 2102212464, %v5904
    %v5917 = vshrl.u32 920167782, %v5905
    %v5918 = vor.u32 %v5916, %v5917
    %v5919 = vshll.u32 920167782, %v5904
    %v5920 = vshrl.u32 1326507024, %v5905
    %v5921 = vor.u32 %v5919, %v5920
    %vm5922 = vcmp.lt.s32.totalorder %v5903, 1
    %vm5923 = vcmp.lt.s32.totalorder %v5903, 2
    %vm5924 = vcmp.lt.s32.totalorder %v5903, 3
    %vm5925 = vcmp.lt.s32.totalorder %v5903, 4
    %v5926 = vsel %vm5922, %v5906, %v5909
    %v5927 = vsel %vm5925, %v5915, 2102212464
    %v5928 = vsel %vm5924, %v5912, %v5927
    %v5929 = vsel %vm5923, %v5926, %v5928
    %v5930 = vsel %vm5922, %v5909, %v5912
    %v5931 = vsel %vm5925, %v5918, 920167782
    %v5932 = vsel %vm5924, %v5915, %v5931
    %v5933 = vsel %vm5923, %v5930, %v5932
    %v5934 = vsel %vm5922, %v5912, %v5915
    %v5935 = vsel %vm5925, %v5921, 1326507024
    %v5936 = vsel %vm5924, %v5918, %v5935
    %v5937 = vsel %vm5923, %v5934, %v5936
    %v5938 = vshll.u32 %v5898, 8
    %v5939 = vmul.u32.u64.compose %v5938, %v5937
    %v5940 = vextract.low.u32 %v5939
    %v5941 = vextract.high.u32 %v5939
    %v5942 = vmul.u32.u64.compose %v5938, %v5933
    %v5943 = vextract.low.u32 %v5942
    %v5944 = vextract.high.u32 %v5942
    %v5945 = vmul.u32 %v5938, %v5929
    %v5946 = vadd.s32 %v5941, %v5943
    %vm5947 = vc.u32 %v5941, %v5943
    %v5948 = vadd.s32 %v5944, 1
    %v5949 = vsel %vm5947, %v5948, %v5944
    %v5950 = vadd.s32 %v5945, %v5949
    %v5951 = vadd.s32 %v5950, 536870912
    %v5952 = vshrl.u32 %v5951, 30
    %v5953 = vshll.u32 %v5952, 30
    %v5954 = vsub.s32 %v5950, %v5953
    %vm5955 = vcmp.lt.s32.totalorder %v5954, 0
    %v5956 = vsub.s32 0, %v5954
    %v5957 = vsel %vm5955, %v5956, %v5954
    %v5958 = vclz %v5957
    %v5959 = vsub.s32 %v5958, 2
    %vm5960 = vcmp.gt.s32.totalorder 0, %v5959
    %v5961 = vsel %vm5960, 0, %v5959
    %v5962 = vsub.s32 32, %v5961
    %v5963 = vshll.u32 %v5954, %v5961
    %v5964 = vshrl.u32 %v5946, %v5962
    %v5965 = vor.u32 %v5963, %v5964
    %v5966 = vsub.s32 4294967266, %v5961
    %v5967 = vadd.s32 %v5966, 127
    %v5968 = vshll.u32 %v5967, 23
    %v5969 = vor.u32 4788187, %v5968
    %v5970 = vand.u32 2147483647, %v5969
    %v5972 = vcvt.s32.f32 %v5965
    %v5973 = vmul.f32 %v5972, %v5970
    %v5974 = vxor.u32 %v5973, 2147483648
    %v5975 = vsel %vm5892, %v5974, %v5973
    %v5976 = vsub.s32 4, %v5952
    %v5977 = vsel %vm5892, %v5976, %v5952
    %v5978 = vsel %vm5891, %v5773, %v5975
    %v5979 = vsel %vm5891, 0, %v5977
    %v5980 = vcosq.f32.pop %v5978
    %v5981 = vsinq.f32.pop %v5978
    %vm5982 = vweird.f32 %v5773
    %v5983 = vadd.s32 %v5979, 3
    %v5984 = vand.u32 %v5983, 3
    %vm5985 = vcmp.lt.s32.totalorder %v5984, 2
    %vm5986 = vcmp.eq.s32.totalorder %v5984, 0
    %v5987 = vxor.u32 %v5981, 2147483648
    %v5988 = vsel %vm5986, %v5980, %v5987
    %vm5989 = vcmp.eq.s32.totalorder %v5984, 2
    %v5990 = vxor.u32 %v5980, 2147483648
    %v5991 = vsel %vm5989, %v5990, %v5981
    %v5992 = vsel %vm5985, %v5988, %v5991
    %v5993 = vsel %vm5982, nan, %v5992
    %v5994 = vand.u32 2147483647, %v5774
    %vm5995 = vcmp.le.f32.partialorder %v5994, 0.7853982
    %vm5996 = vcmp.lt.s32.totalorder %v5774, 0
    %v5997 = vand.u32 %v5774, 2139095040
    %v5998 = vshrl.u32 %v5997, 23
    %v5999 = vsub.s32 %v5998, 127
    %v6000 = vand.u32 2147483647, %v5774
    %v6001 = vand.u32 %v6000, 8388607
    %v6002 = vor.u32 %v6001, 8388608
    %v6003 = vsub.s32 0, %v6002
    %v6004 = vadd.s32 %v5999, 1
    %vm6005 = vcmp.gt.s32.totalorder %v6004, 0
    %v6006 = vsel %vm6005, %v6004, 0
    %v6007 = vshrl.u32 %v6006, 5
    %v6008 = vand.u32 %v6006, 31
    %v6009 = vsub.s32 32, %v6008
    %v6010 = vshrl.u32 683565275, %v6009
    %v6011 = vshll.u32 683565275, %v6008
    %v6012 = vshrl.u32 2475754826, %v6009
    %v6013 = vor.u32 %v6011, %v6012
    %v6014 = vshll.u32 2475754826, %v6008
    %v6015 = vshrl.u32 2131351028, %v6009
    %v6016 = vor.u32 %v6014, %v6015
    %v6017 = vshll.u32 2131351028, %v6008
    %v6018 = vshrl.u32 2102212464, %v6009
    %v6019 = vor.u32 %v6017, %v6018
    %v6020 = vshll.u32 2102212464, %v6008
    %v6021 = vshrl.u32 920167782, %v6009
    %v6022 = vor.u32 %v6020, %v6021
    %v6023 = vshll.u32 920167782, %v6008
    %v6024 = vshrl.u32 1326507024, %v6009
    %v6025 = vor.u32 %v6023, %v6024
    %vm6026 = vcmp.lt.s32.totalorder %v6007, 1
    %vm6027 = vcmp.lt.s32.totalorder %v6007, 2
    %vm6028 = vcmp.lt.s32.totalorder %v6007, 3
    %vm6029 = vcmp.lt.s32.totalorder %v6007, 4
    %v6030 = vsel %vm6026, %v6010, %v6013
    %v6031 = vsel %vm6029, %v6019, 2102212464
    %v6032 = vsel %vm6028, %v6016, %v6031
    %v6033 = vsel %vm6027, %v6030, %v6032
    %v6034 = vsel %vm6026, %v6013, %v6016
    %v6035 = vsel %vm6029, %v6022, 920167782
    %v6036 = vsel %vm6028, %v6019, %v6035
    %v6037 = vsel %vm6027, %v6034, %v6036
    %v6038 = vsel %vm6026, %v6016, %v6019
    %v6039 = vsel %vm6029, %v6025, 1326507024
    %v6040 = vsel %vm6028, %v6022, %v6039
    %v6041 = vsel %vm6027, %v6038, %v6040
    %v6042 = vshll.u32 %v6002, 8
    %v6043 = vmul.u32.u64.compose %v6042, %v6041
    %v6044 = vextract.low.u32 %v6043
    %v6045 = vextract.high.u32 %v6043
    %v6046 = vmul.u32.u64.compose %v6042, %v6037
    %v6047 = vextract.low.u32 %v6046
    %v6048 = vextract.high.u32 %v6046
    %v6049 = vmul.u32 %v6042, %v6033
    %v6050 = vadd.s32 %v6045, %v6047
    %vm6051 = vc.u32 %v6045, %v6047
    %v6052 = vadd.s32 %v6048, 1
    %v6053 = vsel %vm6051, %v6052, %v6048
    %v6054 = vadd.s32 %v6049, %v6053
    %v6055 = vadd.s32 %v6054, 536870912
    %v6056 = vshrl.u32 %v6055, 30
    %v6057 = vshll.u32 %v6056, 30
    %v6058 = vsub.s32 %v6054, %v6057
    %vm6059 = vcmp.lt.s32.totalorder %v6058, 0
    %v6060 = vsub.s32 0, %v6058
    %v6061 = vsel %vm6059, %v6060, %v6058
    %v6062 = vclz %v6061
    %v6063 = vsub.s32 %v6062, 2
    %vm6064 = vcmp.gt.s32.totalorder 0, %v6063
    %v6065 = vsel %vm6064, 0, %v6063
    %v6066 = vsub.s32 32, %v6065
    %v6067 = vshll.u32 %v6058, %v6065
    %v6068 = vshrl.u32 %v6050, %v6066
    %v6069 = vor.u32 %v6067, %v6068
    %v6070 = vsub.s32 4294967266, %v6065
    %v6071 = vadd.s32 %v6070, 127
    %v6072 = vshll.u32 %v6071, 23
    %v6073 = vor.u32 4788187, %v6072
    %v6074 = vand.u32 2147483647, %v6073
    %v6076 = vcvt.s32.f32 %v6069
    %v6077 = vmul.f32 %v6076, %v6074
    %v6078 = vxor.u32 %v6077, 2147483648
    %v6079 = vsel %vm5996, %v6078, %v6077
    %v6080 = vsub.s32 4, %v6056
    %v6081 = vsel %vm5996, %v6080, %v6056
    %v6082 = vsel %vm5995, %v5774, %v6079
    %v6083 = vsel %vm5995, 0, %v6081
    %v6084 = vcosq.f32.pop %v6082
    %v6085 = vsinq.f32.pop %v6082
    %vm6086 = vweird.f32 %v5774
    %v6087 = vadd.s32 %v6083, 3
    %v6088 = vand.u32 %v6087, 3
    %vm6089 = vcmp.lt.s32.totalorder %v6088, 2
    %vm6090 = vcmp.eq.s32.totalorder %v6088, 0
    %v6091 = vxor.u32 %v6085, 2147483648
    %v6092 = vsel %vm6090, %v6084, %v6091
    %vm6093 = vcmp.eq.s32.totalorder %v6088, 2
    %v6094 = vxor.u32 %v6084, 2147483648
    %v6095 = vsel %vm6093, %v6094, %v6085
    %v6096 = vsel %vm6089, %v6092, %v6095
    %v6097 = vsel %vm6086, nan, %v6096
    %v6098 = vand.u32 2147483647, %v5775
    %vm6099 = vcmp.le.f32.partialorder %v6098, 0.7853982
    %vm6100 = vcmp.lt.s32.totalorder %v5775, 0
    %v6101 = vand.u32 %v5775, 2139095040
    %v6102 = vshrl.u32 %v6101, 23
    %v6103 = vsub.s32 %v6102, 127
    %v6104 = vand.u32 2147483647, %v5775
    %v6105 = vand.u32 %v6104, 8388607
    %v6106 = vor.u32 %v6105, 8388608
    %v6107 = vsub.s32 0, %v6106
    %v6108 = vadd.s32 %v6103, 1
    %vm6109 = vcmp.gt.s32.totalorder %v6108, 0
    %v6110 = vsel %vm6109, %v6108, 0
    %v6111 = vshrl.u32 %v6110, 5
    %v6112 = vand.u32 %v6110, 31
    %v6113 = vsub.s32 32, %v6112
    %v6114 = vshrl.u32 683565275, %v6113
    %v6115 = vshll.u32 683565275, %v6112
    %v6116 = vshrl.u32 2475754826, %v6113
    %v6117 = vor.u32 %v6115, %v6116
    %v6118 = vshll.u32 2475754826, %v6112
    %v6119 = vshrl.u32 2131351028, %v6113
    %v6120 = vor.u32 %v6118, %v6119
    %v6121 = vshll.u32 2131351028, %v6112
    %v6122 = vshrl.u32 2102212464, %v6113
    %v6123 = vor.u32 %v6121, %v6122
    %v6124 = vshll.u32 2102212464, %v6112
    %v6125 = vshrl.u32 920167782, %v6113
    %v6126 = vor.u32 %v6124, %v6125
    %v6127 = vshll.u32 920167782, %v6112
    %v6128 = vshrl.u32 1326507024, %v6113
    %v6129 = vor.u32 %v6127, %v6128
    %vm6130 = vcmp.lt.s32.totalorder %v6111, 1
    %vm6131 = vcmp.lt.s32.totalorder %v6111, 2
    %vm6132 = vcmp.lt.s32.totalorder %v6111, 3
    %vm6133 = vcmp.lt.s32.totalorder %v6111, 4
    %v6134 = vsel %vm6130, %v6114, %v6117
    %v6135 = vsel %vm6133, %v6123, 2102212464
    %v6136 = vsel %vm6132, %v6120, %v6135
    %v6137 = vsel %vm6131, %v6134, %v6136
    %v6138 = vsel %vm6130, %v6117, %v6120
    %v6139 = vsel %vm6133, %v6126, 920167782
    %v6140 = vsel %vm6132, %v6123, %v6139
    %v6141 = vsel %vm6131, %v6138, %v6140
    %v6142 = vsel %vm6130, %v6120, %v6123
    %v6143 = vsel %vm6133, %v6129, 1326507024
    %v6144 = vsel %vm6132, %v6126, %v6143
    %v6145 = vsel %vm6131, %v6142, %v6144
    %v6146 = vshll.u32 %v6106, 8
    %v6147 = vmul.u32.u64.compose %v6146, %v6145
    %v6148 = vextract.low.u32 %v6147
    %v6149 = vextract.high.u32 %v6147
    %v6150 = vmul.u32.u64.compose %v6146, %v6141
    %v6151 = vextract.low.u32 %v6150
    %v6152 = vextract.high.u32 %v6150
    %v6153 = vmul.u32 %v6146, %v6137
    %v6154 = vadd.s32 %v6149, %v6151
    %vm6155 = vc.u32 %v6149, %v6151
    %v6156 = vadd.s32 %v6152, 1
    %v6157 = vsel %vm6155, %v6156, %v6152
    %v6158 = vadd.s32 %v6153, %v6157
    %v6159 = vadd.s32 %v6158, 536870912
    %v6160 = vshrl.u32 %v6159, 30
    %v6161 = vshll.u32 %v6160, 30
    %v6162 = vsub.s32 %v6158, %v6161
    %vm6163 = vcmp.lt.s32.totalorder %v6162, 0
    %v6164 = vsub.s32 0, %v6162
    %v6165 = vsel %vm6163, %v6164, %v6162
    %v6166 = vclz %v6165
    %v6167 = vsub.s32 %v6166, 2
    %vm6168 = vcmp.gt.s32.totalorder 0, %v6167
    %v6169 = vsel %vm6168, 0, %v6167
    %v6170 = vsub.s32 32, %v6169
    %v6171 = vshll.u32 %v6162, %v6169
    %v6172 = vshrl.u32 %v6154, %v6170
    %v6173 = vor.u32 %v6171, %v6172
    %v6174 = vsub.s32 4294967266, %v6169
    %v6175 = vadd.s32 %v6174, 127
    %v6176 = vshll.u32 %v6175, 23
    %v6177 = vor.u32 4788187, %v6176
    %v6178 = vand.u32 2147483647, %v6177
    %v6180 = vcvt.s32.f32 %v6173
    %v6181 = vmul.f32 %v6180, %v6178
    %v6182 = vxor.u32 %v6181, 2147483648
    %v6183 = vsel %vm6100, %v6182, %v6181
    %v6184 = vsub.s32 4, %v6160
    %v6185 = vsel %vm6100, %v6184, %v6160
    %v6186 = vsel %vm6099, %v5775, %v6183
    %v6187 = vsel %vm6099, 0, %v6185
    %v6188 = vcosq.f32.pop %v6186
    %v6189 = vsinq.f32.pop %v6186
    %vm6190 = vweird.f32 %v5775
    %v6191 = vadd.s32 %v6187, 3
    %v6192 = vand.u32 %v6191, 3
    %vm6193 = vcmp.lt.s32.totalorder %v6192, 2
    %vm6194 = vcmp.eq.s32.totalorder %v6192, 0
    %v6195 = vxor.u32 %v6189, 2147483648
    %v6196 = vsel %vm6194, %v6188, %v6195
    %vm6197 = vcmp.eq.s32.totalorder %v6192, 2
    %v6198 = vxor.u32 %v6188, 2147483648
    %v6199 = vsel %vm6197, %v6198, %v6189
    %v6200 = vsel %vm6193, %v6196, %v6199
    %v6201 = vsel %vm6190, nan, %v6200
    %v6202 = vand.u32 2147483647, %v5776
    %vm6203 = vcmp.le.f32.partialorder %v6202, 0.7853982
    %vm6204 = vcmp.lt.s32.totalorder %v5776, 0
    %v6205 = vand.u32 %v5776, 2139095040
    %v6206 = vshrl.u32 %v6205, 23
    %v6207 = vsub.s32 %v6206, 127
    %v6208 = vand.u32 2147483647, %v5776
    %v6209 = vand.u32 %v6208, 8388607
    %v6210 = vor.u32 %v6209, 8388608
    %v6211 = vsub.s32 0, %v6210
    %v6212 = vadd.s32 %v6207, 1
    %vm6213 = vcmp.gt.s32.totalorder %v6212, 0
    %v6214 = vsel %vm6213, %v6212, 0
    %v6215 = vshrl.u32 %v6214, 5
    %v6216 = vand.u32 %v6214, 31
    %v6217 = vsub.s32 32, %v6216
    %v6218 = vshrl.u32 683565275, %v6217
    %v6219 = vshll.u32 683565275, %v6216
    %v6220 = vshrl.u32 2475754826, %v6217
    %v6221 = vor.u32 %v6219, %v6220
    %v6222 = vshll.u32 2475754826, %v6216
    %v6223 = vshrl.u32 2131351028, %v6217
    %v6224 = vor.u32 %v6222, %v6223
    %v6225 = vshll.u32 2131351028, %v6216
    %v6226 = vshrl.u32 2102212464, %v6217
    %v6227 = vor.u32 %v6225, %v6226
    %v6228 = vshll.u32 2102212464, %v6216
    %v6229 = vshrl.u32 920167782, %v6217
    %v6230 = vor.u32 %v6228, %v6229
    %v6231 = vshll.u32 920167782, %v6216
    %v6232 = vshrl.u32 1326507024, %v6217
    %v6233 = vor.u32 %v6231, %v6232
    %vm6234 = vcmp.lt.s32.totalorder %v6215, 1
    %vm6235 = vcmp.lt.s32.totalorder %v6215, 2
    %vm6236 = vcmp.lt.s32.totalorder %v6215, 3
    %vm6237 = vcmp.lt.s32.totalorder %v6215, 4
    %v6238 = vsel %vm6234, %v6218, %v6221
    %v6239 = vsel %vm6237, %v6227, 2102212464
    %v6240 = vsel %vm6236, %v6224, %v6239
    %v6241 = vsel %vm6235, %v6238, %v6240
    %v6242 = vsel %vm6234, %v6221, %v6224
    %v6243 = vsel %vm6237, %v6230, 920167782
    %v6244 = vsel %vm6236, %v6227, %v6243
    %v6245 = vsel %vm6235, %v6242, %v6244
    %v6246 = vsel %vm6234, %v6224, %v6227
    %v6247 = vsel %vm6237, %v6233, 1326507024
    %v6248 = vsel %vm6236, %v6230, %v6247
    %v6249 = vsel %vm6235, %v6246, %v6248
    %v6250 = vshll.u32 %v6210, 8
    %v6251 = vmul.u32.u64.compose %v6250, %v6249
    %v6252 = vextract.low.u32 %v6251
    %v6253 = vextract.high.u32 %v6251
    %v6254 = vmul.u32.u64.compose %v6250, %v6245
    %v6255 = vextract.low.u32 %v6254
    %v6256 = vextract.high.u32 %v6254
    %v6257 = vmul.u32 %v6250, %v6241
    %v6258 = vadd.s32 %v6253, %v6255
    %vm6259 = vc.u32 %v6253, %v6255
    %v6260 = vadd.s32 %v6256, 1
    %v6261 = vsel %vm6259, %v6260, %v6256
    %v6262 = vadd.s32 %v6257, %v6261
    %v6263 = vadd.s32 %v6262, 536870912
    %v6264 = vshrl.u32 %v6263, 30
    %v6265 = vshll.u32 %v6264, 30
    %v6266 = vsub.s32 %v6262, %v6265
    %vm6267 = vcmp.lt.s32.totalorder %v6266, 0
    %v6268 = vsub.s32 0, %v6266
    %v6269 = vsel %vm6267, %v6268, %v6266
    %v6270 = vclz %v6269
    %v6271 = vsub.s32 %v6270, 2
    %vm6272 = vcmp.gt.s32.totalorder 0, %v6271
    %v6273 = vsel %vm6272, 0, %v6271
    %v6274 = vsub.s32 32, %v6273
    %v6275 = vshll.u32 %v6266, %v6273
    %v6276 = vshrl.u32 %v6258, %v6274
    %v6277 = vor.u32 %v6275, %v6276
    %v6278 = vsub.s32 4294967266, %v6273
    %v6279 = vadd.s32 %v6278, 127
    %v6280 = vshll.u32 %v6279, 23
    %v6281 = vor.u32 4788187, %v6280
    %v6282 = vand.u32 2147483647, %v6281
    %v6284 = vcvt.s32.f32 %v6277
    %v6285 = vmul.f32 %v6284, %v6282
    %v6286 = vxor.u32 %v6285, 2147483648
    %v6287 = vsel %vm6204, %v6286, %v6285
    %v6288 = vsub.s32 4, %v6264
    %v6289 = vsel %vm6204, %v6288, %v6264
    %v6290 = vsel %vm6203, %v5776, %v6287
    %v6291 = vsel %vm6203, 0, %v6289
    %v6292 = vcosq.f32.pop %v6290
    %v6293 = vsinq.f32.pop %v6290
    %vm6294 = vweird.f32 %v5776
    %v6295 = vadd.s32 %v6291, 3
    %v6296 = vand.u32 %v6295, 3
    %vm6297 = vcmp.lt.s32.totalorder %v6296, 2
    %vm6298 = vcmp.eq.s32.totalorder %v6296, 0
    %v6299 = vxor.u32 %v6293, 2147483648
    %v6300 = vsel %vm6298, %v6292, %v6299
    %vm6301 = vcmp.eq.s32.totalorder %v6296, 2
    %v6302 = vxor.u32 %v6292, 2147483648
    %v6303 = vsel %vm6301, %v6302, %v6293
    %v6304 = vsel %vm6297, %v6300, %v6303
    %v6305 = vsel %vm6294, nan, %v6304
    %v6306 = vand.u32 2147483647, %v5777
    %vm6307 = vcmp.le.f32.partialorder %v6306, 0.7853982
    %vm6308 = vcmp.lt.s32.totalorder %v5777, 0
    %v6309 = vand.u32 %v5777, 2139095040
    %v6310 = vshrl.u32 %v6309, 23
    %v6311 = vsub.s32 %v6310, 127
    %v6312 = vand.u32 2147483647, %v5777
    %v6313 = vand.u32 %v6312, 8388607
    %v6314 = vor.u32 %v6313, 8388608
    %v6315 = vsub.s32 0, %v6314
    %v6316 = vadd.s32 %v6311, 1
    %vm6317 = vcmp.gt.s32.totalorder %v6316, 0
    %v6318 = vsel %vm6317, %v6316, 0
    %v6319 = vshrl.u32 %v6318, 5
    %v6320 = vand.u32 %v6318, 31
    %v6321 = vsub.s32 32, %v6320
    %v6322 = vshrl.u32 683565275, %v6321
    %v6323 = vshll.u32 683565275, %v6320
    %v6324 = vshrl.u32 2475754826, %v6321
    %v6325 = vor.u32 %v6323, %v6324
    %v6326 = vshll.u32 2475754826, %v6320
    %v6327 = vshrl.u32 2131351028, %v6321
    %v6328 = vor.u32 %v6326, %v6327
    %v6329 = vshll.u32 2131351028, %v6320
    %v6330 = vshrl.u32 2102212464, %v6321
    %v6331 = vor.u32 %v6329, %v6330
    %v6332 = vshll.u32 2102212464, %v6320
    %v6333 = vshrl.u32 920167782, %v6321
    %v6334 = vor.u32 %v6332, %v6333
    %v6335 = vshll.u32 920167782, %v6320
    %v6336 = vshrl.u32 1326507024, %v6321
    %v6337 = vor.u32 %v6335, %v6336
    %vm6338 = vcmp.lt.s32.totalorder %v6319, 1
    %vm6339 = vcmp.lt.s32.totalorder %v6319, 2
    %vm6340 = vcmp.lt.s32.totalorder %v6319, 3
    %vm6341 = vcmp.lt.s32.totalorder %v6319, 4
    %v6342 = vsel %vm6338, %v6322, %v6325
    %v6343 = vsel %vm6341, %v6331, 2102212464
    %v6344 = vsel %vm6340, %v6328, %v6343
    %v6345 = vsel %vm6339, %v6342, %v6344
    %v6346 = vsel %vm6338, %v6325, %v6328
    %v6347 = vsel %vm6341, %v6334, 920167782
    %v6348 = vsel %vm6340, %v6331, %v6347
    %v6349 = vsel %vm6339, %v6346, %v6348
    %v6350 = vsel %vm6338, %v6328, %v6331
    %v6351 = vsel %vm6341, %v6337, 1326507024
    %v6352 = vsel %vm6340, %v6334, %v6351
    %v6353 = vsel %vm6339, %v6350, %v6352
    %v6354 = vshll.u32 %v6314, 8
    %v6355 = vmul.u32.u64.compose %v6354, %v6353
    %v6356 = vextract.low.u32 %v6355
    %v6357 = vextract.high.u32 %v6355
    %v6358 = vmul.u32.u64.compose %v6354, %v6349
    %v6359 = vextract.low.u32 %v6358
    %v6360 = vextract.high.u32 %v6358
    %v6361 = vmul.u32 %v6354, %v6345
    %v6362 = vadd.s32 %v6357, %v6359
    %vm6363 = vc.u32 %v6357, %v6359
    %v6364 = vadd.s32 %v6360, 1
    %v6365 = vsel %vm6363, %v6364, %v6360
    %v6366 = vadd.s32 %v6361, %v6365
    %v6367 = vadd.s32 %v6366, 536870912
    %v6368 = vshrl.u32 %v6367, 30
    %v6369 = vshll.u32 %v6368, 30
    %v6370 = vsub.s32 %v6366, %v6369
    %vm6371 = vcmp.lt.s32.totalorder %v6370, 0
    %v6372 = vsub.s32 0, %v6370
    %v6373 = vsel %vm6371, %v6372, %v6370
    %v6374 = vclz %v6373
    %v6375 = vsub.s32 %v6374, 2
    %vm6376 = vcmp.gt.s32.totalorder 0, %v6375
    %v6377 = vsel %vm6376, 0, %v6375
    %v6378 = vsub.s32 32, %v6377
    %v6379 = vshll.u32 %v6370, %v6377
    %v6380 = vshrl.u32 %v6362, %v6378
    %v6381 = vor.u32 %v6379, %v6380
    %v6382 = vsub.s32 4294967266, %v6377
    %v6383 = vadd.s32 %v6382, 127
    %v6384 = vshll.u32 %v6383, 23
    %v6385 = vor.u32 4788187, %v6384
    %v6386 = vand.u32 2147483647, %v6385
    %v6388 = vcvt.s32.f32 %v6381
    %v6389 = vmul.f32 %v6388, %v6386
    %v6390 = vxor.u32 %v6389, 2147483648
    %v6391 = vsel %vm6308, %v6390, %v6389
    %v6392 = vsub.s32 4, %v6368
    %v6393 = vsel %vm6308, %v6392, %v6368
    %v6394 = vsel %vm6307, %v5777, %v6391
    %v6395 = vsel %vm6307, 0, %v6393
    %v6396 = vcosq.f32.pop %v6394
    %v6397 = vsinq.f32.pop %v6394
    %vm6398 = vweird.f32 %v5777
    %v6399 = vadd.s32 %v6395, 3
    %v6400 = vand.u32 %v6399, 3
    %vm6401 = vcmp.lt.s32.totalorder %v6400, 2
    %vm6402 = vcmp.eq.s32.totalorder %v6400, 0
    %v6403 = vxor.u32 %v6397, 2147483648
    %v6404 = vsel %vm6402, %v6396, %v6403
    %vm6405 = vcmp.eq.s32.totalorder %v6400, 2
    %v6406 = vxor.u32 %v6396, 2147483648
    %v6407 = vsel %vm6405, %v6406, %v6397
    %v6408 = vsel %vm6401, %v6404, %v6407
    %v6409 = vsel %vm6398, nan, %v6408
    %v6410 = vand.u32 2147483647, %v5778
    %vm6411 = vcmp.le.f32.partialorder %v6410, 0.7853982
    %vm6412 = vcmp.lt.s32.totalorder %v5778, 0
    %v6413 = vand.u32 %v5778, 2139095040
    %v6414 = vshrl.u32 %v6413, 23
    %v6415 = vsub.s32 %v6414, 127
    %v6416 = vand.u32 2147483647, %v5778
    %v6417 = vand.u32 %v6416, 8388607
    %v6418 = vor.u32 %v6417, 8388608
    %v6419 = vsub.s32 0, %v6418
    %v6420 = vadd.s32 %v6415, 1
    %vm6421 = vcmp.gt.s32.totalorder %v6420, 0
    %v6422 = vsel %vm6421, %v6420, 0
    %v6423 = vshrl.u32 %v6422, 5
    %v6424 = vand.u32 %v6422, 31
    %v6425 = vsub.s32 32, %v6424
    %v6426 = vshrl.u32 683565275, %v6425
    %v6427 = vshll.u32 683565275, %v6424
    %v6428 = vshrl.u32 2475754826, %v6425
    %v6429 = vor.u32 %v6427, %v6428
    %v6430 = vshll.u32 2475754826, %v6424
    %v6431 = vshrl.u32 2131351028, %v6425
    %v6432 = vor.u32 %v6430, %v6431
    %v6433 = vshll.u32 2131351028, %v6424
    %v6434 = vshrl.u32 2102212464, %v6425
    %v6435 = vor.u32 %v6433, %v6434
    %v6436 = vshll.u32 2102212464, %v6424
    %v6437 = vshrl.u32 920167782, %v6425
    %v6438 = vor.u32 %v6436, %v6437
    %v6439 = vshll.u32 920167782, %v6424
    %v6440 = vshrl.u32 1326507024, %v6425
    %v6441 = vor.u32 %v6439, %v6440
    %vm6442 = vcmp.lt.s32.totalorder %v6423, 1
    %vm6443 = vcmp.lt.s32.totalorder %v6423, 2
    %vm6444 = vcmp.lt.s32.totalorder %v6423, 3
    %vm6445 = vcmp.lt.s32.totalorder %v6423, 4
    %v6446 = vsel %vm6442, %v6426, %v6429
    %v6447 = vsel %vm6445, %v6435, 2102212464
    %v6448 = vsel %vm6444, %v6432, %v6447
    %v6449 = vsel %vm6443, %v6446, %v6448
    %v6450 = vsel %vm6442, %v6429, %v6432
    %v6451 = vsel %vm6445, %v6438, 920167782
    %v6452 = vsel %vm6444, %v6435, %v6451
    %v6453 = vsel %vm6443, %v6450, %v6452
    %v6454 = vsel %vm6442, %v6432, %v6435
    %v6455 = vsel %vm6445, %v6441, 1326507024
    %v6456 = vsel %vm6444, %v6438, %v6455
    %v6457 = vsel %vm6443, %v6454, %v6456
    %v6458 = vshll.u32 %v6418, 8
    %v6459 = vmul.u32.u64.compose %v6458, %v6457
    %v6460 = vextract.low.u32 %v6459
    %v6461 = vextract.high.u32 %v6459
    %v6462 = vmul.u32.u64.compose %v6458, %v6453
    %v6463 = vextract.low.u32 %v6462
    %v6464 = vextract.high.u32 %v6462
    %v6465 = vmul.u32 %v6458, %v6449
    %v6466 = vadd.s32 %v6461, %v6463
    %vm6467 = vc.u32 %v6461, %v6463
    %v6468 = vadd.s32 %v6464, 1
    %v6469 = vsel %vm6467, %v6468, %v6464
    %v6470 = vadd.s32 %v6465, %v6469
    %v6471 = vadd.s32 %v6470, 536870912
    %v6472 = vshrl.u32 %v6471, 30
    %v6473 = vshll.u32 %v6472, 30
    %v6474 = vsub.s32 %v6470, %v6473
    %vm6475 = vcmp.lt.s32.totalorder %v6474, 0
    %v6476 = vsub.s32 0, %v6474
    %v6477 = vsel %vm6475, %v6476, %v6474
    %v6478 = vclz %v6477
    %v6479 = vsub.s32 %v6478, 2
    %vm6480 = vcmp.gt.s32.totalorder 0, %v6479
    %v6481 = vsel %vm6480, 0, %v6479
    %v6482 = vsub.s32 32, %v6481
    %v6483 = vshll.u32 %v6474, %v6481
    %v6484 = vshrl.u32 %v6466, %v6482
    %v6485 = vor.u32 %v6483, %v6484
    %v6486 = vsub.s32 4294967266, %v6481
    %v6487 = vadd.s32 %v6486, 127
    %v6488 = vshll.u32 %v6487, 23
    %v6489 = vor.u32 4788187, %v6488
    %v6490 = vand.u32 2147483647, %v6489
    %v6492 = vcvt.s32.f32 %v6485
    %v6493 = vmul.f32 %v6492, %v6490
    %v6494 = vxor.u32 %v6493, 2147483648
    %v6495 = vsel %vm6412, %v6494, %v6493
    %v6496 = vsub.s32 4, %v6472
    %v6497 = vsel %vm6412, %v6496, %v6472
    %v6498 = vsel %vm6411, %v5778, %v6495
    %v6499 = vsel %vm6411, 0, %v6497
    %v6500 = vcosq.f32.pop %v6498
    %v6501 = vsinq.f32.pop %v6498
    %vm6502 = vweird.f32 %v5778
    %v6503 = vadd.s32 %v6499, 3
    %v6504 = vand.u32 %v6503, 3
    %vm6505 = vcmp.lt.s32.totalorder %v6504, 2
    %vm6506 = vcmp.eq.s32.totalorder %v6504, 0
    %v6507 = vxor.u32 %v6501, 2147483648
    %v6508 = vsel %vm6506, %v6500, %v6507
    %vm6509 = vcmp.eq.s32.totalorder %v6504, 2
    %v6510 = vxor.u32 %v6500, 2147483648
    %v6511 = vsel %vm6509, %v6510, %v6501
    %v6512 = vsel %vm6505, %v6508, %v6511
    %v6513 = vsel %vm6502, nan, %v6512
    %v6514 = vand.u32 2147483647, %v5779
    %vm6515 = vcmp.le.f32.partialorder %v6514, 0.7853982
    %vm6516 = vcmp.lt.s32.totalorder %v5779, 0
    %v6517 = vand.u32 %v5779, 2139095040
    %v6518 = vshrl.u32 %v6517, 23
    %v6519 = vsub.s32 %v6518, 127
    %v6520 = vand.u32 2147483647, %v5779
    %v6521 = vand.u32 %v6520, 8388607
    %v6522 = vor.u32 %v6521, 8388608
    %v6523 = vsub.s32 0, %v6522
    %v6524 = vadd.s32 %v6519, 1
    %vm6525 = vcmp.gt.s32.totalorder %v6524, 0
    %v6526 = vsel %vm6525, %v6524, 0
    %v6527 = vshrl.u32 %v6526, 5
    %v6528 = vand.u32 %v6526, 31
    %v6529 = vsub.s32 32, %v6528
    %v6530 = vshrl.u32 683565275, %v6529
    %v6531 = vshll.u32 683565275, %v6528
    %v6532 = vshrl.u32 2475754826, %v6529
    %v6533 = vor.u32 %v6531, %v6532
    %v6534 = vshll.u32 2475754826, %v6528
    %v6535 = vshrl.u32 2131351028, %v6529
    %v6536 = vor.u32 %v6534, %v6535
    %v6537 = vshll.u32 2131351028, %v6528
    %v6538 = vshrl.u32 2102212464, %v6529
    %v6539 = vor.u32 %v6537, %v6538
    %v6540 = vshll.u32 2102212464, %v6528
    %v6541 = vshrl.u32 920167782, %v6529
    %v6542 = vor.u32 %v6540, %v6541
    %v6543 = vshll.u32 920167782, %v6528
    %v6544 = vshrl.u32 1326507024, %v6529
    %v6545 = vor.u32 %v6543, %v6544
    %vm6546 = vcmp.lt.s32.totalorder %v6527, 1
    %vm6547 = vcmp.lt.s32.totalorder %v6527, 2
    %vm6548 = vcmp.lt.s32.totalorder %v6527, 3
    %vm6549 = vcmp.lt.s32.totalorder %v6527, 4
    %v6550 = vsel %vm6546, %v6530, %v6533
    %v6551 = vsel %vm6549, %v6539, 2102212464
    %v6552 = vsel %vm6548, %v6536, %v6551
    %v6553 = vsel %vm6547, %v6550, %v6552
    %v6554 = vsel %vm6546, %v6533, %v6536
    %v6555 = vsel %vm6549, %v6542, 920167782
    %v6556 = vsel %vm6548, %v6539, %v6555
    %v6557 = vsel %vm6547, %v6554, %v6556
    %v6558 = vsel %vm6546, %v6536, %v6539
    %v6559 = vsel %vm6549, %v6545, 1326507024
    %v6560 = vsel %vm6548, %v6542, %v6559
    %v6561 = vsel %vm6547, %v6558, %v6560
    %v6562 = vshll.u32 %v6522, 8
    %v6563 = vmul.u32.u64.compose %v6562, %v6561
    %v6564 = vextract.low.u32 %v6563
    %v6565 = vextract.high.u32 %v6563
    %v6566 = vmul.u32.u64.compose %v6562, %v6557
    %v6567 = vextract.low.u32 %v6566
    %v6568 = vextract.high.u32 %v6566
    %v6569 = vmul.u32 %v6562, %v6553
    %v6570 = vadd.s32 %v6565, %v6567
    %vm6571 = vc.u32 %v6565, %v6567
    %v6572 = vadd.s32 %v6568, 1
    %v6573 = vsel %vm6571, %v6572, %v6568
    %v6574 = vadd.s32 %v6569, %v6573
    %v6575 = vadd.s32 %v6574, 536870912
    %v6576 = vshrl.u32 %v6575, 30
    %v6577 = vshll.u32 %v6576, 30
    %v6578 = vsub.s32 %v6574, %v6577
    %vm6579 = vcmp.lt.s32.totalorder %v6578, 0
    %v6580 = vsub.s32 0, %v6578
    %v6581 = vsel %vm6579, %v6580, %v6578
    %v6582 = vclz %v6581
    %v6583 = vsub.s32 %v6582, 2
    %vm6584 = vcmp.gt.s32.totalorder 0, %v6583
    %v6585 = vsel %vm6584, 0, %v6583
    %v6586 = vsub.s32 32, %v6585
    %v6587 = vshll.u32 %v6578, %v6585
    %v6588 = vshrl.u32 %v6570, %v6586
    %v6589 = vor.u32 %v6587, %v6588
    %v6590 = vsub.s32 4294967266, %v6585
    %v6591 = vadd.s32 %v6590, 127
    %v6592 = vshll.u32 %v6591, 23
    %v6593 = vor.u32 4788187, %v6592
    %v6594 = vand.u32 2147483647, %v6593
    %v6596 = vcvt.s32.f32 %v6589
    %v6597 = vmul.f32 %v6596, %v6594
    %v6598 = vxor.u32 %v6597, 2147483648
    %v6599 = vsel %vm6516, %v6598, %v6597
    %v6600 = vsub.s32 4, %v6576
    %v6601 = vsel %vm6516, %v6600, %v6576
    %v6602 = vsel %vm6515, %v5779, %v6599
    %v6603 = vsel %vm6515, 0, %v6601
    %v6604 = vcosq.f32.pop %v6602
    %v6605 = vsinq.f32.pop %v6602
    %vm6606 = vweird.f32 %v5779
    %v6607 = vadd.s32 %v6603, 3
    %v6608 = vand.u32 %v6607, 3
    %vm6609 = vcmp.lt.s32.totalorder %v6608, 2
    %vm6610 = vcmp.eq.s32.totalorder %v6608, 0
    %v6611 = vxor.u32 %v6605, 2147483648
    %v6612 = vsel %vm6610, %v6604, %v6611
    %vm6613 = vcmp.eq.s32.totalorder %v6608, 2
    %v6614 = vxor.u32 %v6604, 2147483648
    %v6615 = vsel %vm6613, %v6614, %v6605
    %v6616 = vsel %vm6609, %v6612, %v6615
    %v6617 = vsel %vm6606, nan, %v6616
    %v6618 = vand.u32 2147483647, %v5780
    %vm6619 = vcmp.le.f32.partialorder %v6618, 0.7853982
    %vm6620 = vcmp.lt.s32.totalorder %v5780, 0
    %v6621 = vand.u32 %v5780, 2139095040
    %v6622 = vshrl.u32 %v6621, 23
    %v6623 = vsub.s32 %v6622, 127
    %v6624 = vand.u32 2147483647, %v5780
    %v6625 = vand.u32 %v6624, 8388607
    %v6626 = vor.u32 %v6625, 8388608
    %v6627 = vsub.s32 0, %v6626
    %v6628 = vadd.s32 %v6623, 1
    %vm6629 = vcmp.gt.s32.totalorder %v6628, 0
    %v6630 = vsel %vm6629, %v6628, 0
    %v6631 = vshrl.u32 %v6630, 5
    %v6632 = vand.u32 %v6630, 31
    %v6633 = vsub.s32 32, %v6632
    %v6634 = vshrl.u32 683565275, %v6633
    %v6635 = vshll.u32 683565275, %v6632
    %v6636 = vshrl.u32 2475754826, %v6633
    %v6637 = vor.u32 %v6635, %v6636
    %v6638 = vshll.u32 2475754826, %v6632
    %v6639 = vshrl.u32 2131351028, %v6633
    %v6640 = vor.u32 %v6638, %v6639
    %v6641 = vshll.u32 2131351028, %v6632
    %v6642 = vshrl.u32 2102212464, %v6633
    %v6643 = vor.u32 %v6641, %v6642
    %v6644 = vshll.u32 2102212464, %v6632
    %v6645 = vshrl.u32 920167782, %v6633
    %v6646 = vor.u32 %v6644, %v6645
    %v6647 = vshll.u32 920167782, %v6632
    %v6648 = vshrl.u32 1326507024, %v6633
    %v6649 = vor.u32 %v6647, %v6648
    %vm6650 = vcmp.lt.s32.totalorder %v6631, 1
    %vm6651 = vcmp.lt.s32.totalorder %v6631, 2
    %vm6652 = vcmp.lt.s32.totalorder %v6631, 3
    %vm6653 = vcmp.lt.s32.totalorder %v6631, 4
    %v6654 = vsel %vm6650, %v6634, %v6637
    %v6655 = vsel %vm6653, %v6643, 2102212464
    %v6656 = vsel %vm6652, %v6640, %v6655
    %v6657 = vsel %vm6651, %v6654, %v6656
    %v6658 = vsel %vm6650, %v6637, %v6640
    %v6659 = vsel %vm6653, %v6646, 920167782
    %v6660 = vsel %vm6652, %v6643, %v6659
    %v6661 = vsel %vm6651, %v6658, %v6660
    %v6662 = vsel %vm6650, %v6640, %v6643
    %v6663 = vsel %vm6653, %v6649, 1326507024
    %v6664 = vsel %vm6652, %v6646, %v6663
    %v6665 = vsel %vm6651, %v6662, %v6664
    %v6666 = vshll.u32 %v6626, 8
    %v6667 = vmul.u32.u64.compose %v6666, %v6665
    %v6668 = vextract.low.u32 %v6667
    %v6669 = vextract.high.u32 %v6667
    %v6670 = vmul.u32.u64.compose %v6666, %v6661
    %v6671 = vextract.low.u32 %v6670
    %v6672 = vextract.high.u32 %v6670
    %v6673 = vmul.u32 %v6666, %v6657
    %v6674 = vadd.s32 %v6669, %v6671
    %vm6675 = vc.u32 %v6669, %v6671
    %v6676 = vadd.s32 %v6672, 1
    %v6677 = vsel %vm6675, %v6676, %v6672
    %v6678 = vadd.s32 %v6673, %v6677
    %v6679 = vadd.s32 %v6678, 536870912
    %v6680 = vshrl.u32 %v6679, 30
    %v6681 = vshll.u32 %v6680, 30
    %v6682 = vsub.s32 %v6678, %v6681
    %vm6683 = vcmp.lt.s32.totalorder %v6682, 0
    %v6684 = vsub.s32 0, %v6682
    %v6685 = vsel %vm6683, %v6684, %v6682
    %v6686 = vclz %v6685
    %v6687 = vsub.s32 %v6686, 2
    %vm6688 = vcmp.gt.s32.totalorder 0, %v6687
    %v6689 = vsel %vm6688, 0, %v6687
    %v6690 = vsub.s32 32, %v6689
    %v6691 = vshll.u32 %v6682, %v6689
    %v6692 = vshrl.u32 %v6674, %v6690
    %v6693 = vor.u32 %v6691, %v6692
    %v6694 = vsub.s32 4294967266, %v6689
    %v6695 = vadd.s32 %v6694, 127
    %v6696 = vshll.u32 %v6695, 23
    %v6697 = vor.u32 4788187, %v6696
    %v6698 = vand.u32 2147483647, %v6697
    %v6700 = vcvt.s32.f32 %v6693
    %v6701 = vmul.f32 %v6700, %v6698
    %v6702 = vxor.u32 %v6701, 2147483648
    %v6703 = vsel %vm6620, %v6702, %v6701
    %v6704 = vsub.s32 4, %v6680
    %v6705 = vsel %vm6620, %v6704, %v6680
    %v6706 = vsel %vm6619, %v5780, %v6703
    %v6707 = vsel %vm6619, 0, %v6705
    %v6708 = vcosq.f32.pop %v6706
    %v6709 = vsinq.f32.pop %v6706
    %vm6710 = vweird.f32 %v5780
    %v6711 = vadd.s32 %v6707, 3
    %v6712 = vand.u32 %v6711, 3
    %vm6713 = vcmp.lt.s32.totalorder %v6712, 2
    %vm6714 = vcmp.eq.s32.totalorder %v6712, 0
    %v6715 = vxor.u32 %v6709, 2147483648
    %v6716 = vsel %vm6714, %v6708, %v6715
    %vm6717 = vcmp.eq.s32.totalorder %v6712, 2
    %v6718 = vxor.u32 %v6708, 2147483648
    %v6719 = vsel %vm6717, %v6718, %v6709
    %v6720 = vsel %vm6713, %v6716, %v6719
    %v6721 = vsel %vm6710, nan, %v6720
    %v6722 = vand.u32 2147483647, %v5781
    %vm6723 = vcmp.le.f32.partialorder %v6722, 0.7853982
    %vm6724 = vcmp.lt.s32.totalorder %v5781, 0
    %v6725 = vand.u32 %v5781, 2139095040
    %v6726 = vshrl.u32 %v6725, 23
    %v6727 = vsub.s32 %v6726, 127
    %v6728 = vand.u32 2147483647, %v5781
    %v6729 = vand.u32 %v6728, 8388607
    %v6730 = vor.u32 %v6729, 8388608
    %v6731 = vsub.s32 0, %v6730
    %v6732 = vadd.s32 %v6727, 1
    %vm6733 = vcmp.gt.s32.totalorder %v6732, 0
    %v6734 = vsel %vm6733, %v6732, 0
    %v6735 = vshrl.u32 %v6734, 5
    %v6736 = vand.u32 %v6734, 31
    %v6737 = vsub.s32 32, %v6736
    %v6738 = vshrl.u32 683565275, %v6737
    %v6739 = vshll.u32 683565275, %v6736
    %v6740 = vshrl.u32 2475754826, %v6737
    %v6741 = vor.u32 %v6739, %v6740
    %v6742 = vshll.u32 2475754826, %v6736
    %v6743 = vshrl.u32 2131351028, %v6737
    %v6744 = vor.u32 %v6742, %v6743
    %v6745 = vshll.u32 2131351028, %v6736
    %v6746 = vshrl.u32 2102212464, %v6737
    %v6747 = vor.u32 %v6745, %v6746
    %v6748 = vshll.u32 2102212464, %v6736
    %v6749 = vshrl.u32 920167782, %v6737
    %v6750 = vor.u32 %v6748, %v6749
    %v6751 = vshll.u32 920167782, %v6736
    %v6752 = vshrl.u32 1326507024, %v6737
    %v6753 = vor.u32 %v6751, %v6752
    %vm6754 = vcmp.lt.s32.totalorder %v6735, 1
    %vm6755 = vcmp.lt.s32.totalorder %v6735, 2
    %vm6756 = vcmp.lt.s32.totalorder %v6735, 3
    %vm6757 = vcmp.lt.s32.totalorder %v6735, 4
    %v6758 = vsel %vm6754, %v6738, %v6741
    %v6759 = vsel %vm6757, %v6747, 2102212464
    %v6760 = vsel %vm6756, %v6744, %v6759
    %v6761 = vsel %vm6755, %v6758, %v6760
    %v6762 = vsel %vm6754, %v6741, %v6744
    %v6763 = vsel %vm6757, %v6750, 920167782
    %v6764 = vsel %vm6756, %v6747, %v6763
    %v6765 = vsel %vm6755, %v6762, %v6764
    %v6766 = vsel %vm6754, %v6744, %v6747
    %v6767 = vsel %vm6757, %v6753, 1326507024
    %v6768 = vsel %vm6756, %v6750, %v6767
    %v6769 = vsel %vm6755, %v6766, %v6768
    %v6770 = vshll.u32 %v6730, 8
    %v6771 = vmul.u32.u64.compose %v6770, %v6769
    %v6772 = vextract.low.u32 %v6771
    %v6773 = vextract.high.u32 %v6771
    %v6774 = vmul.u32.u64.compose %v6770, %v6765
    %v6775 = vextract.low.u32 %v6774
    %v6776 = vextract.high.u32 %v6774
    %v6777 = vmul.u32 %v6770, %v6761
    %v6778 = vadd.s32 %v6773, %v6775
    %vm6779 = vc.u32 %v6773, %v6775
    %v6780 = vadd.s32 %v6776, 1
    %v6781 = vsel %vm6779, %v6780, %v6776
    %v6782 = vadd.s32 %v6777, %v6781
    %v6783 = vadd.s32 %v6782, 536870912
    %v6784 = vshrl.u32 %v6783, 30
    %v6785 = vshll.u32 %v6784, 30
    %v6786 = vsub.s32 %v6782, %v6785
    %vm6787 = vcmp.lt.s32.totalorder %v6786, 0
    %v6788 = vsub.s32 0, %v6786
    %v6789 = vsel %vm6787, %v6788, %v6786
    %v6790 = vclz %v6789
    %v6791 = vsub.s32 %v6790, 2
    %vm6792 = vcmp.gt.s32.totalorder 0, %v6791
    %v6793 = vsel %vm6792, 0, %v6791
    %v6794 = vsub.s32 32, %v6793
    %v6795 = vshll.u32 %v6786, %v6793
    %v6796 = vshrl.u32 %v6778, %v6794
    %v6797 = vor.u32 %v6795, %v6796
    %v6798 = vsub.s32 4294967266, %v6793
    %v6799 = vadd.s32 %v6798, 127
    %v6800 = vshll.u32 %v6799, 23
    %v6801 = vor.u32 4788187, %v6800
    %v6802 = vand.u32 2147483647, %v6801
    %v6804 = vcvt.s32.f32 %v6797
    %v6805 = vmul.f32 %v6804, %v6802
    %v6806 = vxor.u32 %v6805, 2147483648
    %v6807 = vsel %vm6724, %v6806, %v6805
    %v6808 = vsub.s32 4, %v6784
    %v6809 = vsel %vm6724, %v6808, %v6784
    %v6810 = vsel %vm6723, %v5781, %v6807
    %v6811 = vsel %vm6723, 0, %v6809
    %v6812 = vcosq.f32.pop %v6810
    %v6813 = vsinq.f32.pop %v6810
    %vm6814 = vweird.f32 %v5781
    %v6815 = vadd.s32 %v6811, 3
    %v6816 = vand.u32 %v6815, 3
    %vm6817 = vcmp.lt.s32.totalorder %v6816, 2
    %vm6818 = vcmp.eq.s32.totalorder %v6816, 0
    %v6819 = vxor.u32 %v6813, 2147483648
    %v6820 = vsel %vm6818, %v6812, %v6819
    %vm6821 = vcmp.eq.s32.totalorder %v6816, 2
    %v6822 = vxor.u32 %v6812, 2147483648
    %v6823 = vsel %vm6821, %v6822, %v6813
    %v6824 = vsel %vm6817, %v6820, %v6823
    %v6825 = vsel %vm6814, nan, %v6824
    %v6826 = vand.u32 2147483647, %v5782
    %vm6827 = vcmp.le.f32.partialorder %v6826, 0.7853982
    %vm6828 = vcmp.lt.s32.totalorder %v5782, 0
    %v6829 = vand.u32 %v5782, 2139095040
    %v6830 = vshrl.u32 %v6829, 23
    %v6831 = vsub.s32 %v6830, 127
    %v6832 = vand.u32 2147483647, %v5782
    %v6833 = vand.u32 %v6832, 8388607
    %v6834 = vor.u32 %v6833, 8388608
    %v6835 = vsub.s32 0, %v6834
    %v6836 = vadd.s32 %v6831, 1
    %vm6837 = vcmp.gt.s32.totalorder %v6836, 0
    %v6838 = vsel %vm6837, %v6836, 0
    %v6839 = vshrl.u32 %v6838, 5
    %v6840 = vand.u32 %v6838, 31
    %v6841 = vsub.s32 32, %v6840
    %v6842 = vshrl.u32 683565275, %v6841
    %v6843 = vshll.u32 683565275, %v6840
    %v6844 = vshrl.u32 2475754826, %v6841
    %v6845 = vor.u32 %v6843, %v6844
    %v6846 = vshll.u32 2475754826, %v6840
    %v6847 = vshrl.u32 2131351028, %v6841
    %v6848 = vor.u32 %v6846, %v6847
    %v6849 = vshll.u32 2131351028, %v6840
    %v6850 = vshrl.u32 2102212464, %v6841
    %v6851 = vor.u32 %v6849, %v6850
    %v6852 = vshll.u32 2102212464, %v6840
    %v6853 = vshrl.u32 920167782, %v6841
    %v6854 = vor.u32 %v6852, %v6853
    %v6855 = vshll.u32 920167782, %v6840
    %v6856 = vshrl.u32 1326507024, %v6841
    %v6857 = vor.u32 %v6855, %v6856
    %vm6858 = vcmp.lt.s32.totalorder %v6839, 1
    %vm6859 = vcmp.lt.s32.totalorder %v6839, 2
    %vm6860 = vcmp.lt.s32.totalorder %v6839, 3
    %vm6861 = vcmp.lt.s32.totalorder %v6839, 4
    %v6862 = vsel %vm6858, %v6842, %v6845
    %v6863 = vsel %vm6861, %v6851, 2102212464
    %v6864 = vsel %vm6860, %v6848, %v6863
    %v6865 = vsel %vm6859, %v6862, %v6864
    %v6866 = vsel %vm6858, %v6845, %v6848
    %v6867 = vsel %vm6861, %v6854, 920167782
    %v6868 = vsel %vm6860, %v6851, %v6867
    %v6869 = vsel %vm6859, %v6866, %v6868
    %v6870 = vsel %vm6858, %v6848, %v6851
    %v6871 = vsel %vm6861, %v6857, 1326507024
    %v6872 = vsel %vm6860, %v6854, %v6871
    %v6873 = vsel %vm6859, %v6870, %v6872
    %v6874 = vshll.u32 %v6834, 8
    %v6875 = vmul.u32.u64.compose %v6874, %v6873
    %v6876 = vextract.low.u32 %v6875
    %v6877 = vextract.high.u32 %v6875
    %v6878 = vmul.u32.u64.compose %v6874, %v6869
    %v6879 = vextract.low.u32 %v6878
    %v6880 = vextract.high.u32 %v6878
    %v6881 = vmul.u32 %v6874, %v6865
    %v6882 = vadd.s32 %v6877, %v6879
    %vm6883 = vc.u32 %v6877, %v6879
    %v6884 = vadd.s32 %v6880, 1
    %v6885 = vsel %vm6883, %v6884, %v6880
    %v6886 = vadd.s32 %v6881, %v6885
    %v6887 = vadd.s32 %v6886, 536870912
    %v6888 = vshrl.u32 %v6887, 30
    %v6889 = vshll.u32 %v6888, 30
    %v6890 = vsub.s32 %v6886, %v6889
    %vm6891 = vcmp.lt.s32.totalorder %v6890, 0
    %v6892 = vsub.s32 0, %v6890
    %v6893 = vsel %vm6891, %v6892, %v6890
    %v6894 = vclz %v6893
    %v6895 = vsub.s32 %v6894, 2
    %vm6896 = vcmp.gt.s32.totalorder 0, %v6895
    %v6897 = vsel %vm6896, 0, %v6895
    %v6898 = vsub.s32 32, %v6897
    %v6899 = vshll.u32 %v6890, %v6897
    %v6900 = vshrl.u32 %v6882, %v6898
    %v6901 = vor.u32 %v6899, %v6900
    %v6902 = vsub.s32 4294967266, %v6897
    %v6903 = vadd.s32 %v6902, 127
    %v6904 = vshll.u32 %v6903, 23
    %v6905 = vor.u32 4788187, %v6904
    %v6906 = vand.u32 2147483647, %v6905
    %v6908 = vcvt.s32.f32 %v6901
    %v6909 = vmul.f32 %v6908, %v6906
    %v6910 = vxor.u32 %v6909, 2147483648
    %v6911 = vsel %vm6828, %v6910, %v6909
    %v6912 = vsub.s32 4, %v6888
    %v6913 = vsel %vm6828, %v6912, %v6888
    %v6914 = vsel %vm6827, %v5782, %v6911
    %v6915 = vsel %vm6827, 0, %v6913
    %v6916 = vcosq.f32.pop %v6914
    %v6917 = vsinq.f32.pop %v6914
    %vm6918 = vweird.f32 %v5782
    %v6919 = vadd.s32 %v6915, 3
    %v6920 = vand.u32 %v6919, 3
    %vm6921 = vcmp.lt.s32.totalorder %v6920, 2
    %vm6922 = vcmp.eq.s32.totalorder %v6920, 0
    %v6923 = vxor.u32 %v6917, 2147483648
    %v6924 = vsel %vm6922, %v6916, %v6923
    %vm6925 = vcmp.eq.s32.totalorder %v6920, 2
    %v6926 = vxor.u32 %v6916, 2147483648
    %v6927 = vsel %vm6925, %v6926, %v6917
    %v6928 = vsel %vm6921, %v6924, %v6927
    %v6929 = vsel %vm6918, nan, %v6928
    %v6930 = vand.u32 2147483647, %v5783
    %vm6931 = vcmp.le.f32.partialorder %v6930, 0.7853982
    %vm6932 = vcmp.lt.s32.totalorder %v5783, 0
    %v6933 = vand.u32 %v5783, 2139095040
    %v6934 = vshrl.u32 %v6933, 23
    %v6935 = vsub.s32 %v6934, 127
    %v6936 = vand.u32 2147483647, %v5783
    %v6937 = vand.u32 %v6936, 8388607
    %v6938 = vor.u32 %v6937, 8388608
    %v6939 = vsub.s32 0, %v6938
    %v6940 = vadd.s32 %v6935, 1
    %vm6941 = vcmp.gt.s32.totalorder %v6940, 0
    %v6942 = vsel %vm6941, %v6940, 0
    %v6943 = vshrl.u32 %v6942, 5
    %v6944 = vand.u32 %v6942, 31
    %v6945 = vsub.s32 32, %v6944
    %v6946 = vshrl.u32 683565275, %v6945
    %v6947 = vshll.u32 683565275, %v6944
    %v6948 = vshrl.u32 2475754826, %v6945
    %v6949 = vor.u32 %v6947, %v6948
    %v6950 = vshll.u32 2475754826, %v6944
    %v6951 = vshrl.u32 2131351028, %v6945
    %v6952 = vor.u32 %v6950, %v6951
    %v6953 = vshll.u32 2131351028, %v6944
    %v6954 = vshrl.u32 2102212464, %v6945
    %v6955 = vor.u32 %v6953, %v6954
    %v6956 = vshll.u32 2102212464, %v6944
    %v6957 = vshrl.u32 920167782, %v6945
    %v6958 = vor.u32 %v6956, %v6957
    %v6959 = vshll.u32 920167782, %v6944
    %v6960 = vshrl.u32 1326507024, %v6945
    %v6961 = vor.u32 %v6959, %v6960
    %vm6962 = vcmp.lt.s32.totalorder %v6943, 1
    %vm6963 = vcmp.lt.s32.totalorder %v6943, 2
    %vm6964 = vcmp.lt.s32.totalorder %v6943, 3
    %vm6965 = vcmp.lt.s32.totalorder %v6943, 4
    %v6966 = vsel %vm6962, %v6946, %v6949
    %v6967 = vsel %vm6965, %v6955, 2102212464
    %v6968 = vsel %vm6964, %v6952, %v6967
    %v6969 = vsel %vm6963, %v6966, %v6968
    %v6970 = vsel %vm6962, %v6949, %v6952
    %v6971 = vsel %vm6965, %v6958, 920167782
    %v6972 = vsel %vm6964, %v6955, %v6971
    %v6973 = vsel %vm6963, %v6970, %v6972
    %v6974 = vsel %vm6962, %v6952, %v6955
    %v6975 = vsel %vm6965, %v6961, 1326507024
    %v6976 = vsel %vm6964, %v6958, %v6975
    %v6977 = vsel %vm6963, %v6974, %v6976
    %v6978 = vshll.u32 %v6938, 8
    %v6979 = vmul.u32.u64.compose %v6978, %v6977
    %v6980 = vextract.low.u32 %v6979
    %v6981 = vextract.high.u32 %v6979
    %v6982 = vmul.u32.u64.compose %v6978, %v6973
    %v6983 = vextract.low.u32 %v6982
    %v6984 = vextract.high.u32 %v6982
    %v6985 = vmul.u32 %v6978, %v6969
    %v6986 = vadd.s32 %v6981, %v6983
    %vm6987 = vc.u32 %v6981, %v6983
    %v6988 = vadd.s32 %v6984, 1
    %v6989 = vsel %vm6987, %v6988, %v6984
    %v6990 = vadd.s32 %v6985, %v6989
    %v6991 = vadd.s32 %v6990, 536870912
    %v6992 = vshrl.u32 %v6991, 30
    %v6993 = vshll.u32 %v6992, 30
    %v6994 = vsub.s32 %v6990, %v6993
    %vm6995 = vcmp.lt.s32.totalorder %v6994, 0
    %v6996 = vsub.s32 0, %v6994
    %v6997 = vsel %vm6995, %v6996, %v6994
    %v6998 = vclz %v6997
    %v6999 = vsub.s32 %v6998, 2
    %vm7000 = vcmp.gt.s32.totalorder 0, %v6999
    %v7001 = vsel %vm7000, 0, %v6999
    %v7002 = vsub.s32 32, %v7001
    %v7003 = vshll.u32 %v6994, %v7001
    %v7004 = vshrl.u32 %v6986, %v7002
    %v7005 = vor.u32 %v7003, %v7004
    %v7006 = vsub.s32 4294967266, %v7001
    %v7007 = vadd.s32 %v7006, 127
    %v7008 = vshll.u32 %v7007, 23
    %v7009 = vor.u32 4788187, %v7008
    %v7010 = vand.u32 2147483647, %v7009
    %v7012 = vcvt.s32.f32 %v7005
    %v7013 = vmul.f32 %v7012, %v7010
    %v7014 = vxor.u32 %v7013, 2147483648
    %v7015 = vsel %vm6932, %v7014, %v7013
    %v7016 = vsub.s32 4, %v6992
    %v7017 = vsel %vm6932, %v7016, %v6992
    %v7018 = vsel %vm6931, %v5783, %v7015
    %v7019 = vsel %vm6931, 0, %v7017
    %v7020 = vcosq.f32.pop %v7018
    %v7021 = vsinq.f32.pop %v7018
    %vm7022 = vweird.f32 %v5783
    %v7023 = vadd.s32 %v7019, 3
    %v7024 = vand.u32 %v7023, 3
    %vm7025 = vcmp.lt.s32.totalorder %v7024, 2
    %vm7026 = vcmp.eq.s32.totalorder %v7024, 0
    %v7027 = vxor.u32 %v7021, 2147483648
    %v7028 = vsel %vm7026, %v7020, %v7027
    %vm7029 = vcmp.eq.s32.totalorder %v7024, 2
    %v7030 = vxor.u32 %v7020, 2147483648
    %v7031 = vsel %vm7029, %v7030, %v7021
    %v7032 = vsel %vm7025, %v7028, %v7031
    %v7033 = vsel %vm7022, nan, %v7032
    %v7034 = vand.u32 2147483647, %v5784
    %vm7035 = vcmp.le.f32.partialorder %v7034, 0.7853982
    %vm7036 = vcmp.lt.s32.totalorder %v5784, 0
    %v7037 = vand.u32 %v5784, 2139095040
    %v7038 = vshrl.u32 %v7037, 23
    %v7039 = vsub.s32 %v7038, 127
    %v7040 = vand.u32 2147483647, %v5784
    %v7041 = vand.u32 %v7040, 8388607
    %v7042 = vor.u32 %v7041, 8388608
    %v7043 = vsub.s32 0, %v7042
    %v7044 = vadd.s32 %v7039, 1
    %vm7045 = vcmp.gt.s32.totalorder %v7044, 0
    %v7046 = vsel %vm7045, %v7044, 0
    %v7047 = vshrl.u32 %v7046, 5
    %v7048 = vand.u32 %v7046, 31
    %v7049 = vsub.s32 32, %v7048
    %v7050 = vshrl.u32 683565275, %v7049
    %v7051 = vshll.u32 683565275, %v7048
    %v7052 = vshrl.u32 2475754826, %v7049
    %v7053 = vor.u32 %v7051, %v7052
    %v7054 = vshll.u32 2475754826, %v7048
    %v7055 = vshrl.u32 2131351028, %v7049
    %v7056 = vor.u32 %v7054, %v7055
    %v7057 = vshll.u32 2131351028, %v7048
    %v7058 = vshrl.u32 2102212464, %v7049
    %v7059 = vor.u32 %v7057, %v7058
    %v7060 = vshll.u32 2102212464, %v7048
    %v7061 = vshrl.u32 920167782, %v7049
    %v7062 = vor.u32 %v7060, %v7061
    %v7063 = vshll.u32 920167782, %v7048
    %v7064 = vshrl.u32 1326507024, %v7049
    %v7065 = vor.u32 %v7063, %v7064
    %vm7066 = vcmp.lt.s32.totalorder %v7047, 1
    %vm7067 = vcmp.lt.s32.totalorder %v7047, 2
    %vm7068 = vcmp.lt.s32.totalorder %v7047, 3
    %vm7069 = vcmp.lt.s32.totalorder %v7047, 4
    %v7070 = vsel %vm7066, %v7050, %v7053
    %v7071 = vsel %vm7069, %v7059, 2102212464
    %v7072 = vsel %vm7068, %v7056, %v7071
    %v7073 = vsel %vm7067, %v7070, %v7072
    %v7074 = vsel %vm7066, %v7053, %v7056
    %v7075 = vsel %vm7069, %v7062, 920167782
    %v7076 = vsel %vm7068, %v7059, %v7075
    %v7077 = vsel %vm7067, %v7074, %v7076
    %v7078 = vsel %vm7066, %v7056, %v7059
    %v7079 = vsel %vm7069, %v7065, 1326507024
    %v7080 = vsel %vm7068, %v7062, %v7079
    %v7081 = vsel %vm7067, %v7078, %v7080
    %v7082 = vshll.u32 %v7042, 8
    %v7083 = vmul.u32.u64.compose %v7082, %v7081
    %v7084 = vextract.low.u32 %v7083
    %v7085 = vextract.high.u32 %v7083
    %v7086 = vmul.u32.u64.compose %v7082, %v7077
    %v7087 = vextract.low.u32 %v7086
    %v7088 = vextract.high.u32 %v7086
    %v7089 = vmul.u32 %v7082, %v7073
    %v7090 = vadd.s32 %v7085, %v7087
    %vm7091 = vc.u32 %v7085, %v7087
    %v7092 = vadd.s32 %v7088, 1
    %v7093 = vsel %vm7091, %v7092, %v7088
    %v7094 = vadd.s32 %v7089, %v7093
    %v7095 = vadd.s32 %v7094, 536870912
    %v7096 = vshrl.u32 %v7095, 30
    %v7097 = vshll.u32 %v7096, 30
    %v7098 = vsub.s32 %v7094, %v7097
    %vm7099 = vcmp.lt.s32.totalorder %v7098, 0
    %v7100 = vsub.s32 0, %v7098
    %v7101 = vsel %vm7099, %v7100, %v7098
    %v7102 = vclz %v7101
    %v7103 = vsub.s32 %v7102, 2
    %vm7104 = vcmp.gt.s32.totalorder 0, %v7103
    %v7105 = vsel %vm7104, 0, %v7103
    %v7106 = vsub.s32 32, %v7105
    %v7107 = vshll.u32 %v7098, %v7105
    %v7108 = vshrl.u32 %v7090, %v7106
    %v7109 = vor.u32 %v7107, %v7108
    %v7110 = vsub.s32 4294967266, %v7105
    %v7111 = vadd.s32 %v7110, 127
    %v7112 = vshll.u32 %v7111, 23
    %v7113 = vor.u32 4788187, %v7112
    %v7114 = vand.u32 2147483647, %v7113
    %v7116 = vcvt.s32.f32 %v7109
    %v7117 = vmul.f32 %v7116, %v7114
    %v7118 = vxor.u32 %v7117, 2147483648
    %v7119 = vsel %vm7036, %v7118, %v7117
    %v7120 = vsub.s32 4, %v7096
    %v7121 = vsel %vm7036, %v7120, %v7096
    %v7122 = vsel %vm7035, %v5784, %v7119
    %v7123 = vsel %vm7035, 0, %v7121
    %v7124 = vcosq.f32.pop %v7122
    %v7125 = vsinq.f32.pop %v7122
    %vm7126 = vweird.f32 %v5784
    %v7127 = vadd.s32 %v7123, 3
    %v7128 = vand.u32 %v7127, 3
    %vm7129 = vcmp.lt.s32.totalorder %v7128, 2
    %vm7130 = vcmp.eq.s32.totalorder %v7128, 0
    %v7131 = vxor.u32 %v7125, 2147483648
    %v7132 = vsel %vm7130, %v7124, %v7131
    %vm7133 = vcmp.eq.s32.totalorder %v7128, 2
    %v7134 = vxor.u32 %v7124, 2147483648
    %v7135 = vsel %vm7133, %v7134, %v7125
    %v7136 = vsel %vm7129, %v7132, %v7135
    %v7137 = vsel %vm7126, nan, %v7136
    %v7138 = vand.u32 2147483647, %v5785
    %vm7139 = vcmp.le.f32.partialorder %v7138, 0.7853982
    %vm7140 = vcmp.lt.s32.totalorder %v5785, 0
    %v7141 = vand.u32 %v5785, 2139095040
    %v7142 = vshrl.u32 %v7141, 23
    %v7143 = vsub.s32 %v7142, 127
    %v7144 = vand.u32 2147483647, %v5785
    %v7145 = vand.u32 %v7144, 8388607
    %v7146 = vor.u32 %v7145, 8388608
    %v7147 = vsub.s32 0, %v7146
    %v7148 = vadd.s32 %v7143, 1
    %vm7149 = vcmp.gt.s32.totalorder %v7148, 0
    %v7150 = vsel %vm7149, %v7148, 0
    %v7151 = vshrl.u32 %v7150, 5
    %v7152 = vand.u32 %v7150, 31
    %v7153 = vsub.s32 32, %v7152
    %v7154 = vshrl.u32 683565275, %v7153
    %v7155 = vshll.u32 683565275, %v7152
    %v7156 = vshrl.u32 2475754826, %v7153
    %v7157 = vor.u32 %v7155, %v7156
    %v7158 = vshll.u32 2475754826, %v7152
    %v7159 = vshrl.u32 2131351028, %v7153
    %v7160 = vor.u32 %v7158, %v7159
    %v7161 = vshll.u32 2131351028, %v7152
    %v7162 = vshrl.u32 2102212464, %v7153
    %v7163 = vor.u32 %v7161, %v7162
    %v7164 = vshll.u32 2102212464, %v7152
    %v7165 = vshrl.u32 920167782, %v7153
    %v7166 = vor.u32 %v7164, %v7165
    %v7167 = vshll.u32 920167782, %v7152
    %v7168 = vshrl.u32 1326507024, %v7153
    %v7169 = vor.u32 %v7167, %v7168
    %vm7170 = vcmp.lt.s32.totalorder %v7151, 1
    %vm7171 = vcmp.lt.s32.totalorder %v7151, 2
    %vm7172 = vcmp.lt.s32.totalorder %v7151, 3
    %vm7173 = vcmp.lt.s32.totalorder %v7151, 4
    %v7174 = vsel %vm7170, %v7154, %v7157
    %v7175 = vsel %vm7173, %v7163, 2102212464
    %v7176 = vsel %vm7172, %v7160, %v7175
    %v7177 = vsel %vm7171, %v7174, %v7176
    %v7178 = vsel %vm7170, %v7157, %v7160
    %v7179 = vsel %vm7173, %v7166, 920167782
    %v7180 = vsel %vm7172, %v7163, %v7179
    %v7181 = vsel %vm7171, %v7178, %v7180
    %v7182 = vsel %vm7170, %v7160, %v7163
    %v7183 = vsel %vm7173, %v7169, 1326507024
    %v7184 = vsel %vm7172, %v7166, %v7183
    %v7185 = vsel %vm7171, %v7182, %v7184
    %v7186 = vshll.u32 %v7146, 8
    %v7187 = vmul.u32.u64.compose %v7186, %v7185
    %v7188 = vextract.low.u32 %v7187
    %v7189 = vextract.high.u32 %v7187
    %v7190 = vmul.u32.u64.compose %v7186, %v7181
    %v7191 = vextract.low.u32 %v7190
    %v7192 = vextract.high.u32 %v7190
    %v7193 = vmul.u32 %v7186, %v7177
    %v7194 = vadd.s32 %v7189, %v7191
    %vm7195 = vc.u32 %v7189, %v7191
    %v7196 = vadd.s32 %v7192, 1
    %v7197 = vsel %vm7195, %v7196, %v7192
    %v7198 = vadd.s32 %v7193, %v7197
    %v7199 = vadd.s32 %v7198, 536870912
    %v7200 = vshrl.u32 %v7199, 30
    %v7201 = vshll.u32 %v7200, 30
    %v7202 = vsub.s32 %v7198, %v7201
    %vm7203 = vcmp.lt.s32.totalorder %v7202, 0
    %v7204 = vsub.s32 0, %v7202
    %v7205 = vsel %vm7203, %v7204, %v7202
    %v7206 = vclz %v7205
    %v7207 = vsub.s32 %v7206, 2
    %vm7208 = vcmp.gt.s32.totalorder 0, %v7207
    %v7209 = vsel %vm7208, 0, %v7207
    %v7210 = vsub.s32 32, %v7209
    %v7211 = vshll.u32 %v7202, %v7209
    %v7212 = vshrl.u32 %v7194, %v7210
    %v7213 = vor.u32 %v7211, %v7212
    %v7214 = vsub.s32 4294967266, %v7209
    %v7215 = vadd.s32 %v7214, 127
    %v7216 = vshll.u32 %v7215, 23
    %v7217 = vor.u32 4788187, %v7216
    %v7218 = vand.u32 2147483647, %v7217
    %v7220 = vcvt.s32.f32 %v7213
    %v7221 = vmul.f32 %v7220, %v7218
    %v7222 = vxor.u32 %v7221, 2147483648
    %v7223 = vsel %vm7140, %v7222, %v7221
    %v7224 = vsub.s32 4, %v7200
    %v7225 = vsel %vm7140, %v7224, %v7200
    %v7226 = vsel %vm7139, %v5785, %v7223
    %v7227 = vsel %vm7139, 0, %v7225
    %v7228 = vcosq.f32.pop %v7226
    %v7229 = vsinq.f32.pop %v7226
    %vm7230 = vweird.f32 %v5785
    %v7231 = vadd.s32 %v7227, 3
    %v7232 = vand.u32 %v7231, 3
    %vm7233 = vcmp.lt.s32.totalorder %v7232, 2
    %vm7234 = vcmp.eq.s32.totalorder %v7232, 0
    %v7235 = vxor.u32 %v7229, 2147483648
    %v7236 = vsel %vm7234, %v7228, %v7235
    %vm7237 = vcmp.eq.s32.totalorder %v7232, 2
    %v7238 = vxor.u32 %v7228, 2147483648
    %v7239 = vsel %vm7237, %v7238, %v7229
    %v7240 = vsel %vm7233, %v7236, %v7239
    %v7241 = vsel %vm7230, nan, %v7240
    %s7242 = scalar_lea.vmem %s3, 168
    %v7243 = vld [vmem:[%s7242] sm:$0xff]
    %v7244 = vld [vmem:[%s7242 + $0x8] sm:$0xff]
    %v7245 = vld [vmem:[%s7242 + $0x10] sm:$0xff]
    %v7246 = vld [vmem:[%s7242 + $0x18] sm:$0xff]
    %v7247 = vld [vmem:[%s7242 + $0x20] sm:$0xff]
    %v7248 = vld [vmem:[%s7242 + $0x28] sm:$0xff]
    %v7249 = vld [vmem:[%s7242 + $0x30] sm:$0x3]
    %s7250 = scalar_lea.vmem %s4, 168
    %v7251 = vld [vmem:[%s7250] sm:$0xff]
    %v7252 = vld [vmem:[%s7250 + $0x8] sm:$0xff]
    %v7253 = vld [vmem:[%s7250 + $0x10] sm:$0xff]
    %v7254 = vld [vmem:[%s7250 + $0x18] sm:$0xff]
    %v7255 = vld [vmem:[%s7250 + $0x20] sm:$0xff]
    %v7256 = vld [vmem:[%s7250 + $0x28] sm:$0xff]
    %v7257 = vld [vmem:[%s7250 + $0x30] sm:$0x3]
    %v7258 = vpack.c.bf16 %v7244, %v7243
    %v7259 = vpack.c.bf16 %v7246, %v7245
    %v7260 = vpack.c.bf16 %v7248, %v7247
    %v7261 = vpack.c.bf16 %v7249, %v7249
    %v7262 = vunpack.c.l.bf16 %v7258
    %v7263 = vunpack.c.h.bf16 %v7258
    %v7264 = vunpack.c.l.bf16 %v7259
    %v7265 = vunpack.c.h.bf16 %v7259
    %v7266 = vunpack.c.l.bf16 %v7260
    %v7267 = vunpack.c.h.bf16 %v7260
    %v7268 = vunpack.c.l.bf16 %v7261
    %v7269 = vsub.f32 %v7243, %v7262
    %v7270 = vsub.f32 %v7244, %v7263
    %v7271 = vsub.f32 %v7245, %v7264
    %v7272 = vsub.f32 %v7246, %v7265
    %v7273 = vsub.f32 %v7247, %v7266
    %v7274 = vsub.f32 %v7248, %v7267
    %v7275 = vsub.f32 %v7249, %v7268
    %v7276 = vpack.c.bf16 %v7270, %v7269
    %v7277 = vpack.c.bf16 %v7272, %v7271
    %v7278 = vpack.c.bf16 %v7274, %v7273
    %v7279 = vpack.c.bf16 %v7275, %v7275
    %v7280 = vpack.c.bf16 %v6097, %v5889
    %v7281 = vpack.c.bf16 %v6201, %v5993
    %v7282 = vpack.c.bf16 %v6513, %v6305
    %v7283 = vpack.c.bf16 %v6617, %v6409
    %v7284 = vpack.c.bf16 %v6929, %v6721
    %v7285 = vpack.c.bf16 %v7033, %v6825
    %v7286 = vpack.c.bf16 %v7137, %v7137
    %v7287 = vpack.c.bf16 %v7241, %v7241
    %v7288 = vunpack.c.l.bf16 %v7280
    %v7289 = vunpack.c.l.bf16 %v7281
    %v7290 = vunpack.c.h.bf16 %v7280
    %v7291 = vunpack.c.h.bf16 %v7281
    %v7292 = vunpack.c.l.bf16 %v7282
    %v7293 = vunpack.c.l.bf16 %v7283
    %v7294 = vunpack.c.h.bf16 %v7282
    %v7295 = vunpack.c.h.bf16 %v7283
    %v7296 = vunpack.c.l.bf16 %v7284
    %v7297 = vunpack.c.l.bf16 %v7285
    %v7298 = vunpack.c.h.bf16 %v7284
    %v7299 = vunpack.c.h.bf16 %v7285
    %v7300 = vunpack.c.l.bf16 %v7286
    %v7301 = vunpack.c.l.bf16 %v7287
    %v7302 = vsub.f32 %v5889, %v7288
    %v7303 = vsub.f32 %v5993, %v7289
    %v7304 = vsub.f32 %v6097, %v7290
    %v7305 = vsub.f32 %v6201, %v7291
    %v7306 = vsub.f32 %v6305, %v7292
    %v7307 = vsub.f32 %v6409, %v7293
    %v7308 = vsub.f32 %v6513, %v7294
    %v7309 = vsub.f32 %v6617, %v7295
    %v7310 = vsub.f32 %v6721, %v7296
    %v7311 = vsub.f32 %v6825, %v7297
    %v7312 = vsub.f32 %v6929, %v7298
    %v7313 = vsub.f32 %v7033, %v7299
    %v7314 = vsub.f32 %v7137, %v7300
    %v7315 = vsub.f32 %v7241, %v7301
    %v7316 = vpack.c.bf16 %v7304, %v7302
    %v7317 = vpack.c.bf16 %v7305, %v7303
    %v7318 = vpack.c.bf16 %v7308, %v7306
    %v7319 = vpack.c.bf16 %v7309, %v7307
    %v7320 = vpack.c.bf16 %v7312, %v7310
    %v7321 = vpack.c.bf16 %v7313, %v7311
    %v7322 = vpack.c.bf16 %v7314, %v7314
    %v7323 = vpack.c.bf16 %v7315, %v7315
    %v7325 = vsel %vm1772, %v7258, 0
    %v7328 = vsel %vm1772, %v7259, 0
    %v7331 = vsel %vm1772, %v7260, 0
    %v7334 = vsel %vm1772, %v7261, 0
    %v7337 = vsel %vm1785, %v7322, 0
    %v7340 = vsel %vm1785, %v7323, 0
    %7342 = vmatprep.subr.bf16.mxu0 %v7317
    %7343 = vmatpush1.bf16.msra.mxu0 %v7316
    %7344 = vmatprep.subr.bf16.mxu0 %v7319
    %7345 = vmatpush1.bf16.msra.mxu0 %v7318
    %7346 = vmatprep.subr.bf16.mxu0 %v7321
    %7347 = vmatpush1.bf16.msra.mxu0 %v7320
    %7348 = vmatprep.subr.bf16.mxu0 %v7340
    %7349 = vmatpush1.bf16.msra.mxu0 %v7337
    %7350 = vmatprep.subr.bf16.mxu0 0
    %7351 = vmatpush1.bf16.msra.mxu0 0
    %7352 = vmatprep.subr.bf16.mxu0 0
    %7353 = vmatpush1.bf16.msra.mxu0 0
    %7354 = vmatprep.subr.bf16.mxu0 0
    %7355 = vmatpush1.bf16.msra.mxu0 0
    %7356 = vmatprep.subr.bf16.mxu0 0
    %7357 = vmatpush1.bf16.msra.mxu0 0
    %7358 = vmatprep.subr.bf16.mxu0 0
    %7359 = vmatpush1.bf16.msra.mxu0 0
    %7360 = vmatprep.subr.bf16.mxu0 0
    %7361 = vmatpush1.bf16.msra.mxu0 0
    %7362 = vmatprep.subr.bf16.mxu0 0
    %7363 = vmatpush1.bf16.msra.mxu0 0
    %7364 = vmatprep.subr.bf16.mxu0 0
    %7365 = vmatpush1.bf16.msra.mxu0 0
    %7366 = vmatprep.subr.bf16.mxu0 0
    %7367 = vmatpush1.bf16.msra.mxu0 0
    %7368 = vmatprep.subr.bf16.mxu0 0
    %7369 = vmatpush1.bf16.msra.mxu0 0
    %7370 = vmatprep.subr.bf16.mxu0 0
    %7371 = vmatpush1.bf16.msra.mxu0 0
    %7372 = vmatprep.subr.bf16.mxu0 0
    %7373 = vmatpush1.bf16.msra.mxu0 0
    %7374 = vmatprep.mubr.bf16.mxu0 0
    %7375 = vmatmul.mubr.bf16.gmra.mrb[0].mxu0 %v7325
    %v7376 = vpop.f32.mrb[0].mxu0
    %v7377 = vadd.f32 0.0, %v7376
    %v7378 = vpop.f32.mrb[0].mxu0
    %v7379 = vadd.f32 0.0, %v7378
    %v7380 = vpop.f32.mrb[0].mxu0
    %v7381 = vadd.f32 0.0, %v7380
    %v7382 = vpop.f32.mrb[0].mxu0
    %v7383 = vadd.f32 0.0, %v7382
    %7384 = vmatprep.mubr.bf16.mxu0 0
    %7385 = vmatmul.mubr.bf16.gmra.mrb[0].mxu0 %v7328
    %v7386 = vpop.f32.mrb[0].mxu0
    %v7387 = vadd.f32 0.0, %v7386
    %v7388 = vpop.f32.mrb[0].mxu0
    %v7389 = vadd.f32 0.0, %v7388
    %v7390 = vpop.f32.mrb[0].mxu0
    %v7391 = vadd.f32 0.0, %v7390
    %v7392 = vpop.f32.mrb[0].mxu0
    %v7393 = vadd.f32 0.0, %v7392
    %7394 = vmatprep.mubr.bf16.mxu0 0
    %7395 = vmatmul.mubr.bf16.gmra.mrb[0].mxu0 %v7331
    %v7396 = vpop.f32.mrb[0].mxu0
    %v7397 = vadd.f32 0.0, %v7396
    %v7398 = vpop.f32.mrb[0].mxu0
    %v7399 = vadd.f32 0.0, %v7398
    %v7400 = vpop.f32.mrb[0].mxu0
    %v7401 = vadd.f32 0.0, %v7400
    %v7402 = vpop.f32.mrb[0].mxu0
    %v7403 = vadd.f32 0.0, %v7402
    %7404 = vmatprep.mubr.bf16.mxu0 0
    %7405 = vmatmul.mubr.bf16.gmra.mrb[0].mxu0 %v7334
    %v7406 = vpop.f32.mrb[0].mxu0
    %v7407 = vadd.f32 0.0, %v7406
    %v7408 = vpop.f32.mrb[0].mxu0
    %v7409 = vadd.f32 0.0, %v7408
    %v7410 = vpop.f32.mrb[0].mxu0
    %v7411 = vpop.f32.mrb[0].mxu0
    %7412 = vdwg.mxu0
    %v7414 = vsel %vm1785, %v7286, 0
    %v7417 = vsel %vm1785, %v7287, 0
    %7419 = vmatprep.subr.bf16.mxu0 %v7281
    %7420 = vmatpush1.bf16.msra.mxu0 %v7280
    %7421 = vmatprep.subr.bf16.mxu0 %v7283
    %7422 = vmatpush1.bf16.msra.mxu0 %v7282
    %7423 = vmatprep.subr.bf16.mxu0 %v7285
    %7424 = vmatpush1.bf16.msra.mxu0 %v7284
    %7425 = vmatprep.subr.bf16.mxu0 %v7417
    %7426 = vmatpush1.bf16.msra.mxu0 %v7414
    %7427 = vmatprep.subr.bf16.mxu0 0
    %7428 = vmatpush1.bf16.msra.mxu0 0
    %7429 = vmatprep.subr.bf16.mxu0 0
    %7430 = vmatpush1.bf16.msra.mxu0 0
    %7431 = vmatprep.subr.bf16.mxu0 0
    %7432 = vmatpush1.bf16.msra.mxu0 0
    %7433 = vmatprep.subr.bf16.mxu0 0
    %7434 = vmatpush1.bf16.msra.mxu0 0
    %7435 = vmatprep.subr.bf16.mxu0 0
    %7436 = vmatpush1.bf16.msra.mxu0 0
    %7437 = vmatprep.subr.bf16.mxu0 0
    %7438 = vmatpush1.bf16.msra.mxu0 0
    %7439 = vmatprep.subr.bf16.mxu0 0
    %7440 = vmatpush1.bf16.msra.mxu0 0
    %7441 = vmatprep.subr.bf16.mxu0 0
    %7442 = vmatpush1.bf16.msra.mxu0 0
    %7443 = vmatprep.subr.bf16.mxu0 0
    %7444 = vmatpush1.bf16.msra.mxu0 0
    %7445 = vmatprep.subr.bf16.mxu0 0
    %7446 = vmatpush1.bf16.msra.mxu0 0
    %7447 = vmatprep.subr.bf16.mxu0 0
    %7448 = vmatpush1.bf16.msra.mxu0 0
    %7449 = vmatprep.subr.bf16.mxu0 0
    %7450 = vmatpush1.bf16.msra.mxu0 0
    %7451 = vmatprep.mubr.bf16.mxu0 0
    %7452 = vmatmul.mubr.bf16.gmra.mrb[0].mxu0 %v7325
    %v7453 = vpop.f32.mrb[0].mxu0
    %v7454 = vadd.f32 %v7377, %v7453
    %v7455 = vpop.f32.mrb[0].mxu0
    %v7456 = vadd.f32 %v7379, %v7455
    %v7457 = vpop.f32.mrb[0].mxu0
    %v7458 = vadd.f32 %v7381, %v7457
    %v7459 = vpop.f32.mrb[0].mxu0
    %v7460 = vadd.f32 %v7383, %v7459
    %7461 = vmatprep.mubr.bf16.mxu0 0
    %7462 = vmatmul.mubr.bf16.gmra.mrb[0].mxu0 %v7328
    %v7463 = vpop.f32.mrb[0].mxu0
    %v7464 = vadd.f32 %v7387, %v7463
    %v7465 = vpop.f32.mrb[0].mxu0
    %v7466 = vadd.f32 %v7389, %v7465
    %v7467 = vpop.f32.mrb[0].mxu0
    %v7468 = vadd.f32 %v7391, %v7467
    %v7469 = vpop.f32.mrb[0].mxu0
    %v7470 = vadd.f32 %v7393, %v7469
    %7471 = vmatprep.mubr.bf16.mxu0 0
    %7472 = vmatmul.mubr.bf16.gmra.mrb[0].mxu0 %v7331
    %v7473 = vpop.f32.mrb[0].mxu0
    %v7474 = vadd.f32 %v7397, %v7473
    %v7475 = vpop.f32.mrb[0].mxu0
    %v7476 = vadd.f32 %v7399, %v7475
    %v7477 = vpop.f32.mrb[0].mxu0
    %v7478 = vadd.f32 %v7401, %v7477
    %v7479 = vpop.f32.mrb[0].mxu0
    %v7480 = vadd.f32 %v7403, %v7479
    %7481 = vmatprep.mubr.bf16.mxu0 0
    %7482 = vmatmul.mubr.bf16.gmra.mrb[0].mxu0 %v7334
    %v7483 = vpop.f32.mrb[0].mxu0
    %v7484 = vadd.f32 %v7407, %v7483
    %v7485 = vpop.f32.mrb[0].mxu0
    %v7486 = vadd.f32 %v7409, %v7485
    %v7487 = vpop.f32.mrb[0].mxu0
    %v7488 = vpop.f32.mrb[0].mxu0
    %7489 = vdwg.mxu0
    %v7491 = vsel %vm1772, %v7276, 0
    %v7494 = vsel %vm1772, %v7277, 0
    %v7497 = vsel %vm1772, %v7278, 0
    %v7500 = vsel %vm1772, %v7279, 0
    %7502 = vmatprep.subr.bf16.mxu0 %v7281
    %7503 = vmatpush1.bf16.msra.mxu0 %v7280
    %7504 = vmatprep.subr.bf16.mxu0 %v7283
    %7505 = vmatpush1.bf16.msra.mxu0 %v7282
    %7506 = vmatprep.subr.bf16.mxu0 %v7285
    %7507 = vmatpush1.bf16.msra.mxu0 %v7284
    %7508 = vmatprep.subr.bf16.mxu0 %v7417
    %7509 = vmatpush1.bf16.msra.mxu0 %v7414
    %7510 = vmatprep.subr.bf16.mxu0 0
    %7511 = vmatpush1.bf16.msra.mxu0 0
    %7512 = vmatprep.subr.bf16.mxu0 0
    %7513 = vmatpush1.bf16.msra.mxu0 0
    %7514 = vmatprep.subr.bf16.mxu0 0
    %7515 = vmatpush1.bf16.msra.mxu0 0
    %7516 = vmatprep.subr.bf16.mxu0 0
    %7517 = vmatpush1.bf16.msra.mxu0 0
    %7518 = vmatprep.subr.bf16.mxu0 0
    %7519 = vmatpush1.bf16.msra.mxu0 0
    %7520 = vmatprep.subr.bf16.mxu0 0
    %7521 = vmatpush1.bf16.msra.mxu0 0
    %7522 = vmatprep.subr.bf16.mxu0 0
    %7523 = vmatpush1.bf16.msra.mxu0 0
    %7524 = vmatprep.subr.bf16.mxu0 0
    %7525 = vmatpush1.bf16.msra.mxu0 0
    %7526 = vmatprep.subr.bf16.mxu0 0
    %7527 = vmatpush1.bf16.msra.mxu0 0
    %7528 = vmatprep.subr.bf16.mxu0 0
    %7529 = vmatpush1.bf16.msra.mxu0 0
    %7530 = vmatprep.subr.bf16.mxu0 0
    %7531 = vmatpush1.bf16.msra.mxu0 0
    %7532 = vmatprep.subr.bf16.mxu0 0
    %7533 = vmatpush1.bf16.msra.mxu0 0
    %7534 = vmatprep.mubr.bf16.mxu0 0
    %7535 = vmatmul.mubr.bf16.gmra.mrb[0].mxu0 %v7491
    %v7536 = vpop.f32.mrb[0].mxu0
    %v7537 = vadd.f32 0.0, %v7536
    %v7538 = vpop.f32.mrb[0].mxu0
    %v7539 = vadd.f32 0.0, %v7538
    %v7540 = vpop.f32.mrb[0].mxu0
    %v7541 = vadd.f32 0.0, %v7540
    %v7542 = vpop.f32.mrb[0].mxu0
    %v7543 = vadd.f32 0.0, %v7542
    %7544 = vmatprep.mubr.bf16.mxu0 0
    %7545 = vmatmul.mubr.bf16.gmra.mrb[0].mxu0 %v7494
    %v7546 = vpop.f32.mrb[0].mxu0
    %v7547 = vadd.f32 0.0, %v7546
    %v7548 = vpop.f32.mrb[0].mxu0
    %v7549 = vadd.f32 0.0, %v7548
    %v7550 = vpop.f32.mrb[0].mxu0
    %v7551 = vadd.f32 0.0, %v7550
    %v7552 = vpop.f32.mrb[0].mxu0
    %v7553 = vadd.f32 0.0, %v7552
    %7554 = vmatprep.mubr.bf16.mxu0 0
    %7555 = vmatmul.mubr.bf16.gmra.mrb[0].mxu0 %v7497
    %v7556 = vpop.f32.mrb[0].mxu0
    %v7557 = vadd.f32 0.0, %v7556
    %v7558 = vpop.f32.mrb[0].mxu0
    %v7559 = vadd.f32 0.0, %v7558
    %v7560 = vpop.f32.mrb[0].mxu0
    %v7561 = vadd.f32 0.0, %v7560
    %v7562 = vpop.f32.mrb[0].mxu0
    %v7563 = vadd.f32 0.0, %v7562
    %7564 = vmatprep.mubr.bf16.mxu0 0
    %7565 = vmatmul.mubr.bf16.gmra.mrb[0].mxu0 %v7500
    %v7566 = vpop.f32.mrb[0].mxu0
    %v7567 = vadd.f32 0.0, %v7566
    %v7568 = vpop.f32.mrb[0].mxu0
    %v7569 = vadd.f32 0.0, %v7568
    %v7570 = vpop.f32.mrb[0].mxu0
    %v7571 = vpop.f32.mrb[0].mxu0
    %7572 = vdwg.mxu0
    %v7573 = vadd.f32 %v7454, %v7537
    %v7574 = vadd.f32 %v7456, %v7539
    %v7575 = vadd.f32 %v7458, %v7541
    %v7576 = vadd.f32 %v7460, %v7543
    %v7577 = vadd.f32 %v7464, %v7547
    %v7578 = vadd.f32 %v7466, %v7549
    %v7579 = vadd.f32 %v7468, %v7551
    %v7580 = vadd.f32 %v7470, %v7553
    %v7581 = vadd.f32 %v7474, %v7557
    %v7582 = vadd.f32 %v7476, %v7559
    %v7583 = vadd.f32 %v7478, %v7561
    %v7584 = vadd.f32 %v7480, %v7563
    %v7585 = vadd.f32 %v7484, %v7567
    %v7586 = vadd.f32 %v7486, %v7569
    %7588 = vset.pattern.permute.xlu0 0
    %7589 = vperm.xlu0 %7588, %v7251
    %v7590 = vpop.permute.xlu0 %7589
    %7593 = vset.pattern.permute.xlu0 0
    %7594 = vperm.xlu0 %7593, %v7252
    %v7595 = vpop.permute.xlu0 %7594
    %7598 = vset.pattern.permute.xlu0 0
    %7599 = vperm.xlu0 %7598, %v7253
    %v7600 = vpop.permute.xlu0 %7599
    %7603 = vset.pattern.permute.xlu0 0
    %7604 = vperm.xlu0 %7603, %v7254
    %v7605 = vpop.permute.xlu0 %7604
    %7608 = vset.pattern.permute.xlu0 0
    %7609 = vperm.xlu0 %7608, %v7255
    %v7610 = vpop.permute.xlu0 %7609
    %7613 = vset.pattern.permute.xlu0 0
    %7614 = vperm.xlu0 %7613, %v7256
    %v7615 = vpop.permute.xlu0 %7614
    %7618 = vset.pattern.permute.xlu0 0
    %7619 = vperm.xlu0 %7618, %v7257
    %v7620 = vpop.permute.xlu0 %7619
    %v7622 = vadd.f32 %v7573, %v7590
    %v7623 = vadd.f32 %v7574, %v7590
    %v7624 = vadd.f32 %v7575, %v7595
    %v7625 = vadd.f32 %v7576, %v7595
    %v7626 = vadd.f32 %v7577, %v7600
    %v7627 = vadd.f32 %v7578, %v7600
    %v7628 = vadd.f32 %v7579, %v7605
    %v7629 = vadd.f32 %v7580, %v7605
    %v7630 = vadd.f32 %v7581, %v7610
    %v7631 = vadd.f32 %v7582, %v7610
    %v7632 = vadd.f32 %v7583, %v7615
    %v7633 = vadd.f32 %v7584, %v7615
    %v7634 = vadd.f32 %v7585, %v7620
    %v7635 = vadd.f32 %v7586, %v7620
    %v7636 = vand.u32 2147483647, %v7622
    %vm7637 = vcmp.le.f32.partialorder %v7636, 0.7853982
    %vm7638 = vcmp.lt.s32.totalorder %v7622, 0
    %v7639 = vand.u32 %v7622, 2139095040
    %v7640 = vshrl.u32 %v7639, 23
    %v7641 = vsub.s32 %v7640, 127
    %v7642 = vand.u32 2147483647, %v7622
    %v7643 = vand.u32 %v7642, 8388607
    %v7644 = vor.u32 %v7643, 8388608
    %v7645 = vsub.s32 0, %v7644
    %v7646 = vadd.s32 %v7641, 1
    %vm7647 = vcmp.gt.s32.totalorder %v7646, 0
    %v7648 = vsel %vm7647, %v7646, 0
    %v7649 = vshrl.u32 %v7648, 5
    %v7650 = vand.u32 %v7648, 31
    %v7651 = vsub.s32 32, %v7650
    %v7652 = vshrl.u32 683565275, %v7651
    %v7653 = vshll.u32 683565275, %v7650
    %v7654 = vshrl.u32 2475754826, %v7651
    %v7655 = vor.u32 %v7653, %v7654
    %v7656 = vshll.u32 2475754826, %v7650
    %v7657 = vshrl.u32 2131351028, %v7651
    %v7658 = vor.u32 %v7656, %v7657
    %v7659 = vshll.u32 2131351028, %v7650
    %v7660 = vshrl.u32 2102212464, %v7651
    %v7661 = vor.u32 %v7659, %v7660
    %v7662 = vshll.u32 2102212464, %v7650
    %v7663 = vshrl.u32 920167782, %v7651
    %v7664 = vor.u32 %v7662, %v7663
    %v7665 = vshll.u32 920167782, %v7650
    %v7666 = vshrl.u32 1326507024, %v7651
    %v7667 = vor.u32 %v7665, %v7666
    %vm7668 = vcmp.lt.s32.totalorder %v7649, 1
    %vm7669 = vcmp.lt.s32.totalorder %v7649, 2
    %vm7670 = vcmp.lt.s32.totalorder %v7649, 3
    %vm7671 = vcmp.lt.s32.totalorder %v7649, 4
    %v7672 = vsel %vm7668, %v7652, %v7655
    %v7673 = vsel %vm7671, %v7661, 2102212464
    %v7674 = vsel %vm7670, %v7658, %v7673
    %v7675 = vsel %vm7669, %v7672, %v7674
    %v7676 = vsel %vm7668, %v7655, %v7658
    %v7677 = vsel %vm7671, %v7664, 920167782
    %v7678 = vsel %vm7670, %v7661, %v7677
    %v7679 = vsel %vm7669, %v7676, %v7678
    %v7680 = vsel %vm7668, %v7658, %v7661
    %v7681 = vsel %vm7671, %v7667, 1326507024
    %v7682 = vsel %vm7670, %v7664, %v7681
    %v7683 = vsel %vm7669, %v7680, %v7682
    %v7684 = vshll.u32 %v7644, 8
    %v7685 = vmul.u32.u64.compose %v7684, %v7683
    %v7686 = vextract.low.u32 %v7685
    %v7687 = vextract.high.u32 %v7685
    %v7688 = vmul.u32.u64.compose %v7684, %v7679
    %v7689 = vextract.low.u32 %v7688
    %v7690 = vextract.high.u32 %v7688
    %v7691 = vmul.u32 %v7684, %v7675
    %v7692 = vadd.s32 %v7687, %v7689
    %vm7693 = vc.u32 %v7687, %v7689
    %v7694 = vadd.s32 %v7690, 1
    %v7695 = vsel %vm7693, %v7694, %v7690
    %v7696 = vadd.s32 %v7691, %v7695
    %v7697 = vadd.s32 %v7696, 536870912
    %v7698 = vshrl.u32 %v7697, 30
    %v7699 = vshll.u32 %v7698, 30
    %v7700 = vsub.s32 %v7696, %v7699
    %vm7701 = vcmp.lt.s32.totalorder %v7700, 0
    %v7702 = vsub.s32 0, %v7700
    %v7703 = vsel %vm7701, %v7702, %v7700
    %v7704 = vclz %v7703
    %v7705 = vsub.s32 %v7704, 2
    %vm7706 = vcmp.gt.s32.totalorder 0, %v7705
    %v7707 = vsel %vm7706, 0, %v7705
    %v7708 = vsub.s32 32, %v7707
    %v7709 = vshll.u32 %v7700, %v7707
    %v7710 = vshrl.u32 %v7692, %v7708
    %v7711 = vor.u32 %v7709, %v7710
    %v7712 = vsub.s32 4294967266, %v7707
    %v7713 = vadd.s32 %v7712, 127
    %v7714 = vshll.u32 %v7713, 23
    %v7715 = vor.u32 4788187, %v7714
    %v7716 = vand.u32 2147483647, %v7715
    %v7718 = vcvt.s32.f32 %v7711
    %v7719 = vmul.f32 %v7718, %v7716
    %v7720 = vxor.u32 %v7719, 2147483648
    %v7721 = vsel %vm7638, %v7720, %v7719
    %v7722 = vsub.s32 4, %v7698
    %v7723 = vsel %vm7638, %v7722, %v7698
    %v7724 = vsel %vm7637, %v7622, %v7721
    %v7725 = vsel %vm7637, 0, %v7723
    %v7726 = vcosq.f32.pop %v7724
    %v7727 = vsinq.f32.pop %v7724
    %vm7728 = vweird.f32 %v7622
    %v7729 = vadd.s32 %v7725, 3
    %v7730 = vand.u32 %v7729, 3
    %vm7731 = vcmp.lt.s32.totalorder %v7730, 2
    %vm7732 = vcmp.eq.s32.totalorder %v7730, 0
    %v7733 = vxor.u32 %v7727, 2147483648
    %v7734 = vsel %vm7732, %v7726, %v7733
    %vm7735 = vcmp.eq.s32.totalorder %v7730, 2
    %v7736 = vxor.u32 %v7726, 2147483648
    %v7737 = vsel %vm7735, %v7736, %v7727
    %v7738 = vsel %vm7731, %v7734, %v7737
    %v7739 = vsel %vm7728, nan, %v7738
    %v7740 = vand.u32 2147483647, %v7623
    %vm7741 = vcmp.le.f32.partialorder %v7740, 0.7853982
    %vm7742 = vcmp.lt.s32.totalorder %v7623, 0
    %v7743 = vand.u32 %v7623, 2139095040
    %v7744 = vshrl.u32 %v7743, 23
    %v7745 = vsub.s32 %v7744, 127
    %v7746 = vand.u32 2147483647, %v7623
    %v7747 = vand.u32 %v7746, 8388607
    %v7748 = vor.u32 %v7747, 8388608
    %v7749 = vsub.s32 0, %v7748
    %v7750 = vadd.s32 %v7745, 1
    %vm7751 = vcmp.gt.s32.totalorder %v7750, 0
    %v7752 = vsel %vm7751, %v7750, 0
    %v7753 = vshrl.u32 %v7752, 5
    %v7754 = vand.u32 %v7752, 31
    %v7755 = vsub.s32 32, %v7754
    %v7756 = vshrl.u32 683565275, %v7755
    %v7757 = vshll.u32 683565275, %v7754
    %v7758 = vshrl.u32 2475754826, %v7755
    %v7759 = vor.u32 %v7757, %v7758
    %v7760 = vshll.u32 2475754826, %v7754
    %v7761 = vshrl.u32 2131351028, %v7755
    %v7762 = vor.u32 %v7760, %v7761
    %v7763 = vshll.u32 2131351028, %v7754
    %v7764 = vshrl.u32 2102212464, %v7755
    %v7765 = vor.u32 %v7763, %v7764
    %v7766 = vshll.u32 2102212464, %v7754
    %v7767 = vshrl.u32 920167782, %v7755
    %v7768 = vor.u32 %v7766, %v7767
    %v7769 = vshll.u32 920167782, %v7754
    %v7770 = vshrl.u32 1326507024, %v7755
    %v7771 = vor.u32 %v7769, %v7770
    %vm7772 = vcmp.lt.s32.totalorder %v7753, 1
    %vm7773 = vcmp.lt.s32.totalorder %v7753, 2
    %vm7774 = vcmp.lt.s32.totalorder %v7753, 3
    %vm7775 = vcmp.lt.s32.totalorder %v7753, 4
    %v7776 = vsel %vm7772, %v7756, %v7759
    %v7777 = vsel %vm7775, %v7765, 2102212464
    %v7778 = vsel %vm7774, %v7762, %v7777
    %v7779 = vsel %vm7773, %v7776, %v7778
    %v7780 = vsel %vm7772, %v7759, %v7762
    %v7781 = vsel %vm7775, %v7768, 920167782
    %v7782 = vsel %vm7774, %v7765, %v7781
    %v7783 = vsel %vm7773, %v7780, %v7782
    %v7784 = vsel %vm7772, %v7762, %v7765
    %v7785 = vsel %vm7775, %v7771, 1326507024
    %v7786 = vsel %vm7774, %v7768, %v7785
    %v7787 = vsel %vm7773, %v7784, %v7786
    %v7788 = vshll.u32 %v7748, 8
    %v7789 = vmul.u32.u64.compose %v7788, %v7787
    %v7790 = vextract.low.u32 %v7789
    %v7791 = vextract.high.u32 %v7789
    %v7792 = vmul.u32.u64.compose %v7788, %v7783
    %v7793 = vextract.low.u32 %v7792
    %v7794 = vextract.high.u32 %v7792
    %v7795 = vmul.u32 %v7788, %v7779
    %v7796 = vadd.s32 %v7791, %v7793
    %vm7797 = vc.u32 %v7791, %v7793
    %v7798 = vadd.s32 %v7794, 1
    %v7799 = vsel %vm7797, %v7798, %v7794
    %v7800 = vadd.s32 %v7795, %v7799
    %v7801 = vadd.s32 %v7800, 536870912
    %v7802 = vshrl.u32 %v7801, 30
    %v7803 = vshll.u32 %v7802, 30
    %v7804 = vsub.s32 %v7800, %v7803
    %vm7805 = vcmp.lt.s32.totalorder %v7804, 0
    %v7806 = vsub.s32 0, %v7804
    %v7807 = vsel %vm7805, %v7806, %v7804
    %v7808 = vclz %v7807
    %v7809 = vsub.s32 %v7808, 2
    %vm7810 = vcmp.gt.s32.totalorder 0, %v7809
    %v7811 = vsel %vm7810, 0, %v7809
    %v7812 = vsub.s32 32, %v7811
    %v7813 = vshll.u32 %v7804, %v7811
    %v7814 = vshrl.u32 %v7796, %v7812
    %v7815 = vor.u32 %v7813, %v7814
    %v7816 = vsub.s32 4294967266, %v7811
    %v7817 = vadd.s32 %v7816, 127
    %v7818 = vshll.u32 %v7817, 23
    %v7819 = vor.u32 4788187, %v7818
    %v7820 = vand.u32 2147483647, %v7819
    %v7822 = vcvt.s32.f32 %v7815
    %v7823 = vmul.f32 %v7822, %v7820
    %v7824 = vxor.u32 %v7823, 2147483648
    %v7825 = vsel %vm7742, %v7824, %v7823
    %v7826 = vsub.s32 4, %v7802
    %v7827 = vsel %vm7742, %v7826, %v7802
    %v7828 = vsel %vm7741, %v7623, %v7825
    %v7829 = vsel %vm7741, 0, %v7827
    %v7830 = vcosq.f32.pop %v7828
    %v7831 = vsinq.f32.pop %v7828
    %vm7832 = vweird.f32 %v7623
    %v7833 = vadd.s32 %v7829, 3
    %v7834 = vand.u32 %v7833, 3
    %vm7835 = vcmp.lt.s32.totalorder %v7834, 2
    %vm7836 = vcmp.eq.s32.totalorder %v7834, 0
    %v7837 = vxor.u32 %v7831, 2147483648
    %v7838 = vsel %vm7836, %v7830, %v7837
    %vm7839 = vcmp.eq.s32.totalorder %v7834, 2
    %v7840 = vxor.u32 %v7830, 2147483648
    %v7841 = vsel %vm7839, %v7840, %v7831
    %v7842 = vsel %vm7835, %v7838, %v7841
    %v7843 = vsel %vm7832, nan, %v7842
    %v7844 = vand.u32 2147483647, %v7624
    %vm7845 = vcmp.le.f32.partialorder %v7844, 0.7853982
    %vm7846 = vcmp.lt.s32.totalorder %v7624, 0
    %v7847 = vand.u32 %v7624, 2139095040
    %v7848 = vshrl.u32 %v7847, 23
    %v7849 = vsub.s32 %v7848, 127
    %v7850 = vand.u32 2147483647, %v7624
    %v7851 = vand.u32 %v7850, 8388607
    %v7852 = vor.u32 %v7851, 8388608
    %v7853 = vsub.s32 0, %v7852
    %v7854 = vadd.s32 %v7849, 1
    %vm7855 = vcmp.gt.s32.totalorder %v7854, 0
    %v7856 = vsel %vm7855, %v7854, 0
    %v7857 = vshrl.u32 %v7856, 5
    %v7858 = vand.u32 %v7856, 31
    %v7859 = vsub.s32 32, %v7858
    %v7860 = vshrl.u32 683565275, %v7859
    %v7861 = vshll.u32 683565275, %v7858
    %v7862 = vshrl.u32 2475754826, %v7859
    %v7863 = vor.u32 %v7861, %v7862
    %v7864 = vshll.u32 2475754826, %v7858
    %v7865 = vshrl.u32 2131351028, %v7859
    %v7866 = vor.u32 %v7864, %v7865
    %v7867 = vshll.u32 2131351028, %v7858
    %v7868 = vshrl.u32 2102212464, %v7859
    %v7869 = vor.u32 %v7867, %v7868
    %v7870 = vshll.u32 2102212464, %v7858
    %v7871 = vshrl.u32 920167782, %v7859
    %v7872 = vor.u32 %v7870, %v7871
    %v7873 = vshll.u32 920167782, %v7858
    %v7874 = vshrl.u32 1326507024, %v7859
    %v7875 = vor.u32 %v7873, %v7874
    %vm7876 = vcmp.lt.s32.totalorder %v7857, 1
    %vm7877 = vcmp.lt.s32.totalorder %v7857, 2
    %vm7878 = vcmp.lt.s32.totalorder %v7857, 3
    %vm7879 = vcmp.lt.s32.totalorder %v7857, 4
    %v7880 = vsel %vm7876, %v7860, %v7863
    %v7881 = vsel %vm7879, %v7869, 2102212464
    %v7882 = vsel %vm7878, %v7866, %v7881
    %v7883 = vsel %vm7877, %v7880, %v7882
    %v7884 = vsel %vm7876, %v7863, %v7866
    %v7885 = vsel %vm7879, %v7872, 920167782
    %v7886 = vsel %vm7878, %v7869, %v7885
    %v7887 = vsel %vm7877, %v7884, %v7886
    %v7888 = vsel %vm7876, %v7866, %v7869
    %v7889 = vsel %vm7879, %v7875, 1326507024
    %v7890 = vsel %vm7878, %v7872, %v7889
    %v7891 = vsel %vm7877, %v7888, %v7890
    %v7892 = vshll.u32 %v7852, 8
    %v7893 = vmul.u32.u64.compose %v7892, %v7891
    %v7894 = vextract.low.u32 %v7893
    %v7895 = vextract.high.u32 %v7893
    %v7896 = vmul.u32.u64.compose %v7892, %v7887
    %v7897 = vextract.low.u32 %v7896
    %v7898 = vextract.high.u32 %v7896
    %v7899 = vmul.u32 %v7892, %v7883
    %v7900 = vadd.s32 %v7895, %v7897
    %vm7901 = vc.u32 %v7895, %v7897
    %v7902 = vadd.s32 %v7898, 1
    %v7903 = vsel %vm7901, %v7902, %v7898
    %v7904 = vadd.s32 %v7899, %v7903
    %v7905 = vadd.s32 %v7904, 536870912
    %v7906 = vshrl.u32 %v7905, 30
    %v7907 = vshll.u32 %v7906, 30
    %v7908 = vsub.s32 %v7904, %v7907
    %vm7909 = vcmp.lt.s32.totalorder %v7908, 0
    %v7910 = vsub.s32 0, %v7908
    %v7911 = vsel %vm7909, %v7910, %v7908
    %v7912 = vclz %v7911
    %v7913 = vsub.s32 %v7912, 2
    %vm7914 = vcmp.gt.s32.totalorder 0, %v7913
    %v7915 = vsel %vm7914, 0, %v7913
    %v7916 = vsub.s32 32, %v7915
    %v7917 = vshll.u32 %v7908, %v7915
    %v7918 = vshrl.u32 %v7900, %v7916
    %v7919 = vor.u32 %v7917, %v7918
    %v7920 = vsub.s32 4294967266, %v7915
    %v7921 = vadd.s32 %v7920, 127
    %v7922 = vshll.u32 %v7921, 23
    %v7923 = vor.u32 4788187, %v7922
    %v7924 = vand.u32 2147483647, %v7923
    %v7926 = vcvt.s32.f32 %v7919
    %v7927 = vmul.f32 %v7926, %v7924
    %v7928 = vxor.u32 %v7927, 2147483648
    %v7929 = vsel %vm7846, %v7928, %v7927
    %v7930 = vsub.s32 4, %v7906
    %v7931 = vsel %vm7846, %v7930, %v7906
    %v7932 = vsel %vm7845, %v7624, %v7929
    %v7933 = vsel %vm7845, 0, %v7931
    %v7934 = vcosq.f32.pop %v7932
    %v7935 = vsinq.f32.pop %v7932
    %vm7936 = vweird.f32 %v7624
    %v7937 = vadd.s32 %v7933, 3
    %v7938 = vand.u32 %v7937, 3
    %vm7939 = vcmp.lt.s32.totalorder %v7938, 2
    %vm7940 = vcmp.eq.s32.totalorder %v7938, 0
    %v7941 = vxor.u32 %v7935, 2147483648
    %v7942 = vsel %vm7940, %v7934, %v7941
    %vm7943 = vcmp.eq.s32.totalorder %v7938, 2
    %v7944 = vxor.u32 %v7934, 2147483648
    %v7945 = vsel %vm7943, %v7944, %v7935
    %v7946 = vsel %vm7939, %v7942, %v7945
    %v7947 = vsel %vm7936, nan, %v7946
    %v7948 = vand.u32 2147483647, %v7625
    %vm7949 = vcmp.le.f32.partialorder %v7948, 0.7853982
    %vm7950 = vcmp.lt.s32.totalorder %v7625, 0
    %v7951 = vand.u32 %v7625, 2139095040
    %v7952 = vshrl.u32 %v7951, 23
    %v7953 = vsub.s32 %v7952, 127
    %v7954 = vand.u32 2147483647, %v7625
    %v7955 = vand.u32 %v7954, 8388607
    %v7956 = vor.u32 %v7955, 8388608
    %v7957 = vsub.s32 0, %v7956
    %v7958 = vadd.s32 %v7953, 1
    %vm7959 = vcmp.gt.s32.totalorder %v7958, 0
    %v7960 = vsel %vm7959, %v7958, 0
    %v7961 = vshrl.u32 %v7960, 5
    %v7962 = vand.u32 %v7960, 31
    %v7963 = vsub.s32 32, %v7962
    %v7964 = vshrl.u32 683565275, %v7963
    %v7965 = vshll.u32 683565275, %v7962
    %v7966 = vshrl.u32 2475754826, %v7963
    %v7967 = vor.u32 %v7965, %v7966
    %v7968 = vshll.u32 2475754826, %v7962
    %v7969 = vshrl.u32 2131351028, %v7963
    %v7970 = vor.u32 %v7968, %v7969
    %v7971 = vshll.u32 2131351028, %v7962
    %v7972 = vshrl.u32 2102212464, %v7963
    %v7973 = vor.u32 %v7971, %v7972
    %v7974 = vshll.u32 2102212464, %v7962
    %v7975 = vshrl.u32 920167782, %v7963
    %v7976 = vor.u32 %v7974, %v7975
    %v7977 = vshll.u32 920167782, %v7962
    %v7978 = vshrl.u32 1326507024, %v7963
    %v7979 = vor.u32 %v7977, %v7978
    %vm7980 = vcmp.lt.s32.totalorder %v7961, 1
    %vm7981 = vcmp.lt.s32.totalorder %v7961, 2
    %vm7982 = vcmp.lt.s32.totalorder %v7961, 3
    %vm7983 = vcmp.lt.s32.totalorder %v7961, 4
    %v7984 = vsel %vm7980, %v7964, %v7967
    %v7985 = vsel %vm7983, %v7973, 2102212464
    %v7986 = vsel %vm7982, %v7970, %v7985
    %v7987 = vsel %vm7981, %v7984, %v7986
    %v7988 = vsel %vm7980, %v7967, %v7970
    %v7989 = vsel %vm7983, %v7976, 920167782
    %v7990 = vsel %vm7982, %v7973, %v7989
    %v7991 = vsel %vm7981, %v7988, %v7990
    %v7992 = vsel %vm7980, %v7970, %v7973
    %v7993 = vsel %vm7983, %v7979, 1326507024
    %v7994 = vsel %vm7982, %v7976, %v7993
    %v7995 = vsel %vm7981, %v7992, %v7994
    %v7996 = vshll.u32 %v7956, 8
    %v7997 = vmul.u32.u64.compose %v7996, %v7995
    %v7998 = vextract.low.u32 %v7997
    %v7999 = vextract.high.u32 %v7997
    %v8000 = vmul.u32.u64.compose %v7996, %v7991
    %v8001 = vextract.low.u32 %v8000
    %v8002 = vextract.high.u32 %v8000
    %v8003 = vmul.u32 %v7996, %v7987
    %v8004 = vadd.s32 %v7999, %v8001
    %vm8005 = vc.u32 %v7999, %v8001
    %v8006 = vadd.s32 %v8002, 1
    %v8007 = vsel %vm8005, %v8006, %v8002
    %v8008 = vadd.s32 %v8003, %v8007
    %v8009 = vadd.s32 %v8008, 536870912
    %v8010 = vshrl.u32 %v8009, 30
    %v8011 = vshll.u32 %v8010, 30
    %v8012 = vsub.s32 %v8008, %v8011
    %vm8013 = vcmp.lt.s32.totalorder %v8012, 0
    %v8014 = vsub.s32 0, %v8012
    %v8015 = vsel %vm8013, %v8014, %v8012
    %v8016 = vclz %v8015
    %v8017 = vsub.s32 %v8016, 2
    %vm8018 = vcmp.gt.s32.totalorder 0, %v8017
    %v8019 = vsel %vm8018, 0, %v8017
    %v8020 = vsub.s32 32, %v8019
    %v8021 = vshll.u32 %v8012, %v8019
    %v8022 = vshrl.u32 %v8004, %v8020
    %v8023 = vor.u32 %v8021, %v8022
    %v8024 = vsub.s32 4294967266, %v8019
    %v8025 = vadd.s32 %v8024, 127
    %v8026 = vshll.u32 %v8025, 23
    %v8027 = vor.u32 4788187, %v8026
    %v8028 = vand.u32 2147483647, %v8027
    %v8030 = vcvt.s32.f32 %v8023
    %v8031 = vmul.f32 %v8030, %v8028
    %v8032 = vxor.u32 %v8031, 2147483648
    %v8033 = vsel %vm7950, %v8032, %v8031
    %v8034 = vsub.s32 4, %v8010
    %v8035 = vsel %vm7950, %v8034, %v8010
    %v8036 = vsel %vm7949, %v7625, %v8033
    %v8037 = vsel %vm7949, 0, %v8035
    %v8038 = vcosq.f32.pop %v8036
    %v8039 = vsinq.f32.pop %v8036
    %vm8040 = vweird.f32 %v7625
    %v8041 = vadd.s32 %v8037, 3
    %v8042 = vand.u32 %v8041, 3
    %vm8043 = vcmp.lt.s32.totalorder %v8042, 2
    %vm8044 = vcmp.eq.s32.totalorder %v8042, 0
    %v8045 = vxor.u32 %v8039, 2147483648
    %v8046 = vsel %vm8044, %v8038, %v8045
    %vm8047 = vcmp.eq.s32.totalorder %v8042, 2
    %v8048 = vxor.u32 %v8038, 2147483648
    %v8049 = vsel %vm8047, %v8048, %v8039
    %v8050 = vsel %vm8043, %v8046, %v8049
    %v8051 = vsel %vm8040, nan, %v8050
    %v8052 = vand.u32 2147483647, %v7626
    %vm8053 = vcmp.le.f32.partialorder %v8052, 0.7853982
    %vm8054 = vcmp.lt.s32.totalorder %v7626, 0
    %v8055 = vand.u32 %v7626, 2139095040
    %v8056 = vshrl.u32 %v8055, 23
    %v8057 = vsub.s32 %v8056, 127
    %v8058 = vand.u32 2147483647, %v7626
    %v8059 = vand.u32 %v8058, 8388607
    %v8060 = vor.u32 %v8059, 8388608
    %v8061 = vsub.s32 0, %v8060
    %v8062 = vadd.s32 %v8057, 1
    %vm8063 = vcmp.gt.s32.totalorder %v8062, 0
    %v8064 = vsel %vm8063, %v8062, 0
    %v8065 = vshrl.u32 %v8064, 5
    %v8066 = vand.u32 %v8064, 31
    %v8067 = vsub.s32 32, %v8066
    %v8068 = vshrl.u32 683565275, %v8067
    %v8069 = vshll.u32 683565275, %v8066
    %v8070 = vshrl.u32 2475754826, %v8067
    %v8071 = vor.u32 %v8069, %v8070
    %v8072 = vshll.u32 2475754826, %v8066
    %v8073 = vshrl.u32 2131351028, %v8067
    %v8074 = vor.u32 %v8072, %v8073
    %v8075 = vshll.u32 2131351028, %v8066
    %v8076 = vshrl.u32 2102212464, %v8067
    %v8077 = vor.u32 %v8075, %v8076
    %v8078 = vshll.u32 2102212464, %v8066
    %v8079 = vshrl.u32 920167782, %v8067
    %v8080 = vor.u32 %v8078, %v8079
    %v8081 = vshll.u32 920167782, %v8066
    %v8082 = vshrl.u32 1326507024, %v8067
    %v8083 = vor.u32 %v8081, %v8082
    %vm8084 = vcmp.lt.s32.totalorder %v8065, 1
    %vm8085 = vcmp.lt.s32.totalorder %v8065, 2
    %vm8086 = vcmp.lt.s32.totalorder %v8065, 3
    %vm8087 = vcmp.lt.s32.totalorder %v8065, 4
    %v8088 = vsel %vm8084, %v8068, %v8071
    %v8089 = vsel %vm8087, %v8077, 2102212464
    %v8090 = vsel %vm8086, %v8074, %v8089
    %v8091 = vsel %vm8085, %v8088, %v8090
    %v8092 = vsel %vm8084, %v8071, %v8074
    %v8093 = vsel %vm8087, %v8080, 920167782
    %v8094 = vsel %vm8086, %v8077, %v8093
    %v8095 = vsel %vm8085, %v8092, %v8094
    %v8096 = vsel %vm8084, %v8074, %v8077
    %v8097 = vsel %vm8087, %v8083, 1326507024
    %v8098 = vsel %vm8086, %v8080, %v8097
    %v8099 = vsel %vm8085, %v8096, %v8098
    %v8100 = vshll.u32 %v8060, 8
    %v8101 = vmul.u32.u64.compose %v8100, %v8099
    %v8102 = vextract.low.u32 %v8101
    %v8103 = vextract.high.u32 %v8101
    %v8104 = vmul.u32.u64.compose %v8100, %v8095
    %v8105 = vextract.low.u32 %v8104
    %v8106 = vextract.high.u32 %v8104
    %v8107 = vmul.u32 %v8100, %v8091
    %v8108 = vadd.s32 %v8103, %v8105
    %vm8109 = vc.u32 %v8103, %v8105
    %v8110 = vadd.s32 %v8106, 1
    %v8111 = vsel %vm8109, %v8110, %v8106
    %v8112 = vadd.s32 %v8107, %v8111
    %v8113 = vadd.s32 %v8112, 536870912
    %v8114 = vshrl.u32 %v8113, 30
    %v8115 = vshll.u32 %v8114, 30
    %v8116 = vsub.s32 %v8112, %v8115
    %vm8117 = vcmp.lt.s32.totalorder %v8116, 0
    %v8118 = vsub.s32 0, %v8116
    %v8119 = vsel %vm8117, %v8118, %v8116
    %v8120 = vclz %v8119
    %v8121 = vsub.s32 %v8120, 2
    %vm8122 = vcmp.gt.s32.totalorder 0, %v8121
    %v8123 = vsel %vm8122, 0, %v8121
    %v8124 = vsub.s32 32, %v8123
    %v8125 = vshll.u32 %v8116, %v8123
    %v8126 = vshrl.u32 %v8108, %v8124
    %v8127 = vor.u32 %v8125, %v8126
    %v8128 = vsub.s32 4294967266, %v8123
    %v8129 = vadd.s32 %v8128, 127
    %v8130 = vshll.u32 %v8129, 23
    %v8131 = vor.u32 4788187, %v8130
    %v8132 = vand.u32 2147483647, %v8131
    %v8134 = vcvt.s32.f32 %v8127
    %v8135 = vmul.f32 %v8134, %v8132
    %v8136 = vxor.u32 %v8135, 2147483648
    %v8137 = vsel %vm8054, %v8136, %v8135
    %v8138 = vsub.s32 4, %v8114
    %v8139 = vsel %vm8054, %v8138, %v8114
    %v8140 = vsel %vm8053, %v7626, %v8137
    %v8141 = vsel %vm8053, 0, %v8139
    %v8142 = vcosq.f32.pop %v8140
    %v8143 = vsinq.f32.pop %v8140
    %vm8144 = vweird.f32 %v7626
    %v8145 = vadd.s32 %v8141, 3
    %v8146 = vand.u32 %v8145, 3
    %vm8147 = vcmp.lt.s32.totalorder %v8146, 2
    %vm8148 = vcmp.eq.s32.totalorder %v8146, 0
    %v8149 = vxor.u32 %v8143, 2147483648
    %v8150 = vsel %vm8148, %v8142, %v8149
    %vm8151 = vcmp.eq.s32.totalorder %v8146, 2
    %v8152 = vxor.u32 %v8142, 2147483648
    %v8153 = vsel %vm8151, %v8152, %v8143
    %v8154 = vsel %vm8147, %v8150, %v8153
    %v8155 = vsel %vm8144, nan, %v8154
    %v8156 = vand.u32 2147483647, %v7627
    %vm8157 = vcmp.le.f32.partialorder %v8156, 0.7853982
    %vm8158 = vcmp.lt.s32.totalorder %v7627, 0
    %v8159 = vand.u32 %v7627, 2139095040
    %v8160 = vshrl.u32 %v8159, 23
    %v8161 = vsub.s32 %v8160, 127
    %v8162 = vand.u32 2147483647, %v7627
    %v8163 = vand.u32 %v8162, 8388607
    %v8164 = vor.u32 %v8163, 8388608
    %v8165 = vsub.s32 0, %v8164
    %v8166 = vadd.s32 %v8161, 1
    %vm8167 = vcmp.gt.s32.totalorder %v8166, 0
    %v8168 = vsel %vm8167, %v8166, 0
    %v8169 = vshrl.u32 %v8168, 5
    %v8170 = vand.u32 %v8168, 31
    %v8171 = vsub.s32 32, %v8170
    %v8172 = vshrl.u32 683565275, %v8171
    %v8173 = vshll.u32 683565275, %v8170
    %v8174 = vshrl.u32 2475754826, %v8171
    %v8175 = vor.u32 %v8173, %v8174
    %v8176 = vshll.u32 2475754826, %v8170
    %v8177 = vshrl.u32 2131351028, %v8171
    %v8178 = vor.u32 %v8176, %v8177
    %v8179 = vshll.u32 2131351028, %v8170
    %v8180 = vshrl.u32 2102212464, %v8171
    %v8181 = vor.u32 %v8179, %v8180
    %v8182 = vshll.u32 2102212464, %v8170
    %v8183 = vshrl.u32 920167782, %v8171
    %v8184 = vor.u32 %v8182, %v8183
    %v8185 = vshll.u32 920167782, %v8170
    %v8186 = vshrl.u32 1326507024, %v8171
    %v8187 = vor.u32 %v8185, %v8186
    %vm8188 = vcmp.lt.s32.totalorder %v8169, 1
    %vm8189 = vcmp.lt.s32.totalorder %v8169, 2
    %vm8190 = vcmp.lt.s32.totalorder %v8169, 3
    %vm8191 = vcmp.lt.s32.totalorder %v8169, 4
    %v8192 = vsel %vm8188, %v8172, %v8175
    %v8193 = vsel %vm8191, %v8181, 2102212464
    %v8194 = vsel %vm8190, %v8178, %v8193
    %v8195 = vsel %vm8189, %v8192, %v8194
    %v8196 = vsel %vm8188, %v8175, %v8178
    %v8197 = vsel %vm8191, %v8184, 920167782
    %v8198 = vsel %vm8190, %v8181, %v8197
    %v8199 = vsel %vm8189, %v8196, %v8198
    %v8200 = vsel %vm8188, %v8178, %v8181
    %v8201 = vsel %vm8191, %v8187, 1326507024
    %v8202 = vsel %vm8190, %v8184, %v8201
    %v8203 = vsel %vm8189, %v8200, %v8202
    %v8204 = vshll.u32 %v8164, 8
    %v8205 = vmul.u32.u64.compose %v8204, %v8203
    %v8206 = vextract.low.u32 %v8205
    %v8207 = vextract.high.u32 %v8205
    %v8208 = vmul.u32.u64.compose %v8204, %v8199
    %v8209 = vextract.low.u32 %v8208
    %v8210 = vextract.high.u32 %v8208
    %v8211 = vmul.u32 %v8204, %v8195
    %v8212 = vadd.s32 %v8207, %v8209
    %vm8213 = vc.u32 %v8207, %v8209
    %v8214 = vadd.s32 %v8210, 1
    %v8215 = vsel %vm8213, %v8214, %v8210
    %v8216 = vadd.s32 %v8211, %v8215
    %v8217 = vadd.s32 %v8216, 536870912
    %v8218 = vshrl.u32 %v8217, 30
    %v8219 = vshll.u32 %v8218, 30
    %v8220 = vsub.s32 %v8216, %v8219
    %vm8221 = vcmp.lt.s32.totalorder %v8220, 0
    %v8222 = vsub.s32 0, %v8220
    %v8223 = vsel %vm8221, %v8222, %v8220
    %v8224 = vclz %v8223
    %v8225 = vsub.s32 %v8224, 2
    %vm8226 = vcmp.gt.s32.totalorder 0, %v8225
    %v8227 = vsel %vm8226, 0, %v8225
    %v8228 = vsub.s32 32, %v8227
    %v8229 = vshll.u32 %v8220, %v8227
    %v8230 = vshrl.u32 %v8212, %v8228
    %v8231 = vor.u32 %v8229, %v8230
    %v8232 = vsub.s32 4294967266, %v8227
    %v8233 = vadd.s32 %v8232, 127
    %v8234 = vshll.u32 %v8233, 23
    %v8235 = vor.u32 4788187, %v8234
    %v8236 = vand.u32 2147483647, %v8235
    %v8238 = vcvt.s32.f32 %v8231
    %v8239 = vmul.f32 %v8238, %v8236
    %v8240 = vxor.u32 %v8239, 2147483648
    %v8241 = vsel %vm8158, %v8240, %v8239
    %v8242 = vsub.s32 4, %v8218
    %v8243 = vsel %vm8158, %v8242, %v8218
    %v8244 = vsel %vm8157, %v7627, %v8241
    %v8245 = vsel %vm8157, 0, %v8243
    %v8246 = vcosq.f32.pop %v8244
    %v8247 = vsinq.f32.pop %v8244
    %vm8248 = vweird.f32 %v7627
    %v8249 = vadd.s32 %v8245, 3
    %v8250 = vand.u32 %v8249, 3
    %vm8251 = vcmp.lt.s32.totalorder %v8250, 2
    %vm8252 = vcmp.eq.s32.totalorder %v8250, 0
    %v8253 = vxor.u32 %v8247, 2147483648
    %v8254 = vsel %vm8252, %v8246, %v8253
    %vm8255 = vcmp.eq.s32.totalorder %v8250, 2
    %v8256 = vxor.u32 %v8246, 2147483648
    %v8257 = vsel %vm8255, %v8256, %v8247
    %v8258 = vsel %vm8251, %v8254, %v8257
    %v8259 = vsel %vm8248, nan, %v8258
    %v8260 = vand.u32 2147483647, %v7628
    %vm8261 = vcmp.le.f32.partialorder %v8260, 0.7853982
    %vm8262 = vcmp.lt.s32.totalorder %v7628, 0
    %v8263 = vand.u32 %v7628, 2139095040
    %v8264 = vshrl.u32 %v8263, 23
    %v8265 = vsub.s32 %v8264, 127
    %v8266 = vand.u32 2147483647, %v7628
    %v8267 = vand.u32 %v8266, 8388607
    %v8268 = vor.u32 %v8267, 8388608
    %v8269 = vsub.s32 0, %v8268
    %v8270 = vadd.s32 %v8265, 1
    %vm8271 = vcmp.gt.s32.totalorder %v8270, 0
    %v8272 = vsel %vm8271, %v8270, 0
    %v8273 = vshrl.u32 %v8272, 5
    %v8274 = vand.u32 %v8272, 31
    %v8275 = vsub.s32 32, %v8274
    %v8276 = vshrl.u32 683565275, %v8275
    %v8277 = vshll.u32 683565275, %v8274
    %v8278 = vshrl.u32 2475754826, %v8275
    %v8279 = vor.u32 %v8277, %v8278
    %v8280 = vshll.u32 2475754826, %v8274
    %v8281 = vshrl.u32 2131351028, %v8275
    %v8282 = vor.u32 %v8280, %v8281
    %v8283 = vshll.u32 2131351028, %v8274
    %v8284 = vshrl.u32 2102212464, %v8275
    %v8285 = vor.u32 %v8283, %v8284
    %v8286 = vshll.u32 2102212464, %v8274
    %v8287 = vshrl.u32 920167782, %v8275
    %v8288 = vor.u32 %v8286, %v8287
    %v8289 = vshll.u32 920167782, %v8274
    %v8290 = vshrl.u32 1326507024, %v8275
    %v8291 = vor.u32 %v8289, %v8290
    %vm8292 = vcmp.lt.s32.totalorder %v8273, 1
    %vm8293 = vcmp.lt.s32.totalorder %v8273, 2
    %vm8294 = vcmp.lt.s32.totalorder %v8273, 3
    %vm8295 = vcmp.lt.s32.totalorder %v8273, 4
    %v8296 = vsel %vm8292, %v8276, %v8279
    %v8297 = vsel %vm8295, %v8285, 2102212464
    %v8298 = vsel %vm8294, %v8282, %v8297
    %v8299 = vsel %vm8293, %v8296, %v8298
    %v8300 = vsel %vm8292, %v8279, %v8282
    %v8301 = vsel %vm8295, %v8288, 920167782
    %v8302 = vsel %vm8294, %v8285, %v8301
    %v8303 = vsel %vm8293, %v8300, %v8302
    %v8304 = vsel %vm8292, %v8282, %v8285
    %v8305 = vsel %vm8295, %v8291, 1326507024
    %v8306 = vsel %vm8294, %v8288, %v8305
    %v8307 = vsel %vm8293, %v8304, %v8306
    %v8308 = vshll.u32 %v8268, 8
    %v8309 = vmul.u32.u64.compose %v8308, %v8307
    %v8310 = vextract.low.u32 %v8309
    %v8311 = vextract.high.u32 %v8309
    %v8312 = vmul.u32.u64.compose %v8308, %v8303
    %v8313 = vextract.low.u32 %v8312
    %v8314 = vextract.high.u32 %v8312
    %v8315 = vmul.u32 %v8308, %v8299
    %v8316 = vadd.s32 %v8311, %v8313
    %vm8317 = vc.u32 %v8311, %v8313
    %v8318 = vadd.s32 %v8314, 1
    %v8319 = vsel %vm8317, %v8318, %v8314
    %v8320 = vadd.s32 %v8315, %v8319
    %v8321 = vadd.s32 %v8320, 536870912
    %v8322 = vshrl.u32 %v8321, 30
    %v8323 = vshll.u32 %v8322, 30
    %v8324 = vsub.s32 %v8320, %v8323
    %vm8325 = vcmp.lt.s32.totalorder %v8324, 0
    %v8326 = vsub.s32 0, %v8324
    %v8327 = vsel %vm8325, %v8326, %v8324
    %v8328 = vclz %v8327
    %v8329 = vsub.s32 %v8328, 2
    %vm8330 = vcmp.gt.s32.totalorder 0, %v8329
    %v8331 = vsel %vm8330, 0, %v8329
    %v8332 = vsub.s32 32, %v8331
    %v8333 = vshll.u32 %v8324, %v8331
    %v8334 = vshrl.u32 %v8316, %v8332
    %v8335 = vor.u32 %v8333, %v8334
    %v8336 = vsub.s32 4294967266, %v8331
    %v8337 = vadd.s32 %v8336, 127
    %v8338 = vshll.u32 %v8337, 23
    %v8339 = vor.u32 4788187, %v8338
    %v8340 = vand.u32 2147483647, %v8339
    %v8342 = vcvt.s32.f32 %v8335
    %v8343 = vmul.f32 %v8342, %v8340
    %v8344 = vxor.u32 %v8343, 2147483648
    %v8345 = vsel %vm8262, %v8344, %v8343
    %v8346 = vsub.s32 4, %v8322
    %v8347 = vsel %vm8262, %v8346, %v8322
    %v8348 = vsel %vm8261, %v7628, %v8345
    %v8349 = vsel %vm8261, 0, %v8347
    %v8350 = vcosq.f32.pop %v8348
    %v8351 = vsinq.f32.pop %v8348
    %vm8352 = vweird.f32 %v7628
    %v8353 = vadd.s32 %v8349, 3
    %v8354 = vand.u32 %v8353, 3
    %vm8355 = vcmp.lt.s32.totalorder %v8354, 2
    %vm8356 = vcmp.eq.s32.totalorder %v8354, 0
    %v8357 = vxor.u32 %v8351, 2147483648
    %v8358 = vsel %vm8356, %v8350, %v8357
    %vm8359 = vcmp.eq.s32.totalorder %v8354, 2
    %v8360 = vxor.u32 %v8350, 2147483648
    %v8361 = vsel %vm8359, %v8360, %v8351
    %v8362 = vsel %vm8355, %v8358, %v8361
    %v8363 = vsel %vm8352, nan, %v8362
    %v8364 = vand.u32 2147483647, %v7629
    %vm8365 = vcmp.le.f32.partialorder %v8364, 0.7853982
    %vm8366 = vcmp.lt.s32.totalorder %v7629, 0
    %v8367 = vand.u32 %v7629, 2139095040
    %v8368 = vshrl.u32 %v8367, 23
    %v8369 = vsub.s32 %v8368, 127
    %v8370 = vand.u32 2147483647, %v7629
    %v8371 = vand.u32 %v8370, 8388607
    %v8372 = vor.u32 %v8371, 8388608
    %v8373 = vsub.s32 0, %v8372
    %v8374 = vadd.s32 %v8369, 1
    %vm8375 = vcmp.gt.s32.totalorder %v8374, 0
    %v8376 = vsel %vm8375, %v8374, 0
    %v8377 = vshrl.u32 %v8376, 5
    %v8378 = vand.u32 %v8376, 31
    %v8379 = vsub.s32 32, %v8378
    %v8380 = vshrl.u32 683565275, %v8379
    %v8381 = vshll.u32 683565275, %v8378
    %v8382 = vshrl.u32 2475754826, %v8379
    %v8383 = vor.u32 %v8381, %v8382
    %v8384 = vshll.u32 2475754826, %v8378
    %v8385 = vshrl.u32 2131351028, %v8379
    %v8386 = vor.u32 %v8384, %v8385
    %v8387 = vshll.u32 2131351028, %v8378
    %v8388 = vshrl.u32 2102212464, %v8379
    %v8389 = vor.u32 %v8387, %v8388
    %v8390 = vshll.u32 2102212464, %v8378
    %v8391 = vshrl.u32 920167782, %v8379
    %v8392 = vor.u32 %v8390, %v8391
    %v8393 = vshll.u32 920167782, %v8378
    %v8394 = vshrl.u32 1326507024, %v8379
    %v8395 = vor.u32 %v8393, %v8394
    %vm8396 = vcmp.lt.s32.totalorder %v8377, 1
    %vm8397 = vcmp.lt.s32.totalorder %v8377, 2
    %vm8398 = vcmp.lt.s32.totalorder %v8377, 3
    %vm8399 = vcmp.lt.s32.totalorder %v8377, 4
    %v8400 = vsel %vm8396, %v8380, %v8383
    %v8401 = vsel %vm8399, %v8389, 2102212464
    %v8402 = vsel %vm8398, %v8386, %v8401
    %v8403 = vsel %vm8397, %v8400, %v8402
    %v8404 = vsel %vm8396, %v8383, %v8386
    %v8405 = vsel %vm8399, %v8392, 920167782
    %v8406 = vsel %vm8398, %v8389, %v8405
    %v8407 = vsel %vm8397, %v8404, %v8406
    %v8408 = vsel %vm8396, %v8386, %v8389
    %v8409 = vsel %vm8399, %v8395, 1326507024
    %v8410 = vsel %vm8398, %v8392, %v8409
    %v8411 = vsel %vm8397, %v8408, %v8410
    %v8412 = vshll.u32 %v8372, 8
    %v8413 = vmul.u32.u64.compose %v8412, %v8411
    %v8414 = vextract.low.u32 %v8413
    %v8415 = vextract.high.u32 %v8413
    %v8416 = vmul.u32.u64.compose %v8412, %v8407
    %v8417 = vextract.low.u32 %v8416
    %v8418 = vextract.high.u32 %v8416
    %v8419 = vmul.u32 %v8412, %v8403
    %v8420 = vadd.s32 %v8415, %v8417
    %vm8421 = vc.u32 %v8415, %v8417
    %v8422 = vadd.s32 %v8418, 1
    %v8423 = vsel %vm8421, %v8422, %v8418
    %v8424 = vadd.s32 %v8419, %v8423
    %v8425 = vadd.s32 %v8424, 536870912
    %v8426 = vshrl.u32 %v8425, 30
    %v8427 = vshll.u32 %v8426, 30
    %v8428 = vsub.s32 %v8424, %v8427
    %vm8429 = vcmp.lt.s32.totalorder %v8428, 0
    %v8430 = vsub.s32 0, %v8428
    %v8431 = vsel %vm8429, %v8430, %v8428
    %v8432 = vclz %v8431
    %v8433 = vsub.s32 %v8432, 2
    %vm8434 = vcmp.gt.s32.totalorder 0, %v8433
    %v8435 = vsel %vm8434, 0, %v8433
    %v8436 = vsub.s32 32, %v8435
    %v8437 = vshll.u32 %v8428, %v8435
    %v8438 = vshrl.u32 %v8420, %v8436
    %v8439 = vor.u32 %v8437, %v8438
    %v8440 = vsub.s32 4294967266, %v8435
    %v8441 = vadd.s32 %v8440, 127
    %v8442 = vshll.u32 %v8441, 23
    %v8443 = vor.u32 4788187, %v8442
    %v8444 = vand.u32 2147483647, %v8443
    %v8446 = vcvt.s32.f32 %v8439
    %v8447 = vmul.f32 %v8446, %v8444
    %v8448 = vxor.u32 %v8447, 2147483648
    %v8449 = vsel %vm8366, %v8448, %v8447
    %v8450 = vsub.s32 4, %v8426
    %v8451 = vsel %vm8366, %v8450, %v8426
    %v8452 = vsel %vm8365, %v7629, %v8449
    %v8453 = vsel %vm8365, 0, %v8451
    %v8454 = vcosq.f32.pop %v8452
    %v8455 = vsinq.f32.pop %v8452
    %vm8456 = vweird.f32 %v7629
    %v8457 = vadd.s32 %v8453, 3
    %v8458 = vand.u32 %v8457, 3
    %vm8459 = vcmp.lt.s32.totalorder %v8458, 2
    %vm8460 = vcmp.eq.s32.totalorder %v8458, 0
    %v8461 = vxor.u32 %v8455, 2147483648
    %v8462 = vsel %vm8460, %v8454, %v8461
    %vm8463 = vcmp.eq.s32.totalorder %v8458, 2
    %v8464 = vxor.u32 %v8454, 2147483648
    %v8465 = vsel %vm8463, %v8464, %v8455
    %v8466 = vsel %vm8459, %v8462, %v8465
    %v8467 = vsel %vm8456, nan, %v8466
    %v8468 = vand.u32 2147483647, %v7630
    %vm8469 = vcmp.le.f32.partialorder %v8468, 0.7853982
    %vm8470 = vcmp.lt.s32.totalorder %v7630, 0
    %v8471 = vand.u32 %v7630, 2139095040
    %v8472 = vshrl.u32 %v8471, 23
    %v8473 = vsub.s32 %v8472, 127
    %v8474 = vand.u32 2147483647, %v7630
    %v8475 = vand.u32 %v8474, 8388607
    %v8476 = vor.u32 %v8475, 8388608
    %v8477 = vsub.s32 0, %v8476
    %v8478 = vadd.s32 %v8473, 1
    %vm8479 = vcmp.gt.s32.totalorder %v8478, 0
    %v8480 = vsel %vm8479, %v8478, 0
    %v8481 = vshrl.u32 %v8480, 5
    %v8482 = vand.u32 %v8480, 31
    %v8483 = vsub.s32 32, %v8482
    %v8484 = vshrl.u32 683565275, %v8483
    %v8485 = vshll.u32 683565275, %v8482
    %v8486 = vshrl.u32 2475754826, %v8483
    %v8487 = vor.u32 %v8485, %v8486
    %v8488 = vshll.u32 2475754826, %v8482
    %v8489 = vshrl.u32 2131351028, %v8483
    %v8490 = vor.u32 %v8488, %v8489
    %v8491 = vshll.u32 2131351028, %v8482
    %v8492 = vshrl.u32 2102212464, %v8483
    %v8493 = vor.u32 %v8491, %v8492
    %v8494 = vshll.u32 2102212464, %v8482
    %v8495 = vshrl.u32 920167782, %v8483
    %v8496 = vor.u32 %v8494, %v8495
    %v8497 = vshll.u32 920167782, %v8482
    %v8498 = vshrl.u32 1326507024, %v8483
    %v8499 = vor.u32 %v8497, %v8498
    %vm8500 = vcmp.lt.s32.totalorder %v8481, 1
    %vm8501 = vcmp.lt.s32.totalorder %v8481, 2
    %vm8502 = vcmp.lt.s32.totalorder %v8481, 3
    %vm8503 = vcmp.lt.s32.totalorder %v8481, 4
    %v8504 = vsel %vm8500, %v8484, %v8487
    %v8505 = vsel %vm8503, %v8493, 2102212464
    %v8506 = vsel %vm8502, %v8490, %v8505
    %v8507 = vsel %vm8501, %v8504, %v8506
    %v8508 = vsel %vm8500, %v8487, %v8490
    %v8509 = vsel %vm8503, %v8496, 920167782
    %v8510 = vsel %vm8502, %v8493, %v8509
    %v8511 = vsel %vm8501, %v8508, %v8510
    %v8512 = vsel %vm8500, %v8490, %v8493
    %v8513 = vsel %vm8503, %v8499, 1326507024
    %v8514 = vsel %vm8502, %v8496, %v8513
    %v8515 = vsel %vm8501, %v8512, %v8514
    %v8516 = vshll.u32 %v8476, 8
    %v8517 = vmul.u32.u64.compose %v8516, %v8515
    %v8518 = vextract.low.u32 %v8517
    %v8519 = vextract.high.u32 %v8517
    %v8520 = vmul.u32.u64.compose %v8516, %v8511
    %v8521 = vextract.low.u32 %v8520
    %v8522 = vextract.high.u32 %v8520
    %v8523 = vmul.u32 %v8516, %v8507
    %v8524 = vadd.s32 %v8519, %v8521
    %vm8525 = vc.u32 %v8519, %v8521
    %v8526 = vadd.s32 %v8522, 1
    %v8527 = vsel %vm8525, %v8526, %v8522
    %v8528 = vadd.s32 %v8523, %v8527
    %v8529 = vadd.s32 %v8528, 536870912
    %v8530 = vshrl.u32 %v8529, 30
    %v8531 = vshll.u32 %v8530, 30
    %v8532 = vsub.s32 %v8528, %v8531
    %vm8533 = vcmp.lt.s32.totalorder %v8532, 0
    %v8534 = vsub.s32 0, %v8532
    %v8535 = vsel %vm8533, %v8534, %v8532
    %v8536 = vclz %v8535
    %v8537 = vsub.s32 %v8536, 2
    %vm8538 = vcmp.gt.s32.totalorder 0, %v8537
    %v8539 = vsel %vm8538, 0, %v8537
    %v8540 = vsub.s32 32, %v8539
    %v8541 = vshll.u32 %v8532, %v8539
    %v8542 = vshrl.u32 %v8524, %v8540
    %v8543 = vor.u32 %v8541, %v8542
    %v8544 = vsub.s32 4294967266, %v8539
    %v8545 = vadd.s32 %v8544, 127
    %v8546 = vshll.u32 %v8545, 23
    %v8547 = vor.u32 4788187, %v8546
    %v8548 = vand.u32 2147483647, %v8547
    %v8550 = vcvt.s32.f32 %v8543
    %v8551 = vmul.f32 %v8550, %v8548
    %v8552 = vxor.u32 %v8551, 2147483648
    %v8553 = vsel %vm8470, %v8552, %v8551
    %v8554 = vsub.s32 4, %v8530
    %v8555 = vsel %vm8470, %v8554, %v8530
    %v8556 = vsel %vm8469, %v7630, %v8553
    %v8557 = vsel %vm8469, 0, %v8555
    %v8558 = vcosq.f32.pop %v8556
    %v8559 = vsinq.f32.pop %v8556
    %vm8560 = vweird.f32 %v7630
    %v8561 = vadd.s32 %v8557, 3
    %v8562 = vand.u32 %v8561, 3
    %vm8563 = vcmp.lt.s32.totalorder %v8562, 2
    %vm8564 = vcmp.eq.s32.totalorder %v8562, 0
    %v8565 = vxor.u32 %v8559, 2147483648
    %v8566 = vsel %vm8564, %v8558, %v8565
    %vm8567 = vcmp.eq.s32.totalorder %v8562, 2
    %v8568 = vxor.u32 %v8558, 2147483648
    %v8569 = vsel %vm8567, %v8568, %v8559
    %v8570 = vsel %vm8563, %v8566, %v8569
    %v8571 = vsel %vm8560, nan, %v8570
    %v8572 = vand.u32 2147483647, %v7631
    %vm8573 = vcmp.le.f32.partialorder %v8572, 0.7853982
    %vm8574 = vcmp.lt.s32.totalorder %v7631, 0
    %v8575 = vand.u32 %v7631, 2139095040
    %v8576 = vshrl.u32 %v8575, 23
    %v8577 = vsub.s32 %v8576, 127
    %v8578 = vand.u32 2147483647, %v7631
    %v8579 = vand.u32 %v8578, 8388607
    %v8580 = vor.u32 %v8579, 8388608
    %v8581 = vsub.s32 0, %v8580
    %v8582 = vadd.s32 %v8577, 1
    %vm8583 = vcmp.gt.s32.totalorder %v8582, 0
    %v8584 = vsel %vm8583, %v8582, 0
    %v8585 = vshrl.u32 %v8584, 5
    %v8586 = vand.u32 %v8584, 31
    %v8587 = vsub.s32 32, %v8586
    %v8588 = vshrl.u32 683565275, %v8587
    %v8589 = vshll.u32 683565275, %v8586
    %v8590 = vshrl.u32 2475754826, %v8587
    %v8591 = vor.u32 %v8589, %v8590
    %v8592 = vshll.u32 2475754826, %v8586
    %v8593 = vshrl.u32 2131351028, %v8587
    %v8594 = vor.u32 %v8592, %v8593
    %v8595 = vshll.u32 2131351028, %v8586
    %v8596 = vshrl.u32 2102212464, %v8587
    %v8597 = vor.u32 %v8595, %v8596
    %v8598 = vshll.u32 2102212464, %v8586
    %v8599 = vshrl.u32 920167782, %v8587
    %v8600 = vor.u32 %v8598, %v8599
    %v8601 = vshll.u32 920167782, %v8586
    %v8602 = vshrl.u32 1326507024, %v8587
    %v8603 = vor.u32 %v8601, %v8602
    %vm8604 = vcmp.lt.s32.totalorder %v8585, 1
    %vm8605 = vcmp.lt.s32.totalorder %v8585, 2
    %vm8606 = vcmp.lt.s32.totalorder %v8585, 3
    %vm8607 = vcmp.lt.s32.totalorder %v8585, 4
    %v8608 = vsel %vm8604, %v8588, %v8591
    %v8609 = vsel %vm8607, %v8597, 2102212464
    %v8610 = vsel %vm8606, %v8594, %v8609
    %v8611 = vsel %vm8605, %v8608, %v8610
    %v8612 = vsel %vm8604, %v8591, %v8594
    %v8613 = vsel %vm8607, %v8600, 920167782
    %v8614 = vsel %vm8606, %v8597, %v8613
    %v8615 = vsel %vm8605, %v8612, %v8614
    %v8616 = vsel %vm8604, %v8594, %v8597
    %v8617 = vsel %vm8607, %v8603, 1326507024
    %v8618 = vsel %vm8606, %v8600, %v8617
    %v8619 = vsel %vm8605, %v8616, %v8618
    %v8620 = vshll.u32 %v8580, 8
    %v8621 = vmul.u32.u64.compose %v8620, %v8619
    %v8622 = vextract.low.u32 %v8621
    %v8623 = vextract.high.u32 %v8621
    %v8624 = vmul.u32.u64.compose %v8620, %v8615
    %v8625 = vextract.low.u32 %v8624
    %v8626 = vextract.high.u32 %v8624
    %v8627 = vmul.u32 %v8620, %v8611
    %v8628 = vadd.s32 %v8623, %v8625
    %vm8629 = vc.u32 %v8623, %v8625
    %v8630 = vadd.s32 %v8626, 1
    %v8631 = vsel %vm8629, %v8630, %v8626
    %v8632 = vadd.s32 %v8627, %v8631
    %v8633 = vadd.s32 %v8632, 536870912
    %v8634 = vshrl.u32 %v8633, 30
    %v8635 = vshll.u32 %v8634, 30
    %v8636 = vsub.s32 %v8632, %v8635
    %vm8637 = vcmp.lt.s32.totalorder %v8636, 0
    %v8638 = vsub.s32 0, %v8636
    %v8639 = vsel %vm8637, %v8638, %v8636
    %v8640 = vclz %v8639
    %v8641 = vsub.s32 %v8640, 2
    %vm8642 = vcmp.gt.s32.totalorder 0, %v8641
    %v8643 = vsel %vm8642, 0, %v8641
    %v8644 = vsub.s32 32, %v8643
    %v8645 = vshll.u32 %v8636, %v8643
    %v8646 = vshrl.u32 %v8628, %v8644
    %v8647 = vor.u32 %v8645, %v8646
    %v8648 = vsub.s32 4294967266, %v8643
    %v8649 = vadd.s32 %v8648, 127
    %v8650 = vshll.u32 %v8649, 23
    %v8651 = vor.u32 4788187, %v8650
    %v8652 = vand.u32 2147483647, %v8651
    %v8654 = vcvt.s32.f32 %v8647
    %v8655 = vmul.f32 %v8654, %v8652
    %v8656 = vxor.u32 %v8655, 2147483648
    %v8657 = vsel %vm8574, %v8656, %v8655
    %v8658 = vsub.s32 4, %v8634
    %v8659 = vsel %vm8574, %v8658, %v8634
    %v8660 = vsel %vm8573, %v7631, %v8657
    %v8661 = vsel %vm8573, 0, %v8659
    %v8662 = vcosq.f32.pop %v8660
    %v8663 = vsinq.f32.pop %v8660
    %vm8664 = vweird.f32 %v7631
    %v8665 = vadd.s32 %v8661, 3
    %v8666 = vand.u32 %v8665, 3
    %vm8667 = vcmp.lt.s32.totalorder %v8666, 2
    %vm8668 = vcmp.eq.s32.totalorder %v8666, 0
    %v8669 = vxor.u32 %v8663, 2147483648
    %v8670 = vsel %vm8668, %v8662, %v8669
    %vm8671 = vcmp.eq.s32.totalorder %v8666, 2
    %v8672 = vxor.u32 %v8662, 2147483648
    %v8673 = vsel %vm8671, %v8672, %v8663
    %v8674 = vsel %vm8667, %v8670, %v8673
    %v8675 = vsel %vm8664, nan, %v8674
    %v8676 = vand.u32 2147483647, %v7632
    %vm8677 = vcmp.le.f32.partialorder %v8676, 0.7853982
    %vm8678 = vcmp.lt.s32.totalorder %v7632, 0
    %v8679 = vand.u32 %v7632, 2139095040
    %v8680 = vshrl.u32 %v8679, 23
    %v8681 = vsub.s32 %v8680, 127
    %v8682 = vand.u32 2147483647, %v7632
    %v8683 = vand.u32 %v8682, 8388607
    %v8684 = vor.u32 %v8683, 8388608
    %v8685 = vsub.s32 0, %v8684
    %v8686 = vadd.s32 %v8681, 1
    %vm8687 = vcmp.gt.s32.totalorder %v8686, 0
    %v8688 = vsel %vm8687, %v8686, 0
    %v8689 = vshrl.u32 %v8688, 5
    %v8690 = vand.u32 %v8688, 31
    %v8691 = vsub.s32 32, %v8690
    %v8692 = vshrl.u32 683565275, %v8691
    %v8693 = vshll.u32 683565275, %v8690
    %v8694 = vshrl.u32 2475754826, %v8691
    %v8695 = vor.u32 %v8693, %v8694
    %v8696 = vshll.u32 2475754826, %v8690
    %v8697 = vshrl.u32 2131351028, %v8691
    %v8698 = vor.u32 %v8696, %v8697
    %v8699 = vshll.u32 2131351028, %v8690
    %v8700 = vshrl.u32 2102212464, %v8691
    %v8701 = vor.u32 %v8699, %v8700
    %v8702 = vshll.u32 2102212464, %v8690
    %v8703 = vshrl.u32 920167782, %v8691
    %v8704 = vor.u32 %v8702, %v8703
    %v8705 = vshll.u32 920167782, %v8690
    %v8706 = vshrl.u32 1326507024, %v8691
    %v8707 = vor.u32 %v8705, %v8706
    %vm8708 = vcmp.lt.s32.totalorder %v8689, 1
    %vm8709 = vcmp.lt.s32.totalorder %v8689, 2
    %vm8710 = vcmp.lt.s32.totalorder %v8689, 3
    %vm8711 = vcmp.lt.s32.totalorder %v8689, 4
    %v8712 = vsel %vm8708, %v8692, %v8695
    %v8713 = vsel %vm8711, %v8701, 2102212464
    %v8714 = vsel %vm8710, %v8698, %v8713
    %v8715 = vsel %vm8709, %v8712, %v8714
    %v8716 = vsel %vm8708, %v8695, %v8698
    %v8717 = vsel %vm8711, %v8704, 920167782
    %v8718 = vsel %vm8710, %v8701, %v8717
    %v8719 = vsel %vm8709, %v8716, %v8718
    %v8720 = vsel %vm8708, %v8698, %v8701
    %v8721 = vsel %vm8711, %v8707, 1326507024
    %v8722 = vsel %vm8710, %v8704, %v8721
    %v8723 = vsel %vm8709, %v8720, %v8722
    %v8724 = vshll.u32 %v8684, 8
    %v8725 = vmul.u32.u64.compose %v8724, %v8723
    %v8726 = vextract.low.u32 %v8725
    %v8727 = vextract.high.u32 %v8725
    %v8728 = vmul.u32.u64.compose %v8724, %v8719
    %v8729 = vextract.low.u32 %v8728
    %v8730 = vextract.high.u32 %v8728
    %v8731 = vmul.u32 %v8724, %v8715
    %v8732 = vadd.s32 %v8727, %v8729
    %vm8733 = vc.u32 %v8727, %v8729
    %v8734 = vadd.s32 %v8730, 1
    %v8735 = vsel %vm8733, %v8734, %v8730
    %v8736 = vadd.s32 %v8731, %v8735
    %v8737 = vadd.s32 %v8736, 536870912
    %v8738 = vshrl.u32 %v8737, 30
    %v8739 = vshll.u32 %v8738, 30
    %v8740 = vsub.s32 %v8736, %v8739
    %vm8741 = vcmp.lt.s32.totalorder %v8740, 0
    %v8742 = vsub.s32 0, %v8740
    %v8743 = vsel %vm8741, %v8742, %v8740
    %v8744 = vclz %v8743
    %v8745 = vsub.s32 %v8744, 2
    %vm8746 = vcmp.gt.s32.totalorder 0, %v8745
    %v8747 = vsel %vm8746, 0, %v8745
    %v8748 = vsub.s32 32, %v8747
    %v8749 = vshll.u32 %v8740, %v8747
    %v8750 = vshrl.u32 %v8732, %v8748
    %v8751 = vor.u32 %v8749, %v8750
    %v8752 = vsub.s32 4294967266, %v8747
    %v8753 = vadd.s32 %v8752, 127
    %v8754 = vshll.u32 %v8753, 23
    %v8755 = vor.u32 4788187, %v8754
    %v8756 = vand.u32 2147483647, %v8755
    %v8758 = vcvt.s32.f32 %v8751
    %v8759 = vmul.f32 %v8758, %v8756
    %v8760 = vxor.u32 %v8759, 2147483648
    %v8761 = vsel %vm8678, %v8760, %v8759
    %v8762 = vsub.s32 4, %v8738
    %v8763 = vsel %vm8678, %v8762, %v8738
    %v8764 = vsel %vm8677, %v7632, %v8761
    %v8765 = vsel %vm8677, 0, %v8763
    %v8766 = vcosq.f32.pop %v8764
    %v8767 = vsinq.f32.pop %v8764
    %vm8768 = vweird.f32 %v7632
    %v8769 = vadd.s32 %v8765, 3
    %v8770 = vand.u32 %v8769, 3
    %vm8771 = vcmp.lt.s32.totalorder %v8770, 2
    %vm8772 = vcmp.eq.s32.totalorder %v8770, 0
    %v8773 = vxor.u32 %v8767, 2147483648
    %v8774 = vsel %vm8772, %v8766, %v8773
    %vm8775 = vcmp.eq.s32.totalorder %v8770, 2
    %v8776 = vxor.u32 %v8766, 2147483648
    %v8777 = vsel %vm8775, %v8776, %v8767
    %v8778 = vsel %vm8771, %v8774, %v8777
    %v8779 = vsel %vm8768, nan, %v8778
    %v8780 = vand.u32 2147483647, %v7633
    %vm8781 = vcmp.le.f32.partialorder %v8780, 0.7853982
    %vm8782 = vcmp.lt.s32.totalorder %v7633, 0
    %v8783 = vand.u32 %v7633, 2139095040
    %v8784 = vshrl.u32 %v8783, 23
    %v8785 = vsub.s32 %v8784, 127
    %v8786 = vand.u32 2147483647, %v7633
    %v8787 = vand.u32 %v8786, 8388607
    %v8788 = vor.u32 %v8787, 8388608
    %v8789 = vsub.s32 0, %v8788
    %v8790 = vadd.s32 %v8785, 1
    %vm8791 = vcmp.gt.s32.totalorder %v8790, 0
    %v8792 = vsel %vm8791, %v8790, 0
    %v8793 = vshrl.u32 %v8792, 5
    %v8794 = vand.u32 %v8792, 31
    %v8795 = vsub.s32 32, %v8794
    %v8796 = vshrl.u32 683565275, %v8795
    %v8797 = vshll.u32 683565275, %v8794
    %v8798 = vshrl.u32 2475754826, %v8795
    %v8799 = vor.u32 %v8797, %v8798
    %v8800 = vshll.u32 2475754826, %v8794
    %v8801 = vshrl.u32 2131351028, %v8795
    %v8802 = vor.u32 %v8800, %v8801
    %v8803 = vshll.u32 2131351028, %v8794
    %v8804 = vshrl.u32 2102212464, %v8795
    %v8805 = vor.u32 %v8803, %v8804
    %v8806 = vshll.u32 2102212464, %v8794
    %v8807 = vshrl.u32 920167782, %v8795
    %v8808 = vor.u32 %v8806, %v8807
    %v8809 = vshll.u32 920167782, %v8794
    %v8810 = vshrl.u32 1326507024, %v8795
    %v8811 = vor.u32 %v8809, %v8810
    %vm8812 = vcmp.lt.s32.totalorder %v8793, 1
    %vm8813 = vcmp.lt.s32.totalorder %v8793, 2
    %vm8814 = vcmp.lt.s32.totalorder %v8793, 3
    %vm8815 = vcmp.lt.s32.totalorder %v8793, 4
    %v8816 = vsel %vm8812, %v8796, %v8799
    %v8817 = vsel %vm8815, %v8805, 2102212464
    %v8818 = vsel %vm8814, %v8802, %v8817
    %v8819 = vsel %vm8813, %v8816, %v8818
    %v8820 = vsel %vm8812, %v8799, %v8802
    %v8821 = vsel %vm8815, %v8808, 920167782
    %v8822 = vsel %vm8814, %v8805, %v8821
    %v8823 = vsel %vm8813, %v8820, %v8822
    %v8824 = vsel %vm8812, %v8802, %v8805
    %v8825 = vsel %vm8815, %v8811, 1326507024
    %v8826 = vsel %vm8814, %v8808, %v8825
    %v8827 = vsel %vm8813, %v8824, %v8826
    %v8828 = vshll.u32 %v8788, 8
    %v8829 = vmul.u32.u64.compose %v8828, %v8827
    %v8830 = vextract.low.u32 %v8829
    %v8831 = vextract.high.u32 %v8829
    %v8832 = vmul.u32.u64.compose %v8828, %v8823
    %v8833 = vextract.low.u32 %v8832
    %v8834 = vextract.high.u32 %v8832
    %v8835 = vmul.u32 %v8828, %v8819
    %v8836 = vadd.s32 %v8831, %v8833
    %vm8837 = vc.u32 %v8831, %v8833
    %v8838 = vadd.s32 %v8834, 1
    %v8839 = vsel %vm8837, %v8838, %v8834
    %v8840 = vadd.s32 %v8835, %v8839
    %v8841 = vadd.s32 %v8840, 536870912
    %v8842 = vshrl.u32 %v8841, 30
    %v8843 = vshll.u32 %v8842, 30
    %v8844 = vsub.s32 %v8840, %v8843
    %vm8845 = vcmp.lt.s32.totalorder %v8844, 0
    %v8846 = vsub.s32 0, %v8844
    %v8847 = vsel %vm8845, %v8846, %v8844
    %v8848 = vclz %v8847
    %v8849 = vsub.s32 %v8848, 2
    %vm8850 = vcmp.gt.s32.totalorder 0, %v8849
    %v8851 = vsel %vm8850, 0, %v8849
    %v8852 = vsub.s32 32, %v8851
    %v8853 = vshll.u32 %v8844, %v8851
    %v8854 = vshrl.u32 %v8836, %v8852
    %v8855 = vor.u32 %v8853, %v8854
    %v8856 = vsub.s32 4294967266, %v8851
    %v8857 = vadd.s32 %v8856, 127
    %v8858 = vshll.u32 %v8857, 23
    %v8859 = vor.u32 4788187, %v8858
    %v8860 = vand.u32 2147483647, %v8859
    %v8862 = vcvt.s32.f32 %v8855
    %v8863 = vmul.f32 %v8862, %v8860
    %v8864 = vxor.u32 %v8863, 2147483648
    %v8865 = vsel %vm8782, %v8864, %v8863
    %v8866 = vsub.s32 4, %v8842
    %v8867 = vsel %vm8782, %v8866, %v8842
    %v8868 = vsel %vm8781, %v7633, %v8865
    %v8869 = vsel %vm8781, 0, %v8867
    %v8870 = vcosq.f32.pop %v8868
    %v8871 = vsinq.f32.pop %v8868
    %vm8872 = vweird.f32 %v7633
    %v8873 = vadd.s32 %v8869, 3
    %v8874 = vand.u32 %v8873, 3
    %vm8875 = vcmp.lt.s32.totalorder %v8874, 2
    %vm8876 = vcmp.eq.s32.totalorder %v8874, 0
    %v8877 = vxor.u32 %v8871, 2147483648
    %v8878 = vsel %vm8876, %v8870, %v8877
    %vm8879 = vcmp.eq.s32.totalorder %v8874, 2
    %v8880 = vxor.u32 %v8870, 2147483648
    %v8881 = vsel %vm8879, %v8880, %v8871
    %v8882 = vsel %vm8875, %v8878, %v8881
    %v8883 = vsel %vm8872, nan, %v8882
    %v8884 = vand.u32 2147483647, %v7634
    %vm8885 = vcmp.le.f32.partialorder %v8884, 0.7853982
    %vm8886 = vcmp.lt.s32.totalorder %v7634, 0
    %v8887 = vand.u32 %v7634, 2139095040
    %v8888 = vshrl.u32 %v8887, 23
    %v8889 = vsub.s32 %v8888, 127
    %v8890 = vand.u32 2147483647, %v7634
    %v8891 = vand.u32 %v8890, 8388607
    %v8892 = vor.u32 %v8891, 8388608
    %v8893 = vsub.s32 0, %v8892
    %v8894 = vadd.s32 %v8889, 1
    %vm8895 = vcmp.gt.s32.totalorder %v8894, 0
    %v8896 = vsel %vm8895, %v8894, 0
    %v8897 = vshrl.u32 %v8896, 5
    %v8898 = vand.u32 %v8896, 31
    %v8899 = vsub.s32 32, %v8898
    %v8900 = vshrl.u32 683565275, %v8899
    %v8901 = vshll.u32 683565275, %v8898
    %v8902 = vshrl.u32 2475754826, %v8899
    %v8903 = vor.u32 %v8901, %v8902
    %v8904 = vshll.u32 2475754826, %v8898
    %v8905 = vshrl.u32 2131351028, %v8899
    %v8906 = vor.u32 %v8904, %v8905
    %v8907 = vshll.u32 2131351028, %v8898
    %v8908 = vshrl.u32 2102212464, %v8899
    %v8909 = vor.u32 %v8907, %v8908
    %v8910 = vshll.u32 2102212464, %v8898
    %v8911 = vshrl.u32 920167782, %v8899
    %v8912 = vor.u32 %v8910, %v8911
    %v8913 = vshll.u32 920167782, %v8898
    %v8914 = vshrl.u32 1326507024, %v8899
    %v8915 = vor.u32 %v8913, %v8914
    %vm8916 = vcmp.lt.s32.totalorder %v8897, 1
    %vm8917 = vcmp.lt.s32.totalorder %v8897, 2
    %vm8918 = vcmp.lt.s32.totalorder %v8897, 3
    %vm8919 = vcmp.lt.s32.totalorder %v8897, 4
    %v8920 = vsel %vm8916, %v8900, %v8903
    %v8921 = vsel %vm8919, %v8909, 2102212464
    %v8922 = vsel %vm8918, %v8906, %v8921
    %v8923 = vsel %vm8917, %v8920, %v8922
    %v8924 = vsel %vm8916, %v8903, %v8906
    %v8925 = vsel %vm8919, %v8912, 920167782
    %v8926 = vsel %vm8918, %v8909, %v8925
    %v8927 = vsel %vm8917, %v8924, %v8926
    %v8928 = vsel %vm8916, %v8906, %v8909
    %v8929 = vsel %vm8919, %v8915, 1326507024
    %v8930 = vsel %vm8918, %v8912, %v8929
    %v8931 = vsel %vm8917, %v8928, %v8930
    %v8932 = vshll.u32 %v8892, 8
    %v8933 = vmul.u32.u64.compose %v8932, %v8931
    %v8934 = vextract.low.u32 %v8933
    %v8935 = vextract.high.u32 %v8933
    %v8936 = vmul.u32.u64.compose %v8932, %v8927
    %v8937 = vextract.low.u32 %v8936
    %v8938 = vextract.high.u32 %v8936
    %v8939 = vmul.u32 %v8932, %v8923
    %v8940 = vadd.s32 %v8935, %v8937
    %vm8941 = vc.u32 %v8935, %v8937
    %v8942 = vadd.s32 %v8938, 1
    %v8943 = vsel %vm8941, %v8942, %v8938
    %v8944 = vadd.s32 %v8939, %v8943
    %v8945 = vadd.s32 %v8944, 536870912
    %v8946 = vshrl.u32 %v8945, 30
    %v8947 = vshll.u32 %v8946, 30
    %v8948 = vsub.s32 %v8944, %v8947
    %vm8949 = vcmp.lt.s32.totalorder %v8948, 0
    %v8950 = vsub.s32 0, %v8948
    %v8951 = vsel %vm8949, %v8950, %v8948
    %v8952 = vclz %v8951
    %v8953 = vsub.s32 %v8952, 2
    %vm8954 = vcmp.gt.s32.totalorder 0, %v8953
    %v8955 = vsel %vm8954, 0, %v8953
    %v8956 = vsub.s32 32, %v8955
    %v8957 = vshll.u32 %v8948, %v8955
    %v8958 = vshrl.u32 %v8940, %v8956
    %v8959 = vor.u32 %v8957, %v8958
    %v8960 = vsub.s32 4294967266, %v8955
    %v8961 = vadd.s32 %v8960, 127
    %v8962 = vshll.u32 %v8961, 23
    %v8963 = vor.u32 4788187, %v8962
    %v8964 = vand.u32 2147483647, %v8963
    %v8966 = vcvt.s32.f32 %v8959
    %v8967 = vmul.f32 %v8966, %v8964
    %v8968 = vxor.u32 %v8967, 2147483648
    %v8969 = vsel %vm8886, %v8968, %v8967
    %v8970 = vsub.s32 4, %v8946
    %v8971 = vsel %vm8886, %v8970, %v8946
    %v8972 = vsel %vm8885, %v7634, %v8969
    %v8973 = vsel %vm8885, 0, %v8971
    %v8974 = vcosq.f32.pop %v8972
    %v8975 = vsinq.f32.pop %v8972
    %vm8976 = vweird.f32 %v7634
    %v8977 = vadd.s32 %v8973, 3
    %v8978 = vand.u32 %v8977, 3
    %vm8979 = vcmp.lt.s32.totalorder %v8978, 2
    %vm8980 = vcmp.eq.s32.totalorder %v8978, 0
    %v8981 = vxor.u32 %v8975, 2147483648
    %v8982 = vsel %vm8980, %v8974, %v8981
    %vm8983 = vcmp.eq.s32.totalorder %v8978, 2
    %v8984 = vxor.u32 %v8974, 2147483648
    %v8985 = vsel %vm8983, %v8984, %v8975
    %v8986 = vsel %vm8979, %v8982, %v8985
    %v8987 = vsel %vm8976, nan, %v8986
    %v8988 = vand.u32 2147483647, %v7635
    %vm8989 = vcmp.le.f32.partialorder %v8988, 0.7853982
    %vm8990 = vcmp.lt.s32.totalorder %v7635, 0
    %v8991 = vand.u32 %v7635, 2139095040
    %v8992 = vshrl.u32 %v8991, 23
    %v8993 = vsub.s32 %v8992, 127
    %v8994 = vand.u32 2147483647, %v7635
    %v8995 = vand.u32 %v8994, 8388607
    %v8996 = vor.u32 %v8995, 8388608
    %v8997 = vsub.s32 0, %v8996
    %v8998 = vadd.s32 %v8993, 1
    %vm8999 = vcmp.gt.s32.totalorder %v8998, 0
    %v9000 = vsel %vm8999, %v8998, 0
    %v9001 = vshrl.u32 %v9000, 5
    %v9002 = vand.u32 %v9000, 31
    %v9003 = vsub.s32 32, %v9002
    %v9004 = vshrl.u32 683565275, %v9003
    %v9005 = vshll.u32 683565275, %v9002
    %v9006 = vshrl.u32 2475754826, %v9003
    %v9007 = vor.u32 %v9005, %v9006
    %v9008 = vshll.u32 2475754826, %v9002
    %v9009 = vshrl.u32 2131351028, %v9003
    %v9010 = vor.u32 %v9008, %v9009
    %v9011 = vshll.u32 2131351028, %v9002
    %v9012 = vshrl.u32 2102212464, %v9003
    %v9013 = vor.u32 %v9011, %v9012
    %v9014 = vshll.u32 2102212464, %v9002
    %v9015 = vshrl.u32 920167782, %v9003
    %v9016 = vor.u32 %v9014, %v9015
    %v9017 = vshll.u32 920167782, %v9002
    %v9018 = vshrl.u32 1326507024, %v9003
    %v9019 = vor.u32 %v9017, %v9018
    %vm9020 = vcmp.lt.s32.totalorder %v9001, 1
    %vm9021 = vcmp.lt.s32.totalorder %v9001, 2
    %vm9022 = vcmp.lt.s32.totalorder %v9001, 3
    %vm9023 = vcmp.lt.s32.totalorder %v9001, 4
    %v9024 = vsel %vm9020, %v9004, %v9007
    %v9025 = vsel %vm9023, %v9013, 2102212464
    %v9026 = vsel %vm9022, %v9010, %v9025
    %v9027 = vsel %vm9021, %v9024, %v9026
    %v9028 = vsel %vm9020, %v9007, %v9010
    %v9029 = vsel %vm9023, %v9016, 920167782
    %v9030 = vsel %vm9022, %v9013, %v9029
    %v9031 = vsel %vm9021, %v9028, %v9030
    %v9032 = vsel %vm9020, %v9010, %v9013
    %v9033 = vsel %vm9023, %v9019, 1326507024
    %v9034 = vsel %vm9022, %v9016, %v9033
    %v9035 = vsel %vm9021, %v9032, %v9034
    %v9036 = vshll.u32 %v8996, 8
    %v9037 = vmul.u32.u64.compose %v9036, %v9035
    %v9038 = vextract.low.u32 %v9037
    %v9039 = vextract.high.u32 %v9037
    %v9040 = vmul.u32.u64.compose %v9036, %v9031
    %v9041 = vextract.low.u32 %v9040
    %v9042 = vextract.high.u32 %v9040
    %v9043 = vmul.u32 %v9036, %v9027
    %v9044 = vadd.s32 %v9039, %v9041
    %vm9045 = vc.u32 %v9039, %v9041
    %v9046 = vadd.s32 %v9042, 1
    %v9047 = vsel %vm9045, %v9046, %v9042
    %v9048 = vadd.s32 %v9043, %v9047
    %v9049 = vadd.s32 %v9048, 536870912
    %v9050 = vshrl.u32 %v9049, 30
    %v9051 = vshll.u32 %v9050, 30
    %v9052 = vsub.s32 %v9048, %v9051
    %vm9053 = vcmp.lt.s32.totalorder %v9052, 0
    %v9054 = vsub.s32 0, %v9052
    %v9055 = vsel %vm9053, %v9054, %v9052
    %v9056 = vclz %v9055
    %v9057 = vsub.s32 %v9056, 2
    %vm9058 = vcmp.gt.s32.totalorder 0, %v9057
    %v9059 = vsel %vm9058, 0, %v9057
    %v9060 = vsub.s32 32, %v9059
    %v9061 = vshll.u32 %v9052, %v9059
    %v9062 = vshrl.u32 %v9044, %v9060
    %v9063 = vor.u32 %v9061, %v9062
    %v9064 = vsub.s32 4294967266, %v9059
    %v9065 = vadd.s32 %v9064, 127
    %v9066 = vshll.u32 %v9065, 23
    %v9067 = vor.u32 4788187, %v9066
    %v9068 = vand.u32 2147483647, %v9067
    %v9070 = vcvt.s32.f32 %v9063
    %v9071 = vmul.f32 %v9070, %v9068
    %v9072 = vxor.u32 %v9071, 2147483648
    %v9073 = vsel %vm8990, %v9072, %v9071
    %v9074 = vsub.s32 4, %v9050
    %v9075 = vsel %vm8990, %v9074, %v9050
    %v9076 = vsel %vm8989, %v7635, %v9073
    %v9077 = vsel %vm8989, 0, %v9075
    %v9078 = vcosq.f32.pop %v9076
    %v9079 = vsinq.f32.pop %v9076
    %vm9080 = vweird.f32 %v7635
    %v9081 = vadd.s32 %v9077, 3
    %v9082 = vand.u32 %v9081, 3
    %vm9083 = vcmp.lt.s32.totalorder %v9082, 2
    %vm9084 = vcmp.eq.s32.totalorder %v9082, 0
    %v9085 = vxor.u32 %v9079, 2147483648
    %v9086 = vsel %vm9084, %v9078, %v9085
    %vm9087 = vcmp.eq.s32.totalorder %v9082, 2
    %v9088 = vxor.u32 %v9078, 2147483648
    %v9089 = vsel %vm9087, %v9088, %v9079
    %v9090 = vsel %vm9083, %v9086, %v9089
    %v9091 = vsel %vm9080, nan, %v9090
    %s9092 = scalar_lea.vmem %s3, 224
    %v9093 = vld [vmem:[%s9092] sm:$0xff]
    %v9094 = vld [vmem:[%s9092 + $0x8] sm:$0xff]
    %v9095 = vld [vmem:[%s9092 + $0x10] sm:$0xff]
    %v9096 = vld [vmem:[%s9092 + $0x18] sm:$0xff]
    %v9097 = vld [vmem:[%s9092 + $0x20] sm:$0xff]
    %v9098 = vld [vmem:[%s9092 + $0x28] sm:$0xff]
    %v9099 = vld [vmem:[%s9092 + $0x30] sm:$0x3]
    %s9100 = scalar_lea.vmem %s4, 224
    %v9101 = vld [vmem:[%s9100] sm:$0xff]
    %v9102 = vld [vmem:[%s9100 + $0x8] sm:$0xff]
    %v9103 = vld [vmem:[%s9100 + $0x10] sm:$0xff]
    %v9104 = vld [vmem:[%s9100 + $0x18] sm:$0xff]
    %v9105 = vld [vmem:[%s9100 + $0x20] sm:$0xff]
    %v9106 = vld [vmem:[%s9100 + $0x28] sm:$0xff]
    %v9107 = vld [vmem:[%s9100 + $0x30] sm:$0x3]
    %v9108 = vpack.c.bf16 %v9094, %v9093
    %v9109 = vpack.c.bf16 %v9096, %v9095
    %v9110 = vpack.c.bf16 %v9098, %v9097
    %v9111 = vpack.c.bf16 %v9099, %v9099
    %v9112 = vunpack.c.l.bf16 %v9108
    %v9113 = vunpack.c.h.bf16 %v9108
    %v9114 = vunpack.c.l.bf16 %v9109
    %v9115 = vunpack.c.h.bf16 %v9109
    %v9116 = vunpack.c.l.bf16 %v9110
    %v9117 = vunpack.c.h.bf16 %v9110
    %v9118 = vunpack.c.l.bf16 %v9111
    %v9119 = vsub.f32 %v9093, %v9112
    %v9120 = vsub.f32 %v9094, %v9113
    %v9121 = vsub.f32 %v9095, %v9114
    %v9122 = vsub.f32 %v9096, %v9115
    %v9123 = vsub.f32 %v9097, %v9116
    %v9124 = vsub.f32 %v9098, %v9117
    %v9125 = vsub.f32 %v9099, %v9118
    %v9126 = vpack.c.bf16 %v9120, %v9119
    %v9127 = vpack.c.bf16 %v9122, %v9121
    %v9128 = vpack.c.bf16 %v9124, %v9123
    %v9129 = vpack.c.bf16 %v9125, %v9125
    %v9130 = vpack.c.bf16 %v7947, %v7739
    %v9131 = vpack.c.bf16 %v8051, %v7843
    %v9132 = vpack.c.bf16 %v8363, %v8155
    %v9133 = vpack.c.bf16 %v8467, %v8259
    %v9134 = vpack.c.bf16 %v8779, %v8571
    %v9135 = vpack.c.bf16 %v8883, %v8675
    %v9136 = vpack.c.bf16 %v8987, %v8987
    %v9137 = vpack.c.bf16 %v9091, %v9091
    %v9138 = vunpack.c.l.bf16 %v9130
    %v9139 = vunpack.c.l.bf16 %v9131
    %v9140 = vunpack.c.h.bf16 %v9130
    %v9141 = vunpack.c.h.bf16 %v9131
    %v9142 = vunpack.c.l.bf16 %v9132
    %v9143 = vunpack.c.l.bf16 %v9133
    %v9144 = vunpack.c.h.bf16 %v9132
    %v9145 = vunpack.c.h.bf16 %v9133
    %v9146 = vunpack.c.l.bf16 %v9134
    %v9147 = vunpack.c.l.bf16 %v9135
    %v9148 = vunpack.c.h.bf16 %v9134
    %v9149 = vunpack.c.h.bf16 %v9135
    %v9150 = vunpack.c.l.bf16 %v9136
    %v9151 = vunpack.c.l.bf16 %v9137
    %v9152 = vsub.f32 %v7739, %v9138
    %v9153 = vsub.f32 %v7843, %v9139
    %v9154 = vsub.f32 %v7947, %v9140
    %v9155 = vsub.f32 %v8051, %v9141
    %v9156 = vsub.f32 %v8155, %v9142
    %v9157 = vsub.f32 %v8259, %v9143
    %v9158 = vsub.f32 %v8363, %v9144
    %v9159 = vsub.f32 %v8467, %v9145
    %v9160 = vsub.f32 %v8571, %v9146
    %v9161 = vsub.f32 %v8675, %v9147
    %v9162 = vsub.f32 %v8779, %v9148
    %v9163 = vsub.f32 %v8883, %v9149
    %v9164 = vsub.f32 %v8987, %v9150
    %v9165 = vsub.f32 %v9091, %v9151
    %v9166 = vpack.c.bf16 %v9154, %v9152
    %v9167 = vpack.c.bf16 %v9155, %v9153
    %v9168 = vpack.c.bf16 %v9158, %v9156
    %v9169 = vpack.c.bf16 %v9159, %v9157
    %v9170 = vpack.c.bf16 %v9162, %v9160
    %v9171 = vpack.c.bf16 %v9163, %v9161
    %v9172 = vpack.c.bf16 %v9164, %v9164
    %v9173 = vpack.c.bf16 %v9165, %v9165
    %v9175 = vsel %vm1772, %v9108, 0
    %v9178 = vsel %vm1772, %v9109, 0
    %v9181 = vsel %vm1772, %v9110, 0
    %v9184 = vsel %vm1772, %v9111, 0
    %v9187 = vsel %vm1785, %v9172, 0
    %v9190 = vsel %vm1785, %v9173, 0
    %9192 = vmatprep.subr.bf16.mxu0 %v9167
    %9193 = vmatpush1.bf16.msra.mxu0 %v9166
    %9194 = vmatprep.subr.bf16.mxu0 %v9169
    %9195 = vmatpush1.bf16.msra.mxu0 %v9168
    %9196 = vmatprep.subr.bf16.mxu0 %v9171
    %9197 = vmatpush1.bf16.msra.mxu0 %v9170
    %9198 = vmatprep.subr.bf16.mxu0 %v9190
    %9199 = vmatpush1.bf16.msra.mxu0 %v9187
    %9200 = vmatprep.subr.bf16.mxu0 0
    %9201 = vmatpush1.bf16.msra.mxu0 0
    %9202 = vmatprep.subr.bf16.mxu0 0
    %9203 = vmatpush1.bf16.msra.mxu0 0
    %9204 = vmatprep.subr.bf16.mxu0 0
    %9205 = vmatpush1.bf16.msra.mxu0 0
    %9206 = vmatprep.subr.bf16.mxu0 0
    %9207 = vmatpush1.bf16.msra.mxu0 0
    %9208 = vmatprep.subr.bf16.mxu0 0
    %9209 = vmatpush1.bf16.msra.mxu0 0
    %9210 = vmatprep.subr.bf16.mxu0 0
    %9211 = vmatpush1.bf16.msra.mxu0 0
    %9212 = vmatprep.subr.bf16.mxu0 0
    %9213 = vmatpush1.bf16.msra.mxu0 0
    %9214 = vmatprep.subr.bf16.mxu0 0
    %9215 = vmatpush1.bf16.msra.mxu0 0
    %9216 = vmatprep.subr.bf16.mxu0 0
    %9217 = vmatpush1.bf16.msra.mxu0 0
    %9218 = vmatprep.subr.bf16.mxu0 0
    %9219 = vmatpush1.bf16.msra.mxu0 0
    %9220 = vmatprep.subr.bf16.mxu0 0
    %9221 = vmatpush1.bf16.msra.mxu0 0
    %9222 = vmatprep.subr.bf16.mxu0 0
    %9223 = vmatpush1.bf16.msra.mxu0 0
    %9224 = vmatprep.mubr.bf16.mxu0 0
    %9225 = vmatmul.mubr.bf16.gmra.mrb[0].mxu0 %v9175
    %v9226 = vpop.f32.mrb[0].mxu0
    %v9227 = vadd.f32 0.0, %v9226
    %v9228 = vpop.f32.mrb[0].mxu0
    %v9229 = vadd.f32 0.0, %v9228
    %v9230 = vpop.f32.mrb[0].mxu0
    %v9231 = vadd.f32 0.0, %v9230
    %v9232 = vpop.f32.mrb[0].mxu0
    %v9233 = vadd.f32 0.0, %v9232
    %9234 = vmatprep.mubr.bf16.mxu0 0
    %9235 = vmatmul.mubr.bf16.gmra.mrb[0].mxu0 %v9178
    %v9236 = vpop.f32.mrb[0].mxu0
    %v9237 = vadd.f32 0.0, %v9236
    %v9238 = vpop.f32.mrb[0].mxu0
    %v9239 = vadd.f32 0.0, %v9238
    %v9240 = vpop.f32.mrb[0].mxu0
    %v9241 = vadd.f32 0.0, %v9240
    %v9242 = vpop.f32.mrb[0].mxu0
    %v9243 = vadd.f32 0.0, %v9242
    %9244 = vmatprep.mubr.bf16.mxu0 0
    %9245 = vmatmul.mubr.bf16.gmra.mrb[0].mxu0 %v9181
    %v9246 = vpop.f32.mrb[0].mxu0
    %v9247 = vadd.f32 0.0, %v9246
    %v9248 = vpop.f32.mrb[0].mxu0
    %v9249 = vadd.f32 0.0, %v9248
    %v9250 = vpop.f32.mrb[0].mxu0
    %v9251 = vadd.f32 0.0, %v9250
    %v9252 = vpop.f32.mrb[0].mxu0
    %v9253 = vadd.f32 0.0, %v9252
    %9254 = vmatprep.mubr.bf16.mxu0 0
    %9255 = vmatmul.mubr.bf16.gmra.mrb[0].mxu0 %v9184
    %v9256 = vpop.f32.mrb[0].mxu0
    %v9257 = vadd.f32 0.0, %v9256
    %v9258 = vpop.f32.mrb[0].mxu0
    %v9259 = vadd.f32 0.0, %v9258
    %v9260 = vpop.f32.mrb[0].mxu0
    %v9261 = vpop.f32.mrb[0].mxu0
    %9262 = vdwg.mxu0
    %v9264 = vsel %vm1785, %v9136, 0
    %v9267 = vsel %vm1785, %v9137, 0
    %9269 = vmatprep.subr.bf16.mxu0 %v9131
    %9270 = vmatpush1.bf16.msra.mxu0 %v9130
    %9271 = vmatprep.subr.bf16.mxu0 %v9133
    %9272 = vmatpush1.bf16.msra.mxu0 %v9132
    %9273 = vmatprep.subr.bf16.mxu0 %v9135
    %9274 = vmatpush1.bf16.msra.mxu0 %v9134
    %9275 = vmatprep.subr.bf16.mxu0 %v9267
    %9276 = vmatpush1.bf16.msra.mxu0 %v9264
    %9277 = vmatprep.subr.bf16.mxu0 0
    %9278 = vmatpush1.bf16.msra.mxu0 0
    %9279 = vmatprep.subr.bf16.mxu0 0
    %9280 = vmatpush1.bf16.msra.mxu0 0
    %9281 = vmatprep.subr.bf16.mxu0 0
    %9282 = vmatpush1.bf16.msra.mxu0 0
    %9283 = vmatprep.subr.bf16.mxu0 0
    %9284 = vmatpush1.bf16.msra.mxu0 0
    %9285 = vmatprep.subr.bf16.mxu0 0
    %9286 = vmatpush1.bf16.msra.mxu0 0
    %9287 = vmatprep.subr.bf16.mxu0 0
    %9288 = vmatpush1.bf16.msra.mxu0 0
    %9289 = vmatprep.subr.bf16.mxu0 0
    %9290 = vmatpush1.bf16.msra.mxu0 0
    %9291 = vmatprep.subr.bf16.mxu0 0
    %9292 = vmatpush1.bf16.msra.mxu0 0
    %9293 = vmatprep.subr.bf16.mxu0 0
    %9294 = vmatpush1.bf16.msra.mxu0 0
    %9295 = vmatprep.subr.bf16.mxu0 0
    %9296 = vmatpush1.bf16.msra.mxu0 0
    %9297 = vmatprep.subr.bf16.mxu0 0
    %9298 = vmatpush1.bf16.msra.mxu0 0
    %9299 = vmatprep.subr.bf16.mxu0 0
    %9300 = vmatpush1.bf16.msra.mxu0 0
    %9301 = vmatprep.mubr.bf16.mxu0 0
    %9302 = vmatmul.mubr.bf16.gmra.mrb[0].mxu0 %v9175
    %v9303 = vpop.f32.mrb[0].mxu0
    %v9304 = vadd.f32 %v9227, %v9303
    %v9305 = vpop.f32.mrb[0].mxu0
    %v9306 = vadd.f32 %v9229, %v9305
    %v9307 = vpop.f32.mrb[0].mxu0
    %v9308 = vadd.f32 %v9231, %v9307
    %v9309 = vpop.f32.mrb[0].mxu0
    %v9310 = vadd.f32 %v9233, %v9309
    %9311 = vmatprep.mubr.bf16.mxu0 0
    %9312 = vmatmul.mubr.bf16.gmra.mrb[0].mxu0 %v9178
    %v9313 = vpop.f32.mrb[0].mxu0
    %v9314 = vadd.f32 %v9237, %v9313
    %v9315 = vpop.f32.mrb[0].mxu0
    %v9316 = vadd.f32 %v9239, %v9315
    %v9317 = vpop.f32.mrb[0].mxu0
    %v9318 = vadd.f32 %v9241, %v9317
    %v9319 = vpop.f32.mrb[0].mxu0
    %v9320 = vadd.f32 %v9243, %v9319
    %9321 = vmatprep.mubr.bf16.mxu0 0
    %9322 = vmatmul.mubr.bf16.gmra.mrb[0].mxu0 %v9181
    %v9323 = vpop.f32.mrb[0].mxu0
    %v9324 = vadd.f32 %v9247, %v9323
    %v9325 = vpop.f32.mrb[0].mxu0
    %v9326 = vadd.f32 %v9249, %v9325
    %v9327 = vpop.f32.mrb[0].mxu0
    %v9328 = vadd.f32 %v9251, %v9327
    %v9329 = vpop.f32.mrb[0].mxu0
    %v9330 = vadd.f32 %v9253, %v9329
    %9331 = vmatprep.mubr.bf16.mxu0 0
    %9332 = vmatmul.mubr.bf16.gmra.mrb[0].mxu0 %v9184
    %v9333 = vpop.f32.mrb[0].mxu0
    %v9334 = vadd.f32 %v9257, %v9333
    %v9335 = vpop.f32.mrb[0].mxu0
    %v9336 = vadd.f32 %v9259, %v9335
    %v9337 = vpop.f32.mrb[0].mxu0
    %v9338 = vpop.f32.mrb[0].mxu0
    %9339 = vdwg.mxu0
    %v9341 = vsel %vm1772, %v9126, 0
    %v9344 = vsel %vm1772, %v9127, 0
    %v9347 = vsel %vm1772, %v9128, 0
    %v9350 = vsel %vm1772, %v9129, 0
    %9352 = vmatprep.subr.bf16.mxu0 %v9131
    %9353 = vmatpush1.bf16.msra.mxu0 %v9130
    %9354 = vmatprep.subr.bf16.mxu0 %v9133
    %9355 = vmatpush1.bf16.msra.mxu0 %v9132
    %9356 = vmatprep.subr.bf16.mxu0 %v9135
    %9357 = vmatpush1.bf16.msra.mxu0 %v9134
    %9358 = vmatprep.subr.bf16.mxu0 %v9267
    %9359 = vmatpush1.bf16.msra.mxu0 %v9264
    %9360 = vmatprep.subr.bf16.mxu0 0
    %9361 = vmatpush1.bf16.msra.mxu0 0
    %9362 = vmatprep.subr.bf16.mxu0 0
    %9363 = vmatpush1.bf16.msra.mxu0 0
    %9364 = vmatprep.subr.bf16.mxu0 0
    %9365 = vmatpush1.bf16.msra.mxu0 0
    %9366 = vmatprep.subr.bf16.mxu0 0
    %9367 = vmatpush1.bf16.msra.mxu0 0
    %9368 = vmatprep.subr.bf16.mxu0 0
    %9369 = vmatpush1.bf16.msra.mxu0 0
    %9370 = vmatprep.subr.bf16.mxu0 0
    %9371 = vmatpush1.bf16.msra.mxu0 0
    %9372 = vmatprep.subr.bf16.mxu0 0
    %9373 = vmatpush1.bf16.msra.mxu0 0
    %9374 = vmatprep.subr.bf16.mxu0 0
    %9375 = vmatpush1.bf16.msra.mxu0 0
    %9376 = vmatprep.subr.bf16.mxu0 0
    %9377 = vmatpush1.bf16.msra.mxu0 0
    %9378 = vmatprep.subr.bf16.mxu0 0
    %9379 = vmatpush1.bf16.msra.mxu0 0
    %9380 = vmatprep.subr.bf16.mxu0 0
    %9381 = vmatpush1.bf16.msra.mxu0 0
    %9382 = vmatprep.subr.bf16.mxu0 0
    %9383 = vmatpush1.bf16.msra.mxu0 0
    %9384 = vmatprep.mubr.bf16.mxu0 0
    %9385 = vmatmul.mubr.bf16.gmra.mrb[0].mxu0 %v9341
    %v9386 = vpop.f32.mrb[0].mxu0
    %v9387 = vadd.f32 0.0, %v9386
    %v9388 = vpop.f32.mrb[0].mxu0
    %v9389 = vadd.f32 0.0, %v9388
    %v9390 = vpop.f32.mrb[0].mxu0
    %v9391 = vadd.f32 0.0, %v9390
    %v9392 = vpop.f32.mrb[0].mxu0
    %v9393 = vadd.f32 0.0, %v9392
    %9394 = vmatprep.mubr.bf16.mxu0 0
    %9395 = vmatmul.mubr.bf16.gmra.mrb[0].mxu0 %v9344
    %v9396 = vpop.f32.mrb[0].mxu0
    %v9397 = vadd.f32 0.0, %v9396
    %v9398 = vpop.f32.mrb[0].mxu0
    %v9399 = vadd.f32 0.0, %v9398
    %v9400 = vpop.f32.mrb[0].mxu0
    %v9401 = vadd.f32 0.0, %v9400
    %v9402 = vpop.f32.mrb[0].mxu0
    %v9403 = vadd.f32 0.0, %v9402
    %9404 = vmatprep.mubr.bf16.mxu0 0
    %9405 = vmatmul.mubr.bf16.gmra.mrb[0].mxu0 %v9347
    %v9406 = vpop.f32.mrb[0].mxu0
    %v9407 = vadd.f32 0.0, %v9406
    %v9408 = vpop.f32.mrb[0].mxu0
    %v9409 = vadd.f32 0.0, %v9408
    %v9410 = vpop.f32.mrb[0].mxu0
    %v9411 = vadd.f32 0.0, %v9410
    %v9412 = vpop.f32.mrb[0].mxu0
    %v9413 = vadd.f32 0.0, %v9412
    %9414 = vmatprep.mubr.bf16.mxu0 0
    %9415 = vmatmul.mubr.bf16.gmra.mrb[0].mxu0 %v9350
    %v9416 = vpop.f32.mrb[0].mxu0
    %v9417 = vadd.f32 0.0, %v9416
    %v9418 = vpop.f32.mrb[0].mxu0
    %v9419 = vadd.f32 0.0, %v9418
    %v9420 = vpop.f32.mrb[0].mxu0
    %v9421 = vpop.f32.mrb[0].mxu0
    %9422 = vdwg.mxu0
    %v9423 = vadd.f32 %v9304, %v9387
    %v9424 = vadd.f32 %v9306, %v9389
    %v9425 = vadd.f32 %v9308, %v9391
    %v9426 = vadd.f32 %v9310, %v9393
    %v9427 = vadd.f32 %v9314, %v9397
    %v9428 = vadd.f32 %v9316, %v9399
    %v9429 = vadd.f32 %v9318, %v9401
    %v9430 = vadd.f32 %v9320, %v9403
    %v9431 = vadd.f32 %v9324, %v9407
    %v9432 = vadd.f32 %v9326, %v9409
    %v9433 = vadd.f32 %v9328, %v9411
    %v9434 = vadd.f32 %v9330, %v9413
    %v9435 = vadd.f32 %v9334, %v9417
    %v9436 = vadd.f32 %v9336, %v9419
    %9438 = vset.pattern.permute.xlu0 0
    %9439 = vperm.xlu0 %9438, %v9101
    %v9440 = vpop.permute.xlu0 %9439
    %9443 = vset.pattern.permute.xlu0 0
    %9444 = vperm.xlu0 %9443, %v9102
    %v9445 = vpop.permute.xlu0 %9444
    %9448 = vset.pattern.permute.xlu0 0
    %9449 = vperm.xlu0 %9448, %v9103
    %v9450 = vpop.permute.xlu0 %9449
    %9453 = vset.pattern.permute.xlu0 0
    %9454 = vperm.xlu0 %9453, %v9104
    %v9455 = vpop.permute.xlu0 %9454
    %9458 = vset.pattern.permute.xlu0 0
    %9459 = vperm.xlu0 %9458, %v9105
    %v9460 = vpop.permute.xlu0 %9459
    %9463 = vset.pattern.permute.xlu0 0
    %9464 = vperm.xlu0 %9463, %v9106
    %v9465 = vpop.permute.xlu0 %9464
    %9468 = vset.pattern.permute.xlu0 0
    %9469 = vperm.xlu0 %9468, %v9107
    %v9470 = vpop.permute.xlu0 %9469
    %v9472 = vadd.f32 %v9423, %v9440
    %v9473 = vadd.f32 %v9424, %v9440
    %v9474 = vadd.f32 %v9425, %v9445
    %v9475 = vadd.f32 %v9426, %v9445
    %v9476 = vadd.f32 %v9427, %v9450
    %v9477 = vadd.f32 %v9428, %v9450
    %v9478 = vadd.f32 %v9429, %v9455
    %v9479 = vadd.f32 %v9430, %v9455
    %v9480 = vadd.f32 %v9431, %v9460
    %v9481 = vadd.f32 %v9432, %v9460
    %v9482 = vadd.f32 %v9433, %v9465
    %v9483 = vadd.f32 %v9434, %v9465
    %v9484 = vadd.f32 %v9435, %v9470
    %v9485 = vadd.f32 %v9436, %v9470
    %v9486 = vand.u32 2147483647, %v9472
    %vm9487 = vcmp.le.f32.partialorder %v9486, 0.7853982
    %vm9488 = vcmp.lt.s32.totalorder %v9472, 0
    %v9489 = vand.u32 %v9472, 2139095040
    %v9490 = vshrl.u32 %v9489, 23
    %v9491 = vsub.s32 %v9490, 127
    %v9492 = vand.u32 2147483647, %v9472
    %v9493 = vand.u32 %v9492, 8388607
    %v9494 = vor.u32 %v9493, 8388608
    %v9495 = vsub.s32 0, %v9494
    %v9496 = vadd.s32 %v9491, 1
    %vm9497 = vcmp.gt.s32.totalorder %v9496, 0
    %v9498 = vsel %vm9497, %v9496, 0
    %v9499 = vshrl.u32 %v9498, 5
    %v9500 = vand.u32 %v9498, 31
    %v9501 = vsub.s32 32, %v9500
    %v9502 = vshrl.u32 683565275, %v9501
    %v9503 = vshll.u32 683565275, %v9500
    %v9504 = vshrl.u32 2475754826, %v9501
    %v9505 = vor.u32 %v9503, %v9504
    %v9506 = vshll.u32 2475754826, %v9500
    %v9507 = vshrl.u32 2131351028, %v9501
    %v9508 = vor.u32 %v9506, %v9507
    %v9509 = vshll.u32 2131351028, %v9500
    %v9510 = vshrl.u32 2102212464, %v9501
    %v9511 = vor.u32 %v9509, %v9510
    %v9512 = vshll.u32 2102212464, %v9500
    %v9513 = vshrl.u32 920167782, %v9501
    %v9514 = vor.u32 %v9512, %v9513
    %v9515 = vshll.u32 920167782, %v9500
    %v9516 = vshrl.u32 1326507024, %v9501
    %v9517 = vor.u32 %v9515, %v9516
    %vm9518 = vcmp.lt.s32.totalorder %v9499, 1
    %vm9519 = vcmp.lt.s32.totalorder %v9499, 2
    %vm9520 = vcmp.lt.s32.totalorder %v9499, 3
    %vm9521 = vcmp.lt.s32.totalorder %v9499, 4
    %v9522 = vsel %vm9518, %v9502, %v9505
    %v9523 = vsel %vm9521, %v9511, 2102212464
    %v9524 = vsel %vm9520, %v9508, %v9523
    %v9525 = vsel %vm9519, %v9522, %v9524
    %v9526 = vsel %vm9518, %v9505, %v9508
    %v9527 = vsel %vm9521, %v9514, 920167782
    %v9528 = vsel %vm9520, %v9511, %v9527
    %v9529 = vsel %vm9519, %v9526, %v9528
    %v9530 = vsel %vm9518, %v9508, %v9511
    %v9531 = vsel %vm9521, %v9517, 1326507024
    %v9532 = vsel %vm9520, %v9514, %v9531
    %v9533 = vsel %vm9519, %v9530, %v9532
    %v9534 = vshll.u32 %v9494, 8
    %v9535 = vmul.u32.u64.compose %v9534, %v9533
    %v9536 = vextract.low.u32 %v9535
    %v9537 = vextract.high.u32 %v9535
    %v9538 = vmul.u32.u64.compose %v9534, %v9529
    %v9539 = vextract.low.u32 %v9538
    %v9540 = vextract.high.u32 %v9538
    %v9541 = vmul.u32 %v9534, %v9525
    %v9542 = vadd.s32 %v9537, %v9539
    %vm9543 = vc.u32 %v9537, %v9539
    %v9544 = vadd.s32 %v9540, 1
    %v9545 = vsel %vm9543, %v9544, %v9540
    %v9546 = vadd.s32 %v9541, %v9545
    %v9547 = vadd.s32 %v9546, 536870912
    %v9548 = vshrl.u32 %v9547, 30
    %v9549 = vshll.u32 %v9548, 30
    %v9550 = vsub.s32 %v9546, %v9549
    %vm9551 = vcmp.lt.s32.totalorder %v9550, 0
    %v9552 = vsub.s32 0, %v9550
    %v9553 = vsel %vm9551, %v9552, %v9550
    %v9554 = vclz %v9553
    %v9555 = vsub.s32 %v9554, 2
    %vm9556 = vcmp.gt.s32.totalorder 0, %v9555
    %v9557 = vsel %vm9556, 0, %v9555
    %v9558 = vsub.s32 32, %v9557
    %v9559 = vshll.u32 %v9550, %v9557
    %v9560 = vshrl.u32 %v9542, %v9558
    %v9561 = vor.u32 %v9559, %v9560
    %v9562 = vsub.s32 4294967266, %v9557
    %v9563 = vadd.s32 %v9562, 127
    %v9564 = vshll.u32 %v9563, 23
    %v9565 = vor.u32 4788187, %v9564
    %v9566 = vand.u32 2147483647, %v9565
    %v9568 = vcvt.s32.f32 %v9561
    %v9569 = vmul.f32 %v9568, %v9566
    %v9570 = vxor.u32 %v9569, 2147483648
    %v9571 = vsel %vm9488, %v9570, %v9569
    %v9572 = vsub.s32 4, %v9548
    %v9573 = vsel %vm9488, %v9572, %v9548
    %v9574 = vsel %vm9487, %v9472, %v9571
    %v9575 = vsel %vm9487, 0, %v9573
    %v9576 = vcosq.f32.pop %v9574
    %v9577 = vsinq.f32.pop %v9574
    %vm9578 = vweird.f32 %v9472
    %v9579 = vadd.s32 %v9575, 3
    %v9580 = vand.u32 %v9579, 3
    %vm9581 = vcmp.lt.s32.totalorder %v9580, 2
    %vm9582 = vcmp.eq.s32.totalorder %v9580, 0
    %v9583 = vxor.u32 %v9577, 2147483648
    %v9584 = vsel %vm9582, %v9576, %v9583
    %vm9585 = vcmp.eq.s32.totalorder %v9580, 2
    %v9586 = vxor.u32 %v9576, 2147483648
    %v9587 = vsel %vm9585, %v9586, %v9577
    %v9588 = vsel %vm9581, %v9584, %v9587
    %v9589 = vsel %vm9578, nan, %v9588
    %v9590 = vand.u32 2147483647, %v9473
    %vm9591 = vcmp.le.f32.partialorder %v9590, 0.7853982
    %vm9592 = vcmp.lt.s32.totalorder %v9473, 0
    %v9593 = vand.u32 %v9473, 2139095040
    %v9594 = vshrl.u32 %v9593, 23
    %v9595 = vsub.s32 %v9594, 127
    %v9596 = vand.u32 2147483647, %v9473
    %v9597 = vand.u32 %v9596, 8388607
    %v9598 = vor.u32 %v9597, 8388608
    %v9599 = vsub.s32 0, %v9598
    %v9600 = vadd.s32 %v9595, 1
    %vm9601 = vcmp.gt.s32.totalorder %v9600, 0
    %v9602 = vsel %vm9601, %v9600, 0
    %v9603 = vshrl.u32 %v9602, 5
    %v9604 = vand.u32 %v9602, 31
    %v9605 = vsub.s32 32, %v9604
    %v9606 = vshrl.u32 683565275, %v9605
    %v9607 = vshll.u32 683565275, %v9604
    %v9608 = vshrl.u32 2475754826, %v9605
    %v9609 = vor.u32 %v9607, %v9608
    %v9610 = vshll.u32 2475754826, %v9604
    %v9611 = vshrl.u32 2131351028, %v9605
    %v9612 = vor.u32 %v9610, %v9611
    %v9613 = vshll.u32 2131351028, %v9604
    %v9614 = vshrl.u32 2102212464, %v9605
    %v9615 = vor.u32 %v9613, %v9614
    %v9616 = vshll.u32 2102212464, %v9604
    %v9617 = vshrl.u32 920167782, %v9605
    %v9618 = vor.u32 %v9616, %v9617
    %v9619 = vshll.u32 920167782, %v9604
    %v9620 = vshrl.u32 1326507024, %v9605
    %v9621 = vor.u32 %v9619, %v9620
    %vm9622 = vcmp.lt.s32.totalorder %v9603, 1
    %vm9623 = vcmp.lt.s32.totalorder %v9603, 2
    %vm9624 = vcmp.lt.s32.totalorder %v9603, 3
    %vm9625 = vcmp.lt.s32.totalorder %v9603, 4
    %v9626 = vsel %vm9622, %v9606, %v9609
    %v9627 = vsel %vm9625, %v9615, 2102212464
    %v9628 = vsel %vm9624, %v9612, %v9627
    %v9629 = vsel %vm9623, %v9626, %v9628
    %v9630 = vsel %vm9622, %v9609, %v9612
    %v9631 = vsel %vm9625, %v9618, 920167782
    %v9632 = vsel %vm9624, %v9615, %v9631
    %v9633 = vsel %vm9623, %v9630, %v9632
    %v9634 = vsel %vm9622, %v9612, %v9615
    %v9635 = vsel %vm9625, %v9621, 1326507024
    %v9636 = vsel %vm9624, %v9618, %v9635
    %v9637 = vsel %vm9623, %v9634, %v9636
    %v9638 = vshll.u32 %v9598, 8
    %v9639 = vmul.u32.u64.compose %v9638, %v9637
    %v9640 = vextract.low.u32 %v9639
    %v9641 = vextract.high.u32 %v9639
    %v9642 = vmul.u32.u64.compose %v9638, %v9633
    %v9643 = vextract.low.u32 %v9642
    %v9644 = vextract.high.u32 %v9642
    %v9645 = vmul.u32 %v9638, %v9629
    %v9646 = vadd.s32 %v9641, %v9643
    %vm9647 = vc.u32 %v9641, %v9643
    %v9648 = vadd.s32 %v9644, 1
    %v9649 = vsel %vm9647, %v9648, %v9644
    %v9650 = vadd.s32 %v9645, %v9649
    %v9651 = vadd.s32 %v9650, 536870912
    %v9652 = vshrl.u32 %v9651, 30
    %v9653 = vshll.u32 %v9652, 30
    %v9654 = vsub.s32 %v9650, %v9653
    %vm9655 = vcmp.lt.s32.totalorder %v9654, 0
    %v9656 = vsub.s32 0, %v9654
    %v9657 = vsel %vm9655, %v9656, %v9654
    %v9658 = vclz %v9657
    %v9659 = vsub.s32 %v9658, 2
    %vm9660 = vcmp.gt.s32.totalorder 0, %v9659
    %v9661 = vsel %vm9660, 0, %v9659
    %v9662 = vsub.s32 32, %v9661
    %v9663 = vshll.u32 %v9654, %v9661
    %v9664 = vshrl.u32 %v9646, %v9662
    %v9665 = vor.u32 %v9663, %v9664
    %v9666 = vsub.s32 4294967266, %v9661
    %v9667 = vadd.s32 %v9666, 127
    %v9668 = vshll.u32 %v9667, 23
    %v9669 = vor.u32 4788187, %v9668
    %v9670 = vand.u32 2147483647, %v9669
    %v9672 = vcvt.s32.f32 %v9665
    %v9673 = vmul.f32 %v9672, %v9670
    %v9674 = vxor.u32 %v9673, 2147483648
    %v9675 = vsel %vm9592, %v9674, %v9673
    %v9676 = vsub.s32 4, %v9652
    %v9677 = vsel %vm9592, %v9676, %v9652
    %v9678 = vsel %vm9591, %v9473, %v9675
    %v9679 = vsel %vm9591, 0, %v9677
    %v9680 = vcosq.f32.pop %v9678
    %v9681 = vsinq.f32.pop %v9678
    %vm9682 = vweird.f32 %v9473
    %v9683 = vadd.s32 %v9679, 3
    %v9684 = vand.u32 %v9683, 3
    %vm9685 = vcmp.lt.s32.totalorder %v9684, 2
    %vm9686 = vcmp.eq.s32.totalorder %v9684, 0
    %v9687 = vxor.u32 %v9681, 2147483648
    %v9688 = vsel %vm9686, %v9680, %v9687
    %vm9689 = vcmp.eq.s32.totalorder %v9684, 2
    %v9690 = vxor.u32 %v9680, 2147483648
    %v9691 = vsel %vm9689, %v9690, %v9681
    %v9692 = vsel %vm9685, %v9688, %v9691
    %v9693 = vsel %vm9682, nan, %v9692
    %v9694 = vand.u32 2147483647, %v9474
    %vm9695 = vcmp.le.f32.partialorder %v9694, 0.7853982
    %vm9696 = vcmp.lt.s32.totalorder %v9474, 0
    %v9697 = vand.u32 %v9474, 2139095040
    %v9698 = vshrl.u32 %v9697, 23
    %v9699 = vsub.s32 %v9698, 127
    %v9700 = vand.u32 2147483647, %v9474
    %v9701 = vand.u32 %v9700, 8388607
    %v9702 = vor.u32 %v9701, 8388608
    %v9703 = vsub.s32 0, %v9702
    %v9704 = vadd.s32 %v9699, 1
    %vm9705 = vcmp.gt.s32.totalorder %v9704, 0
    %v9706 = vsel %vm9705, %v9704, 0
    %v9707 = vshrl.u32 %v9706, 5
    %v9708 = vand.u32 %v9706, 31
    %v9709 = vsub.s32 32, %v9708
    %v9710 = vshrl.u32 683565275, %v9709
    %v9711 = vshll.u32 683565275, %v9708
    %v9712 = vshrl.u32 2475754826, %v9709
    %v9713 = vor.u32 %v9711, %v9712
    %v9714 = vshll.u32 2475754826, %v9708
    %v9715 = vshrl.u32 2131351028, %v9709
    %v9716 = vor.u32 %v9714, %v9715
    %v9717 = vshll.u32 2131351028, %v9708
    %v9718 = vshrl.u32 2102212464, %v9709
    %v9719 = vor.u32 %v9717, %v9718
    %v9720 = vshll.u32 2102212464, %v9708
    %v9721 = vshrl.u32 920167782, %v9709
    %v9722 = vor.u32 %v9720, %v9721
    %v9723 = vshll.u32 920167782, %v9708
    %v9724 = vshrl.u32 1326507024, %v9709
    %v9725 = vor.u32 %v9723, %v9724
    %vm9726 = vcmp.lt.s32.totalorder %v9707, 1
    %vm9727 = vcmp.lt.s32.totalorder %v9707, 2
    %vm9728 = vcmp.lt.s32.totalorder %v9707, 3
    %vm9729 = vcmp.lt.s32.totalorder %v9707, 4
    %v9730 = vsel %vm9726, %v9710, %v9713
    %v9731 = vsel %vm9729, %v9719, 2102212464
    %v9732 = vsel %vm9728, %v9716, %v9731
    %v9733 = vsel %vm9727, %v9730, %v9732
    %v9734 = vsel %vm9726, %v9713, %v9716
    %v9735 = vsel %vm9729, %v9722, 920167782
    %v9736 = vsel %vm9728, %v9719, %v9735
    %v9737 = vsel %vm9727, %v9734, %v9736
    %v9738 = vsel %vm9726, %v9716, %v9719
    %v9739 = vsel %vm9729, %v9725, 1326507024
    %v9740 = vsel %vm9728, %v9722, %v9739
    %v9741 = vsel %vm9727, %v9738, %v9740
    %v9742 = vshll.u32 %v9702, 8
    %v9743 = vmul.u32.u64.compose %v9742, %v9741
    %v9744 = vextract.low.u32 %v9743
    %v9745 = vextract.high.u32 %v9743
    %v9746 = vmul.u32.u64.compose %v9742, %v9737
    %v9747 = vextract.low.u32 %v9746
    %v9748 = vextract.high.u32 %v9746
    %v9749 = vmul.u32 %v9742, %v9733
    %v9750 = vadd.s32 %v9745, %v9747
    %vm9751 = vc.u32 %v9745, %v9747
    %v9752 = vadd.s32 %v9748, 1
    %v9753 = vsel %vm9751, %v9752, %v9748
    %v9754 = vadd.s32 %v9749, %v9753
    %v9755 = vadd.s32 %v9754, 536870912
    %v9756 = vshrl.u32 %v9755, 30
    %v9757 = vshll.u32 %v9756, 30
    %v9758 = vsub.s32 %v9754, %v9757
    %vm9759 = vcmp.lt.s32.totalorder %v9758, 0
    %v9760 = vsub.s32 0, %v9758
    %v9761 = vsel %vm9759, %v9760, %v9758
    %v9762 = vclz %v9761
    %v9763 = vsub.s32 %v9762, 2
    %vm9764 = vcmp.gt.s32.totalorder 0, %v9763
    %v9765 = vsel %vm9764, 0, %v9763
    %v9766 = vsub.s32 32, %v9765
    %v9767 = vshll.u32 %v9758, %v9765
    %v9768 = vshrl.u32 %v9750, %v9766
    %v9769 = vor.u32 %v9767, %v9768
    %v9770 = vsub.s32 4294967266, %v9765
    %v9771 = vadd.s32 %v9770, 127
    %v9772 = vshll.u32 %v9771, 23
    %v9773 = vor.u32 4788187, %v9772
    %v9774 = vand.u32 2147483647, %v9773
    %v9776 = vcvt.s32.f32 %v9769
    %v9777 = vmul.f32 %v9776, %v9774
    %v9778 = vxor.u32 %v9777, 2147483648
    %v9779 = vsel %vm9696, %v9778, %v9777
    %v9780 = vsub.s32 4, %v9756
    %v9781 = vsel %vm9696, %v9780, %v9756
    %v9782 = vsel %vm9695, %v9474, %v9779
    %v9783 = vsel %vm9695, 0, %v9781
    %v9784 = vcosq.f32.pop %v9782
    %v9785 = vsinq.f32.pop %v9782
    %vm9786 = vweird.f32 %v9474
    %v9787 = vadd.s32 %v9783, 3
    %v9788 = vand.u32 %v9787, 3
    %vm9789 = vcmp.lt.s32.totalorder %v9788, 2
    %vm9790 = vcmp.eq.s32.totalorder %v9788, 0
    %v9791 = vxor.u32 %v9785, 2147483648
    %v9792 = vsel %vm9790, %v9784, %v9791
    %vm9793 = vcmp.eq.s32.totalorder %v9788, 2
    %v9794 = vxor.u32 %v9784, 2147483648
    %v9795 = vsel %vm9793, %v9794, %v9785
    %v9796 = vsel %vm9789, %v9792, %v9795
    %v9797 = vsel %vm9786, nan, %v9796
    %v9798 = vand.u32 2147483647, %v9475
    %vm9799 = vcmp.le.f32.partialorder %v9798, 0.7853982
    %vm9800 = vcmp.lt.s32.totalorder %v9475, 0
    %v9801 = vand.u32 %v9475, 2139095040
    %v9802 = vshrl.u32 %v9801, 23
    %v9803 = vsub.s32 %v9802, 127
    %v9804 = vand.u32 2147483647, %v9475
    %v9805 = vand.u32 %v9804, 8388607
    %v9806 = vor.u32 %v9805, 8388608
    %v9807 = vsub.s32 0, %v9806
    %v9808 = vadd.s32 %v9803, 1
    %vm9809 = vcmp.gt.s32.totalorder %v9808, 0
    %v9810 = vsel %vm9809, %v9808, 0
    %v9811 = vshrl.u32 %v9810, 5
    %v9812 = vand.u32 %v9810, 31
    %v9813 = vsub.s32 32, %v9812
    %v9814 = vshrl.u32 683565275, %v9813
    %v9815 = vshll.u32 683565275, %v9812
    %v9816 = vshrl.u32 2475754826, %v9813
    %v9817 = vor.u32 %v9815, %v9816
    %v9818 = vshll.u32 2475754826, %v9812
    %v9819 = vshrl.u32 2131351028, %v9813
    %v9820 = vor.u32 %v9818, %v9819
    %v9821 = vshll.u32 2131351028, %v9812
    %v9822 = vshrl.u32 2102212464, %v9813
    %v9823 = vor.u32 %v9821, %v9822
    %v9824 = vshll.u32 2102212464, %v9812
    %v9825 = vshrl.u32 920167782, %v9813
    %v9826 = vor.u32 %v9824, %v9825
    %v9827 = vshll.u32 920167782, %v9812
    %v9828 = vshrl.u32 1326507024, %v9813
    %v9829 = vor.u32 %v9827, %v9828
    %vm9830 = vcmp.lt.s32.totalorder %v9811, 1
    %vm9831 = vcmp.lt.s32.totalorder %v9811, 2
    %vm9832 = vcmp.lt.s32.totalorder %v9811, 3
    %vm9833 = vcmp.lt.s32.totalorder %v9811, 4
    %v9834 = vsel %vm9830, %v9814, %v9817
    %v9835 = vsel %vm9833, %v9823, 2102212464
    %v9836 = vsel %vm9832, %v9820, %v9835
    %v9837 = vsel %vm9831, %v9834, %v9836
    %v9838 = vsel %vm9830, %v9817, %v9820
    %v9839 = vsel %vm9833, %v9826, 920167782
    %v9840 = vsel %vm9832, %v9823, %v9839
    %v9841 = vsel %vm9831, %v9838, %v9840
    %v9842 = vsel %vm9830, %v9820, %v9823
    %v9843 = vsel %vm9833, %v9829, 1326507024
    %v9844 = vsel %vm9832, %v9826, %v9843
    %v9845 = vsel %vm9831, %v9842, %v9844
    %v9846 = vshll.u32 %v9806, 8
    %v9847 = vmul.u32.u64.compose %v9846, %v9845
    %v9848 = vextract.low.u32 %v9847
    %v9849 = vextract.high.u32 %v9847
    %v9850 = vmul.u32.u64.compose %v9846, %v9841
    %v9851 = vextract.low.u32 %v9850
    %v9852 = vextract.high.u32 %v9850
    %v9853 = vmul.u32 %v9846, %v9837
    %v9854 = vadd.s32 %v9849, %v9851
    %vm9855 = vc.u32 %v9849, %v9851
    %v9856 = vadd.s32 %v9852, 1
    %v9857 = vsel %vm9855, %v9856, %v9852
    %v9858 = vadd.s32 %v9853, %v9857
    %v9859 = vadd.s32 %v9858, 536870912
    %v9860 = vshrl.u32 %v9859, 30
    %v9861 = vshll.u32 %v9860, 30
    %v9862 = vsub.s32 %v9858, %v9861
    %vm9863 = vcmp.lt.s32.totalorder %v9862, 0
    %v9864 = vsub.s32 0, %v9862
    %v9865 = vsel %vm9863, %v9864, %v9862
    %v9866 = vclz %v9865
    %v9867 = vsub.s32 %v9866, 2
    %vm9868 = vcmp.gt.s32.totalorder 0, %v9867
    %v9869 = vsel %vm9868, 0, %v9867
    %v9870 = vsub.s32 32, %v9869
    %v9871 = vshll.u32 %v9862, %v9869
    %v9872 = vshrl.u32 %v9854, %v9870
    %v9873 = vor.u32 %v9871, %v9872
    %v9874 = vsub.s32 4294967266, %v9869
    %v9875 = vadd.s32 %v9874, 127
    %v9876 = vshll.u32 %v9875, 23
    %v9877 = vor.u32 4788187, %v9876
    %v9878 = vand.u32 2147483647, %v9877
    %v9880 = vcvt.s32.f32 %v9873
    %v9881 = vmul.f32 %v9880, %v9878
    %v9882 = vxor.u32 %v9881, 2147483648
    %v9883 = vsel %vm9800, %v9882, %v9881
    %v9884 = vsub.s32 4, %v9860
    %v9885 = vsel %vm9800, %v9884, %v9860
    %v9886 = vsel %vm9799, %v9475, %v9883
    %v9887 = vsel %vm9799, 0, %v9885
    %v9888 = vcosq.f32.pop %v9886
    %v9889 = vsinq.f32.pop %v9886
    %vm9890 = vweird.f32 %v9475
    %v9891 = vadd.s32 %v9887, 3
    %v9892 = vand.u32 %v9891, 3
    %vm9893 = vcmp.lt.s32.totalorder %v9892, 2
    %vm9894 = vcmp.eq.s32.totalorder %v9892, 0
    %v9895 = vxor.u32 %v9889, 2147483648
    %v9896 = vsel %vm9894, %v9888, %v9895
    %vm9897 = vcmp.eq.s32.totalorder %v9892, 2
    %v9898 = vxor.u32 %v9888, 2147483648
    %v9899 = vsel %vm9897, %v9898, %v9889
    %v9900 = vsel %vm9893, %v9896, %v9899
    %v9901 = vsel %vm9890, nan, %v9900
    %v9902 = vand.u32 2147483647, %v9476
    %vm9903 = vcmp.le.f32.partialorder %v9902, 0.7853982
    %vm9904 = vcmp.lt.s32.totalorder %v9476, 0
    %v9905 = vand.u32 %v9476, 2139095040
    %v9906 = vshrl.u32 %v9905, 23
    %v9907 = vsub.s32 %v9906, 127
    %v9908 = vand.u32 2147483647, %v9476
    %v9909 = vand.u32 %v9908, 8388607
    %v9910 = vor.u32 %v9909, 8388608
    %v9911 = vsub.s32 0, %v9910
    %v9912 = vadd.s32 %v9907, 1
    %vm9913 = vcmp.gt.s32.totalorder %v9912, 0
    %v9914 = vsel %vm9913, %v9912, 0
    %v9915 = vshrl.u32 %v9914, 5
    %v9916 = vand.u32 %v9914, 31
    %v9917 = vsub.s32 32, %v9916
    %v9918 = vshrl.u32 683565275, %v9917
    %v9919 = vshll.u32 683565275, %v9916
    %v9920 = vshrl.u32 2475754826, %v9917
    %v9921 = vor.u32 %v9919, %v9920
    %v9922 = vshll.u32 2475754826, %v9916
    %v9923 = vshrl.u32 2131351028, %v9917
    %v9924 = vor.u32 %v9922, %v9923
    %v9925 = vshll.u32 2131351028, %v9916
    %v9926 = vshrl.u32 2102212464, %v9917
    %v9927 = vor.u32 %v9925, %v9926
    %v9928 = vshll.u32 2102212464, %v9916
    %v9929 = vshrl.u32 920167782, %v9917
    %v9930 = vor.u32 %v9928, %v9929
    %v9931 = vshll.u32 920167782, %v9916
    %v9932 = vshrl.u32 1326507024, %v9917
    %v9933 = vor.u32 %v9931, %v9932
    %vm9934 = vcmp.lt.s32.totalorder %v9915, 1
    %vm9935 = vcmp.lt.s32.totalorder %v9915, 2
    %vm9936 = vcmp.lt.s32.totalorder %v9915, 3
    %vm9937 = vcmp.lt.s32.totalorder %v9915, 4
    %v9938 = vsel %vm9934, %v9918, %v9921
    %v9939 = vsel %vm9937, %v9927, 2102212464
    %v9940 = vsel %vm9936, %v9924, %v9939
    %v9941 = vsel %vm9935, %v9938, %v9940
    %v9942 = vsel %vm9934, %v9921, %v9924
    %v9943 = vsel %vm9937, %v9930, 920167782
    %v9944 = vsel %vm9936, %v9927, %v9943
    %v9945 = vsel %vm9935, %v9942, %v9944
    %v9946 = vsel %vm9934, %v9924, %v9927
    %v9947 = vsel %vm9937, %v9933, 1326507024
    %v9948 = vsel %vm9936, %v9930, %v9947
    %v9949 = vsel %vm9935, %v9946, %v9948
    %v9950 = vshll.u32 %v9910, 8
    %v9951 = vmul.u32.u64.compose %v9950, %v9949
    %v9952 = vextract.low.u32 %v9951
    %v9953 = vextract.high.u32 %v9951
    %v9954 = vmul.u32.u64.compose %v9950, %v9945
    %v9955 = vextract.low.u32 %v9954
    %v9956 = vextract.high.u32 %v9954
    %v9957 = vmul.u32 %v9950, %v9941
    %v9958 = vadd.s32 %v9953, %v9955
    %vm9959 = vc.u32 %v9953, %v9955
    %v9960 = vadd.s32 %v9956, 1
    %v9961 = vsel %vm9959, %v9960, %v9956
    %v9962 = vadd.s32 %v9957, %v9961
    %v9963 = vadd.s32 %v9962, 536870912
    %v9964 = vshrl.u32 %v9963, 30
    %v9965 = vshll.u32 %v9964, 30
    %v9966 = vsub.s32 %v9962, %v9965
    %vm9967 = vcmp.lt.s32.totalorder %v9966, 0
    %v9968 = vsub.s32 0, %v9966
    %v9969 = vsel %vm9967, %v9968, %v9966
    %v9970 = vclz %v9969
    %v9971 = vsub.s32 %v9970, 2
    %vm9972 = vcmp.gt.s32.totalorder 0, %v9971
    %v9973 = vsel %vm9972, 0, %v9971
    %v9974 = vsub.s32 32, %v9973
    %v9975 = vshll.u32 %v9966, %v9973
    %v9976 = vshrl.u32 %v9958, %v9974
    %v9977 = vor.u32 %v9975, %v9976
    %v9978 = vsub.s32 4294967266, %v9973
    %v9979 = vadd.s32 %v9978, 127
    %v9980 = vshll.u32 %v9979, 23
    %v9981 = vor.u32 4788187, %v9980
    %v9982 = vand.u32 2147483647, %v9981
    %v9984 = vcvt.s32.f32 %v9977
    %v9985 = vmul.f32 %v9984, %v9982
    %v9986 = vxor.u32 %v9985, 2147483648
    %v9987 = vsel %vm9904, %v9986, %v9985
    %v9988 = vsub.s32 4, %v9964
    %v9989 = vsel %vm9904, %v9988, %v9964
    %v9990 = vsel %vm9903, %v9476, %v9987
    %v9991 = vsel %vm9903, 0, %v9989
    %v9992 = vcosq.f32.pop %v9990
    %v9993 = vsinq.f32.pop %v9990
    %vm9994 = vweird.f32 %v9476
    %v9995 = vadd.s32 %v9991, 3
    %v9996 = vand.u32 %v9995, 3
    %vm9997 = vcmp.lt.s32.totalorder %v9996, 2
    %vm9998 = vcmp.eq.s32.totalorder %v9996, 0
    %v9999 = vxor.u32 %v9993, 2147483648
    %v10000 = vsel %vm9998, %v9992, %v9999
    %vm10001 = vcmp.eq.s32.totalorder %v9996, 2
    %v10002 = vxor.u32 %v9992, 2147483648
    %v10003 = vsel %vm10001, %v10002, %v9993
    %v10004 = vsel %vm9997, %v10000, %v10003
    %v10005 = vsel %vm9994, nan, %v10004
    %v10006 = vand.u32 2147483647, %v9477
    %vm10007 = vcmp.le.f32.partialorder %v10006, 0.7853982
    %vm10008 = vcmp.lt.s32.totalorder %v9477, 0
    %v10009 = vand.u32 %v9477, 2139095040
    %v10010 = vshrl.u32 %v10009, 23
    %v10011 = vsub.s32 %v10010, 127
    %v10012 = vand.u32 2147483647, %v9477
    %v10013 = vand.u32 %v10012, 8388607
    %v10014 = vor.u32 %v10013, 8388608
    %v10015 = vsub.s32 0, %v10014
    %v10016 = vadd.s32 %v10011, 1
    %vm10017 = vcmp.gt.s32.totalorder %v10016, 0
    %v10018 = vsel %vm10017, %v10016, 0
    %v10019 = vshrl.u32 %v10018, 5
    %v10020 = vand.u32 %v10018, 31
    %v10021 = vsub.s32 32, %v10020
    %v10022 = vshrl.u32 683565275, %v10021
    %v10023 = vshll.u32 683565275, %v10020
    %v10024 = vshrl.u32 2475754826, %v10021
    %v10025 = vor.u32 %v10023, %v10024
    %v10026 = vshll.u32 2475754826, %v10020
    %v10027 = vshrl.u32 2131351028, %v10021
    %v10028 = vor.u32 %v10026, %v10027
    %v10029 = vshll.u32 2131351028, %v10020
    %v10030 = vshrl.u32 2102212464, %v10021
    %v10031 = vor.u32 %v10029, %v10030
    %v10032 = vshll.u32 2102212464, %v10020
    %v10033 = vshrl.u32 920167782, %v10021
    %v10034 = vor.u32 %v10032, %v10033
    %v10035 = vshll.u32 920167782, %v10020
    %v10036 = vshrl.u32 1326507024, %v10021
    %v10037 = vor.u32 %v10035, %v10036
    %vm10038 = vcmp.lt.s32.totalorder %v10019, 1
    %vm10039 = vcmp.lt.s32.totalorder %v10019, 2
    %vm10040 = vcmp.lt.s32.totalorder %v10019, 3
    %vm10041 = vcmp.lt.s32.totalorder %v10019, 4
    %v10042 = vsel %vm10038, %v10022, %v10025
    %v10043 = vsel %vm10041, %v10031, 2102212464
    %v10044 = vsel %vm10040, %v10028, %v10043
    %v10045 = vsel %vm10039, %v10042, %v10044
    %v10046 = vsel %vm10038, %v10025, %v10028
    %v10047 = vsel %vm10041, %v10034, 920167782
    %v10048 = vsel %vm10040, %v10031, %v10047
    %v10049 = vsel %vm10039, %v10046, %v10048
    %v10050 = vsel %vm10038, %v10028, %v10031
    %v10051 = vsel %vm10041, %v10037, 1326507024
    %v10052 = vsel %vm10040, %v10034, %v10051
    %v10053 = vsel %vm10039, %v10050, %v10052
    %v10054 = vshll.u32 %v10014, 8
    %v10055 = vmul.u32.u64.compose %v10054, %v10053
    %v10056 = vextract.low.u32 %v10055
    %v10057 = vextract.high.u32 %v10055
    %v10058 = vmul.u32.u64.compose %v10054, %v10049
    %v10059 = vextract.low.u32 %v10058
    %v10060 = vextract.high.u32 %v10058
    %v10061 = vmul.u32 %v10054, %v10045
    %v10062 = vadd.s32 %v10057, %v10059
    %vm10063 = vc.u32 %v10057, %v10059
    %v10064 = vadd.s32 %v10060, 1
    %v10065 = vsel %vm10063, %v10064, %v10060
    %v10066 = vadd.s32 %v10061, %v10065
    %v10067 = vadd.s32 %v10066, 536870912
    %v10068 = vshrl.u32 %v10067, 30
    %v10069 = vshll.u32 %v10068, 30
    %v10070 = vsub.s32 %v10066, %v10069
    %vm10071 = vcmp.lt.s32.totalorder %v10070, 0
    %v10072 = vsub.s32 0, %v10070
    %v10073 = vsel %vm10071, %v10072, %v10070
    %v10074 = vclz %v10073
    %v10075 = vsub.s32 %v10074, 2
    %vm10076 = vcmp.gt.s32.totalorder 0, %v10075
    %v10077 = vsel %vm10076, 0, %v10075
    %v10078 = vsub.s32 32, %v10077
    %v10079 = vshll.u32 %v10070, %v10077
    %v10080 = vshrl.u32 %v10062, %v10078
    %v10081 = vor.u32 %v10079, %v10080
    %v10082 = vsub.s32 4294967266, %v10077
    %v10083 = vadd.s32 %v10082, 127
    %v10084 = vshll.u32 %v10083, 23
    %v10085 = vor.u32 4788187, %v10084
    %v10086 = vand.u32 2147483647, %v10085
    %v10088 = vcvt.s32.f32 %v10081
    %v10089 = vmul.f32 %v10088, %v10086
    %v10090 = vxor.u32 %v10089, 2147483648
    %v10091 = vsel %vm10008, %v10090, %v10089
    %v10092 = vsub.s32 4, %v10068
    %v10093 = vsel %vm10008, %v10092, %v10068
    %v10094 = vsel %vm10007, %v9477, %v10091
    %v10095 = vsel %vm10007, 0, %v10093
    %v10096 = vcosq.f32.pop %v10094
    %v10097 = vsinq.f32.pop %v10094
    %vm10098 = vweird.f32 %v9477
    %v10099 = vadd.s32 %v10095, 3
    %v10100 = vand.u32 %v10099, 3
    %vm10101 = vcmp.lt.s32.totalorder %v10100, 2
    %vm10102 = vcmp.eq.s32.totalorder %v10100, 0
    %v10103 = vxor.u32 %v10097, 2147483648
    %v10104 = vsel %vm10102, %v10096, %v10103
    %vm10105 = vcmp.eq.s32.totalorder %v10100, 2
    %v10106 = vxor.u32 %v10096, 2147483648
    %v10107 = vsel %vm10105, %v10106, %v10097
    %v10108 = vsel %vm10101, %v10104, %v10107
    %v10109 = vsel %vm10098, nan, %v10108
    %v10110 = vand.u32 2147483647, %v9478
    %vm10111 = vcmp.le.f32.partialorder %v10110, 0.7853982
    %vm10112 = vcmp.lt.s32.totalorder %v9478, 0
    %v10113 = vand.u32 %v9478, 2139095040
    %v10114 = vshrl.u32 %v10113, 23
    %v10115 = vsub.s32 %v10114, 127
    %v10116 = vand.u32 2147483647, %v9478
    %v10117 = vand.u32 %v10116, 8388607
    %v10118 = vor.u32 %v10117, 8388608
    %v10119 = vsub.s32 0, %v10118
    %v10120 = vadd.s32 %v10115, 1
    %vm10121 = vcmp.gt.s32.totalorder %v10120, 0
    %v10122 = vsel %vm10121, %v10120, 0
    %v10123 = vshrl.u32 %v10122, 5
    %v10124 = vand.u32 %v10122, 31
    %v10125 = vsub.s32 32, %v10124
    %v10126 = vshrl.u32 683565275, %v10125
    %v10127 = vshll.u32 683565275, %v10124
    %v10128 = vshrl.u32 2475754826, %v10125
    %v10129 = vor.u32 %v10127, %v10128
    %v10130 = vshll.u32 2475754826, %v10124
    %v10131 = vshrl.u32 2131351028, %v10125
    %v10132 = vor.u32 %v10130, %v10131
    %v10133 = vshll.u32 2131351028, %v10124
    %v10134 = vshrl.u32 2102212464, %v10125
    %v10135 = vor.u32 %v10133, %v10134
    %v10136 = vshll.u32 2102212464, %v10124
    %v10137 = vshrl.u32 920167782, %v10125
    %v10138 = vor.u32 %v10136, %v10137
    %v10139 = vshll.u32 920167782, %v10124
    %v10140 = vshrl.u32 1326507024, %v10125
    %v10141 = vor.u32 %v10139, %v10140
    %vm10142 = vcmp.lt.s32.totalorder %v10123, 1
    %vm10143 = vcmp.lt.s32.totalorder %v10123, 2
    %vm10144 = vcmp.lt.s32.totalorder %v10123, 3
    %vm10145 = vcmp.lt.s32.totalorder %v10123, 4
    %v10146 = vsel %vm10142, %v10126, %v10129
    %v10147 = vsel %vm10145, %v10135, 2102212464
    %v10148 = vsel %vm10144, %v10132, %v10147
    %v10149 = vsel %vm10143, %v10146, %v10148
    %v10150 = vsel %vm10142, %v10129, %v10132
    %v10151 = vsel %vm10145, %v10138, 920167782
    %v10152 = vsel %vm10144, %v10135, %v10151
    %v10153 = vsel %vm10143, %v10150, %v10152
    %v10154 = vsel %vm10142, %v10132, %v10135
    %v10155 = vsel %vm10145, %v10141, 1326507024
    %v10156 = vsel %vm10144, %v10138, %v10155
    %v10157 = vsel %vm10143, %v10154, %v10156
    %v10158 = vshll.u32 %v10118, 8
    %v10159 = vmul.u32.u64.compose %v10158, %v10157
    %v10160 = vextract.low.u32 %v10159
    %v10161 = vextract.high.u32 %v10159
    %v10162 = vmul.u32.u64.compose %v10158, %v10153
    %v10163 = vextract.low.u32 %v10162
    %v10164 = vextract.high.u32 %v10162
    %v10165 = vmul.u32 %v10158, %v10149
    %v10166 = vadd.s32 %v10161, %v10163
    %vm10167 = vc.u32 %v10161, %v10163
    %v10168 = vadd.s32 %v10164, 1
    %v10169 = vsel %vm10167, %v10168, %v10164
    %v10170 = vadd.s32 %v10165, %v10169
    %v10171 = vadd.s32 %v10170, 536870912
    %v10172 = vshrl.u32 %v10171, 30
    %v10173 = vshll.u32 %v10172, 30
    %v10174 = vsub.s32 %v10170, %v10173
    %vm10175 = vcmp.lt.s32.totalorder %v10174, 0
    %v10176 = vsub.s32 0, %v10174
    %v10177 = vsel %vm10175, %v10176, %v10174
    %v10178 = vclz %v10177
    %v10179 = vsub.s32 %v10178, 2
    %vm10180 = vcmp.gt.s32.totalorder 0, %v10179
    %v10181 = vsel %vm10180, 0, %v10179
    %v10182 = vsub.s32 32, %v10181
    %v10183 = vshll.u32 %v10174, %v10181
    %v10184 = vshrl.u32 %v10166, %v10182
    %v10185 = vor.u32 %v10183, %v10184
    %v10186 = vsub.s32 4294967266, %v10181
    %v10187 = vadd.s32 %v10186, 127
    %v10188 = vshll.u32 %v10187, 23
    %v10189 = vor.u32 4788187, %v10188
    %v10190 = vand.u32 2147483647, %v10189
    %v10192 = vcvt.s32.f32 %v10185
    %v10193 = vmul.f32 %v10192, %v10190
    %v10194 = vxor.u32 %v10193, 2147483648
    %v10195 = vsel %vm10112, %v10194, %v10193
    %v10196 = vsub.s32 4, %v10172
    %v10197 = vsel %vm10112, %v10196, %v10172
    %v10198 = vsel %vm10111, %v9478, %v10195
    %v10199 = vsel %vm10111, 0, %v10197
    %v10200 = vcosq.f32.pop %v10198
    %v10201 = vsinq.f32.pop %v10198
    %vm10202 = vweird.f32 %v9478
    %v10203 = vadd.s32 %v10199, 3
    %v10204 = vand.u32 %v10203, 3
    %vm10205 = vcmp.lt.s32.totalorder %v10204, 2
    %vm10206 = vcmp.eq.s32.totalorder %v10204, 0
    %v10207 = vxor.u32 %v10201, 2147483648
    %v10208 = vsel %vm10206, %v10200, %v10207
    %vm10209 = vcmp.eq.s32.totalorder %v10204, 2
    %v10210 = vxor.u32 %v10200, 2147483648
    %v10211 = vsel %vm10209, %v10210, %v10201
    %v10212 = vsel %vm10205, %v10208, %v10211
    %v10213 = vsel %vm10202, nan, %v10212
    %v10214 = vand.u32 2147483647, %v9479
    %vm10215 = vcmp.le.f32.partialorder %v10214, 0.7853982
    %vm10216 = vcmp.lt.s32.totalorder %v9479, 0
    %v10217 = vand.u32 %v9479, 2139095040
    %v10218 = vshrl.u32 %v10217, 23
    %v10219 = vsub.s32 %v10218, 127
    %v10220 = vand.u32 2147483647, %v9479
    %v10221 = vand.u32 %v10220, 8388607
    %v10222 = vor.u32 %v10221, 8388608
    %v10223 = vsub.s32 0, %v10222
    %v10224 = vadd.s32 %v10219, 1
    %vm10225 = vcmp.gt.s32.totalorder %v10224, 0
    %v10226 = vsel %vm10225, %v10224, 0
    %v10227 = vshrl.u32 %v10226, 5
    %v10228 = vand.u32 %v10226, 31
    %v10229 = vsub.s32 32, %v10228
    %v10230 = vshrl.u32 683565275, %v10229
    %v10231 = vshll.u32 683565275, %v10228
    %v10232 = vshrl.u32 2475754826, %v10229
    %v10233 = vor.u32 %v10231, %v10232
    %v10234 = vshll.u32 2475754826, %v10228
    %v10235 = vshrl.u32 2131351028, %v10229
    %v10236 = vor.u32 %v10234, %v10235
    %v10237 = vshll.u32 2131351028, %v10228
    %v10238 = vshrl.u32 2102212464, %v10229
    %v10239 = vor.u32 %v10237, %v10238
    %v10240 = vshll.u32 2102212464, %v10228
    %v10241 = vshrl.u32 920167782, %v10229
    %v10242 = vor.u32 %v10240, %v10241
    %v10243 = vshll.u32 920167782, %v10228
    %v10244 = vshrl.u32 1326507024, %v10229
    %v10245 = vor.u32 %v10243, %v10244
    %vm10246 = vcmp.lt.s32.totalorder %v10227, 1
    %vm10247 = vcmp.lt.s32.totalorder %v10227, 2
    %vm10248 = vcmp.lt.s32.totalorder %v10227, 3
    %vm10249 = vcmp.lt.s32.totalorder %v10227, 4
    %v10250 = vsel %vm10246, %v10230, %v10233
    %v10251 = vsel %vm10249, %v10239, 2102212464
    %v10252 = vsel %vm10248, %v10236, %v10251
    %v10253 = vsel %vm10247, %v10250, %v10252
    %v10254 = vsel %vm10246, %v10233, %v10236
    %v10255 = vsel %vm10249, %v10242, 920167782
    %v10256 = vsel %vm10248, %v10239, %v10255
    %v10257 = vsel %vm10247, %v10254, %v10256
    %v10258 = vsel %vm10246, %v10236, %v10239
    %v10259 = vsel %vm10249, %v10245, 1326507024
    %v10260 = vsel %vm10248, %v10242, %v10259
    %v10261 = vsel %vm10247, %v10258, %v10260
    %v10262 = vshll.u32 %v10222, 8
    %v10263 = vmul.u32.u64.compose %v10262, %v10261
    %v10264 = vextract.low.u32 %v10263
    %v10265 = vextract.high.u32 %v10263
    %v10266 = vmul.u32.u64.compose %v10262, %v10257
    %v10267 = vextract.low.u32 %v10266
    %v10268 = vextract.high.u32 %v10266
    %v10269 = vmul.u32 %v10262, %v10253
    %v10270 = vadd.s32 %v10265, %v10267
    %vm10271 = vc.u32 %v10265, %v10267
    %v10272 = vadd.s32 %v10268, 1
    %v10273 = vsel %vm10271, %v10272, %v10268
    %v10274 = vadd.s32 %v10269, %v10273
    %v10275 = vadd.s32 %v10274, 536870912
    %v10276 = vshrl.u32 %v10275, 30
    %v10277 = vshll.u32 %v10276, 30
    %v10278 = vsub.s32 %v10274, %v10277
    %vm10279 = vcmp.lt.s32.totalorder %v10278, 0
    %v10280 = vsub.s32 0, %v10278
    %v10281 = vsel %vm10279, %v10280, %v10278
    %v10282 = vclz %v10281
    %v10283 = vsub.s32 %v10282, 2
    %vm10284 = vcmp.gt.s32.totalorder 0, %v10283
    %v10285 = vsel %vm10284, 0, %v10283
    %v10286 = vsub.s32 32, %v10285
    %v10287 = vshll.u32 %v10278, %v10285
    %v10288 = vshrl.u32 %v10270, %v10286
    %v10289 = vor.u32 %v10287, %v10288
    %v10290 = vsub.s32 4294967266, %v10285
    %v10291 = vadd.s32 %v10290, 127
    %v10292 = vshll.u32 %v10291, 23
    %v10293 = vor.u32 4788187, %v10292
    %v10294 = vand.u32 2147483647, %v10293
    %v10296 = vcvt.s32.f32 %v10289
    %v10297 = vmul.f32 %v10296, %v10294
    %v10298 = vxor.u32 %v10297, 2147483648
    %v10299 = vsel %vm10216, %v10298, %v10297
    %v10300 = vsub.s32 4, %v10276
    %v10301 = vsel %vm10216, %v10300, %v10276
    %v10302 = vsel %vm10215, %v9479, %v10299
    %v10303 = vsel %vm10215, 0, %v10301
    %v10304 = vcosq.f32.pop %v10302
    %v10305 = vsinq.f32.pop %v10302
    %vm10306 = vweird.f32 %v9479
    %v10307 = vadd.s32 %v10303, 3
    %v10308 = vand.u32 %v10307, 3
    %vm10309 = vcmp.lt.s32.totalorder %v10308, 2
    %vm10310 = vcmp.eq.s32.totalorder %v10308, 0
    %v10311 = vxor.u32 %v10305, 2147483648
    %v10312 = vsel %vm10310, %v10304, %v10311
    %vm10313 = vcmp.eq.s32.totalorder %v10308, 2
    %v10314 = vxor.u32 %v10304, 2147483648
    %v10315 = vsel %vm10313, %v10314, %v10305
    %v10316 = vsel %vm10309, %v10312, %v10315
    %v10317 = vsel %vm10306, nan, %v10316
    %v10318 = vand.u32 2147483647, %v9480
    %vm10319 = vcmp.le.f32.partialorder %v10318, 0.7853982
    %vm10320 = vcmp.lt.s32.totalorder %v9480, 0
    %v10321 = vand.u32 %v9480, 2139095040
    %v10322 = vshrl.u32 %v10321, 23
    %v10323 = vsub.s32 %v10322, 127
    %v10324 = vand.u32 2147483647, %v9480
    %v10325 = vand.u32 %v10324, 8388607
    %v10326 = vor.u32 %v10325, 8388608
    %v10327 = vsub.s32 0, %v10326
    %v10328 = vadd.s32 %v10323, 1
    %vm10329 = vcmp.gt.s32.totalorder %v10328, 0
    %v10330 = vsel %vm10329, %v10328, 0
    %v10331 = vshrl.u32 %v10330, 5
    %v10332 = vand.u32 %v10330, 31
    %v10333 = vsub.s32 32, %v10332
    %v10334 = vshrl.u32 683565275, %v10333
    %v10335 = vshll.u32 683565275, %v10332
    %v10336 = vshrl.u32 2475754826, %v10333
    %v10337 = vor.u32 %v10335, %v10336
    %v10338 = vshll.u32 2475754826, %v10332
    %v10339 = vshrl.u32 2131351028, %v10333
    %v10340 = vor.u32 %v10338, %v10339
    %v10341 = vshll.u32 2131351028, %v10332
    %v10342 = vshrl.u32 2102212464, %v10333
    %v10343 = vor.u32 %v10341, %v10342
    %v10344 = vshll.u32 2102212464, %v10332
    %v10345 = vshrl.u32 920167782, %v10333
    %v10346 = vor.u32 %v10344, %v10345
    %v10347 = vshll.u32 920167782, %v10332
    %v10348 = vshrl.u32 1326507024, %v10333
    %v10349 = vor.u32 %v10347, %v10348
    %vm10350 = vcmp.lt.s32.totalorder %v10331, 1
    %vm10351 = vcmp.lt.s32.totalorder %v10331, 2
    %vm10352 = vcmp.lt.s32.totalorder %v10331, 3
    %vm10353 = vcmp.lt.s32.totalorder %v10331, 4
    %v10354 = vsel %vm10350, %v10334, %v10337
    %v10355 = vsel %vm10353, %v10343, 2102212464
    %v10356 = vsel %vm10352, %v10340, %v10355
    %v10357 = vsel %vm10351, %v10354, %v10356
    %v10358 = vsel %vm10350, %v10337, %v10340
    %v10359 = vsel %vm10353, %v10346, 920167782
    %v10360 = vsel %vm10352, %v10343, %v10359
    %v10361 = vsel %vm10351, %v10358, %v10360
    %v10362 = vsel %vm10350, %v10340, %v10343
    %v10363 = vsel %vm10353, %v10349, 1326507024
    %v10364 = vsel %vm10352, %v10346, %v10363
    %v10365 = vsel %vm10351, %v10362, %v10364
    %v10366 = vshll.u32 %v10326, 8
    %v10367 = vmul.u32.u64.compose %v10366, %v10365
    %v10368 = vextract.low.u32 %v10367
    %v10369 = vextract.high.u32 %v10367
    %v10370 = vmul.u32.u64.compose %v10366, %v10361
    %v10371 = vextract.low.u32 %v10370
    %v10372 = vextract.high.u32 %v10370
    %v10373 = vmul.u32 %v10366, %v10357
    %v10374 = vadd.s32 %v10369, %v10371
    %vm10375 = vc.u32 %v10369, %v10371
    %v10376 = vadd.s32 %v10372, 1
    %v10377 = vsel %vm10375, %v10376, %v10372
    %v10378 = vadd.s32 %v10373, %v10377
    %v10379 = vadd.s32 %v10378, 536870912
    %v10380 = vshrl.u32 %v10379, 30
    %v10381 = vshll.u32 %v10380, 30
    %v10382 = vsub.s32 %v10378, %v10381
    %vm10383 = vcmp.lt.s32.totalorder %v10382, 0
    %v10384 = vsub.s32 0, %v10382
    %v10385 = vsel %vm10383, %v10384, %v10382
    %v10386 = vclz %v10385
    %v10387 = vsub.s32 %v10386, 2
    %vm10388 = vcmp.gt.s32.totalorder 0, %v10387
    %v10389 = vsel %vm10388, 0, %v10387
    %v10390 = vsub.s32 32, %v10389
    %v10391 = vshll.u32 %v10382, %v10389
    %v10392 = vshrl.u32 %v10374, %v10390
    %v10393 = vor.u32 %v10391, %v10392
    %v10394 = vsub.s32 4294967266, %v10389
    %v10395 = vadd.s32 %v10394, 127
    %v10396 = vshll.u32 %v10395, 23
    %v10397 = vor.u32 4788187, %v10396
    %v10398 = vand.u32 2147483647, %v10397
    %v10400 = vcvt.s32.f32 %v10393
    %v10401 = vmul.f32 %v10400, %v10398
    %v10402 = vxor.u32 %v10401, 2147483648
    %v10403 = vsel %vm10320, %v10402, %v10401
    %v10404 = vsub.s32 4, %v10380
    %v10405 = vsel %vm10320, %v10404, %v10380
    %v10406 = vsel %vm10319, %v9480, %v10403
    %v10407 = vsel %vm10319, 0, %v10405
    %v10408 = vcosq.f32.pop %v10406
    %v10409 = vsinq.f32.pop %v10406
    %vm10410 = vweird.f32 %v9480
    %v10411 = vadd.s32 %v10407, 3
    %v10412 = vand.u32 %v10411, 3
    %vm10413 = vcmp.lt.s32.totalorder %v10412, 2
    %vm10414 = vcmp.eq.s32.totalorder %v10412, 0
    %v10415 = vxor.u32 %v10409, 2147483648
    %v10416 = vsel %vm10414, %v10408, %v10415
    %vm10417 = vcmp.eq.s32.totalorder %v10412, 2
    %v10418 = vxor.u32 %v10408, 2147483648
    %v10419 = vsel %vm10417, %v10418, %v10409
    %v10420 = vsel %vm10413, %v10416, %v10419
    %v10421 = vsel %vm10410, nan, %v10420
    %v10422 = vand.u32 2147483647, %v9481
    %vm10423 = vcmp.le.f32.partialorder %v10422, 0.7853982
    %vm10424 = vcmp.lt.s32.totalorder %v9481, 0
    %v10425 = vand.u32 %v9481, 2139095040
    %v10426 = vshrl.u32 %v10425, 23
    %v10427 = vsub.s32 %v10426, 127
    %v10428 = vand.u32 2147483647, %v9481
    %v10429 = vand.u32 %v10428, 8388607
    %v10430 = vor.u32 %v10429, 8388608
    %v10431 = vsub.s32 0, %v10430
    %v10432 = vadd.s32 %v10427, 1
    %vm10433 = vcmp.gt.s32.totalorder %v10432, 0
    %v10434 = vsel %vm10433, %v10432, 0
    %v10435 = vshrl.u32 %v10434, 5
    %v10436 = vand.u32 %v10434, 31
    %v10437 = vsub.s32 32, %v10436
    %v10438 = vshrl.u32 683565275, %v10437
    %v10439 = vshll.u32 683565275, %v10436
    %v10440 = vshrl.u32 2475754826, %v10437
    %v10441 = vor.u32 %v10439, %v10440
    %v10442 = vshll.u32 2475754826, %v10436
    %v10443 = vshrl.u32 2131351028, %v10437
    %v10444 = vor.u32 %v10442, %v10443
    %v10445 = vshll.u32 2131351028, %v10436
    %v10446 = vshrl.u32 2102212464, %v10437
    %v10447 = vor.u32 %v10445, %v10446
    %v10448 = vshll.u32 2102212464, %v10436
    %v10449 = vshrl.u32 920167782, %v10437
    %v10450 = vor.u32 %v10448, %v10449
    %v10451 = vshll.u32 920167782, %v10436
    %v10452 = vshrl.u32 1326507024, %v10437
    %v10453 = vor.u32 %v10451, %v10452
    %vm10454 = vcmp.lt.s32.totalorder %v10435, 1
    %vm10455 = vcmp.lt.s32.totalorder %v10435, 2
    %vm10456 = vcmp.lt.s32.totalorder %v10435, 3
    %vm10457 = vcmp.lt.s32.totalorder %v10435, 4
    %v10458 = vsel %vm10454, %v10438, %v10441
    %v10459 = vsel %vm10457, %v10447, 2102212464
    %v10460 = vsel %vm10456, %v10444, %v10459
    %v10461 = vsel %vm10455, %v10458, %v10460
    %v10462 = vsel %vm10454, %v10441, %v10444
    %v10463 = vsel %vm10457, %v10450, 920167782
    %v10464 = vsel %vm10456, %v10447, %v10463
    %v10465 = vsel %vm10455, %v10462, %v10464
    %v10466 = vsel %vm10454, %v10444, %v10447
    %v10467 = vsel %vm10457, %v10453, 1326507024
    %v10468 = vsel %vm10456, %v10450, %v10467
    %v10469 = vsel %vm10455, %v10466, %v10468
    %v10470 = vshll.u32 %v10430, 8
    %v10471 = vmul.u32.u64.compose %v10470, %v10469
    %v10472 = vextract.low.u32 %v10471
    %v10473 = vextract.high.u32 %v10471
    %v10474 = vmul.u32.u64.compose %v10470, %v10465
    %v10475 = vextract.low.u32 %v10474
    %v10476 = vextract.high.u32 %v10474
    %v10477 = vmul.u32 %v10470, %v10461
    %v10478 = vadd.s32 %v10473, %v10475
    %vm10479 = vc.u32 %v10473, %v10475
    %v10480 = vadd.s32 %v10476, 1
    %v10481 = vsel %vm10479, %v10480, %v10476
    %v10482 = vadd.s32 %v10477, %v10481
    %v10483 = vadd.s32 %v10482, 536870912
    %v10484 = vshrl.u32 %v10483, 30
    %v10485 = vshll.u32 %v10484, 30
    %v10486 = vsub.s32 %v10482, %v10485
    %vm10487 = vcmp.lt.s32.totalorder %v10486, 0
    %v10488 = vsub.s32 0, %v10486
    %v10489 = vsel %vm10487, %v10488, %v10486
    %v10490 = vclz %v10489
    %v10491 = vsub.s32 %v10490, 2
    %vm10492 = vcmp.gt.s32.totalorder 0, %v10491
    %v10493 = vsel %vm10492, 0, %v10491
    %v10494 = vsub.s32 32, %v10493
    %v10495 = vshll.u32 %v10486, %v10493
    %v10496 = vshrl.u32 %v10478, %v10494
    %v10497 = vor.u32 %v10495, %v10496
    %v10498 = vsub.s32 4294967266, %v10493
    %v10499 = vadd.s32 %v10498, 127
    %v10500 = vshll.u32 %v10499, 23
    %v10501 = vor.u32 4788187, %v10500
    %v10502 = vand.u32 2147483647, %v10501
    %v10504 = vcvt.s32.f32 %v10497
    %v10505 = vmul.f32 %v10504, %v10502
    %v10506 = vxor.u32 %v10505, 2147483648
    %v10507 = vsel %vm10424, %v10506, %v10505
    %v10508 = vsub.s32 4, %v10484
    %v10509 = vsel %vm10424, %v10508, %v10484
    %v10510 = vsel %vm10423, %v9481, %v10507
    %v10511 = vsel %vm10423, 0, %v10509
    %v10512 = vcosq.f32.pop %v10510
    %v10513 = vsinq.f32.pop %v10510
    %vm10514 = vweird.f32 %v9481
    %v10515 = vadd.s32 %v10511, 3
    %v10516 = vand.u32 %v10515, 3
    %vm10517 = vcmp.lt.s32.totalorder %v10516, 2
    %vm10518 = vcmp.eq.s32.totalorder %v10516, 0
    %v10519 = vxor.u32 %v10513, 2147483648
    %v10520 = vsel %vm10518, %v10512, %v10519
    %vm10521 = vcmp.eq.s32.totalorder %v10516, 2
    %v10522 = vxor.u32 %v10512, 2147483648
    %v10523 = vsel %vm10521, %v10522, %v10513
    %v10524 = vsel %vm10517, %v10520, %v10523
    %v10525 = vsel %vm10514, nan, %v10524
    %v10526 = vand.u32 2147483647, %v9482
    %vm10527 = vcmp.le.f32.partialorder %v10526, 0.7853982
    %vm10528 = vcmp.lt.s32.totalorder %v9482, 0
    %v10529 = vand.u32 %v9482, 2139095040
    %v10530 = vshrl.u32 %v10529, 23
    %v10531 = vsub.s32 %v10530, 127
    %v10532 = vand.u32 2147483647, %v9482
    %v10533 = vand.u32 %v10532, 8388607
    %v10534 = vor.u32 %v10533, 8388608
    %v10535 = vsub.s32 0, %v10534
    %v10536 = vadd.s32 %v10531, 1
    %vm10537 = vcmp.gt.s32.totalorder %v10536, 0
    %v10538 = vsel %vm10537, %v10536, 0
    %v10539 = vshrl.u32 %v10538, 5
    %v10540 = vand.u32 %v10538, 31
    %v10541 = vsub.s32 32, %v10540
    %v10542 = vshrl.u32 683565275, %v10541
    %v10543 = vshll.u32 683565275, %v10540
    %v10544 = vshrl.u32 2475754826, %v10541
    %v10545 = vor.u32 %v10543, %v10544
    %v10546 = vshll.u32 2475754826, %v10540
    %v10547 = vshrl.u32 2131351028, %v10541
    %v10548 = vor.u32 %v10546, %v10547
    %v10549 = vshll.u32 2131351028, %v10540
    %v10550 = vshrl.u32 2102212464, %v10541
    %v10551 = vor.u32 %v10549, %v10550
    %v10552 = vshll.u32 2102212464, %v10540
    %v10553 = vshrl.u32 920167782, %v10541
    %v10554 = vor.u32 %v10552, %v10553
    %v10555 = vshll.u32 920167782, %v10540
    %v10556 = vshrl.u32 1326507024, %v10541
    %v10557 = vor.u32 %v10555, %v10556
    %vm10558 = vcmp.lt.s32.totalorder %v10539, 1
    %vm10559 = vcmp.lt.s32.totalorder %v10539, 2
    %vm10560 = vcmp.lt.s32.totalorder %v10539, 3
    %vm10561 = vcmp.lt.s32.totalorder %v10539, 4
    %v10562 = vsel %vm10558, %v10542, %v10545
    %v10563 = vsel %vm10561, %v10551, 2102212464
    %v10564 = vsel %vm10560, %v10548, %v10563
    %v10565 = vsel %vm10559, %v10562, %v10564
    %v10566 = vsel %vm10558, %v10545, %v10548
    %v10567 = vsel %vm10561, %v10554, 920167782
    %v10568 = vsel %vm10560, %v10551, %v10567
    %v10569 = vsel %vm10559, %v10566, %v10568
    %v10570 = vsel %vm10558, %v10548, %v10551
    %v10571 = vsel %vm10561, %v10557, 1326507024
    %v10572 = vsel %vm10560, %v10554, %v10571
    %v10573 = vsel %vm10559, %v10570, %v10572
    %v10574 = vshll.u32 %v10534, 8
    %v10575 = vmul.u32.u64.compose %v10574, %v10573
    %v10576 = vextract.low.u32 %v10575
    %v10577 = vextract.high.u32 %v10575
    %v10578 = vmul.u32.u64.compose %v10574, %v10569
    %v10579 = vextract.low.u32 %v10578
    %v10580 = vextract.high.u32 %v10578
    %v10581 = vmul.u32 %v10574, %v10565
    %v10582 = vadd.s32 %v10577, %v10579
    %vm10583 = vc.u32 %v10577, %v10579
    %v10584 = vadd.s32 %v10580, 1
    %v10585 = vsel %vm10583, %v10584, %v10580
    %v10586 = vadd.s32 %v10581, %v10585
    %v10587 = vadd.s32 %v10586, 536870912
    %v10588 = vshrl.u32 %v10587, 30
    %v10589 = vshll.u32 %v10588, 30
    %v10590 = vsub.s32 %v10586, %v10589
    %vm10591 = vcmp.lt.s32.totalorder %v10590, 0
    %v10592 = vsub.s32 0, %v10590
    %v10593 = vsel %vm10591, %v10592, %v10590
    %v10594 = vclz %v10593
    %v10595 = vsub.s32 %v10594, 2
    %vm10596 = vcmp.gt.s32.totalorder 0, %v10595
    %v10597 = vsel %vm10596, 0, %v10595
    %v10598 = vsub.s32 32, %v10597
    %v10599 = vshll.u32 %v10590, %v10597
    %v10600 = vshrl.u32 %v10582, %v10598
    %v10601 = vor.u32 %v10599, %v10600
    %v10602 = vsub.s32 4294967266, %v10597
    %v10603 = vadd.s32 %v10602, 127
    %v10604 = vshll.u32 %v10603, 23
    %v10605 = vor.u32 4788187, %v10604
    %v10606 = vand.u32 2147483647, %v10605
    %v10608 = vcvt.s32.f32 %v10601
    %v10609 = vmul.f32 %v10608, %v10606
    %v10610 = vxor.u32 %v10609, 2147483648
    %v10611 = vsel %vm10528, %v10610, %v10609
    %v10612 = vsub.s32 4, %v10588
    %v10613 = vsel %vm10528, %v10612, %v10588
    %v10614 = vsel %vm10527, %v9482, %v10611
    %v10615 = vsel %vm10527, 0, %v10613
    %v10616 = vcosq.f32.pop %v10614
    %v10617 = vsinq.f32.pop %v10614
    %vm10618 = vweird.f32 %v9482
    %v10619 = vadd.s32 %v10615, 3
    %v10620 = vand.u32 %v10619, 3
    %vm10621 = vcmp.lt.s32.totalorder %v10620, 2
    %vm10622 = vcmp.eq.s32.totalorder %v10620, 0
    %v10623 = vxor.u32 %v10617, 2147483648
    %v10624 = vsel %vm10622, %v10616, %v10623
    %vm10625 = vcmp.eq.s32.totalorder %v10620, 2
    %v10626 = vxor.u32 %v10616, 2147483648
    %v10627 = vsel %vm10625, %v10626, %v10617
    %v10628 = vsel %vm10621, %v10624, %v10627
    %v10629 = vsel %vm10618, nan, %v10628
    %v10630 = vand.u32 2147483647, %v9483
    %vm10631 = vcmp.le.f32.partialorder %v10630, 0.7853982
    %vm10632 = vcmp.lt.s32.totalorder %v9483, 0
    %v10633 = vand.u32 %v9483, 2139095040
    %v10634 = vshrl.u32 %v10633, 23
    %v10635 = vsub.s32 %v10634, 127
    %v10636 = vand.u32 2147483647, %v9483
    %v10637 = vand.u32 %v10636, 8388607
    %v10638 = vor.u32 %v10637, 8388608
    %v10639 = vsub.s32 0, %v10638
    %v10640 = vadd.s32 %v10635, 1
    %vm10641 = vcmp.gt.s32.totalorder %v10640, 0
    %v10642 = vsel %vm10641, %v10640, 0
    %v10643 = vshrl.u32 %v10642, 5
    %v10644 = vand.u32 %v10642, 31
    %v10645 = vsub.s32 32, %v10644
    %v10646 = vshrl.u32 683565275, %v10645
    %v10647 = vshll.u32 683565275, %v10644
    %v10648 = vshrl.u32 2475754826, %v10645
    %v10649 = vor.u32 %v10647, %v10648
    %v10650 = vshll.u32 2475754826, %v10644
    %v10651 = vshrl.u32 2131351028, %v10645
    %v10652 = vor.u32 %v10650, %v10651
    %v10653 = vshll.u32 2131351028, %v10644
    %v10654 = vshrl.u32 2102212464, %v10645
    %v10655 = vor.u32 %v10653, %v10654
    %v10656 = vshll.u32 2102212464, %v10644
    %v10657 = vshrl.u32 920167782, %v10645
    %v10658 = vor.u32 %v10656, %v10657
    %v10659 = vshll.u32 920167782, %v10644
    %v10660 = vshrl.u32 1326507024, %v10645
    %v10661 = vor.u32 %v10659, %v10660
    %vm10662 = vcmp.lt.s32.totalorder %v10643, 1
    %vm10663 = vcmp.lt.s32.totalorder %v10643, 2
    %vm10664 = vcmp.lt.s32.totalorder %v10643, 3
    %vm10665 = vcmp.lt.s32.totalorder %v10643, 4
    %v10666 = vsel %vm10662, %v10646, %v10649
    %v10667 = vsel %vm10665, %v10655, 2102212464
    %v10668 = vsel %vm10664, %v10652, %v10667
    %v10669 = vsel %vm10663, %v10666, %v10668
    %v10670 = vsel %vm10662, %v10649, %v10652
    %v10671 = vsel %vm10665, %v10658, 920167782
    %v10672 = vsel %vm10664, %v10655, %v10671
    %v10673 = vsel %vm10663, %v10670, %v10672
    %v10674 = vsel %vm10662, %v10652, %v10655
    %v10675 = vsel %vm10665, %v10661, 1326507024
    %v10676 = vsel %vm10664, %v10658, %v10675
    %v10677 = vsel %vm10663, %v10674, %v10676
    %v10678 = vshll.u32 %v10638, 8
    %v10679 = vmul.u32.u64.compose %v10678, %v10677
    %v10680 = vextract.low.u32 %v10679
    %v10681 = vextract.high.u32 %v10679
    %v10682 = vmul.u32.u64.compose %v10678, %v10673
    %v10683 = vextract.low.u32 %v10682
    %v10684 = vextract.high.u32 %v10682
    %v10685 = vmul.u32 %v10678, %v10669
    %v10686 = vadd.s32 %v10681, %v10683
    %vm10687 = vc.u32 %v10681, %v10683
    %v10688 = vadd.s32 %v10684, 1
    %v10689 = vsel %vm10687, %v10688, %v10684
    %v10690 = vadd.s32 %v10685, %v10689
    %v10691 = vadd.s32 %v10690, 536870912
    %v10692 = vshrl.u32 %v10691, 30
    %v10693 = vshll.u32 %v10692, 30
    %v10694 = vsub.s32 %v10690, %v10693
    %vm10695 = vcmp.lt.s32.totalorder %v10694, 0
    %v10696 = vsub.s32 0, %v10694
    %v10697 = vsel %vm10695, %v10696, %v10694
    %v10698 = vclz %v10697
    %v10699 = vsub.s32 %v10698, 2
    %vm10700 = vcmp.gt.s32.totalorder 0, %v10699
    %v10701 = vsel %vm10700, 0, %v10699
    %v10702 = vsub.s32 32, %v10701
    %v10703 = vshll.u32 %v10694, %v10701
    %v10704 = vshrl.u32 %v10686, %v10702
    %v10705 = vor.u32 %v10703, %v10704
    %v10706 = vsub.s32 4294967266, %v10701
    %v10707 = vadd.s32 %v10706, 127
    %v10708 = vshll.u32 %v10707, 23
    %v10709 = vor.u32 4788187, %v10708
    %v10710 = vand.u32 2147483647, %v10709
    %v10712 = vcvt.s32.f32 %v10705
    %v10713 = vmul.f32 %v10712, %v10710
    %v10714 = vxor.u32 %v10713, 2147483648
    %v10715 = vsel %vm10632, %v10714, %v10713
    %v10716 = vsub.s32 4, %v10692
    %v10717 = vsel %vm10632, %v10716, %v10692
    %v10718 = vsel %vm10631, %v9483, %v10715
    %v10719 = vsel %vm10631, 0, %v10717
    %v10720 = vcosq.f32.pop %v10718
    %v10721 = vsinq.f32.pop %v10718
    %vm10722 = vweird.f32 %v9483
    %v10723 = vadd.s32 %v10719, 3
    %v10724 = vand.u32 %v10723, 3
    %vm10725 = vcmp.lt.s32.totalorder %v10724, 2
    %vm10726 = vcmp.eq.s32.totalorder %v10724, 0
    %v10727 = vxor.u32 %v10721, 2147483648
    %v10728 = vsel %vm10726, %v10720, %v10727
    %vm10729 = vcmp.eq.s32.totalorder %v10724, 2
    %v10730 = vxor.u32 %v10720, 2147483648
    %v10731 = vsel %vm10729, %v10730, %v10721
    %v10732 = vsel %vm10725, %v10728, %v10731
    %v10733 = vsel %vm10722, nan, %v10732
    %v10734 = vand.u32 2147483647, %v9484
    %vm10735 = vcmp.le.f32.partialorder %v10734, 0.7853982
    %vm10736 = vcmp.lt.s32.totalorder %v9484, 0
    %v10737 = vand.u32 %v9484, 2139095040
    %v10738 = vshrl.u32 %v10737, 23
    %v10739 = vsub.s32 %v10738, 127
    %v10740 = vand.u32 2147483647, %v9484
    %v10741 = vand.u32 %v10740, 8388607
    %v10742 = vor.u32 %v10741, 8388608
    %v10743 = vsub.s32 0, %v10742
    %v10744 = vadd.s32 %v10739, 1
    %vm10745 = vcmp.gt.s32.totalorder %v10744, 0
    %v10746 = vsel %vm10745, %v10744, 0
    %v10747 = vshrl.u32 %v10746, 5
    %v10748 = vand.u32 %v10746, 31
    %v10749 = vsub.s32 32, %v10748
    %v10750 = vshrl.u32 683565275, %v10749
    %v10751 = vshll.u32 683565275, %v10748
    %v10752 = vshrl.u32 2475754826, %v10749
    %v10753 = vor.u32 %v10751, %v10752
    %v10754 = vshll.u32 2475754826, %v10748
    %v10755 = vshrl.u32 2131351028, %v10749
    %v10756 = vor.u32 %v10754, %v10755
    %v10757 = vshll.u32 2131351028, %v10748
    %v10758 = vshrl.u32 2102212464, %v10749
    %v10759 = vor.u32 %v10757, %v10758
    %v10760 = vshll.u32 2102212464, %v10748
    %v10761 = vshrl.u32 920167782, %v10749
    %v10762 = vor.u32 %v10760, %v10761
    %v10763 = vshll.u32 920167782, %v10748
    %v10764 = vshrl.u32 1326507024, %v10749
    %v10765 = vor.u32 %v10763, %v10764
    %vm10766 = vcmp.lt.s32.totalorder %v10747, 1
    %vm10767 = vcmp.lt.s32.totalorder %v10747, 2
    %vm10768 = vcmp.lt.s32.totalorder %v10747, 3
    %vm10769 = vcmp.lt.s32.totalorder %v10747, 4
    %v10770 = vsel %vm10766, %v10750, %v10753
    %v10771 = vsel %vm10769, %v10759, 2102212464
    %v10772 = vsel %vm10768, %v10756, %v10771
    %v10773 = vsel %vm10767, %v10770, %v10772
    %v10774 = vsel %vm10766, %v10753, %v10756
    %v10775 = vsel %vm10769, %v10762, 920167782
    %v10776 = vsel %vm10768, %v10759, %v10775
    %v10777 = vsel %vm10767, %v10774, %v10776
    %v10778 = vsel %vm10766, %v10756, %v10759
    %v10779 = vsel %vm10769, %v10765, 1326507024
    %v10780 = vsel %vm10768, %v10762, %v10779
    %v10781 = vsel %vm10767, %v10778, %v10780
    %v10782 = vshll.u32 %v10742, 8
    %v10783 = vmul.u32.u64.compose %v10782, %v10781
    %v10784 = vextract.low.u32 %v10783
    %v10785 = vextract.high.u32 %v10783
    %v10786 = vmul.u32.u64.compose %v10782, %v10777
    %v10787 = vextract.low.u32 %v10786
    %v10788 = vextract.high.u32 %v10786
    %v10789 = vmul.u32 %v10782, %v10773
    %v10790 = vadd.s32 %v10785, %v10787
    %vm10791 = vc.u32 %v10785, %v10787
    %v10792 = vadd.s32 %v10788, 1
    %v10793 = vsel %vm10791, %v10792, %v10788
    %v10794 = vadd.s32 %v10789, %v10793
    %v10795 = vadd.s32 %v10794, 536870912
    %v10796 = vshrl.u32 %v10795, 30
    %v10797 = vshll.u32 %v10796, 30
    %v10798 = vsub.s32 %v10794, %v10797
    %vm10799 = vcmp.lt.s32.totalorder %v10798, 0
    %v10800 = vsub.s32 0, %v10798
    %v10801 = vsel %vm10799, %v10800, %v10798
    %v10802 = vclz %v10801
    %v10803 = vsub.s32 %v10802, 2
    %vm10804 = vcmp.gt.s32.totalorder 0, %v10803
    %v10805 = vsel %vm10804, 0, %v10803
    %v10806 = vsub.s32 32, %v10805
    %v10807 = vshll.u32 %v10798, %v10805
    %v10808 = vshrl.u32 %v10790, %v10806
    %v10809 = vor.u32 %v10807, %v10808
    %v10810 = vsub.s32 4294967266, %v10805
    %v10811 = vadd.s32 %v10810, 127
    %v10812 = vshll.u32 %v10811, 23
    %v10813 = vor.u32 4788187, %v10812
    %v10814 = vand.u32 2147483647, %v10813
    %v10816 = vcvt.s32.f32 %v10809
    %v10817 = vmul.f32 %v10816, %v10814
    %v10818 = vxor.u32 %v10817, 2147483648
    %v10819 = vsel %vm10736, %v10818, %v10817
    %v10820 = vsub.s32 4, %v10796
    %v10821 = vsel %vm10736, %v10820, %v10796
    %v10822 = vsel %vm10735, %v9484, %v10819
    %v10823 = vsel %vm10735, 0, %v10821
    %v10824 = vcosq.f32.pop %v10822
    %v10825 = vsinq.f32.pop %v10822
    %vm10826 = vweird.f32 %v9484
    %v10827 = vadd.s32 %v10823, 3
    %v10828 = vand.u32 %v10827, 3
    %vm10829 = vcmp.lt.s32.totalorder %v10828, 2
    %vm10830 = vcmp.eq.s32.totalorder %v10828, 0
    %v10831 = vxor.u32 %v10825, 2147483648
    %v10832 = vsel %vm10830, %v10824, %v10831
    %vm10833 = vcmp.eq.s32.totalorder %v10828, 2
    %v10834 = vxor.u32 %v10824, 2147483648
    %v10835 = vsel %vm10833, %v10834, %v10825
    %v10836 = vsel %vm10829, %v10832, %v10835
    %v10837 = vsel %vm10826, nan, %v10836
    %v10838 = vand.u32 2147483647, %v9485
    %vm10839 = vcmp.le.f32.partialorder %v10838, 0.7853982
    %vm10840 = vcmp.lt.s32.totalorder %v9485, 0
    %v10841 = vand.u32 %v9485, 2139095040
    %v10842 = vshrl.u32 %v10841, 23
    %v10843 = vsub.s32 %v10842, 127
    %v10844 = vand.u32 2147483647, %v9485
    %v10845 = vand.u32 %v10844, 8388607
    %v10846 = vor.u32 %v10845, 8388608
    %v10847 = vsub.s32 0, %v10846
    %v10848 = vadd.s32 %v10843, 1
    %vm10849 = vcmp.gt.s32.totalorder %v10848, 0
    %v10850 = vsel %vm10849, %v10848, 0
    %v10851 = vshrl.u32 %v10850, 5
    %v10852 = vand.u32 %v10850, 31
    %v10853 = vsub.s32 32, %v10852
    %v10854 = vshrl.u32 683565275, %v10853
    %v10855 = vshll.u32 683565275, %v10852
    %v10856 = vshrl.u32 2475754826, %v10853
    %v10857 = vor.u32 %v10855, %v10856
    %v10858 = vshll.u32 2475754826, %v10852
    %v10859 = vshrl.u32 2131351028, %v10853
    %v10860 = vor.u32 %v10858, %v10859
    %v10861 = vshll.u32 2131351028, %v10852
    %v10862 = vshrl.u32 2102212464, %v10853
    %v10863 = vor.u32 %v10861, %v10862
    %v10864 = vshll.u32 2102212464, %v10852
    %v10865 = vshrl.u32 920167782, %v10853
    %v10866 = vor.u32 %v10864, %v10865
    %v10867 = vshll.u32 920167782, %v10852
    %v10868 = vshrl.u32 1326507024, %v10853
    %v10869 = vor.u32 %v10867, %v10868
    %vm10870 = vcmp.lt.s32.totalorder %v10851, 1
    %vm10871 = vcmp.lt.s32.totalorder %v10851, 2
    %vm10872 = vcmp.lt.s32.totalorder %v10851, 3
    %vm10873 = vcmp.lt.s32.totalorder %v10851, 4
    %v10874 = vsel %vm10870, %v10854, %v10857
    %v10875 = vsel %vm10873, %v10863, 2102212464
    %v10876 = vsel %vm10872, %v10860, %v10875
    %v10877 = vsel %vm10871, %v10874, %v10876
    %v10878 = vsel %vm10870, %v10857, %v10860
    %v10879 = vsel %vm10873, %v10866, 920167782
    %v10880 = vsel %vm10872, %v10863, %v10879
    %v10881 = vsel %vm10871, %v10878, %v10880
    %v10882 = vsel %vm10870, %v10860, %v10863
    %v10883 = vsel %vm10873, %v10869, 1326507024
    %v10884 = vsel %vm10872, %v10866, %v10883
    %v10885 = vsel %vm10871, %v10882, %v10884
    %v10886 = vshll.u32 %v10846, 8
    %v10887 = vmul.u32.u64.compose %v10886, %v10885
    %v10888 = vextract.low.u32 %v10887
    %v10889 = vextract.high.u32 %v10887
    %v10890 = vmul.u32.u64.compose %v10886, %v10881
    %v10891 = vextract.low.u32 %v10890
    %v10892 = vextract.high.u32 %v10890
    %v10893 = vmul.u32 %v10886, %v10877
    %v10894 = vadd.s32 %v10889, %v10891
    %vm10895 = vc.u32 %v10889, %v10891
    %v10896 = vadd.s32 %v10892, 1
    %v10897 = vsel %vm10895, %v10896, %v10892
    %v10898 = vadd.s32 %v10893, %v10897
    %v10899 = vadd.s32 %v10898, 536870912
    %v10900 = vshrl.u32 %v10899, 30
    %v10901 = vshll.u32 %v10900, 30
    %v10902 = vsub.s32 %v10898, %v10901
    %vm10903 = vcmp.lt.s32.totalorder %v10902, 0
    %v10904 = vsub.s32 0, %v10902
    %v10905 = vsel %vm10903, %v10904, %v10902
    %v10906 = vclz %v10905
    %v10907 = vsub.s32 %v10906, 2
    %vm10908 = vcmp.gt.s32.totalorder 0, %v10907
    %v10909 = vsel %vm10908, 0, %v10907
    %v10910 = vsub.s32 32, %v10909
    %v10911 = vshll.u32 %v10902, %v10909
    %v10912 = vshrl.u32 %v10894, %v10910
    %v10913 = vor.u32 %v10911, %v10912
    %v10914 = vsub.s32 4294967266, %v10909
    %v10915 = vadd.s32 %v10914, 127
    %v10916 = vshll.u32 %v10915, 23
    %v10917 = vor.u32 4788187, %v10916
    %v10918 = vand.u32 2147483647, %v10917
    %v10920 = vcvt.s32.f32 %v10913
    %v10921 = vmul.f32 %v10920, %v10918
    %v10922 = vxor.u32 %v10921, 2147483648
    %v10923 = vsel %vm10840, %v10922, %v10921
    %v10924 = vsub.s32 4, %v10900
    %v10925 = vsel %vm10840, %v10924, %v10900
    %v10926 = vsel %vm10839, %v9485, %v10923
    %v10927 = vsel %vm10839, 0, %v10925
    %v10928 = vcosq.f32.pop %v10926
    %v10929 = vsinq.f32.pop %v10926
    %vm10930 = vweird.f32 %v9485
    %v10931 = vadd.s32 %v10927, 3
    %v10932 = vand.u32 %v10931, 3
    %vm10933 = vcmp.lt.s32.totalorder %v10932, 2
    %vm10934 = vcmp.eq.s32.totalorder %v10932, 0
    %v10935 = vxor.u32 %v10929, 2147483648
    %v10936 = vsel %vm10934, %v10928, %v10935
    %vm10937 = vcmp.eq.s32.totalorder %v10932, 2
    %v10938 = vxor.u32 %v10928, 2147483648
    %v10939 = vsel %vm10937, %v10938, %v10929
    %v10940 = vsel %vm10933, %v10936, %v10939
    %v10941 = vsel %vm10930, nan, %v10940
    %v10942 = vld [vmem:[%s5] sm:$0x1]
    %v10943 = vld [vmem:[#allocation2] sm:$0x1]
    %10945 = vset.pattern.permute.xlu0 0
    %10946 = vperm.xlu0 %10945, %v10943
    %v10947 = vpop.permute.xlu0 %10946
    %v10949 = vlaneseq
    %v10950 = vshrl.u32 %v10949, 7
    %v10951 = vsub.s32 0, %v10950
    %v10952 = vrot.slane %v10947, %v10951
    %v10954 = vsel %vm1772, %v10942, 0
    %vm10956 = vcmask 1041408
    %v10958 = vsel %vm10956, %v10837, 0
    %v10961 = vsel %vm10956, %v10941, 0
    %10963 = vmatprep.subr.mxu0 %v9693
    %10964 = vmatpush1.msra.mxu0 %v9589
    %10965 = vmatprep.subr.mxu0 %v9901
    %10966 = vmatpush1.msra.mxu0 %v9797
    %10967 = vmatprep.subr.mxu0 %v10109
    %10968 = vmatpush1.msra.mxu0 %v10005
    %10969 = vmatprep.subr.mxu0 %v10317
    %10970 = vmatpush1.msra.mxu0 %v10213
    %10971 = vmatprep.subr.mxu0 %v10525
    %10972 = vmatpush1.msra.mxu0 %v10421
    %10973 = vmatprep.subr.mxu0 %v10733
    %10974 = vmatpush1.msra.mxu0 %v10629
    %10975 = vmatprep.subr.mxu0 %v10961
    %10976 = vmatpush1.msra.mxu0 %v10958
    %10977 = vmatprep.subr.mxu0 0.0
    %10978 = vmatpush1.msra.mxu0 0.0
    %10979 = vmatprep.subr.mxu0 0.0
    %10980 = vmatpush1.msra.mxu0 0.0
    %10981 = vmatprep.subr.mxu0 0.0
    %10982 = vmatpush1.msra.mxu0 0.0
    %10983 = vmatprep.subr.mxu0 0.0
    %10984 = vmatpush1.msra.mxu0 0.0
    %10985 = vmatprep.subr.mxu0 0.0
    %10986 = vmatpush1.msra.mxu0 0.0
    %10987 = vmatprep.subr.mxu0 0.0
    %10988 = vmatpush1.msra.mxu0 0.0
    %10989 = vmatprep.subr.mxu0 0.0
    %10990 = vmatpush1.msra.mxu0 0.0
    %10991 = vmatprep.subr.mxu0 0.0
    %10992 = vmatpush1.msra.mxu0 0.0
    %10993 = vmatprep.subr.mxu0 0.0
    %10994 = vmatpush1.msra.mxu0 0.0
    %10995 = vmatprep.subr.mxu0 0.0
    %10996 = vmatpush1.msra.mxu0 0.0
    %10997 = vmatprep.subr.mxu0 0.0
    %10998 = vmatpush1.msra.mxu0 0.0
    %10999 = vmatprep.subr.mxu0 0.0
    %11000 = vmatpush1.msra.mxu0 0.0
    %11001 = vmatprep.subr.mxu0 0.0
    %11002 = vmatpush1.msra.mxu0 0.0
    %11003 = vmatprep.subr.mxu0 0.0
    %11004 = vmatpush1.msra.mxu0 0.0
    %11005 = vmatprep.subr.mxu0 0.0
    %11006 = vmatpush1.msra.mxu0 0.0
    %11007 = vmatprep.subr.mxu0 0.0
    %11008 = vmatpush1.msra.mxu0 0.0
    %11009 = vmatprep.subr.mxu0 0.0
    %11010 = vmatpush1.msra.mxu0 0.0
    %11011 = vmatprep.subr.mxu0 0.0
    %11012 = vmatpush1.msra.mxu0 0.0
    %11013 = vmatprep.subr.mxu0 0.0
    %11014 = vmatpush1.msra.mxu0 0.0
    %11015 = vmatprep.subr.mxu0 0.0
    %11016 = vmatpush1.msra.mxu0 0.0
    %11017 = vmatprep.subr.mxu0 0.0
    %11018 = vmatpush1.msra.mxu0 0.0
    %11019 = vmatprep.subr.mxu0 0.0
    %11020 = vmatpush1.msra.mxu0 0.0
    %11021 = vmatprep.subr.mxu0 0.0
    %11022 = vmatpush1.msra.mxu0 0.0
    %11023 = vmatprep.subr.mxu0 0.0
    %11024 = vmatpush1.msra.mxu0 0.0
    %11025 = vmatprep.subr.mxu0 0.0
    %11026 = vmatpush1.msra.mxu0 0.0
    %11027 = vmatprep.mubr.f32.mxu0 0.0
    %11028 = vmatmul.mubr.f32.gmra.mrb[0].mxu0 %v10954
    %v11029 = vpop.f32.mrb[0].mxu0
    %v11030 = vadd.f32 %v10952, %v11029
    %v11031 = vpop.f32.mrb[0].mxu0
    %v11032 = vadd.f32 %v10952, %v11031
    %11033 = vdwg.mxu0
    %v11034 = vsub.f32 %v30, 1.0
    %v11035 = vmul.f32 %v30, %v11034
    %v11036 = vrot.slane %v30, 7
    %v11037 = vrot.slane %v11036, 2
    %v11039 = vmul.f32 %v11035, %v11037
    %v11041 = vrot.slane %v11034, 7
    %v11042 = vrot.slane %v11041, 2
    %v11044 = vmul.f32 %v11039, %v11042
    %v11047 = vcombine.low %v11030, %v11032
    %v11049 = vunpack.c.l.s4 1983009808
    %v11050 = vunpack.c.0.s8 %v11049
    %v11051 = vlaneseq
    %v11052 = vshrl.u32 %v11051, 7
    %v11053 = vsub.s32 %v11050, %v11052
    %v11054 = vrot.slane %v11047, %v11053
    %v11056 = vmul.f32 %v11044, %v11054
    %v11057 = vmul.f32 %v30, 6.2831855
    %v11058 = vand.u32 2147483647, %v11057
    %vm11059 = vcmp.le.f32.partialorder %v11058, 0.7853982
    %vm11060 = vcmp.lt.s32.totalorder %v11057, 0
    %v11061 = vand.u32 %v11057, 2139095040
    %v11062 = vshrl.u32 %v11061, 23
    %v11063 = vsub.s32 %v11062, 127
    %v11064 = vand.u32 2147483647, %v11057
    %v11065 = vand.u32 %v11064, 8388607
    %v11066 = vor.u32 %v11065, 8388608
    %v11067 = vsub.s32 0, %v11066
    %v11068 = vadd.s32 %v11063, 1
    %vm11069 = vcmp.gt.s32.totalorder %v11068, 0
    %v11070 = vsel %vm11069, %v11068, 0
    %v11071 = vshrl.u32 %v11070, 5
    %v11072 = vand.u32 %v11070, 31
    %v11073 = vsub.s32 32, %v11072
    %v11074 = vshrl.u32 683565275, %v11073
    %v11075 = vshll.u32 683565275, %v11072
    %v11076 = vshrl.u32 2475754826, %v11073
    %v11077 = vor.u32 %v11075, %v11076
    %v11078 = vshll.u32 2475754826, %v11072
    %v11079 = vshrl.u32 2131351028, %v11073
    %v11080 = vor.u32 %v11078, %v11079
    %v11081 = vshll.u32 2131351028, %v11072
    %v11082 = vshrl.u32 2102212464, %v11073
    %v11083 = vor.u32 %v11081, %v11082
    %v11084 = vshll.u32 2102212464, %v11072
    %v11085 = vshrl.u32 920167782, %v11073
    %v11086 = vor.u32 %v11084, %v11085
    %v11087 = vshll.u32 920167782, %v11072
    %v11088 = vshrl.u32 1326507024, %v11073
    %v11089 = vor.u32 %v11087, %v11088
    %vm11090 = vcmp.lt.s32.totalorder %v11071, 1
    %vm11091 = vcmp.lt.s32.totalorder %v11071, 2
    %vm11092 = vcmp.lt.s32.totalorder %v11071, 3
    %vm11093 = vcmp.lt.s32.totalorder %v11071, 4
    %v11094 = vsel %vm11090, %v11074, %v11077
    %v11095 = vsel %vm11093, %v11083, 2102212464
    %v11096 = vsel %vm11092, %v11080, %v11095
    %v11097 = vsel %vm11091, %v11094, %v11096
    %v11098 = vsel %vm11090, %v11077, %v11080
    %v11099 = vsel %vm11093, %v11086, 920167782
    %v11100 = vsel %vm11092, %v11083, %v11099
    %v11101 = vsel %vm11091, %v11098, %v11100
    %v11102 = vsel %vm11090, %v11080, %v11083
    %v11103 = vsel %vm11093, %v11089, 1326507024
    %v11104 = vsel %vm11092, %v11086, %v11103
    %v11105 = vsel %vm11091, %v11102, %v11104
    %v11106 = vshll.u32 %v11066, 8
    %v11107 = vmul.u32.u64.compose %v11106, %v11105
    %v11108 = vextract.low.u32 %v11107
    %v11109 = vextract.high.u32 %v11107
    %v11110 = vmul.u32.u64.compose %v11106, %v11101
    %v11111 = vextract.low.u32 %v11110
    %v11112 = vextract.high.u32 %v11110
    %v11113 = vmul.u32 %v11106, %v11097
    %v11114 = vadd.s32 %v11109, %v11111
    %vm11115 = vc.u32 %v11109, %v11111
    %v11116 = vadd.s32 %v11112, 1
    %v11117 = vsel %vm11115, %v11116, %v11112
    %v11118 = vadd.s32 %v11113, %v11117
    %v11119 = vadd.s32 %v11118, 536870912
    %v11120 = vshrl.u32 %v11119, 30
    %v11121 = vshll.u32 %v11120, 30
    %v11122 = vsub.s32 %v11118, %v11121
    %vm11123 = vcmp.lt.s32.totalorder %v11122, 0
    %v11124 = vsub.s32 0, %v11122
    %v11125 = vsel %vm11123, %v11124, %v11122
    %v11126 = vclz %v11125
    %v11127 = vsub.s32 %v11126, 2
    %vm11128 = vcmp.gt.s32.totalorder 0, %v11127
    %v11129 = vsel %vm11128, 0, %v11127
    %v11130 = vsub.s32 32, %v11129
    %v11131 = vshll.u32 %v11122, %v11129
    %v11132 = vshrl.u32 %v11114, %v11130
    %v11133 = vor.u32 %v11131, %v11132
    %v11134 = vsub.s32 4294967266, %v11129
    %v11135 = vadd.s32 %v11134, 127
    %v11136 = vshll.u32 %v11135, 23
    %v11137 = vor.u32 4788187, %v11136
    %v11138 = vand.u32 2147483647, %v11137
    %v11140 = vcvt.s32.f32 %v11133
    %v11141 = vmul.f32 %v11140, %v11138
    %v11142 = vxor.u32 %v11141, 2147483648
    %v11143 = vsel %vm11060, %v11142, %v11141
    %v11144 = vsub.s32 4, %v11120
    %v11145 = vsel %vm11060, %v11144, %v11120
    %v11146 = vsel %vm11059, %v11057, %v11143
    %v11147 = vsel %vm11059, 0, %v11145
    %v11148 = vcosq.f32.pop %v11146
    %v11149 = vsinq.f32.pop %v11146
    %vm11150 = vweird.f32 %v11057
    %v11151 = vadd.s32 %v11147, 3
    %v11152 = vand.u32 %v11151, 3
    %vm11153 = vcmp.lt.s32.totalorder %v11152, 2
    %vm11154 = vcmp.eq.s32.totalorder %v11152, 0
    %v11155 = vxor.u32 %v11149, 2147483648
    %v11156 = vsel %vm11154, %v11148, %v11155
    %vm11157 = vcmp.eq.s32.totalorder %v11152, 2
    %v11158 = vxor.u32 %v11148, 2147483648
    %v11159 = vsel %vm11157, %v11158, %v11149
    %v11160 = vsel %vm11153, %v11156, %v11159
    %v11161 = vsel %vm11150, nan, %v11160
    %v11163 = vrot.slane %v11161, 7
    %v11165 = vmul.f32 %v30, %v11163
    %v11167 = vrot.slane %v11165, 7
    %v11168 = vrot.slane %v11167, 2
    %v11170 = vadd.f32 %v11056, %v11168
    %v11173 = vunpack.c.l.s4 1966171168
    %v11174 = vunpack.c.0.s8 %v11173
    %v11175 = vlaneseq
    %v11176 = vshrl.u32 %v11175, 7
    %v11177 = vsub.s32 %v11174, %v11176
    %v11178 = vrot.slane %v11170, %v11177
    %v11180 = vlaneseq
    %vm11181 = vcmp.ge.s32.totalorder %v11180, 0
    %vm11182 = vcmp.lt.s32.totalorder %v11180, 256
    %vm11183 = vmand %vm11181, %vm11182
    %11184 = vst.msk [vmem:[#allocation3] sm:$0x3] %vm11183, %v11178
    // Predicated region
    $region30: #{tpu_custom_call.1} parent=1 // pred_check
      _
    $region31: #{tpu_custom_call.1} parent=1 // pred_check_branch
      %11186 = sbr.rel (0) target = $region33
    $region32: #{tpu_custom_call.1} parent=1 // pred_region
      %s11188 = ssub.s32 32, 32
      %11189 = vsyncadd [#allocation4], %s11188
      %s11191 = sshll.u32 [#allocation3], 4
      %s11192 = int_to_ptr.vmem [resolvable:$true] %s11191
      %11194 = dma.vmem_to_hbm [thread:$0]  %s11192, 32, %s7, [#allocation4]
    $region33: #{tpu_custom_call.1} parent=1 // pred_fallthru
      _
    // Predicated region
    $region34: #{tpu_custom_call.1} parent=1 // pred_check
      _
    $region35: #{tpu_custom_call.1} parent=1 // pred_check_branch
      %11196 = sbr.rel (0) target = $region37
    $region36: #{tpu_custom_call.1} parent=1 // pred_region
      %11197 = dma.done [#allocation4], 32
    $region37: #{tpu_custom_call.1} parent=1 // pred_fallthru
      _
    %11198 = vsyncpa [#allocation4], 1

</llo_original>
